<compile_context>
chip_gen: v5e
topology: v5e:2x2
jax: 0.10.0
libtpu: 0.0.40
codegen_flags: <defaults>
</compile_context>

<pallas_src>
import functools

import jax
import jax.numpy as jnp
from jax import lax
from jax.experimental import pallas as pl
from jax.experimental.pallas import tpu as pltpu


# ----------------------------------------------------------------------------
# Generation-aware tuning
# ----------------------------------------------------------------------------
@functools.lru_cache(maxsize=None)
def _tpu_tuning():
    vmem_bytes = 64 << 20                      # conservative (v7x-safe) default
    try:
        info = pltpu.get_tpu_info()
        vmem_bytes = int(getattr(info, "vmem_capacity_bytes", vmem_bytes))
    except Exception:
        pass
    if vmem_bytes > (64 << 20):
        # v5e / v6e: one TensorCore per chip, 128 MiB VMEM -> merge Cout tiles
        # (fewer grid steps / DMA programs) and raise the scoped VMEM limit.
        return {"split_cout": False, "max_tco": 512, "vmem_limit": 96 << 20}
    # v7x-like: two TensorCores share the grid, 64 MiB VMEM per core -> split
    # Cout so both cores get work, keep the VMEM limit conservative.
    return {"split_cout": True, "max_tco": 256, "vmem_limit": 48 << 20}


def _pick_cout_tile(cout, cfg):
    if cfg["split_cout"] and cout >= 256:
        tco = max(128, cout // 2)              # >= 2 grid steps -> both TCs busy
    else:
        tco = cout
    tco = min(tco, cfg["max_tco"], cout)
    while cout % tco:
        tco //= 2
    return max(tco, 1)


# ----------------------------------------------------------------------------
# Fused Conv2d(3x3, pad=1) + bias + BatchNorm2d(batch stats) + ReLU
# ----------------------------------------------------------------------------
def fused_conv3x3_bn_relu(xpad, w2d, bias, gamma, beta, *, out_dtype,
                          eps=1e-5):
    """xpad:  (N, H+2, W+2, Cin) bf16  -- input with the 3x3 zero halo applied
    w2d:   (9*Cin, Cout)      bf16  -- rows ordered (ky, kx, ci)
    bias/gamma/beta: (1, Cout) f32
    Returns (N*H*W, Cout) activations in `out_dtype` (rows in NHW order).
    """
    N, Hp, Wp, Cin = xpad.shape
    H, W = Hp - 2, Wp - 2
    K, Cout = w2d.shape
    assert K == 9 * Cin
    M = N * H * W

    cfg = _tpu_tuning()
    tco = _pick_cout_tile(Cout, cfg)
    inv_m = 1.0 / float(M)

    def kernel(x_ref, w_ref, b_ref, g_ref, be_ref, o_ref):
        xa = x_ref[...]                                  # (N, H+2, W+2, Cin) bf16
        # 3x3 conv as 9 accumulating MXU dots (static ref slices are free; no
        # im2col patches buffer, no per-step bf16 cast -- input is already bf16).
        acc = jnp.zeros((M, tco), jnp.float32)
        t = 0
        for dy in range(3):
            for dx in range(3):
                tap = xa[:, dy:dy + H, dx:dx + W, :].reshape(M, Cin)
                acc = acc + jnp.dot(tap, w_ref[t * Cin:(t + 1) * Cin, :],
                                    preferred_element_type=jnp.float32)
                t += 1
        acc = acc + b_ref[...]                           # conv bias
        # BatchNorm training-mode batch stats over all N*H*W rows (resident in
        # this tile); two-pass variance avoids E[x^2]-E[x]^2 cancellation.
        mean = jnp.sum(acc, axis=0, keepdims=True) * inv_m
        centered = acc - mean
        var = jnp.sum(centered * centered, axis=0, keepdims=True) * inv_m
        scale = g_ref[...] * lax.rsqrt(var + eps)
        act = jnp.maximum(centered * scale + be_ref[...], 0.0)
        o_ref[...] = act.astype(o_ref.dtype)

    return pl.pallas_call(
        kernel,
        out_shape=jax.ShapeDtypeStruct((M, Cout), out_dtype),
        grid=(Cout // tco,),
        in_specs=[
            # full padded activation; constant index -> DMA'd once, stays resident
            pl.BlockSpec((N, Hp, Wp, Cin), lambda c: (0, 0, 0, 0)),
            # each weight tile streamed from HBM exactly once per conv
            pl.BlockSpec((K, tco), lambda c: (0, c)),
            pl.BlockSpec((1, tco), lambda c: (0, c)),
            pl.BlockSpec((1, tco), lambda c: (0, c)),
            pl.BlockSpec((1, tco), lambda c: (0, c)),
        ],
        out_specs=pl.BlockSpec((M, tco), lambda c: (0, c)),
        compiler_params=pltpu.CompilerParams(
            dimension_semantics=("parallel",),   # Cout tiles shard across TCs
            vmem_limit_bytes=cfg["vmem_limit"]),
    )(xpad, w2d, bias, gamma, beta)


# ----------------------------------------------------------------------------
# ConvBlock forward (NCHW in / NCHW out, like the PyTorch module)
# ----------------------------------------------------------------------------
def conv_block_apply(params, x_nchw):
    N, _, H, W = x_nchw.shape
    c1 = params["w1"].shape[1]
    c2 = params["w2"].shape[1]
    x = jnp.transpose(x_nchw, (0, 2, 3, 1)).astype(jnp.bfloat16)        # NHWC bf16
    xpad = jnp.pad(x, ((0, 0), (1, 1), (1, 1), (0, 0)))
    a1 = fused_conv3x3_bn_relu(xpad, params["w1"], params["b1"],
                               params["g1"], params["be1"],
                               out_dtype=jnp.bfloat16)                   # (M, c1)
    # TODO(synk): the halo pad between the two convs could be fused into the
    # first kernel's store (offset write into a pre-padded buffer).
    a1pad = jnp.pad(a1.reshape(N, H, W, c1), ((0, 0), (1, 1), (1, 1), (0, 0)))
    a2 = fused_conv3x3_bn_relu(a1pad, params["w2"], params["b2"],
                               params["g2"], params["be2"],
                               out_dtype=jnp.float32)                    # (M, c2)
    return jnp.transpose(a2.reshape(N, H, W, c2), (0, 3, 1, 2))


conv_block_forward = jax.jit(conv_block_apply)


# ----------------------------------------------------------------------------
# Parameters & pure-JAX reference
# ----------------------------------------------------------------------------
def init_conv_block_params(key, in_channels, out_channels):
    """Conv weights pre-laid-out as (9*Cin, Cout) bf16, rows ordered (ky,kx,ci);
    conv bias and BN affine params stay f32 (BN init: weight=1, bias=0)."""
    p = {}
    for i, (ci, co) in enumerate(
            [(in_channels, out_channels), (out_channels, out_channels)], start=1):
        key, k1, k2 = jax.random.split(key, 3)
        w = (jax.random.normal(k1, (3, 3, ci, co), jnp.float32)
             * (1.0 / jnp.sqrt(9.0 * ci)))
        p[f"w{i}"] = w.reshape(9 * ci, co).astype(jnp.bfloat16)
        p[f"b{i}"] = (jax.random.normal(k2, (co,), jnp.float32) * 0.01
                      ).reshape(1, co)
        p[f"g{i}"] = jnp.ones((1, co), jnp.float32)
        p[f"be{i}"] = jnp.zeros((1, co), jnp.float32)
    return p, key


def conv_block_reference(params, x_nchw, eps=1e-5):
    """Pure-JAX reference with the kernel's numerics (bf16 weights/activations,
    f32 accumulation, training-mode batch-stat BatchNorm)."""
    def one(x, w2d, b, g, be, out_dtype):
        ci, co = w2d.shape[0] // 9, w2d.shape[1]
        w = w2d.reshape(3, 3, ci, co)
        y = lax.conv_general_dilated(
            x, w, window_strides=(1, 1), padding="SAME",
            dimension_numbers=("NHWC", "HWIO", "NHWC"),
            preferred_element_type=jnp.float32)
        y = y + b.reshape(1, 1, 1, co)
        mean = jnp.mean(y, axis=(0, 1, 2), keepdims=True)
        var = jnp.mean((y - mean) ** 2, axis=(0, 1, 2), keepdims=True)
        y = (y - mean) * (g.reshape(1, 1, 1, co) * lax.rsqrt(var + eps)) \
            + be.reshape(1, 1, 1, co)
        return jnp.maximum(y, 0.0).astype(out_dtype)

    x = jnp.transpose(x_nchw, (0, 2, 3, 1)).astype(jnp.bfloat16)
    a1 = one(x, params["w1"], params["b1"], params["g1"], params["be1"],
             jnp.bfloat16)
    a2 = one(a1, params["w2"], params["b2"], params["g2"], params["be2"],
             jnp.float32)
    return jnp.transpose(a2, (0, 3, 1, 2))


# TODO(synk): BatchNorm running_mean/running_var buffer updates (a training
# side effect) are not modeled; only the training-mode forward math is.

if __name__ == "__main__":
    key = jax.random.PRNGKey(0)
    key, kx = jax.random.split(key)
    x = jax.random.normal(kx, (2, 4, 16, 16), jnp.float32)       # NCHW

    # ConvBlock(4, 64)
    p1, key = init_conv_block_params(key, 4, 64)
    out1 = jax.block_until_ready(conv_block_forward(p1, x))
    assert out1.shape == (2, 64, 16, 16)

    # ConvBlock(64, 256) stacked on top (exercises the multi-tile Cout grid)
    p2, key = init_conv_block_params(key, 64, 256)
    out2 = jax.block_until_ready(conv_block_forward(p2, out1))
    assert out2.shape == (2, 256, 16, 16)

    # Correctness vs. pure-JAX reference (same bf16/f32 mixed precision).
    ref1 = conv_block_reference(p1, x)
    ref2 = conv_block_reference(p2, ref1)
    assert jnp.allclose(out1, ref1, atol=1e-1, rtol=1e-1)
    assert jnp.allclose(out2, ref2, atol=1e-1, rtol=1e-1)

    print("KERNEL_OK")
</pallas_src>

<mosaic_0001>
module attributes {stable_mosaic.version = 11 : i64} {
  func.func @kernel(%arg0: i32, %arg1: memref<2x18x18x4xbf16, #tpu.memory_space<vmem>>, %arg2: memref<36x64xbf16, #tpu.memory_space<vmem>>, %arg3: memref<1x64xf32, #tpu.memory_space<vmem>>, %arg4: memref<1x64xf32, #tpu.memory_space<vmem>>, %arg5: memref<1x64xf32, #tpu.memory_space<vmem>>, %arg6: memref<512x64xbf16, #tpu.memory_space<vmem>>) attributes {dimension_semantics = [#tpu.dimension_semantics<parallel>], iteration_bounds = array<i64: 1>, scalar_prefetch = 0 : i64, scratch_operands = 0 : i64, tpu.core_type = #tpu.core_type<tc>, window_params = [{pipeline_mode = #tpu.pipeline_mode<synchronous>, transform_indices = @transform_0, window_bounds = array<i64: 2, 18, 18, 4>}, {transform_indices = @transform_1, window_bounds = array<i64: 36, 64>}, {transform_indices = @transform_2, window_bounds = array<i64: 1, 64>}, {transform_indices = @transform_3, window_bounds = array<i64: 1, 64>}, {transform_indices = @transform_4, window_bounds = array<i64: 1, 64>}, {transform_indices = @transform_5, window_bounds = array<i64: 512, 64>}]} {
    %c0 = arith.constant 0 : index
    %c0_0 = arith.constant 0 : index
    %c0_1 = arith.constant 0 : index
    %c0_2 = arith.constant 0 : index
    %0 = vector.load %arg1[%c0, %c0_0, %c0_1, %c0_2] : memref<2x18x18x4xbf16, #tpu.memory_space<vmem>>, vector<2x18x18x4xbf16>
    %cst = arith.constant 0.000000e+00 : f32
    %1 = vector.broadcast %cst : f32 to vector<512x64xf32>
    %2 = vector.extract_strided_slice %0 {offsets = [0, 0, 0, 0], sizes = [2, 16, 16, 4], strides = [1, 1, 1, 1]} : vector<2x18x18x4xbf16> to vector<2x16x16x4xbf16>
    %3 = vector.shape_cast %2 : vector<2x16x16x4xbf16> to vector<512x4xbf16>
    %c0_3 = arith.constant 0 : index
    %c0_4 = arith.constant 0 : index
    %4 = vector.load %arg2[%c0_3, %c0_4] : memref<36x64xbf16, #tpu.memory_space<vmem>>, vector<4x64xbf16>
    %cst_5 = arith.constant dense<0.000000e+00> : vector<512x64xf32>
    %5 = tpu.matmul %3, %4, %cst_5 {dimension_numbers = #tpu.dot_dimension_numbers<[1], [0], [0], [1], [0, 0, 1, 1], [], []>} : vector<512x4xbf16>, vector<4x64xbf16>, vector<512x64xf32> -> vector<512x64xf32>
    %6 = arith.addf %1, %5 : vector<512x64xf32>
    %7 = vector.extract_strided_slice %0 {offsets = [0, 0, 1, 0], sizes = [2, 16, 16, 4], strides = [1, 1, 1, 1]} : vector<2x18x18x4xbf16> to vector<2x16x16x4xbf16>
    %8 = vector.shape_cast %7 : vector<2x16x16x4xbf16> to vector<512x4xbf16>
    %c4 = arith.constant 4 : index
    %c0_6 = arith.constant 0 : index
    %9 = vector.load %arg2[%c4, %c0_6] : memref<36x64xbf16, #tpu.memory_space<vmem>>, vector<4x64xbf16>
    %cst_7 = arith.constant dense<0.000000e+00> : vector<512x64xf32>
    %10 = tpu.matmul %8, %9, %cst_7 {dimension_numbers = #tpu.dot_dimension_numbers<[1], [0], [0], [1], [0, 0, 1, 1], [], []>} : vector<512x4xbf16>, vector<4x64xbf16>, vector<512x64xf32> -> vector<512x64xf32>
    %11 = arith.addf %6, %10 : vector<512x64xf32>
    %12 = vector.extract_strided_slice %0 {offsets = [0, 0, 2, 0], sizes = [2, 16, 16, 4], strides = [1, 1, 1, 1]} : vector<2x18x18x4xbf16> to vector<2x16x16x4xbf16>
    %13 = vector.shape_cast %12 : vector<2x16x16x4xbf16> to vector<512x4xbf16>
    %c8 = arith.constant 8 : index
    %c0_8 = arith.constant 0 : index
    %14 = vector.load %arg2[%c8, %c0_8] : memref<36x64xbf16, #tpu.memory_space<vmem>>, vector<4x64xbf16>
    %cst_9 = arith.constant dense<0.000000e+00> : vector<512x64xf32>
    %15 = tpu.matmul %13, %14, %cst_9 {dimension_numbers = #tpu.dot_dimension_numbers<[1], [0], [0], [1], [0, 0, 1, 1], [], []>} : vector<512x4xbf16>, vector<4x64xbf16>, vector<512x64xf32> -> vector<512x64xf32>
    %16 = arith.addf %11, %15 : vector<512x64xf32>
    %17 = vector.extract_strided_slice %0 {offsets = [0, 1, 0, 0], sizes = [2, 16, 16, 4], strides = [1, 1, 1, 1]} : vector<2x18x18x4xbf16> to vector<2x16x16x4xbf16>
    %18 = vector.shape_cast %17 : vector<2x16x16x4xbf16> to vector<512x4xbf16>
    %c12 = arith.constant 12 : index
    %c0_10 = arith.constant 0 : index
    %19 = vector.load %arg2[%c12, %c0_10] : memref<36x64xbf16, #tpu.memory_space<vmem>>, vector<4x64xbf16>
    %cst_11 = arith.constant dense<0.000000e+00> : vector<512x64xf32>
    %20 = tpu.matmul %18, %19, %cst_11 {dimension_numbers = #tpu.dot_dimension_numbers<[1], [0], [0], [1], [0, 0, 1, 1], [], []>} : vector<512x4xbf16>, vector<4x64xbf16>, vector<512x64xf32> -> vector<512x64xf32>
    %21 = arith.addf %16, %20 : vector<512x64xf32>
    %22 = vector.extract_strided_slice %0 {offsets = [0, 1, 1, 0], sizes = [2, 16, 16, 4], strides = [1, 1, 1, 1]} : vector<2x18x18x4xbf16> to vector<2x16x16x4xbf16>
    %23 = vector.shape_cast %22 : vector<2x16x16x4xbf16> to vector<512x4xbf16>
    %c16 = arith.constant 16 : index
    %c0_12 = arith.constant 0 : index
    %24 = vector.load %arg2[%c16, %c0_12] : memref<36x64xbf16, #tpu.memory_space<vmem>>, vector<4x64xbf16>
    %cst_13 = arith.constant dense<0.000000e+00> : vector<512x64xf32>
    %25 = tpu.matmul %23, %24, %cst_13 {dimension_numbers = #tpu.dot_dimension_numbers<[1], [0], [0], [1], [0, 0, 1, 1], [], []>} : vector<512x4xbf16>, vector<4x64xbf16>, vector<512x64xf32> -> vector<512x64xf32>
    %26 = arith.addf %21, %25 : vector<512x64xf32>
    %27 = vector.extract_strided_slice %0 {offsets = [0, 1, 2, 0], sizes = [2, 16, 16, 4], strides = [1, 1, 1, 1]} : vector<2x18x18x4xbf16> to vector<2x16x16x4xbf16>
    %28 = vector.shape_cast %27 : vector<2x16x16x4xbf16> to vector<512x4xbf16>
    %c20 = arith.constant 20 : index
    %c0_14 = arith.constant 0 : index
    %29 = vector.load %arg2[%c20, %c0_14] : memref<36x64xbf16, #tpu.memory_space<vmem>>, vector<4x64xbf16>
    %cst_15 = arith.constant dense<0.000000e+00> : vector<512x64xf32>
    %30 = tpu.matmul %28, %29, %cst_15 {dimension_numbers = #tpu.dot_dimension_numbers<[1], [0], [0], [1], [0, 0, 1, 1], [], []>} : vector<512x4xbf16>, vector<4x64xbf16>, vector<512x64xf32> -> vector<512x64xf32>
    %31 = arith.addf %26, %30 : vector<512x64xf32>
    %32 = vector.extract_strided_slice %0 {offsets = [0, 2, 0, 0], sizes = [2, 16, 16, 4], strides = [1, 1, 1, 1]} : vector<2x18x18x4xbf16> to vector<2x16x16x4xbf16>
    %33 = vector.shape_cast %32 : vector<2x16x16x4xbf16> to vector<512x4xbf16>
    %c24 = arith.constant 24 : index
    %c0_16 = arith.constant 0 : index
    %34 = vector.load %arg2[%c24, %c0_16] : memref<36x64xbf16, #tpu.memory_space<vmem>>, vector<4x64xbf16>
    %cst_17 = arith.constant dense<0.000000e+00> : vector<512x64xf32>
    %35 = tpu.matmul %33, %34, %cst_17 {dimension_numbers = #tpu.dot_dimension_numbers<[1], [0], [0], [1], [0, 0, 1, 1], [], []>} : vector<512x4xbf16>, vector<4x64xbf16>, vector<512x64xf32> -> vector<512x64xf32>
    %36 = arith.addf %31, %35 : vector<512x64xf32>
    %37 = vector.extract_strided_slice %0 {offsets = [0, 2, 1, 0], sizes = [2, 16, 16, 4], strides = [1, 1, 1, 1]} : vector<2x18x18x4xbf16> to vector<2x16x16x4xbf16>
    %38 = vector.shape_cast %37 : vector<2x16x16x4xbf16> to vector<512x4xbf16>
    %c28 = arith.constant 28 : index
    %c0_18 = arith.constant 0 : index
    %39 = vector.load %arg2[%c28, %c0_18] : memref<36x64xbf16, #tpu.memory_space<vmem>>, vector<4x64xbf16>
    %cst_19 = arith.constant dense<0.000000e+00> : vector<512x64xf32>
    %40 = tpu.matmul %38, %39, %cst_19 {dimension_numbers = #tpu.dot_dimension_numbers<[1], [0], [0], [1], [0, 0, 1, 1], [], []>} : vector<512x4xbf16>, vector<4x64xbf16>, vector<512x64xf32> -> vector<512x64xf32>
    %41 = arith.addf %36, %40 : vector<512x64xf32>
    %42 = vector.extract_strided_slice %0 {offsets = [0, 2, 2, 0], sizes = [2, 16, 16, 4], strides = [1, 1, 1, 1]} : vector<2x18x18x4xbf16> to vector<2x16x16x4xbf16>
    %43 = vector.shape_cast %42 : vector<2x16x16x4xbf16> to vector<512x4xbf16>
    %c32 = arith.constant 32 : index
    %c0_20 = arith.constant 0 : index
    %44 = vector.load %arg2[%c32, %c0_20] : memref<36x64xbf16, #tpu.memory_space<vmem>>, vector<4x64xbf16>
    %cst_21 = arith.constant dense<0.000000e+00> : vector<512x64xf32>
    %45 = tpu.matmul %43, %44, %cst_21 {dimension_numbers = #tpu.dot_dimension_numbers<[1], [0], [0], [1], [0, 0, 1, 1], [], []>} : vector<512x4xbf16>, vector<4x64xbf16>, vector<512x64xf32> -> vector<512x64xf32>
    %46 = arith.addf %41, %45 : vector<512x64xf32>
    %c0_22 = arith.constant 0 : index
    %c0_23 = arith.constant 0 : index
    %47 = vector.load %arg3[%c0_22, %c0_23] : memref<1x64xf32, #tpu.memory_space<vmem>>, vector<1x64xf32>
    %48 = vector.broadcast %47 : vector<1x64xf32> to vector<512x64xf32>
    %49 = arith.addf %46, %48 : vector<512x64xf32>
    %cst_24 = arith.constant dense<0.000000e+00> : vector<64xf32>
    %50 = vector.multi_reduction <add>, %49, %cst_24 [0] : vector<512x64xf32> to vector<64xf32>
    %51 = vector.shape_cast %50 : vector<64xf32> to vector<1x64xf32>
    %cst_25 = arith.constant 0.001953125 : f32
    %52 = vector.broadcast %cst_25 : f32 to vector<1x64xf32>
    %53 = arith.mulf %51, %52 : vector<1x64xf32>
    %54 = vector.broadcast %53 : vector<1x64xf32> to vector<512x64xf32>
    %55 = arith.subf %49, %54 : vector<512x64xf32>
    %56 = arith.mulf %55, %55 : vector<512x64xf32>
    %cst_26 = arith.constant dense<0.000000e+00> : vector<64xf32>
    %57 = vector.multi_reduction <add>, %56, %cst_26 [0] : vector<512x64xf32> to vector<64xf32>
    %58 = vector.shape_cast %57 : vector<64xf32> to vector<1x64xf32>
    %cst_27 = arith.constant 0.001953125 : f32
    %59 = vector.broadcast %cst_27 : f32 to vector<1x64xf32>
    %60 = arith.mulf %58, %59 : vector<1x64xf32>
    %c0_28 = arith.constant 0 : index
    %c0_29 = arith.constant 0 : index
    %61 = vector.load %arg4[%c0_28, %c0_29] : memref<1x64xf32, #tpu.memory_space<vmem>>, vector<1x64xf32>
    %cst_30 = arith.constant 9.99999974E-6 : f32
    %62 = vector.broadcast %cst_30 : f32 to vector<1x64xf32>
    %63 = arith.addf %60, %62 : vector<1x64xf32>
    %64 = math.rsqrt %63 : vector<1x64xf32>
    %65 = arith.mulf %61, %64 : vector<1x64xf32>
    %66 = vector.broadcast %65 : vector<1x64xf32> to vector<512x64xf32>
    %67 = arith.mulf %55, %66 : vector<512x64xf32>
    %c0_31 = arith.constant 0 : index
    %c0_32 = arith.constant 0 : index
    %68 = vector.load %arg5[%c0_31, %c0_32] : memref<1x64xf32, #tpu.memory_space<vmem>>, vector<1x64xf32>
    %69 = vector.broadcast %68 : vector<1x64xf32> to vector<512x64xf32>
    %70 = arith.addf %67, %69 : vector<512x64xf32>
    %cst_33 = arith.constant 0.000000e+00 : f32
    %71 = vector.broadcast %cst_33 : f32 to vector<512x64xf32>
    %72 = arith.maximumf %70, %71 : vector<512x64xf32>
    %73 = arith.truncf %72 : vector<512x64xf32> to vector<512x64xbf16>
    %c0_34 = arith.constant 0 : index
    %c0_35 = arith.constant 0 : index
    %74 = vector.load %arg6[%c0_34, %c0_35] : memref<512x64xbf16, #tpu.memory_space<vmem>>, vector<512x64xbf16>
    tpu.vector_store %arg6[%c0_34, %c0_35], %73 {strides = array<i32>} : memref<512x64xbf16, #tpu.memory_space<vmem>>, vector<512x64xbf16>,
    return
  }
  func.func @transform_0(%arg0: i32) -> (i32, i32, i32, i32) {
    %c0_i32 = arith.constant 0 : i32
    %c0_i32_0 = arith.constant 0 : i32
    %c0_i32_1 = arith.constant 0 : i32
    %c0_i32_2 = arith.constant 0 : i32
    %c0_i32_3 = arith.constant 0 : i32
    return %c0_i32, %c0_i32_0, %c0_i32_1, %c0_i32_2 : i32, i32, i32, i32
  }
  func.func @transform_1(%arg0: i32) -> (i32, i32) {
    %c0_i32 = arith.constant 0 : i32
    %c0_i32_0 = arith.constant 0 : i32
    return %c0_i32, %arg0 : i32, i32
  }
  func.func @transform_2(%arg0: i32) -> (i32, i32) {
    %c0_i32 = arith.constant 0 : i32
    %c0_i32_0 = arith.constant 0 : i32
    return %c0_i32, %arg0 : i32, i32
  }
  func.func @transform_3(%arg0: i32) -> (i32, i32) {
    %c0_i32 = arith.constant 0 : i32
    %c0_i32_0 = arith.constant 0 : i32
    return %c0_i32, %arg0 : i32, i32
  }
  func.func @transform_4(%arg0: i32) -> (i32, i32) {
    %c0_i32 = arith.constant 0 : i32
    %c0_i32_0 = arith.constant 0 : i32
    return %c0_i32, %arg0 : i32, i32
  }
  func.func @transform_5(%arg0: i32) -> (i32, i32) {
    %c0_i32 = arith.constant 0 : i32
    %c0_i32_0 = arith.constant 0 : i32
    return %c0_i32, %arg0 : i32, i32
  }
}

module attributes {stable_mosaic.version = 11 : i64} {
  func.func @kernel(%arg0: i32, %arg1: memref<2x18x18x64xbf16, #tpu.memory_space<vmem>>, %arg2: memref<576x64xbf16, #tpu.memory_space<vmem>>, %arg3: memref<1x64xf32, #tpu.memory_space<vmem>>, %arg4: memref<1x64xf32, #tpu.memory_space<vmem>>, %arg5: memref<1x64xf32, #tpu.memory_space<vmem>>, %arg6: memref<512x64xf32, #tpu.memory_space<vmem>>) attributes {dimension_semantics = [#tpu.dimension_semantics<parallel>], iteration_bounds = array<i64: 1>, scalar_prefetch = 0 : i64, scratch_operands = 0 : i64, tpu.core_type = #tpu.core_type<tc>, window_params = [{pipeline_mode = #tpu.pipeline_mode<synchronous>, transform_indices = @transform_0, window_bounds = array<i64: 2, 18, 18, 64>}, {transform_indices = @transform_1, window_bounds = array<i64: 576, 64>}, {transform_indices = @transform_2, window_bounds = array<i64: 1, 64>}, {transform_indices = @transform_3, window_bounds = array<i64: 1, 64>}, {transform_indices = @transform_4, window_bounds = array<i64: 1, 64>}, {transform_indices = @transform_5, window_bounds = array<i64: 512, 64>}]} {
    %c0 = arith.constant 0 : index
    %c0_0 = arith.constant 0 : index
    %c0_1 = arith.constant 0 : index
    %c0_2 = arith.constant 0 : index
    %0 = vector.load %arg1[%c0, %c0_0, %c0_1, %c0_2] : memref<2x18x18x64xbf16, #tpu.memory_space<vmem>>, vector<2x18x18x64xbf16>
    %cst = arith.constant 0.000000e+00 : f32
    %1 = vector.broadcast %cst : f32 to vector<512x64xf32>
    %2 = vector.extract_strided_slice %0 {offsets = [0, 0, 0, 0], sizes = [2, 16, 16, 64], strides = [1, 1, 1, 1]} : vector<2x18x18x64xbf16> to vector<2x16x16x64xbf16>
    %3 = vector.shape_cast %2 : vector<2x16x16x64xbf16> to vector<512x64xbf16>
    %c0_3 = arith.constant 0 : index
    %c0_4 = arith.constant 0 : index
    %4 = vector.load %arg2[%c0_3, %c0_4] : memref<576x64xbf16, #tpu.memory_space<vmem>>, vector<64x64xbf16>
    %cst_5 = arith.constant dense<0.000000e+00> : vector<512x64xf32>
    %5 = tpu.matmul %3, %4, %cst_5 {dimension_numbers = #tpu.dot_dimension_numbers<[1], [0], [0], [1], [0, 0, 1, 1], [], []>} : vector<512x64xbf16>, vector<64x64xbf16>, vector<512x64xf32> -> vector<512x64xf32>
    %6 = arith.addf %1, %5 : vector<512x64xf32>
    %7 = vector.extract_strided_slice %0 {offsets = [0, 0, 1, 0], sizes = [2, 16, 16, 64], strides = [1, 1, 1, 1]} : vector<2x18x18x64xbf16> to vector<2x16x16x64xbf16>
    %8 = vector.shape_cast %7 : vector<2x16x16x64xbf16> to vector<512x64xbf16>
    %c64 = arith.constant 64 : index
    %c0_6 = arith.constant 0 : index
    %9 = vector.load %arg2[%c64, %c0_6] : memref<576x64xbf16, #tpu.memory_space<vmem>>, vector<64x64xbf16>
    %cst_7 = arith.constant dense<0.000000e+00> : vector<512x64xf32>
    %10 = tpu.matmul %8, %9, %cst_7 {dimension_numbers = #tpu.dot_dimension_numbers<[1], [0], [0], [1], [0, 0, 1, 1], [], []>} : vector<512x64xbf16>, vector<64x64xbf16>, vector<512x64xf32> -> vector<512x64xf32>
    %11 = arith.addf %6, %10 : vector<512x64xf32>
    %12 = vector.extract_strided_slice %0 {offsets = [0, 0, 2, 0], sizes = [2, 16, 16, 64], strides = [1, 1, 1, 1]} : vector<2x18x18x64xbf16> to vector<2x16x16x64xbf16>
    %13 = vector.shape_cast %12 : vector<2x16x16x64xbf16> to vector<512x64xbf16>
    %c128 = arith.constant 128 : index
    %c0_8 = arith.constant 0 : index
    %14 = vector.load %arg2[%c128, %c0_8] : memref<576x64xbf16, #tpu.memory_space<vmem>>, vector<64x64xbf16>
    %cst_9 = arith.constant dense<0.000000e+00> : vector<512x64xf32>
    %15 = tpu.matmul %13, %14, %cst_9 {dimension_numbers = #tpu.dot_dimension_numbers<[1], [0], [0], [1], [0, 0, 1, 1], [], []>} : vector<512x64xbf16>, vector<64x64xbf16>, vector<512x64xf32> -> vector<512x64xf32>
    %16 = arith.addf %11, %15 : vector<512x64xf32>
    %17 = vector.extract_strided_slice %0 {offsets = [0, 1, 0, 0], sizes = [2, 16, 16, 64], strides = [1, 1, 1, 1]} : vector<2x18x18x64xbf16> to vector<2x16x16x64xbf16>
    %18 = vector.shape_cast %17 : vector<2x16x16x64xbf16> to vector<512x64xbf16>
    %c192 = arith.constant 192 : index
    %c0_10 = arith.constant 0 : index
    %19 = vector.load %arg2[%c192, %c0_10] : memref<576x64xbf16, #tpu.memory_space<vmem>>, vector<64x64xbf16>
    %cst_11 = arith.constant dense<0.000000e+00> : vector<512x64xf32>
    %20 = tpu.matmul %18, %19, %cst_11 {dimension_numbers = #tpu.dot_dimension_numbers<[1], [0], [0], [1], [0, 0, 1, 1], [], []>} : vector<512x64xbf16>, vector<64x64xbf16>, vector<512x64xf32> -> vector<512x64xf32>
    %21 = arith.addf %16, %20 : vector<512x64xf32>
    %22 = vector.extract_strided_slice %0 {offsets = [0, 1, 1, 0], sizes = [2, 16, 16, 64], strides = [1, 1, 1, 1]} : vector<2x18x18x64xbf16> to vector<2x16x16x64xbf16>
    %23 = vector.shape_cast %22 : vector<2x16x16x64xbf16> to vector<512x64xbf16>
    %c256 = arith.constant 256 : index
    %c0_12 = arith.constant 0 : index
    %24 = vector.load %arg2[%c256, %c0_12] : memref<576x64xbf16, #tpu.memory_space<vmem>>, vector<64x64xbf16>
    %cst_13 = arith.constant dense<0.000000e+00> : vector<512x64xf32>
    %25 = tpu.matmul %23, %24, %cst_13 {dimension_numbers = #tpu.dot_dimension_numbers<[1], [0], [0], [1], [0, 0, 1, 1], [], []>} : vector<512x64xbf16>, vector<64x64xbf16>, vector<512x64xf32> -> vector<512x64xf32>
    %26 = arith.addf %21, %25 : vector<512x64xf32>
    %27 = vector.extract_strided_slice %0 {offsets = [0, 1, 2, 0], sizes = [2, 16, 16, 64], strides = [1, 1, 1, 1]} : vector<2x18x18x64xbf16> to vector<2x16x16x64xbf16>
    %28 = vector.shape_cast %27 : vector<2x16x16x64xbf16> to vector<512x64xbf16>
    %c320 = arith.constant 320 : index
    %c0_14 = arith.constant 0 : index
    %29 = vector.load %arg2[%c320, %c0_14] : memref<576x64xbf16, #tpu.memory_space<vmem>>, vector<64x64xbf16>
    %cst_15 = arith.constant dense<0.000000e+00> : vector<512x64xf32>
    %30 = tpu.matmul %28, %29, %cst_15 {dimension_numbers = #tpu.dot_dimension_numbers<[1], [0], [0], [1], [0, 0, 1, 1], [], []>} : vector<512x64xbf16>, vector<64x64xbf16>, vector<512x64xf32> -> vector<512x64xf32>
    %31 = arith.addf %26, %30 : vector<512x64xf32>
    %32 = vector.extract_strided_slice %0 {offsets = [0, 2, 0, 0], sizes = [2, 16, 16, 64], strides = [1, 1, 1, 1]} : vector<2x18x18x64xbf16> to vector<2x16x16x64xbf16>
    %33 = vector.shape_cast %32 : vector<2x16x16x64xbf16> to vector<512x64xbf16>
    %c384 = arith.constant 384 : index
    %c0_16 = arith.constant 0 : index
    %34 = vector.load %arg2[%c384, %c0_16] : memref<576x64xbf16, #tpu.memory_space<vmem>>, vector<64x64xbf16>
    %cst_17 = arith.constant dense<0.000000e+00> : vector<512x64xf32>
    %35 = tpu.matmul %33, %34, %cst_17 {dimension_numbers = #tpu.dot_dimension_numbers<[1], [0], [0], [1], [0, 0, 1, 1], [], []>} : vector<512x64xbf16>, vector<64x64xbf16>, vector<512x64xf32> -> vector<512x64xf32>
    %36 = arith.addf %31, %35 : vector<512x64xf32>
    %37 = vector.extract_strided_slice %0 {offsets = [0, 2, 1, 0], sizes = [2, 16, 16, 64], strides = [1, 1, 1, 1]} : vector<2x18x18x64xbf16> to vector<2x16x16x64xbf16>
    %38 = vector.shape_cast %37 : vector<2x16x16x64xbf16> to vector<512x64xbf16>
    %c448 = arith.constant 448 : index
    %c0_18 = arith.constant 0 : index
    %39 = vector.load %arg2[%c448, %c0_18] : memref<576x64xbf16, #tpu.memory_space<vmem>>, vector<64x64xbf16>
    %cst_19 = arith.constant dense<0.000000e+00> : vector<512x64xf32>
    %40 = tpu.matmul %38, %39, %cst_19 {dimension_numbers = #tpu.dot_dimension_numbers<[1], [0], [0], [1], [0, 0, 1, 1], [], []>} : vector<512x64xbf16>, vector<64x64xbf16>, vector<512x64xf32> -> vector<512x64xf32>
    %41 = arith.addf %36, %40 : vector<512x64xf32>
    %42 = vector.extract_strided_slice %0 {offsets = [0, 2, 2, 0], sizes = [2, 16, 16, 64], strides = [1, 1, 1, 1]} : vector<2x18x18x64xbf16> to vector<2x16x16x64xbf16>
    %43 = vector.shape_cast %42 : vector<2x16x16x64xbf16> to vector<512x64xbf16>
    %c512 = arith.constant 512 : index
    %c0_20 = arith.constant 0 : index
    %44 = vector.load %arg2[%c512, %c0_20] : memref<576x64xbf16, #tpu.memory_space<vmem>>, vector<64x64xbf16>
    %cst_21 = arith.constant dense<0.000000e+00> : vector<512x64xf32>
    %45 = tpu.matmul %43, %44, %cst_21 {dimension_numbers = #tpu.dot_dimension_numbers<[1], [0], [0], [1], [0, 0, 1, 1], [], []>} : vector<512x64xbf16>, vector<64x64xbf16>, vector<512x64xf32> -> vector<512x64xf32>
    %46 = arith.addf %41, %45 : vector<512x64xf32>
    %c0_22 = arith.constant 0 : index
    %c0_23 = arith.constant 0 : index
    %47 = vector.load %arg3[%c0_22, %c0_23] : memref<1x64xf32, #tpu.memory_space<vmem>>, vector<1x64xf32>
    %48 = vector.broadcast %47 : vector<1x64xf32> to vector<512x64xf32>
    %49 = arith.addf %46, %48 : vector<512x64xf32>
    %cst_24 = arith.constant dense<0.000000e+00> : vector<64xf32>
    %50 = vector.multi_reduction <add>, %49, %cst_24 [0] : vector<512x64xf32> to vector<64xf32>
    %51 = vector.shape_cast %50 : vector<64xf32> to vector<1x64xf32>
    %cst_25 = arith.constant 0.001953125 : f32
    %52 = vector.broadcast %cst_25 : f32 to vector<1x64xf32>
    %53 = arith.mulf %51, %52 : vector<1x64xf32>
    %54 = vector.broadcast %53 : vector<1x64xf32> to vector<512x64xf32>
    %55 = arith.subf %49, %54 : vector<512x64xf32>
    %56 = arith.mulf %55, %55 : vector<512x64xf32>
    %cst_26 = arith.constant dense<0.000000e+00> : vector<64xf32>
    %57 = vector.multi_reduction <add>, %56, %cst_26 [0] : vector<512x64xf32> to vector<64xf32>
    %58 = vector.shape_cast %57 : vector<64xf32> to vector<1x64xf32>
    %cst_27 = arith.constant 0.001953125 : f32
    %59 = vector.broadcast %cst_27 : f32 to vector<1x64xf32>
    %60 = arith.mulf %58, %59 : vector<1x64xf32>
    %c0_28 = arith.constant 0 : index
    %c0_29 = arith.constant 0 : index
    %61 = vector.load %arg4[%c0_28, %c0_29] : memref<1x64xf32, #tpu.memory_space<vmem>>, vector<1x64xf32>
    %cst_30 = arith.constant 9.99999974E-6 : f32
    %62 = vector.broadcast %cst_30 : f32 to vector<1x64xf32>
    %63 = arith.addf %60, %62 : vector<1x64xf32>
    %64 = math.rsqrt %63 : vector<1x64xf32>
    %65 = arith.mulf %61, %64 : vector<1x64xf32>
    %66 = vector.broadcast %65 : vector<1x64xf32> to vector<512x64xf32>
    %67 = arith.mulf %55, %66 : vector<512x64xf32>
    %c0_31 = arith.constant 0 : index
    %c0_32 = arith.constant 0 : index
    %68 = vector.load %arg5[%c0_31, %c0_32] : memref<1x64xf32, #tpu.memory_space<vmem>>, vector<1x64xf32>
    %69 = vector.broadcast %68 : vector<1x64xf32> to vector<512x64xf32>
    %70 = arith.addf %67, %69 : vector<512x64xf32>
    %cst_33 = arith.constant 0.000000e+00 : f32
    %71 = vector.broadcast %cst_33 : f32 to vector<512x64xf32>
    %72 = arith.maximumf %70, %71 : vector<512x64xf32>
    %c0_34 = arith.constant 0 : index
    %c0_35 = arith.constant 0 : index
    %73 = vector.load %arg6[%c0_34, %c0_35] : memref<512x64xf32, #tpu.memory_space<vmem>>, vector<512x64xf32>
    tpu.vector_store %arg6[%c0_34, %c0_35], %72 {strides = array<i32>} : memref<512x64xf32, #tpu.memory_space<vmem>>, vector<512x64xf32>,
    return
  }
  func.func @transform_0(%arg0: i32) -> (i32, i32, i32, i32) {
    %c0_i32 = arith.constant 0 : i32
    %c0_i32_0 = arith.constant 0 : i32
    %c0_i32_1 = arith.constant 0 : i32
    %c0_i32_2 = arith.constant 0 : i32
    %c0_i32_3 = arith.constant 0 : i32
    return %c0_i32, %c0_i32_0, %c0_i32_1, %c0_i32_2 : i32, i32, i32, i32
  }
  func.func @transform_1(%arg0: i32) -> (i32, i32) {
    %c0_i32 = arith.constant 0 : i32
    %c0_i32_0 = arith.constant 0 : i32
    return %c0_i32, %arg0 : i32, i32
  }
  func.func @transform_2(%arg0: i32) -> (i32, i32) {
    %c0_i32 = arith.constant 0 : i32
    %c0_i32_0 = arith.constant 0 : i32
    return %c0_i32, %arg0 : i32, i32
  }
  func.func @transform_3(%arg0: i32) -> (i32, i32) {
    %c0_i32 = arith.constant 0 : i32
    %c0_i32_0 = arith.constant 0 : i32
    return %c0_i32, %arg0 : i32, i32
  }
  func.func @transform_4(%arg0: i32) -> (i32, i32) {
    %c0_i32 = arith.constant 0 : i32
    %c0_i32_0 = arith.constant 0 : i32
    return %c0_i32, %arg0 : i32, i32
  }
  func.func @transform_5(%arg0: i32) -> (i32, i32) {
    %c0_i32 = arith.constant 0 : i32
    %c0_i32_0 = arith.constant 0 : i32
    return %c0_i32, %arg0 : i32, i32
  }
}

</mosaic_0001>

<llo_original>
// kernel: conv_block_apply.3
$region0: #{conv_block_apply.3}
  #allocation0 [shape = 'u32[]', space=smem, size = 0x4, offset = 0x4, fixed_abs, tag = 'smem constant byte address 0x4 - core index']
  #allocation1 [shape = 'u32[72,128]{1,0:T(1,128)}', space=vmem, size = 0x9000, scoped, tag = 'internal scratch']
  %s0 = inlined_call_operand.vmem [shape: bf16[2,18,18,64], index: 0, kind: input, shape index: {}]
  %s1 = inlined_call_operand.vmem [shape: bf16[576,64], index: 1, kind: input, shape index: {}]
  %s2 = inlined_call_operand.vmem [shape: f32[1,64], index: 2, kind: input, shape index: {}]
  %s3 = inlined_call_operand.vmem [shape: f32[1,64], index: 3, kind: input, shape index: {}]
  %s4 = inlined_call_operand.vmem [shape: f32[1,64], index: 4, kind: input, shape index: {}]
  %s5 = inlined_call_operand.hbm [shape: f32[512,64], index: 5, kind: output, shape index: {}]
  %s6 = sld [smem:[#allocation0]]
  $region30: #{conv_block_apply.3} parent=0
    _
  %s8 = ssub.s32 1, %s6
  %s9 = scalar_select 0, %s8, %s6
  $region1: #{conv_block_apply.3} parent=0
    #allocation2 [shape = 'u8[262144]{0}', space=vmem, size = 0x40000, scoped, tag = 'output window, operand 0, single buffered']
    #allocation3 [shape = 's32[1]{0}', space=sflag, size = 0x4, scoped, tag = 'scoped memory for conv_block_apply.3']
    %10 = vsyncpa [#allocation3], 0
    // Predicated region
    $region2: #{conv_block_apply.3} parent=1 // pred_check
      _
    $region3: #{conv_block_apply.3} parent=1 // pred_check_branch
      %12 = sbr.rel (0) target = $region5
    $region4: #{conv_block_apply.3} parent=1 // pred_region
      _
    $region5: #{conv_block_apply.3} parent=1 // pred_fallthru
      _
    // Predicated region
    $region6: #{conv_block_apply.3} parent=1 // pred_check
      _
    $region7: #{conv_block_apply.3} parent=1 // pred_check_branch
      %14 = sbr.rel (0) target = $region9
    $region8: #{conv_block_apply.3} parent=1 // pred_region
      _
    $region9: #{conv_block_apply.3} parent=1 // pred_fallthru
      _
    // Predicated region
    $region10: #{conv_block_apply.3} parent=1 // pred_check
      _
    $region11: #{conv_block_apply.3} parent=1 // pred_check_branch
      %16 = sbr.rel (0) target = $region13
    $region12: #{conv_block_apply.3} parent=1 // pred_region
      _
    $region13: #{conv_block_apply.3} parent=1 // pred_fallthru
      _
    // Predicated region
    $region14: #{conv_block_apply.3} parent=1 // pred_check
      _
    $region15: #{conv_block_apply.3} parent=1 // pred_check_branch
      %18 = sbr.rel (0) target = $region17
    $region16: #{conv_block_apply.3} parent=1 // pred_region
      _
    $region17: #{conv_block_apply.3} parent=1 // pred_fallthru
      _
    // Predicated region
    $region18: #{conv_block_apply.3} parent=1 // pred_check
      _
    $region19: #{conv_block_apply.3} parent=1 // pred_check_branch
      %20 = sbr.rel (0) target = $region21
    $region20: #{conv_block_apply.3} parent=1 // pred_region
      _
    $region21: #{conv_block_apply.3} parent=1 // pred_fallthru
      _
    %v22 = vld [vmem:[%s0] sm:$0xf]
    %v23 = vld [vmem:[%s0 + $0x4] sm:$0xf]
    %v24 = vld [vmem:[%s0 + $0x8] sm:$0x1]
    %v25 = vld [vmem:[%s0 + $0xc] sm:$0xf]
    %v26 = vld [vmem:[%s0 + $0x10] sm:$0xf]
    %v27 = vld [vmem:[%s0 + $0x14] sm:$0x1]
    %v28 = vld [vmem:[%s0 + $0x18] sm:$0xf]
    %v29 = vld [vmem:[%s0 + $0x1c] sm:$0xf]
    %v30 = vld [vmem:[%s0 + $0x20] sm:$0x1]
    %v31 = vld [vmem:[%s0 + $0x24] sm:$0xf]
    %v32 = vld [vmem:[%s0 + $0x28] sm:$0xf]
    %v33 = vld [vmem:[%s0 + $0x2c] sm:$0x1]
    %v34 = vld [vmem:[%s0 + $0x30] sm:$0xf]
    %v35 = vld [vmem:[%s0 + $0x34] sm:$0xf]
    %v36 = vld [vmem:[%s0 + $0x38] sm:$0x1]
    %v37 = vld [vmem:[%s0 + $0x3c] sm:$0xf]
    %v38 = vld [vmem:[%s0 + $0x40] sm:$0xf]
    %v39 = vld [vmem:[%s0 + $0x44] sm:$0x1]
    %v40 = vld [vmem:[%s0 + $0x48] sm:$0xf]
    %v41 = vld [vmem:[%s0 + $0x4c] sm:$0xf]
    %v42 = vld [vmem:[%s0 + $0x50] sm:$0x1]
    %v43 = vld [vmem:[%s0 + $0x54] sm:$0xf]
    %v44 = vld [vmem:[%s0 + $0x58] sm:$0xf]
    %v45 = vld [vmem:[%s0 + $0x5c] sm:$0x1]
    %v46 = vld [vmem:[%s0 + $0x60] sm:$0xf]
    %v47 = vld [vmem:[%s0 + $0x64] sm:$0xf]
    %v48 = vld [vmem:[%s0 + $0x68] sm:$0x1]
    %v49 = vld [vmem:[%s0 + $0x6c] sm:$0xf]
    %v50 = vld [vmem:[%s0 + $0x70] sm:$0xf]
    %v51 = vld [vmem:[%s0 + $0x74] sm:$0x1]
    %v52 = vld [vmem:[%s0 + $0x78] sm:$0xf]
    %v53 = vld [vmem:[%s0 + $0x7c] sm:$0xf]
    %v54 = vld [vmem:[%s0 + $0x80] sm:$0x1]
    %v55 = vld [vmem:[%s0 + $0x84] sm:$0xf]
    %v56 = vld [vmem:[%s0 + $0x88] sm:$0xf]
    %v57 = vld [vmem:[%s0 + $0x8c] sm:$0x1]
    %v58 = vld [vmem:[%s0 + $0x90] sm:$0xf]
    %v59 = vld [vmem:[%s0 + $0x94] sm:$0xf]
    %v60 = vld [vmem:[%s0 + $0x98] sm:$0x1]
    %v61 = vld [vmem:[%s0 + $0x9c] sm:$0xf]
    %v62 = vld [vmem:[%s0 + $0xa0] sm:$0xf]
    %v63 = vld [vmem:[%s0 + $0xa4] sm:$0x1]
    %v64 = vld [vmem:[%s0 + $0xa8] sm:$0xf]
    %v65 = vld [vmem:[%s0 + $0xac] sm:$0xf]
    %v66 = vld [vmem:[%s0 + $0xb0] sm:$0x1]
    %v67 = vld [vmem:[%s0 + $0xb4] sm:$0xf]
    %v68 = vld [vmem:[%s0 + $0xb8] sm:$0xf]
    %v69 = vld [vmem:[%s0 + $0xbc] sm:$0x1]
    %v70 = vld [vmem:[%s0 + $0xc0] sm:$0xf]
    %v71 = vld [vmem:[%s0 + $0xc4] sm:$0xf]
    %v72 = vld [vmem:[%s0 + $0xc8] sm:$0x1]
    %v73 = vld [vmem:[%s0 + $0xcc] sm:$0xf]
    %v74 = vld [vmem:[%s0 + $0xd0] sm:$0xf]
    %v75 = vld [vmem:[%s0 + $0xd4] sm:$0x1]
    %v76 = vld [vmem:[%s0 + $0xd8] sm:$0xf]
    %v77 = vld [vmem:[%s0 + $0xdc] sm:$0xf]
    %v78 = vld [vmem:[%s0 + $0xe0] sm:$0x1]
    %v79 = vld [vmem:[%s0 + $0xe4] sm:$0xf]
    %v80 = vld [vmem:[%s0 + $0xe8] sm:$0xf]
    %v81 = vld [vmem:[%s0 + $0xec] sm:$0x1]
    %v82 = vld [vmem:[%s0 + $0xf0] sm:$0xf]
    %v83 = vld [vmem:[%s0 + $0xf4] sm:$0xf]
    %v84 = vld [vmem:[%s0 + $0xf8] sm:$0x1]
    %v85 = vld [vmem:[%s0 + $0xfc] sm:$0xf]
    %v86 = vld [vmem:[%s0 + $0x100] sm:$0xf]
    %v87 = vld [vmem:[%s0 + $0x104] sm:$0x1]
    %v88 = vld [vmem:[%s0 + $0x108] sm:$0xf]
    %v89 = vld [vmem:[%s0 + $0x10c] sm:$0xf]
    %v90 = vld [vmem:[%s0 + $0x110] sm:$0x1]
    %v91 = vld [vmem:[%s0 + $0x114] sm:$0xf]
    %v92 = vld [vmem:[%s0 + $0x118] sm:$0xf]
    %v93 = vld [vmem:[%s0 + $0x11c] sm:$0x1]
    %v94 = vld [vmem:[%s0 + $0x120] sm:$0xf]
    %v95 = vld [vmem:[%s0 + $0x124] sm:$0xf]
    %v96 = vld [vmem:[%s0 + $0x128] sm:$0x1]
    %v97 = vld [vmem:[%s0 + $0x12c] sm:$0xf]
    %v98 = vld [vmem:[%s0 + $0x130] sm:$0xf]
    %v99 = vld [vmem:[%s0 + $0x134] sm:$0x1]
    %v100 = vld [vmem:[%s0 + $0x138] sm:$0xf]
    %v101 = vld [vmem:[%s0 + $0x13c] sm:$0xf]
    %v102 = vld [vmem:[%s0 + $0x140] sm:$0x1]
    %v103 = vld [vmem:[%s0 + $0x144] sm:$0xf]
    %v104 = vld [vmem:[%s0 + $0x148] sm:$0xf]
    %v105 = vld [vmem:[%s0 + $0x14c] sm:$0x1]
    %v106 = vld [vmem:[%s0 + $0x150] sm:$0xf]
    %v107 = vld [vmem:[%s0 + $0x154] sm:$0xf]
    %v108 = vld [vmem:[%s0 + $0x158] sm:$0x1]
    %v109 = vld [vmem:[%s0 + $0x15c] sm:$0xf]
    %v110 = vld [vmem:[%s0 + $0x160] sm:$0xf]
    %v111 = vld [vmem:[%s0 + $0x164] sm:$0x1]
    %v112 = vld [vmem:[%s0 + $0x168] sm:$0xf]
    %v113 = vld [vmem:[%s0 + $0x16c] sm:$0xf]
    %v114 = vld [vmem:[%s0 + $0x170] sm:$0x1]
    %v115 = vld [vmem:[%s0 + $0x174] sm:$0xf]
    %v116 = vld [vmem:[%s0 + $0x178] sm:$0xf]
    %v117 = vld [vmem:[%s0 + $0x17c] sm:$0x1]
    %v118 = vld [vmem:[%s0 + $0x180] sm:$0xf]
    %v119 = vld [vmem:[%s0 + $0x184] sm:$0xf]
    %v120 = vld [vmem:[%s0 + $0x188] sm:$0x1]
    %v121 = vld [vmem:[%s0 + $0x18c] sm:$0xf]
    %v122 = vld [vmem:[%s0 + $0x190] sm:$0xf]
    %v123 = vld [vmem:[%s0 + $0x194] sm:$0x1]
    %v124 = vld [vmem:[%s0 + $0x198] sm:$0xf]
    %v125 = vld [vmem:[%s0 + $0x19c] sm:$0xf]
    %v126 = vld [vmem:[%s0 + $0x1a0] sm:$0x1]
    %v127 = vld [vmem:[%s0 + $0x1a4] sm:$0xf]
    %v128 = vld [vmem:[%s0 + $0x1a8] sm:$0xf]
    %v129 = vld [vmem:[%s0 + $0x1ac] sm:$0x1]
    %v130 = vld [vmem:[%s1] sm:$0xf]
    %v131 = vld [vmem:[%s1 + $0x4] sm:$0xf]
    %v132 = vld [vmem:[%s1 + $0x8] sm:$0xf]
    %v133 = vld [vmem:[%s1 + $0xc] sm:$0xf]
    %v134 = vld [vmem:[%s1 + $0x10] sm:$0xf]
    %v135 = vld [vmem:[%s1 + $0x14] sm:$0xf]
    %v136 = vld [vmem:[%s1 + $0x18] sm:$0xf]
    %v137 = vld [vmem:[%s1 + $0x1c] sm:$0xf]
    %vm138 = vsmask.f32 3328
    %vm139 = vsmask.f32 7440
    %vm140 = vmor %vm138, %vm139
    %v142 = vshrl.u32 %v22, 16
    %v144 = vrot.slane %v142, 4
    %v145 = vshll.u32 %v22, 16
    %v147 = vrot.slane %v145, 5
    %v148 = vor.u32 %v144, %v147
    %v149 = vrot.slane %v148, 4
    %v151 = vshll.u32 %v23, 16
    %v153 = vrot.slane %v151, 5
    %v154 = vsel %vm140, %v149, %v153
    %v155 = vshrl.u32 %v23, 16
    %v157 = vrot.slane %v155, 4
    %v158 = vor.u32 %v157, %v153
    %v159 = vrot.slane %v158, 4
    %v161 = vshll.u32 %v24, 16
    %v163 = vrot.slane %v161, 5
    %v164 = vsel %vm140, %v159, %v163
    %v166 = vshrl.u32 %v25, 16
    %v168 = vrot.slane %v166, 4
    %v169 = vshll.u32 %v25, 16
    %v171 = vrot.slane %v169, 5
    %v172 = vor.u32 %v168, %v171
    %v173 = vrot.slane %v172, 4
    %v175 = vshll.u32 %v26, 16
    %v177 = vrot.slane %v175, 5
    %v178 = vsel %vm140, %v173, %v177
    %v179 = vshrl.u32 %v26, 16
    %v181 = vrot.slane %v179, 4
    %v182 = vor.u32 %v181, %v177
    %v183 = vrot.slane %v182, 4
    %v185 = vshll.u32 %v27, 16
    %v187 = vrot.slane %v185, 5
    %v188 = vsel %vm140, %v183, %v187
    %v190 = vshrl.u32 %v28, 16
    %v192 = vrot.slane %v190, 4
    %v193 = vshll.u32 %v28, 16
    %v195 = vrot.slane %v193, 5
    %v196 = vor.u32 %v192, %v195
    %v197 = vrot.slane %v196, 4
    %v199 = vshll.u32 %v29, 16
    %v201 = vrot.slane %v199, 5
    %v202 = vsel %vm140, %v197, %v201
    %v203 = vshrl.u32 %v29, 16
    %v205 = vrot.slane %v203, 4
    %v206 = vor.u32 %v205, %v201
    %v207 = vrot.slane %v206, 4
    %v209 = vshll.u32 %v30, 16
    %v211 = vrot.slane %v209, 5
    %v212 = vsel %vm140, %v207, %v211
    %v214 = vshrl.u32 %v31, 16
    %v216 = vrot.slane %v214, 4
    %v217 = vshll.u32 %v31, 16
    %v219 = vrot.slane %v217, 5
    %v220 = vor.u32 %v216, %v219
    %v221 = vrot.slane %v220, 4
    %v223 = vshll.u32 %v32, 16
    %v225 = vrot.slane %v223, 5
    %v226 = vsel %vm140, %v221, %v225
    %v227 = vshrl.u32 %v32, 16
    %v229 = vrot.slane %v227, 4
    %v230 = vor.u32 %v229, %v225
    %v231 = vrot.slane %v230, 4
    %v233 = vshll.u32 %v33, 16
    %v235 = vrot.slane %v233, 5
    %v236 = vsel %vm140, %v231, %v235
    %v238 = vshrl.u32 %v34, 16
    %v240 = vrot.slane %v238, 4
    %v241 = vshll.u32 %v34, 16
    %v243 = vrot.slane %v241, 5
    %v244 = vor.u32 %v240, %v243
    %v245 = vrot.slane %v244, 4
    %v247 = vshll.u32 %v35, 16
    %v249 = vrot.slane %v247, 5
    %v250 = vsel %vm140, %v245, %v249
    %v251 = vshrl.u32 %v35, 16
    %v253 = vrot.slane %v251, 4
    %v254 = vor.u32 %v253, %v249
    %v255 = vrot.slane %v254, 4
    %v257 = vshll.u32 %v36, 16
    %v259 = vrot.slane %v257, 5
    %v260 = vsel %vm140, %v255, %v259
    %v262 = vshrl.u32 %v37, 16
    %v264 = vrot.slane %v262, 4
    %v265 = vshll.u32 %v37, 16
    %v267 = vrot.slane %v265, 5
    %v268 = vor.u32 %v264, %v267
    %v269 = vrot.slane %v268, 4
    %v271 = vshll.u32 %v38, 16
    %v273 = vrot.slane %v271, 5
    %v274 = vsel %vm140, %v269, %v273
    %v275 = vshrl.u32 %v38, 16
    %v277 = vrot.slane %v275, 4
    %v278 = vor.u32 %v277, %v273
    %v279 = vrot.slane %v278, 4
    %v281 = vshll.u32 %v39, 16
    %v283 = vrot.slane %v281, 5
    %v284 = vsel %vm140, %v279, %v283
    %v286 = vshrl.u32 %v40, 16
    %v288 = vrot.slane %v286, 4
    %v289 = vshll.u32 %v40, 16
    %v291 = vrot.slane %v289, 5
    %v292 = vor.u32 %v288, %v291
    %v293 = vrot.slane %v292, 4
    %v295 = vshll.u32 %v41, 16
    %v297 = vrot.slane %v295, 5
    %v298 = vsel %vm140, %v293, %v297
    %v299 = vshrl.u32 %v41, 16
    %v301 = vrot.slane %v299, 4
    %v302 = vor.u32 %v301, %v297
    %v303 = vrot.slane %v302, 4
    %v305 = vshll.u32 %v42, 16
    %v307 = vrot.slane %v305, 5
    %v308 = vsel %vm140, %v303, %v307
    %v310 = vshrl.u32 %v43, 16
    %v312 = vrot.slane %v310, 4
    %v313 = vshll.u32 %v43, 16
    %v315 = vrot.slane %v313, 5
    %v316 = vor.u32 %v312, %v315
    %v317 = vrot.slane %v316, 4
    %v319 = vshll.u32 %v44, 16
    %v321 = vrot.slane %v319, 5
    %v322 = vsel %vm140, %v317, %v321
    %v323 = vshrl.u32 %v44, 16
    %v325 = vrot.slane %v323, 4
    %v326 = vor.u32 %v325, %v321
    %v327 = vrot.slane %v326, 4
    %v329 = vshll.u32 %v45, 16
    %v331 = vrot.slane %v329, 5
    %v332 = vsel %vm140, %v327, %v331
    %v334 = vshrl.u32 %v46, 16
    %v336 = vrot.slane %v334, 4
    %v337 = vshll.u32 %v46, 16
    %v339 = vrot.slane %v337, 5
    %v340 = vor.u32 %v336, %v339
    %v341 = vrot.slane %v340, 4
    %v343 = vshll.u32 %v47, 16
    %v345 = vrot.slane %v343, 5
    %v346 = vsel %vm140, %v341, %v345
    %v347 = vshrl.u32 %v47, 16
    %v349 = vrot.slane %v347, 4
    %v350 = vor.u32 %v349, %v345
    %v351 = vrot.slane %v350, 4
    %v353 = vshll.u32 %v48, 16
    %v355 = vrot.slane %v353, 5
    %v356 = vsel %vm140, %v351, %v355
    %v358 = vshrl.u32 %v49, 16
    %v360 = vrot.slane %v358, 4
    %v361 = vshll.u32 %v49, 16
    %v363 = vrot.slane %v361, 5
    %v364 = vor.u32 %v360, %v363
    %v365 = vrot.slane %v364, 4
    %v367 = vshll.u32 %v50, 16
    %v369 = vrot.slane %v367, 5
    %v370 = vsel %vm140, %v365, %v369
    %v371 = vshrl.u32 %v50, 16
    %v373 = vrot.slane %v371, 4
    %v374 = vor.u32 %v373, %v369
    %v375 = vrot.slane %v374, 4
    %v377 = vshll.u32 %v51, 16
    %v379 = vrot.slane %v377, 5
    %v380 = vsel %vm140, %v375, %v379
    %v382 = vshrl.u32 %v52, 16
    %v384 = vrot.slane %v382, 4
    %v385 = vshll.u32 %v52, 16
    %v387 = vrot.slane %v385, 5
    %v388 = vor.u32 %v384, %v387
    %v389 = vrot.slane %v388, 4
    %v391 = vshll.u32 %v53, 16
    %v393 = vrot.slane %v391, 5
    %v394 = vsel %vm140, %v389, %v393
    %v395 = vshrl.u32 %v53, 16
    %v397 = vrot.slane %v395, 4
    %v398 = vor.u32 %v397, %v393
    %v399 = vrot.slane %v398, 4
    %v401 = vshll.u32 %v54, 16
    %v403 = vrot.slane %v401, 5
    %v404 = vsel %vm140, %v399, %v403
    %v406 = vshrl.u32 %v55, 16
    %v408 = vrot.slane %v406, 4
    %v409 = vshll.u32 %v55, 16
    %v411 = vrot.slane %v409, 5
    %v412 = vor.u32 %v408, %v411
    %v413 = vrot.slane %v412, 4
    %v415 = vshll.u32 %v56, 16
    %v417 = vrot.slane %v415, 5
    %v418 = vsel %vm140, %v413, %v417
    %v419 = vshrl.u32 %v56, 16
    %v421 = vrot.slane %v419, 4
    %v422 = vor.u32 %v421, %v417
    %v423 = vrot.slane %v422, 4
    %v425 = vshll.u32 %v57, 16
    %v427 = vrot.slane %v425, 5
    %v428 = vsel %vm140, %v423, %v427
    %v430 = vshrl.u32 %v58, 16
    %v432 = vrot.slane %v430, 4
    %v433 = vshll.u32 %v58, 16
    %v435 = vrot.slane %v433, 5
    %v436 = vor.u32 %v432, %v435
    %v437 = vrot.slane %v436, 4
    %v439 = vshll.u32 %v59, 16
    %v441 = vrot.slane %v439, 5
    %v442 = vsel %vm140, %v437, %v441
    %v443 = vshrl.u32 %v59, 16
    %v445 = vrot.slane %v443, 4
    %v446 = vor.u32 %v445, %v441
    %v447 = vrot.slane %v446, 4
    %v449 = vshll.u32 %v60, 16
    %v451 = vrot.slane %v449, 5
    %v452 = vsel %vm140, %v447, %v451
    %v454 = vshrl.u32 %v61, 16
    %v456 = vrot.slane %v454, 4
    %v457 = vshll.u32 %v61, 16
    %v459 = vrot.slane %v457, 5
    %v460 = vor.u32 %v456, %v459
    %v461 = vrot.slane %v460, 4
    %v463 = vshll.u32 %v62, 16
    %v465 = vrot.slane %v463, 5
    %v466 = vsel %vm140, %v461, %v465
    %v467 = vshrl.u32 %v62, 16
    %v469 = vrot.slane %v467, 4
    %v470 = vor.u32 %v469, %v465
    %v471 = vrot.slane %v470, 4
    %v473 = vshll.u32 %v63, 16
    %v475 = vrot.slane %v473, 5
    %v476 = vsel %vm140, %v471, %v475
    %v478 = vshrl.u32 %v64, 16
    %v480 = vrot.slane %v478, 4
    %v481 = vshll.u32 %v64, 16
    %v483 = vrot.slane %v481, 5
    %v484 = vor.u32 %v480, %v483
    %v485 = vrot.slane %v484, 4
    %v487 = vshll.u32 %v65, 16
    %v489 = vrot.slane %v487, 5
    %v490 = vsel %vm140, %v485, %v489
    %v491 = vshrl.u32 %v65, 16
    %v493 = vrot.slane %v491, 4
    %v494 = vor.u32 %v493, %v489
    %v495 = vrot.slane %v494, 4
    %v497 = vshll.u32 %v66, 16
    %v499 = vrot.slane %v497, 5
    %v500 = vsel %vm140, %v495, %v499
    %v502 = vshrl.u32 %v67, 16
    %v504 = vrot.slane %v502, 4
    %v505 = vshll.u32 %v67, 16
    %v507 = vrot.slane %v505, 5
    %v508 = vor.u32 %v504, %v507
    %v509 = vrot.slane %v508, 4
    %v511 = vshll.u32 %v68, 16
    %v513 = vrot.slane %v511, 5
    %v514 = vsel %vm140, %v509, %v513
    %v515 = vshrl.u32 %v68, 16
    %v517 = vrot.slane %v515, 4
    %v518 = vor.u32 %v517, %v513
    %v519 = vrot.slane %v518, 4
    %v521 = vshll.u32 %v69, 16
    %v523 = vrot.slane %v521, 5
    %v524 = vsel %vm140, %v519, %v523
    %v526 = vshrl.u32 %v76, 16
    %v528 = vrot.slane %v526, 4
    %v529 = vshll.u32 %v76, 16
    %v531 = vrot.slane %v529, 5
    %v532 = vor.u32 %v528, %v531
    %v533 = vrot.slane %v532, 4
    %v535 = vshll.u32 %v77, 16
    %v537 = vrot.slane %v535, 5
    %v538 = vsel %vm140, %v533, %v537
    %v539 = vshrl.u32 %v77, 16
    %v541 = vrot.slane %v539, 4
    %v542 = vor.u32 %v541, %v537
    %v543 = vrot.slane %v542, 4
    %v545 = vshll.u32 %v78, 16
    %v547 = vrot.slane %v545, 5
    %v548 = vsel %vm140, %v543, %v547
    %v550 = vshrl.u32 %v79, 16
    %v552 = vrot.slane %v550, 4
    %v553 = vshll.u32 %v79, 16
    %v555 = vrot.slane %v553, 5
    %v556 = vor.u32 %v552, %v555
    %v557 = vrot.slane %v556, 4
    %v559 = vshll.u32 %v80, 16
    %v561 = vrot.slane %v559, 5
    %v562 = vsel %vm140, %v557, %v561
    %v563 = vshrl.u32 %v80, 16
    %v565 = vrot.slane %v563, 4
    %v566 = vor.u32 %v565, %v561
    %v567 = vrot.slane %v566, 4
    %v569 = vshll.u32 %v81, 16
    %v571 = vrot.slane %v569, 5
    %v572 = vsel %vm140, %v567, %v571
    %v574 = vshrl.u32 %v82, 16
    %v576 = vrot.slane %v574, 4
    %v577 = vshll.u32 %v82, 16
    %v579 = vrot.slane %v577, 5
    %v580 = vor.u32 %v576, %v579
    %v581 = vrot.slane %v580, 4
    %v583 = vshll.u32 %v83, 16
    %v585 = vrot.slane %v583, 5
    %v586 = vsel %vm140, %v581, %v585
    %v587 = vshrl.u32 %v83, 16
    %v589 = vrot.slane %v587, 4
    %v590 = vor.u32 %v589, %v585
    %v591 = vrot.slane %v590, 4
    %v593 = vshll.u32 %v84, 16
    %v595 = vrot.slane %v593, 5
    %v596 = vsel %vm140, %v591, %v595
    %v598 = vshrl.u32 %v85, 16
    %v600 = vrot.slane %v598, 4
    %v601 = vshll.u32 %v85, 16
    %v603 = vrot.slane %v601, 5
    %v604 = vor.u32 %v600, %v603
    %v605 = vrot.slane %v604, 4
    %v607 = vshll.u32 %v86, 16
    %v609 = vrot.slane %v607, 5
    %v610 = vsel %vm140, %v605, %v609
    %v611 = vshrl.u32 %v86, 16
    %v613 = vrot.slane %v611, 4
    %v614 = vor.u32 %v613, %v609
    %v615 = vrot.slane %v614, 4
    %v617 = vshll.u32 %v87, 16
    %v619 = vrot.slane %v617, 5
    %v620 = vsel %vm140, %v615, %v619
    %v622 = vshrl.u32 %v88, 16
    %v624 = vrot.slane %v622, 4
    %v625 = vshll.u32 %v88, 16
    %v627 = vrot.slane %v625, 5
    %v628 = vor.u32 %v624, %v627
    %v629 = vrot.slane %v628, 4
    %v631 = vshll.u32 %v89, 16
    %v633 = vrot.slane %v631, 5
    %v634 = vsel %vm140, %v629, %v633
    %v635 = vshrl.u32 %v89, 16
    %v637 = vrot.slane %v635, 4
    %v638 = vor.u32 %v637, %v633
    %v639 = vrot.slane %v638, 4
    %v641 = vshll.u32 %v90, 16
    %v643 = vrot.slane %v641, 5
    %v644 = vsel %vm140, %v639, %v643
    %v646 = vshrl.u32 %v91, 16
    %v648 = vrot.slane %v646, 4
    %v649 = vshll.u32 %v91, 16
    %v651 = vrot.slane %v649, 5
    %v652 = vor.u32 %v648, %v651
    %v653 = vrot.slane %v652, 4
    %v655 = vshll.u32 %v92, 16
    %v657 = vrot.slane %v655, 5
    %v658 = vsel %vm140, %v653, %v657
    %v659 = vshrl.u32 %v92, 16
    %v661 = vrot.slane %v659, 4
    %v662 = vor.u32 %v661, %v657
    %v663 = vrot.slane %v662, 4
    %v665 = vshll.u32 %v93, 16
    %v667 = vrot.slane %v665, 5
    %v668 = vsel %vm140, %v663, %v667
    %v670 = vshrl.u32 %v94, 16
    %v672 = vrot.slane %v670, 4
    %v673 = vshll.u32 %v94, 16
    %v675 = vrot.slane %v673, 5
    %v676 = vor.u32 %v672, %v675
    %v677 = vrot.slane %v676, 4
    %v679 = vshll.u32 %v95, 16
    %v681 = vrot.slane %v679, 5
    %v682 = vsel %vm140, %v677, %v681
    %v683 = vshrl.u32 %v95, 16
    %v685 = vrot.slane %v683, 4
    %v686 = vor.u32 %v685, %v681
    %v687 = vrot.slane %v686, 4
    %v689 = vshll.u32 %v96, 16
    %v691 = vrot.slane %v689, 5
    %v692 = vsel %vm140, %v687, %v691
    %v694 = vshrl.u32 %v97, 16
    %v696 = vrot.slane %v694, 4
    %v697 = vshll.u32 %v97, 16
    %v699 = vrot.slane %v697, 5
    %v700 = vor.u32 %v696, %v699
    %v701 = vrot.slane %v700, 4
    %v703 = vshll.u32 %v98, 16
    %v705 = vrot.slane %v703, 5
    %v706 = vsel %vm140, %v701, %v705
    %v707 = vshrl.u32 %v98, 16
    %v709 = vrot.slane %v707, 4
    %v710 = vor.u32 %v709, %v705
    %v711 = vrot.slane %v710, 4
    %v713 = vshll.u32 %v99, 16
    %v715 = vrot.slane %v713, 5
    %v716 = vsel %vm140, %v711, %v715
    %v718 = vshrl.u32 %v100, 16
    %v720 = vrot.slane %v718, 4
    %v721 = vshll.u32 %v100, 16
    %v723 = vrot.slane %v721, 5
    %v724 = vor.u32 %v720, %v723
    %v725 = vrot.slane %v724, 4
    %v727 = vshll.u32 %v101, 16
    %v729 = vrot.slane %v727, 5
    %v730 = vsel %vm140, %v725, %v729
    %v731 = vshrl.u32 %v101, 16
    %v733 = vrot.slane %v731, 4
    %v734 = vor.u32 %v733, %v729
    %v735 = vrot.slane %v734, 4
    %v737 = vshll.u32 %v102, 16
    %v739 = vrot.slane %v737, 5
    %v740 = vsel %vm140, %v735, %v739
    %v742 = vshrl.u32 %v103, 16
    %v744 = vrot.slane %v742, 4
    %v745 = vshll.u32 %v103, 16
    %v747 = vrot.slane %v745, 5
    %v748 = vor.u32 %v744, %v747
    %v749 = vrot.slane %v748, 4
    %v751 = vshll.u32 %v104, 16
    %v753 = vrot.slane %v751, 5
    %v754 = vsel %vm140, %v749, %v753
    %v755 = vshrl.u32 %v104, 16
    %v757 = vrot.slane %v755, 4
    %v758 = vor.u32 %v757, %v753
    %v759 = vrot.slane %v758, 4
    %v761 = vshll.u32 %v105, 16
    %v763 = vrot.slane %v761, 5
    %v764 = vsel %vm140, %v759, %v763
    %v766 = vshrl.u32 %v106, 16
    %v768 = vrot.slane %v766, 4
    %v769 = vshll.u32 %v106, 16
    %v771 = vrot.slane %v769, 5
    %v772 = vor.u32 %v768, %v771
    %v773 = vrot.slane %v772, 4
    %v775 = vshll.u32 %v107, 16
    %v777 = vrot.slane %v775, 5
    %v778 = vsel %vm140, %v773, %v777
    %v779 = vshrl.u32 %v107, 16
    %v781 = vrot.slane %v779, 4
    %v782 = vor.u32 %v781, %v777
    %v783 = vrot.slane %v782, 4
    %v785 = vshll.u32 %v108, 16
    %v787 = vrot.slane %v785, 5
    %v788 = vsel %vm140, %v783, %v787
    %v790 = vshrl.u32 %v109, 16
    %v792 = vrot.slane %v790, 4
    %v793 = vshll.u32 %v109, 16
    %v795 = vrot.slane %v793, 5
    %v796 = vor.u32 %v792, %v795
    %v797 = vrot.slane %v796, 4
    %v799 = vshll.u32 %v110, 16
    %v801 = vrot.slane %v799, 5
    %v802 = vsel %vm140, %v797, %v801
    %v803 = vshrl.u32 %v110, 16
    %v805 = vrot.slane %v803, 4
    %v806 = vor.u32 %v805, %v801
    %v807 = vrot.slane %v806, 4
    %v809 = vshll.u32 %v111, 16
    %v811 = vrot.slane %v809, 5
    %v812 = vsel %vm140, %v807, %v811
    %v814 = vshrl.u32 %v112, 16
    %v816 = vrot.slane %v814, 4
    %v817 = vshll.u32 %v112, 16
    %v819 = vrot.slane %v817, 5
    %v820 = vor.u32 %v816, %v819
    %v821 = vrot.slane %v820, 4
    %v823 = vshll.u32 %v113, 16
    %v825 = vrot.slane %v823, 5
    %v826 = vsel %vm140, %v821, %v825
    %v827 = vshrl.u32 %v113, 16
    %v829 = vrot.slane %v827, 4
    %v830 = vor.u32 %v829, %v825
    %v831 = vrot.slane %v830, 4
    %v833 = vshll.u32 %v114, 16
    %v835 = vrot.slane %v833, 5
    %v836 = vsel %vm140, %v831, %v835
    %v838 = vshrl.u32 %v115, 16
    %v840 = vrot.slane %v838, 4
    %v841 = vshll.u32 %v115, 16
    %v843 = vrot.slane %v841, 5
    %v844 = vor.u32 %v840, %v843
    %v845 = vrot.slane %v844, 4
    %v847 = vshll.u32 %v116, 16
    %v849 = vrot.slane %v847, 5
    %v850 = vsel %vm140, %v845, %v849
    %v851 = vshrl.u32 %v116, 16
    %v853 = vrot.slane %v851, 4
    %v854 = vor.u32 %v853, %v849
    %v855 = vrot.slane %v854, 4
    %v857 = vshll.u32 %v117, 16
    %v859 = vrot.slane %v857, 5
    %v860 = vsel %vm140, %v855, %v859
    %v862 = vshrl.u32 %v118, 16
    %v864 = vrot.slane %v862, 4
    %v865 = vshll.u32 %v118, 16
    %v867 = vrot.slane %v865, 5
    %v868 = vor.u32 %v864, %v867
    %v869 = vrot.slane %v868, 4
    %v871 = vshll.u32 %v119, 16
    %v873 = vrot.slane %v871, 5
    %v874 = vsel %vm140, %v869, %v873
    %v875 = vshrl.u32 %v119, 16
    %v877 = vrot.slane %v875, 4
    %v878 = vor.u32 %v877, %v873
    %v879 = vrot.slane %v878, 4
    %v881 = vshll.u32 %v120, 16
    %v883 = vrot.slane %v881, 5
    %v884 = vsel %vm140, %v879, %v883
    %v886 = vshrl.u32 %v121, 16
    %v888 = vrot.slane %v886, 4
    %v889 = vshll.u32 %v121, 16
    %v891 = vrot.slane %v889, 5
    %v892 = vor.u32 %v888, %v891
    %v893 = vrot.slane %v892, 4
    %v895 = vshll.u32 %v122, 16
    %v897 = vrot.slane %v895, 5
    %v898 = vsel %vm140, %v893, %v897
    %v899 = vshrl.u32 %v122, 16
    %v901 = vrot.slane %v899, 4
    %v902 = vor.u32 %v901, %v897
    %v903 = vrot.slane %v902, 4
    %v905 = vshll.u32 %v123, 16
    %v907 = vrot.slane %v905, 5
    %v908 = vsel %vm140, %v903, %v907
    %v909 = vld [vmem:[%s1 + $0x20] sm:$0xf]
    %v910 = vld [vmem:[%s1 + $0x24] sm:$0xf]
    %v911 = vld [vmem:[%s1 + $0x28] sm:$0xf]
    %v912 = vld [vmem:[%s1 + $0x2c] sm:$0xf]
    %v913 = vld [vmem:[%s1 + $0x30] sm:$0xf]
    %v914 = vld [vmem:[%s1 + $0x34] sm:$0xf]
    %v915 = vld [vmem:[%s1 + $0x38] sm:$0xf]
    %v916 = vld [vmem:[%s1 + $0x3c] sm:$0xf]
    %v917 = vunpack.c.l.b16 %v154
    %v918 = vunpack.c.l.b16 %v164
    %v919 = vunpack.c.l.b16 %v178
    %v920 = vunpack.c.l.b16 %v188
    %v921 = vunpack.c.l.b16 %v202
    %v922 = vunpack.c.l.b16 %v212
    %v923 = vunpack.c.l.b16 %v226
    %v924 = vunpack.c.l.b16 %v236
    %v925 = vunpack.c.l.b16 %v250
    %v926 = vunpack.c.l.b16 %v260
    %v927 = vunpack.c.l.b16 %v274
    %v928 = vunpack.c.l.b16 %v284
    %v929 = vunpack.c.l.b16 %v298
    %v930 = vunpack.c.l.b16 %v308
    %v931 = vunpack.c.l.b16 %v322
    %v932 = vunpack.c.l.b16 %v332
    %v933 = vunpack.c.l.b16 %v346
    %v934 = vunpack.c.l.b16 %v356
    %v935 = vunpack.c.l.b16 %v370
    %v936 = vunpack.c.l.b16 %v380
    %v937 = vunpack.c.l.b16 %v394
    %v938 = vunpack.c.l.b16 %v404
    %v939 = vunpack.c.l.b16 %v418
    %v940 = vunpack.c.l.b16 %v428
    %v941 = vunpack.c.l.b16 %v442
    %v942 = vunpack.c.l.b16 %v452
    %v943 = vunpack.c.l.b16 %v466
    %v944 = vunpack.c.l.b16 %v476
    %v945 = vunpack.c.l.b16 %v490
    %v946 = vunpack.c.l.b16 %v500
    %v947 = vunpack.c.l.b16 %v514
    %v948 = vunpack.c.l.b16 %v524
    %v949 = vunpack.c.l.b16 %v538
    %v950 = vunpack.c.l.b16 %v548
    %v951 = vunpack.c.l.b16 %v562
    %v952 = vunpack.c.l.b16 %v572
    %v953 = vunpack.c.l.b16 %v586
    %v954 = vunpack.c.l.b16 %v596
    %v955 = vunpack.c.l.b16 %v610
    %v956 = vunpack.c.l.b16 %v620
    %v957 = vunpack.c.l.b16 %v634
    %v958 = vunpack.c.l.b16 %v644
    %v959 = vunpack.c.l.b16 %v658
    %v960 = vunpack.c.l.b16 %v668
    %v961 = vunpack.c.l.b16 %v682
    %v962 = vunpack.c.l.b16 %v692
    %v963 = vunpack.c.l.b16 %v706
    %v964 = vunpack.c.l.b16 %v716
    %v965 = vunpack.c.l.b16 %v730
    %v966 = vunpack.c.l.b16 %v740
    %v967 = vunpack.c.l.b16 %v754
    %v968 = vunpack.c.l.b16 %v764
    %v969 = vunpack.c.l.b16 %v778
    %v970 = vunpack.c.l.b16 %v788
    %v971 = vunpack.c.l.b16 %v802
    %v972 = vunpack.c.l.b16 %v812
    %v973 = vunpack.c.l.b16 %v826
    %v974 = vunpack.c.l.b16 %v836
    %v975 = vunpack.c.l.b16 %v850
    %v976 = vunpack.c.l.b16 %v860
    %v977 = vunpack.c.l.b16 %v874
    %v978 = vunpack.c.l.b16 %v884
    %v979 = vunpack.c.l.b16 %v898
    %v980 = vunpack.c.l.b16 %v908
    %v981 = vpack.c.b16 %v918, %v917
    %v982 = vpack.c.b16 %v920, %v919
    %v983 = vpack.c.b16 %v922, %v921
    %v984 = vpack.c.b16 %v924, %v923
    %v985 = vpack.c.b16 %v926, %v925
    %v986 = vpack.c.b16 %v928, %v927
    %v987 = vpack.c.b16 %v930, %v929
    %v988 = vpack.c.b16 %v932, %v931
    %v989 = vpack.c.b16 %v934, %v933
    %v990 = vpack.c.b16 %v936, %v935
    %v991 = vpack.c.b16 %v938, %v937
    %v992 = vpack.c.b16 %v940, %v939
    %v993 = vpack.c.b16 %v942, %v941
    %v994 = vpack.c.b16 %v944, %v943
    %v995 = vpack.c.b16 %v946, %v945
    %v996 = vpack.c.b16 %v948, %v947
    %v997 = vpack.c.b16 %v950, %v949
    %v998 = vpack.c.b16 %v952, %v951
    %v999 = vpack.c.b16 %v954, %v953
    %v1000 = vpack.c.b16 %v956, %v955
    %v1001 = vpack.c.b16 %v958, %v957
    %v1002 = vpack.c.b16 %v960, %v959
    %v1003 = vpack.c.b16 %v962, %v961
    %v1004 = vpack.c.b16 %v964, %v963
    %v1005 = vpack.c.b16 %v966, %v965
    %v1006 = vpack.c.b16 %v968, %v967
    %v1007 = vpack.c.b16 %v970, %v969
    %v1008 = vpack.c.b16 %v972, %v971
    %v1009 = vpack.c.b16 %v974, %v973
    %v1010 = vpack.c.b16 %v976, %v975
    %v1011 = vpack.c.b16 %v978, %v977
    %v1012 = vpack.c.b16 %v980, %v979
    %v1021 = vunpack.c.l.b16 %v909
    %v1022 = vunpack.c.l.b16 %v910
    %v1023 = vunpack.c.l.b16 %v911
    %v1024 = vunpack.c.l.b16 %v912
    %v1025 = vunpack.c.l.b16 %v913
    %v1026 = vunpack.c.l.b16 %v914
    %v1027 = vunpack.c.l.b16 %v915
    %v1028 = vunpack.c.l.b16 %v916
    %v1029 = vpack.c.b16 %v1022, %v1021
    %v1030 = vpack.c.b16 %v1024, %v1023
    %v1031 = vpack.c.b16 %v1026, %v1025
    %v1032 = vpack.c.b16 %v1028, %v1027
    %vm1037 = vcmask 523264
    %v1039 = vsel %vm1037, %v981, 0
    %v1042 = vsel %vm1037, %v982, 0
    %v1045 = vsel %vm1037, %v983, 0
    %v1048 = vsel %vm1037, %v984, 0
    %v1051 = vsel %vm1037, %v985, 0
    %v1054 = vsel %vm1037, %v986, 0
    %v1057 = vsel %vm1037, %v987, 0
    %v1060 = vsel %vm1037, %v988, 0
    %v1063 = vsel %vm1037, %v989, 0
    %v1066 = vsel %vm1037, %v990, 0
    %v1069 = vsel %vm1037, %v991, 0
    %v1072 = vsel %vm1037, %v992, 0
    %v1075 = vsel %vm1037, %v993, 0
    %v1078 = vsel %vm1037, %v994, 0
    %v1081 = vsel %vm1037, %v995, 0
    %v1084 = vsel %vm1037, %v996, 0
    %v1087 = vsel %vm1037, %v997, 0
    %v1090 = vsel %vm1037, %v998, 0
    %v1093 = vsel %vm1037, %v999, 0
    %v1096 = vsel %vm1037, %v1000, 0
    %v1099 = vsel %vm1037, %v1001, 0
    %v1102 = vsel %vm1037, %v1002, 0
    %v1105 = vsel %vm1037, %v1003, 0
    %v1108 = vsel %vm1037, %v1004, 0
    %v1111 = vsel %vm1037, %v1005, 0
    %v1114 = vsel %vm1037, %v1006, 0
    %v1117 = vsel %vm1037, %v1007, 0
    %v1120 = vsel %vm1037, %v1008, 0
    %v1123 = vsel %vm1037, %v1009, 0
    %v1126 = vsel %vm1037, %v1010, 0
    %v1129 = vsel %vm1037, %v1011, 0
    %v1132 = vsel %vm1037, %v1012, 0
    %1134 = vmatpush.bf16.msra.mxu0 0
    %1135 = vmatpush.bf16.msra.mxu0 0
    %1136 = vmatpush.bf16.msra.mxu0 0
    %1137 = vmatpush.bf16.msra.mxu0 0
    %1138 = vmatpush.bf16.msra.mxu0 %v1032
    %1139 = vmatpush.bf16.msra.mxu0 %v1031
    %1140 = vmatpush.bf16.msra.mxu0 %v1030
    %1141 = vmatpush.bf16.msra.mxu0 %v1029
    %1142 = vmatmul.bf16.gmra.mxu0 %v1039
    %v1143 = vpop.f32.mrf.mxu0
    %v1144 = vadd.f32 0.0, %v1143
    %v1145 = vpop.f32.mrf.mxu0
    %v1146 = vadd.f32 0.0, %v1145
    %1147 = vmatmul.bf16.gmra.mxu0 %v1042
    %v1148 = vpop.f32.mrf.mxu0
    %v1149 = vadd.f32 0.0, %v1148
    %v1150 = vpop.f32.mrf.mxu0
    %v1151 = vadd.f32 0.0, %v1150
    %1152 = vmatmul.bf16.gmra.mxu0 %v1045
    %v1153 = vpop.f32.mrf.mxu0
    %v1154 = vadd.f32 0.0, %v1153
    %v1155 = vpop.f32.mrf.mxu0
    %v1156 = vadd.f32 0.0, %v1155
    %1157 = vmatmul.bf16.gmra.mxu0 %v1048
    %v1158 = vpop.f32.mrf.mxu0
    %v1159 = vadd.f32 0.0, %v1158
    %v1160 = vpop.f32.mrf.mxu0
    %v1161 = vadd.f32 0.0, %v1160
    %1162 = vmatmul.bf16.gmra.mxu0 %v1051
    %v1163 = vpop.f32.mrf.mxu0
    %v1164 = vadd.f32 0.0, %v1163
    %v1165 = vpop.f32.mrf.mxu0
    %v1166 = vadd.f32 0.0, %v1165
    %1167 = vmatmul.bf16.gmra.mxu0 %v1054
    %v1168 = vpop.f32.mrf.mxu0
    %v1169 = vadd.f32 0.0, %v1168
    %v1170 = vpop.f32.mrf.mxu0
    %v1171 = vadd.f32 0.0, %v1170
    %1172 = vmatmul.bf16.gmra.mxu0 %v1057
    %v1173 = vpop.f32.mrf.mxu0
    %v1174 = vadd.f32 0.0, %v1173
    %v1175 = vpop.f32.mrf.mxu0
    %v1176 = vadd.f32 0.0, %v1175
    %1177 = vmatmul.bf16.gmra.mxu0 %v1060
    %v1178 = vpop.f32.mrf.mxu0
    %v1179 = vadd.f32 0.0, %v1178
    %v1180 = vpop.f32.mrf.mxu0
    %v1181 = vadd.f32 0.0, %v1180
    %1182 = vmatmul.bf16.gmra.mxu0 %v1063
    %v1183 = vpop.f32.mrf.mxu0
    %v1184 = vadd.f32 0.0, %v1183
    %v1185 = vpop.f32.mrf.mxu0
    %v1186 = vadd.f32 0.0, %v1185
    %1187 = vmatmul.bf16.gmra.mxu0 %v1066
    %v1188 = vpop.f32.mrf.mxu0
    %v1189 = vadd.f32 0.0, %v1188
    %v1190 = vpop.f32.mrf.mxu0
    %v1191 = vadd.f32 0.0, %v1190
    %1192 = vmatmul.bf16.gmra.mxu0 %v1069
    %v1193 = vpop.f32.mrf.mxu0
    %v1194 = vadd.f32 0.0, %v1193
    %v1195 = vpop.f32.mrf.mxu0
    %v1196 = vadd.f32 0.0, %v1195
    %1197 = vmatmul.bf16.gmra.mxu0 %v1072
    %v1198 = vpop.f32.mrf.mxu0
    %v1199 = vadd.f32 0.0, %v1198
    %v1200 = vpop.f32.mrf.mxu0
    %v1201 = vadd.f32 0.0, %v1200
    %1202 = vmatmul.bf16.gmra.mxu0 %v1075
    %v1203 = vpop.f32.mrf.mxu0
    %v1204 = vadd.f32 0.0, %v1203
    %v1205 = vpop.f32.mrf.mxu0
    %v1206 = vadd.f32 0.0, %v1205
    %1207 = vmatmul.bf16.gmra.mxu0 %v1078
    %v1208 = vpop.f32.mrf.mxu0
    %v1209 = vadd.f32 0.0, %v1208
    %v1210 = vpop.f32.mrf.mxu0
    %v1211 = vadd.f32 0.0, %v1210
    %1212 = vmatmul.bf16.gmra.mxu0 %v1081
    %v1213 = vpop.f32.mrf.mxu0
    %v1214 = vadd.f32 0.0, %v1213
    %v1215 = vpop.f32.mrf.mxu0
    %v1216 = vadd.f32 0.0, %v1215
    %1217 = vmatmul.bf16.gmra.mxu0 %v1084
    %v1218 = vpop.f32.mrf.mxu0
    %v1219 = vadd.f32 0.0, %v1218
    %v1220 = vpop.f32.mrf.mxu0
    %v1221 = vadd.f32 0.0, %v1220
    %1222 = vmatmul.bf16.gmra.mxu0 %v1087
    %v1223 = vpop.f32.mrf.mxu0
    %v1224 = vadd.f32 0.0, %v1223
    %v1225 = vpop.f32.mrf.mxu0
    %v1226 = vadd.f32 0.0, %v1225
    %1227 = vmatmul.bf16.gmra.mxu0 %v1090
    %v1228 = vpop.f32.mrf.mxu0
    %v1229 = vadd.f32 0.0, %v1228
    %v1230 = vpop.f32.mrf.mxu0
    %v1231 = vadd.f32 0.0, %v1230
    %1232 = vmatmul.bf16.gmra.mxu0 %v1093
    %v1233 = vpop.f32.mrf.mxu0
    %v1234 = vadd.f32 0.0, %v1233
    %v1235 = vpop.f32.mrf.mxu0
    %v1236 = vadd.f32 0.0, %v1235
    %1237 = vmatmul.bf16.gmra.mxu0 %v1096
    %v1238 = vpop.f32.mrf.mxu0
    %v1239 = vadd.f32 0.0, %v1238
    %v1240 = vpop.f32.mrf.mxu0
    %v1241 = vadd.f32 0.0, %v1240
    %1242 = vmatmul.bf16.gmra.mxu0 %v1099
    %v1243 = vpop.f32.mrf.mxu0
    %v1244 = vadd.f32 0.0, %v1243
    %v1245 = vpop.f32.mrf.mxu0
    %v1246 = vadd.f32 0.0, %v1245
    %1247 = vmatmul.bf16.gmra.mxu0 %v1102
    %v1248 = vpop.f32.mrf.mxu0
    %v1249 = vadd.f32 0.0, %v1248
    %v1250 = vpop.f32.mrf.mxu0
    %v1251 = vadd.f32 0.0, %v1250
    %1252 = vmatmul.bf16.gmra.mxu0 %v1105
    %v1253 = vpop.f32.mrf.mxu0
    %v1254 = vadd.f32 0.0, %v1253
    %v1255 = vpop.f32.mrf.mxu0
    %v1256 = vadd.f32 0.0, %v1255
    %1257 = vmatmul.bf16.gmra.mxu0 %v1108
    %v1258 = vpop.f32.mrf.mxu0
    %v1259 = vadd.f32 0.0, %v1258
    %v1260 = vpop.f32.mrf.mxu0
    %v1261 = vadd.f32 0.0, %v1260
    %1262 = vmatmul.bf16.gmra.mxu0 %v1111
    %v1263 = vpop.f32.mrf.mxu0
    %v1264 = vadd.f32 0.0, %v1263
    %v1265 = vpop.f32.mrf.mxu0
    %v1266 = vadd.f32 0.0, %v1265
    %1267 = vmatmul.bf16.gmra.mxu0 %v1114
    %v1268 = vpop.f32.mrf.mxu0
    %v1269 = vadd.f32 0.0, %v1268
    %v1270 = vpop.f32.mrf.mxu0
    %v1271 = vadd.f32 0.0, %v1270
    %1272 = vmatmul.bf16.gmra.mxu0 %v1117
    %v1273 = vpop.f32.mrf.mxu0
    %v1274 = vadd.f32 0.0, %v1273
    %v1275 = vpop.f32.mrf.mxu0
    %v1276 = vadd.f32 0.0, %v1275
    %1277 = vmatmul.bf16.gmra.mxu0 %v1120
    %v1278 = vpop.f32.mrf.mxu0
    %v1279 = vadd.f32 0.0, %v1278
    %v1280 = vpop.f32.mrf.mxu0
    %v1281 = vadd.f32 0.0, %v1280
    %1282 = vmatmul.bf16.gmra.mxu0 %v1123
    %v1283 = vpop.f32.mrf.mxu0
    %v1284 = vadd.f32 0.0, %v1283
    %v1285 = vpop.f32.mrf.mxu0
    %v1286 = vadd.f32 0.0, %v1285
    %1287 = vmatmul.bf16.gmra.mxu0 %v1126
    %v1288 = vpop.f32.mrf.mxu0
    %v1289 = vadd.f32 0.0, %v1288
    %v1290 = vpop.f32.mrf.mxu0
    %v1291 = vadd.f32 0.0, %v1290
    %1292 = vmatmul.bf16.gmra.mxu0 %v1129
    %v1293 = vpop.f32.mrf.mxu0
    %v1294 = vadd.f32 0.0, %v1293
    %v1295 = vpop.f32.mrf.mxu0
    %v1296 = vadd.f32 0.0, %v1295
    %1297 = vmatmul.bf16.gmra.mxu0 %v1132
    %v1298 = vpop.f32.mrf.mxu0
    %v1299 = vadd.f32 0.0, %v1298
    %v1300 = vpop.f32.mrf.mxu0
    %v1301 = vadd.f32 0.0, %v1300
    %1302 = vdwg.mxu0
    %v1367 = vunpack.c.l.b16 %v22
    %v1368 = vunpack.c.l.b16 %v23
    %v1369 = vunpack.c.l.b16 %v25
    %v1370 = vunpack.c.l.b16 %v26
    %v1371 = vunpack.c.l.b16 %v28
    %v1372 = vunpack.c.l.b16 %v29
    %v1373 = vunpack.c.l.b16 %v31
    %v1374 = vunpack.c.l.b16 %v32
    %v1375 = vunpack.c.l.b16 %v34
    %v1376 = vunpack.c.l.b16 %v35
    %v1377 = vunpack.c.l.b16 %v37
    %v1378 = vunpack.c.l.b16 %v38
    %v1379 = vunpack.c.l.b16 %v40
    %v1380 = vunpack.c.l.b16 %v41
    %v1381 = vunpack.c.l.b16 %v43
    %v1382 = vunpack.c.l.b16 %v44
    %v1383 = vunpack.c.l.b16 %v46
    %v1384 = vunpack.c.l.b16 %v47
    %v1385 = vunpack.c.l.b16 %v49
    %v1386 = vunpack.c.l.b16 %v50
    %v1387 = vunpack.c.l.b16 %v52
    %v1388 = vunpack.c.l.b16 %v53
    %v1389 = vunpack.c.l.b16 %v55
    %v1390 = vunpack.c.l.b16 %v56
    %v1391 = vunpack.c.l.b16 %v58
    %v1392 = vunpack.c.l.b16 %v59
    %v1393 = vunpack.c.l.b16 %v61
    %v1394 = vunpack.c.l.b16 %v62
    %v1395 = vunpack.c.l.b16 %v64
    %v1396 = vunpack.c.l.b16 %v65
    %v1397 = vunpack.c.l.b16 %v67
    %v1398 = vunpack.c.l.b16 %v68
    %v1399 = vunpack.c.l.b16 %v76
    %v1400 = vunpack.c.l.b16 %v77
    %v1401 = vunpack.c.l.b16 %v79
    %v1402 = vunpack.c.l.b16 %v80
    %v1403 = vunpack.c.l.b16 %v82
    %v1404 = vunpack.c.l.b16 %v83
    %v1405 = vunpack.c.l.b16 %v85
    %v1406 = vunpack.c.l.b16 %v86
    %v1407 = vunpack.c.l.b16 %v88
    %v1408 = vunpack.c.l.b16 %v89
    %v1409 = vunpack.c.l.b16 %v91
    %v1410 = vunpack.c.l.b16 %v92
    %v1411 = vunpack.c.l.b16 %v94
    %v1412 = vunpack.c.l.b16 %v95
    %v1413 = vunpack.c.l.b16 %v97
    %v1414 = vunpack.c.l.b16 %v98
    %v1415 = vunpack.c.l.b16 %v100
    %v1416 = vunpack.c.l.b16 %v101
    %v1417 = vunpack.c.l.b16 %v103
    %v1418 = vunpack.c.l.b16 %v104
    %v1419 = vunpack.c.l.b16 %v106
    %v1420 = vunpack.c.l.b16 %v107
    %v1421 = vunpack.c.l.b16 %v109
    %v1422 = vunpack.c.l.b16 %v110
    %v1423 = vunpack.c.l.b16 %v112
    %v1424 = vunpack.c.l.b16 %v113
    %v1425 = vunpack.c.l.b16 %v115
    %v1426 = vunpack.c.l.b16 %v116
    %v1427 = vunpack.c.l.b16 %v118
    %v1428 = vunpack.c.l.b16 %v119
    %v1429 = vunpack.c.l.b16 %v121
    %v1430 = vunpack.c.l.b16 %v122
    %v1431 = vpack.c.b16 %v1368, %v1367
    %v1432 = vpack.c.b16 %v1370, %v1369
    %v1433 = vpack.c.b16 %v1372, %v1371
    %v1434 = vpack.c.b16 %v1374, %v1373
    %v1435 = vpack.c.b16 %v1376, %v1375
    %v1436 = vpack.c.b16 %v1378, %v1377
    %v1437 = vpack.c.b16 %v1380, %v1379
    %v1438 = vpack.c.b16 %v1382, %v1381
    %v1439 = vpack.c.b16 %v1384, %v1383
    %v1440 = vpack.c.b16 %v1386, %v1385
    %v1441 = vpack.c.b16 %v1388, %v1387
    %v1442 = vpack.c.b16 %v1390, %v1389
    %v1443 = vpack.c.b16 %v1392, %v1391
    %v1444 = vpack.c.b16 %v1394, %v1393
    %v1445 = vpack.c.b16 %v1396, %v1395
    %v1446 = vpack.c.b16 %v1398, %v1397
    %v1447 = vpack.c.b16 %v1400, %v1399
    %v1448 = vpack.c.b16 %v1402, %v1401
    %v1449 = vpack.c.b16 %v1404, %v1403
    %v1450 = vpack.c.b16 %v1406, %v1405
    %v1451 = vpack.c.b16 %v1408, %v1407
    %v1452 = vpack.c.b16 %v1410, %v1409
    %v1453 = vpack.c.b16 %v1412, %v1411
    %v1454 = vpack.c.b16 %v1414, %v1413
    %v1455 = vpack.c.b16 %v1416, %v1415
    %v1456 = vpack.c.b16 %v1418, %v1417
    %v1457 = vpack.c.b16 %v1420, %v1419
    %v1458 = vpack.c.b16 %v1422, %v1421
    %v1459 = vpack.c.b16 %v1424, %v1423
    %v1460 = vpack.c.b16 %v1426, %v1425
    %v1461 = vpack.c.b16 %v1428, %v1427
    %v1462 = vpack.c.b16 %v1430, %v1429
    %v1471 = vunpack.c.l.b16 %v130
    %v1472 = vunpack.c.l.b16 %v131
    %v1473 = vunpack.c.l.b16 %v132
    %v1474 = vunpack.c.l.b16 %v133
    %v1475 = vunpack.c.l.b16 %v134
    %v1476 = vunpack.c.l.b16 %v135
    %v1477 = vunpack.c.l.b16 %v136
    %v1478 = vunpack.c.l.b16 %v137
    %v1479 = vpack.c.b16 %v1472, %v1471
    %v1480 = vpack.c.b16 %v1474, %v1473
    %v1481 = vpack.c.b16 %v1476, %v1475
    %v1482 = vpack.c.b16 %v1478, %v1477
    %v1488 = vsel %vm1037, %v1431, 0
    %v1491 = vsel %vm1037, %v1432, 0
    %v1494 = vsel %vm1037, %v1433, 0
    %v1497 = vsel %vm1037, %v1434, 0
    %v1500 = vsel %vm1037, %v1435, 0
    %v1503 = vsel %vm1037, %v1436, 0
    %v1506 = vsel %vm1037, %v1437, 0
    %v1509 = vsel %vm1037, %v1438, 0
    %v1512 = vsel %vm1037, %v1439, 0
    %v1515 = vsel %vm1037, %v1440, 0
    %v1518 = vsel %vm1037, %v1441, 0
    %v1521 = vsel %vm1037, %v1442, 0
    %v1524 = vsel %vm1037, %v1443, 0
    %v1527 = vsel %vm1037, %v1444, 0
    %v1530 = vsel %vm1037, %v1445, 0
    %v1533 = vsel %vm1037, %v1446, 0
    %v1536 = vsel %vm1037, %v1447, 0
    %v1539 = vsel %vm1037, %v1448, 0
    %v1542 = vsel %vm1037, %v1449, 0
    %v1545 = vsel %vm1037, %v1450, 0
    %v1548 = vsel %vm1037, %v1451, 0
    %v1551 = vsel %vm1037, %v1452, 0
    %v1554 = vsel %vm1037, %v1453, 0
    %v1557 = vsel %vm1037, %v1454, 0
    %v1560 = vsel %vm1037, %v1455, 0
    %v1563 = vsel %vm1037, %v1456, 0
    %v1566 = vsel %vm1037, %v1457, 0
    %v1569 = vsel %vm1037, %v1458, 0
    %v1572 = vsel %vm1037, %v1459, 0
    %v1575 = vsel %vm1037, %v1460, 0
    %v1578 = vsel %vm1037, %v1461, 0
    %v1581 = vsel %vm1037, %v1462, 0
    %1583 = vmatpush.bf16.msra.mxu0 0
    %1584 = vmatpush.bf16.msra.mxu0 0
    %1585 = vmatpush.bf16.msra.mxu0 0
    %1586 = vmatpush.bf16.msra.mxu0 0
    %1587 = vmatpush.bf16.msra.mxu0 %v1482
    %1588 = vmatpush.bf16.msra.mxu0 %v1481
    %1589 = vmatpush.bf16.msra.mxu0 %v1480
    %1590 = vmatpush.bf16.msra.mxu0 %v1479
    %1591 = vmatmul.bf16.gmra.mxu0 %v1488
    %v1592 = vpop.f32.mrf.mxu0
    %v1593 = vadd.f32 %v1144, %v1592
    %v1594 = vpop.f32.mrf.mxu0
    %v1595 = vadd.f32 %v1146, %v1594
    %1596 = vmatmul.bf16.gmra.mxu0 %v1491
    %v1597 = vpop.f32.mrf.mxu0
    %v1598 = vadd.f32 %v1149, %v1597
    %v1599 = vpop.f32.mrf.mxu0
    %v1600 = vadd.f32 %v1151, %v1599
    %1601 = vmatmul.bf16.gmra.mxu0 %v1494
    %v1602 = vpop.f32.mrf.mxu0
    %v1603 = vadd.f32 %v1154, %v1602
    %v1604 = vpop.f32.mrf.mxu0
    %v1605 = vadd.f32 %v1156, %v1604
    %1606 = vmatmul.bf16.gmra.mxu0 %v1497
    %v1607 = vpop.f32.mrf.mxu0
    %v1608 = vadd.f32 %v1159, %v1607
    %v1609 = vpop.f32.mrf.mxu0
    %v1610 = vadd.f32 %v1161, %v1609
    %1611 = vmatmul.bf16.gmra.mxu0 %v1500
    %v1612 = vpop.f32.mrf.mxu0
    %v1613 = vadd.f32 %v1164, %v1612
    %v1614 = vpop.f32.mrf.mxu0
    %v1615 = vadd.f32 %v1166, %v1614
    %1616 = vmatmul.bf16.gmra.mxu0 %v1503
    %v1617 = vpop.f32.mrf.mxu0
    %v1618 = vadd.f32 %v1169, %v1617
    %v1619 = vpop.f32.mrf.mxu0
    %v1620 = vadd.f32 %v1171, %v1619
    %1621 = vmatmul.bf16.gmra.mxu0 %v1506
    %v1622 = vpop.f32.mrf.mxu0
    %v1623 = vadd.f32 %v1174, %v1622
    %v1624 = vpop.f32.mrf.mxu0
    %v1625 = vadd.f32 %v1176, %v1624
    %1626 = vmatmul.bf16.gmra.mxu0 %v1509
    %v1627 = vpop.f32.mrf.mxu0
    %v1628 = vadd.f32 %v1179, %v1627
    %v1629 = vpop.f32.mrf.mxu0
    %v1630 = vadd.f32 %v1181, %v1629
    %1631 = vmatmul.bf16.gmra.mxu0 %v1512
    %v1632 = vpop.f32.mrf.mxu0
    %v1633 = vadd.f32 %v1184, %v1632
    %v1634 = vpop.f32.mrf.mxu0
    %v1635 = vadd.f32 %v1186, %v1634
    %1636 = vmatmul.bf16.gmra.mxu0 %v1515
    %v1637 = vpop.f32.mrf.mxu0
    %v1638 = vadd.f32 %v1189, %v1637
    %v1639 = vpop.f32.mrf.mxu0
    %v1640 = vadd.f32 %v1191, %v1639
    %1641 = vmatmul.bf16.gmra.mxu0 %v1518
    %v1642 = vpop.f32.mrf.mxu0
    %v1643 = vadd.f32 %v1194, %v1642
    %v1644 = vpop.f32.mrf.mxu0
    %v1645 = vadd.f32 %v1196, %v1644
    %1646 = vmatmul.bf16.gmra.mxu0 %v1521
    %v1647 = vpop.f32.mrf.mxu0
    %v1648 = vadd.f32 %v1199, %v1647
    %v1649 = vpop.f32.mrf.mxu0
    %v1650 = vadd.f32 %v1201, %v1649
    %1651 = vmatmul.bf16.gmra.mxu0 %v1524
    %v1652 = vpop.f32.mrf.mxu0
    %v1653 = vadd.f32 %v1204, %v1652
    %v1654 = vpop.f32.mrf.mxu0
    %v1655 = vadd.f32 %v1206, %v1654
    %1656 = vmatmul.bf16.gmra.mxu0 %v1527
    %v1657 = vpop.f32.mrf.mxu0
    %v1658 = vadd.f32 %v1209, %v1657
    %v1659 = vpop.f32.mrf.mxu0
    %v1660 = vadd.f32 %v1211, %v1659
    %1661 = vmatmul.bf16.gmra.mxu0 %v1530
    %v1662 = vpop.f32.mrf.mxu0
    %v1663 = vadd.f32 %v1214, %v1662
    %v1664 = vpop.f32.mrf.mxu0
    %v1665 = vadd.f32 %v1216, %v1664
    %1666 = vmatmul.bf16.gmra.mxu0 %v1533
    %v1667 = vpop.f32.mrf.mxu0
    %v1668 = vadd.f32 %v1219, %v1667
    %v1669 = vpop.f32.mrf.mxu0
    %v1670 = vadd.f32 %v1221, %v1669
    %1671 = vmatmul.bf16.gmra.mxu0 %v1536
    %v1672 = vpop.f32.mrf.mxu0
    %v1673 = vadd.f32 %v1224, %v1672
    %v1674 = vpop.f32.mrf.mxu0
    %v1675 = vadd.f32 %v1226, %v1674
    %1676 = vmatmul.bf16.gmra.mxu0 %v1539
    %v1677 = vpop.f32.mrf.mxu0
    %v1678 = vadd.f32 %v1229, %v1677
    %v1679 = vpop.f32.mrf.mxu0
    %v1680 = vadd.f32 %v1231, %v1679
    %1681 = vmatmul.bf16.gmra.mxu0 %v1542
    %v1682 = vpop.f32.mrf.mxu0
    %v1683 = vadd.f32 %v1234, %v1682
    %v1684 = vpop.f32.mrf.mxu0
    %v1685 = vadd.f32 %v1236, %v1684
    %1686 = vmatmul.bf16.gmra.mxu0 %v1545
    %v1687 = vpop.f32.mrf.mxu0
    %v1688 = vadd.f32 %v1239, %v1687
    %v1689 = vpop.f32.mrf.mxu0
    %v1690 = vadd.f32 %v1241, %v1689
    %1691 = vmatmul.bf16.gmra.mxu0 %v1548
    %v1692 = vpop.f32.mrf.mxu0
    %v1693 = vadd.f32 %v1244, %v1692
    %v1694 = vpop.f32.mrf.mxu0
    %v1695 = vadd.f32 %v1246, %v1694
    %1696 = vmatmul.bf16.gmra.mxu0 %v1551
    %v1697 = vpop.f32.mrf.mxu0
    %v1698 = vadd.f32 %v1249, %v1697
    %v1699 = vpop.f32.mrf.mxu0
    %v1700 = vadd.f32 %v1251, %v1699
    %1701 = vmatmul.bf16.gmra.mxu0 %v1554
    %v1702 = vpop.f32.mrf.mxu0
    %v1703 = vadd.f32 %v1254, %v1702
    %v1704 = vpop.f32.mrf.mxu0
    %v1705 = vadd.f32 %v1256, %v1704
    %1706 = vmatmul.bf16.gmra.mxu0 %v1557
    %v1707 = vpop.f32.mrf.mxu0
    %v1708 = vadd.f32 %v1259, %v1707
    %v1709 = vpop.f32.mrf.mxu0
    %v1710 = vadd.f32 %v1261, %v1709
    %1711 = vmatmul.bf16.gmra.mxu0 %v1560
    %v1712 = vpop.f32.mrf.mxu0
    %v1713 = vadd.f32 %v1264, %v1712
    %v1714 = vpop.f32.mrf.mxu0
    %v1715 = vadd.f32 %v1266, %v1714
    %1716 = vmatmul.bf16.gmra.mxu0 %v1563
    %v1717 = vpop.f32.mrf.mxu0
    %v1718 = vadd.f32 %v1269, %v1717
    %v1719 = vpop.f32.mrf.mxu0
    %v1720 = vadd.f32 %v1271, %v1719
    %1721 = vmatmul.bf16.gmra.mxu0 %v1566
    %v1722 = vpop.f32.mrf.mxu0
    %v1723 = vadd.f32 %v1274, %v1722
    %v1724 = vpop.f32.mrf.mxu0
    %v1725 = vadd.f32 %v1276, %v1724
    %1726 = vmatmul.bf16.gmra.mxu0 %v1569
    %v1727 = vpop.f32.mrf.mxu0
    %v1728 = vadd.f32 %v1279, %v1727
    %v1729 = vpop.f32.mrf.mxu0
    %v1730 = vadd.f32 %v1281, %v1729
    %1731 = vmatmul.bf16.gmra.mxu0 %v1572
    %v1732 = vpop.f32.mrf.mxu0
    %v1733 = vadd.f32 %v1284, %v1732
    %v1734 = vpop.f32.mrf.mxu0
    %v1735 = vadd.f32 %v1286, %v1734
    %1736 = vmatmul.bf16.gmra.mxu0 %v1575
    %v1737 = vpop.f32.mrf.mxu0
    %v1738 = vadd.f32 %v1289, %v1737
    %v1739 = vpop.f32.mrf.mxu0
    %v1740 = vadd.f32 %v1291, %v1739
    %1741 = vmatmul.bf16.gmra.mxu0 %v1578
    %v1742 = vpop.f32.mrf.mxu0
    %v1743 = vadd.f32 %v1294, %v1742
    %v1744 = vpop.f32.mrf.mxu0
    %v1745 = vadd.f32 %v1296, %v1744
    %1746 = vmatmul.bf16.gmra.mxu0 %v1581
    %v1747 = vpop.f32.mrf.mxu0
    %v1748 = vadd.f32 %v1299, %v1747
    %v1749 = vpop.f32.mrf.mxu0
    %v1750 = vadd.f32 %v1301, %v1749
    %1751 = vdwg.mxu0
    %vm1784 = vcmask 1042432
    %vm1785 = vcmask 1046532
    %vm1786 = vmor %vm1784, %vm1785
    %v1787 = vrot.slane %v22, 5
    %v1788 = vrot.slane %v1787, 4
    %v1789 = vrot.slane %v23, 5
    %v1790 = vsel %vm1786, %v1788, %v1789
    %v1791 = vrot.slane %v1789, 4
    %v1792 = vrot.slane %v24, 5
    %v1793 = vsel %vm1786, %v1791, %v1792
    %v1794 = vrot.slane %v25, 5
    %v1795 = vrot.slane %v1794, 4
    %v1796 = vrot.slane %v26, 5
    %v1797 = vsel %vm1786, %v1795, %v1796
    %v1798 = vrot.slane %v1796, 4
    %v1799 = vrot.slane %v27, 5
    %v1800 = vsel %vm1786, %v1798, %v1799
    %v1801 = vrot.slane %v28, 5
    %v1802 = vrot.slane %v1801, 4
    %v1803 = vrot.slane %v29, 5
    %v1804 = vsel %vm1786, %v1802, %v1803
    %v1805 = vrot.slane %v1803, 4
    %v1806 = vrot.slane %v30, 5
    %v1807 = vsel %vm1786, %v1805, %v1806
    %v1808 = vrot.slane %v31, 5
    %v1809 = vrot.slane %v1808, 4
    %v1810 = vrot.slane %v32, 5
    %v1811 = vsel %vm1786, %v1809, %v1810
    %v1812 = vrot.slane %v1810, 4
    %v1813 = vrot.slane %v33, 5
    %v1814 = vsel %vm1786, %v1812, %v1813
    %v1815 = vrot.slane %v34, 5
    %v1816 = vrot.slane %v1815, 4
    %v1817 = vrot.slane %v35, 5
    %v1818 = vsel %vm1786, %v1816, %v1817
    %v1819 = vrot.slane %v1817, 4
    %v1820 = vrot.slane %v36, 5
    %v1821 = vsel %vm1786, %v1819, %v1820
    %v1822 = vrot.slane %v37, 5
    %v1823 = vrot.slane %v1822, 4
    %v1824 = vrot.slane %v38, 5
    %v1825 = vsel %vm1786, %v1823, %v1824
    %v1826 = vrot.slane %v1824, 4
    %v1827 = vrot.slane %v39, 5
    %v1828 = vsel %vm1786, %v1826, %v1827
    %v1829 = vrot.slane %v40, 5
    %v1830 = vrot.slane %v1829, 4
    %v1831 = vrot.slane %v41, 5
    %v1832 = vsel %vm1786, %v1830, %v1831
    %v1833 = vrot.slane %v1831, 4
    %v1834 = vrot.slane %v42, 5
    %v1835 = vsel %vm1786, %v1833, %v1834
    %v1836 = vrot.slane %v43, 5
    %v1837 = vrot.slane %v1836, 4
    %v1838 = vrot.slane %v44, 5
    %v1839 = vsel %vm1786, %v1837, %v1838
    %v1840 = vrot.slane %v1838, 4
    %v1841 = vrot.slane %v45, 5
    %v1842 = vsel %vm1786, %v1840, %v1841
    %v1843 = vrot.slane %v46, 5
    %v1844 = vrot.slane %v1843, 4
    %v1845 = vrot.slane %v47, 5
    %v1846 = vsel %vm1786, %v1844, %v1845
    %v1847 = vrot.slane %v1845, 4
    %v1848 = vrot.slane %v48, 5
    %v1849 = vsel %vm1786, %v1847, %v1848
    %v1850 = vrot.slane %v49, 5
    %v1851 = vrot.slane %v1850, 4
    %v1852 = vrot.slane %v50, 5
    %v1853 = vsel %vm1786, %v1851, %v1852
    %v1854 = vrot.slane %v1852, 4
    %v1855 = vrot.slane %v51, 5
    %v1856 = vsel %vm1786, %v1854, %v1855
    %v1857 = vrot.slane %v52, 5
    %v1858 = vrot.slane %v1857, 4
    %v1859 = vrot.slane %v53, 5
    %v1860 = vsel %vm1786, %v1858, %v1859
    %v1861 = vrot.slane %v1859, 4
    %v1862 = vrot.slane %v54, 5
    %v1863 = vsel %vm1786, %v1861, %v1862
    %v1864 = vrot.slane %v55, 5
    %v1865 = vrot.slane %v1864, 4
    %v1866 = vrot.slane %v56, 5
    %v1867 = vsel %vm1786, %v1865, %v1866
    %v1868 = vrot.slane %v1866, 4
    %v1869 = vrot.slane %v57, 5
    %v1870 = vsel %vm1786, %v1868, %v1869
    %v1871 = vrot.slane %v58, 5
    %v1872 = vrot.slane %v1871, 4
    %v1873 = vrot.slane %v59, 5
    %v1874 = vsel %vm1786, %v1872, %v1873
    %v1875 = vrot.slane %v1873, 4
    %v1876 = vrot.slane %v60, 5
    %v1877 = vsel %vm1786, %v1875, %v1876
    %v1878 = vrot.slane %v61, 5
    %v1879 = vrot.slane %v1878, 4
    %v1880 = vrot.slane %v62, 5
    %v1881 = vsel %vm1786, %v1879, %v1880
    %v1882 = vrot.slane %v1880, 4
    %v1883 = vrot.slane %v63, 5
    %v1884 = vsel %vm1786, %v1882, %v1883
    %v1885 = vrot.slane %v64, 5
    %v1886 = vrot.slane %v1885, 4
    %v1887 = vrot.slane %v65, 5
    %v1888 = vsel %vm1786, %v1886, %v1887
    %v1889 = vrot.slane %v1887, 4
    %v1890 = vrot.slane %v66, 5
    %v1891 = vsel %vm1786, %v1889, %v1890
    %v1892 = vrot.slane %v67, 5
    %v1893 = vrot.slane %v1892, 4
    %v1894 = vrot.slane %v68, 5
    %v1895 = vsel %vm1786, %v1893, %v1894
    %v1896 = vrot.slane %v1894, 4
    %v1897 = vrot.slane %v69, 5
    %v1898 = vsel %vm1786, %v1896, %v1897
    %v1899 = vrot.slane %v76, 5
    %v1900 = vrot.slane %v1899, 4
    %v1901 = vrot.slane %v77, 5
    %v1902 = vsel %vm1786, %v1900, %v1901
    %v1903 = vrot.slane %v1901, 4
    %v1904 = vrot.slane %v78, 5
    %v1905 = vsel %vm1786, %v1903, %v1904
    %v1906 = vrot.slane %v79, 5
    %v1907 = vrot.slane %v1906, 4
    %v1908 = vrot.slane %v80, 5
    %v1909 = vsel %vm1786, %v1907, %v1908
    %v1910 = vrot.slane %v1908, 4
    %v1911 = vrot.slane %v81, 5
    %v1912 = vsel %vm1786, %v1910, %v1911
    %v1913 = vrot.slane %v82, 5
    %v1914 = vrot.slane %v1913, 4
    %v1915 = vrot.slane %v83, 5
    %v1916 = vsel %vm1786, %v1914, %v1915
    %v1917 = vrot.slane %v1915, 4
    %v1918 = vrot.slane %v84, 5
    %v1919 = vsel %vm1786, %v1917, %v1918
    %v1920 = vrot.slane %v85, 5
    %v1921 = vrot.slane %v1920, 4
    %v1922 = vrot.slane %v86, 5
    %v1923 = vsel %vm1786, %v1921, %v1922
    %v1924 = vrot.slane %v1922, 4
    %v1925 = vrot.slane %v87, 5
    %v1926 = vsel %vm1786, %v1924, %v1925
    %v1927 = vrot.slane %v88, 5
    %v1928 = vrot.slane %v1927, 4
    %v1929 = vrot.slane %v89, 5
    %v1930 = vsel %vm1786, %v1928, %v1929
    %v1931 = vrot.slane %v1929, 4
    %v1932 = vrot.slane %v90, 5
    %v1933 = vsel %vm1786, %v1931, %v1932
    %v1934 = vrot.slane %v91, 5
    %v1935 = vrot.slane %v1934, 4
    %v1936 = vrot.slane %v92, 5
    %v1937 = vsel %vm1786, %v1935, %v1936
    %v1938 = vrot.slane %v1936, 4
    %v1939 = vrot.slane %v93, 5
    %v1940 = vsel %vm1786, %v1938, %v1939
    %v1941 = vrot.slane %v94, 5
    %v1942 = vrot.slane %v1941, 4
    %v1943 = vrot.slane %v95, 5
    %v1944 = vsel %vm1786, %v1942, %v1943
    %v1945 = vrot.slane %v1943, 4
    %v1946 = vrot.slane %v96, 5
    %v1947 = vsel %vm1786, %v1945, %v1946
    %v1948 = vrot.slane %v97, 5
    %v1949 = vrot.slane %v1948, 4
    %v1950 = vrot.slane %v98, 5
    %v1951 = vsel %vm1786, %v1949, %v1950
    %v1952 = vrot.slane %v1950, 4
    %v1953 = vrot.slane %v99, 5
    %v1954 = vsel %vm1786, %v1952, %v1953
    %v1955 = vrot.slane %v100, 5
    %v1956 = vrot.slane %v1955, 4
    %v1957 = vrot.slane %v101, 5
    %v1958 = vsel %vm1786, %v1956, %v1957
    %v1959 = vrot.slane %v1957, 4
    %v1960 = vrot.slane %v102, 5
    %v1961 = vsel %vm1786, %v1959, %v1960
    %v1962 = vrot.slane %v103, 5
    %v1963 = vrot.slane %v1962, 4
    %v1964 = vrot.slane %v104, 5
    %v1965 = vsel %vm1786, %v1963, %v1964
    %v1966 = vrot.slane %v1964, 4
    %v1967 = vrot.slane %v105, 5
    %v1968 = vsel %vm1786, %v1966, %v1967
    %v1969 = vrot.slane %v106, 5
    %v1970 = vrot.slane %v1969, 4
    %v1971 = vrot.slane %v107, 5
    %v1972 = vsel %vm1786, %v1970, %v1971
    %v1973 = vrot.slane %v1971, 4
    %v1974 = vrot.slane %v108, 5
    %v1975 = vsel %vm1786, %v1973, %v1974
    %v1976 = vrot.slane %v109, 5
    %v1977 = vrot.slane %v1976, 4
    %v1978 = vrot.slane %v110, 5
    %v1979 = vsel %vm1786, %v1977, %v1978
    %v1980 = vrot.slane %v1978, 4
    %v1981 = vrot.slane %v111, 5
    %v1982 = vsel %vm1786, %v1980, %v1981
    %v1983 = vrot.slane %v112, 5
    %v1984 = vrot.slane %v1983, 4
    %v1985 = vrot.slane %v113, 5
    %v1986 = vsel %vm1786, %v1984, %v1985
    %v1987 = vrot.slane %v1985, 4
    %v1988 = vrot.slane %v114, 5
    %v1989 = vsel %vm1786, %v1987, %v1988
    %v1990 = vrot.slane %v115, 5
    %v1991 = vrot.slane %v1990, 4
    %v1992 = vrot.slane %v116, 5
    %v1993 = vsel %vm1786, %v1991, %v1992
    %v1994 = vrot.slane %v1992, 4
    %v1995 = vrot.slane %v117, 5
    %v1996 = vsel %vm1786, %v1994, %v1995
    %v1997 = vrot.slane %v118, 5
    %v1998 = vrot.slane %v1997, 4
    %v1999 = vrot.slane %v119, 5
    %v2000 = vsel %vm1786, %v1998, %v1999
    %v2001 = vrot.slane %v1999, 4
    %v2002 = vrot.slane %v120, 5
    %v2003 = vsel %vm1786, %v2001, %v2002
    %v2004 = vrot.slane %v121, 5
    %v2005 = vrot.slane %v2004, 4
    %v2006 = vrot.slane %v122, 5
    %v2007 = vsel %vm1786, %v2005, %v2006
    %v2008 = vrot.slane %v2006, 4
    %v2009 = vrot.slane %v123, 5
    %v2010 = vsel %vm1786, %v2008, %v2009
    %v2011 = vld [vmem:[%s1 + $0x40] sm:$0xf]
    %v2012 = vld [vmem:[%s1 + $0x44] sm:$0xf]
    %v2013 = vld [vmem:[%s1 + $0x48] sm:$0xf]
    %v2014 = vld [vmem:[%s1 + $0x4c] sm:$0xf]
    %v2015 = vld [vmem:[%s1 + $0x50] sm:$0xf]
    %v2016 = vld [vmem:[%s1 + $0x54] sm:$0xf]
    %v2017 = vld [vmem:[%s1 + $0x58] sm:$0xf]
    %v2018 = vld [vmem:[%s1 + $0x5c] sm:$0xf]
    %v2019 = vunpack.c.l.b16 %v1790
    %v2020 = vunpack.c.l.b16 %v1793
    %v2021 = vunpack.c.l.b16 %v1797
    %v2022 = vunpack.c.l.b16 %v1800
    %v2023 = vunpack.c.l.b16 %v1804
    %v2024 = vunpack.c.l.b16 %v1807
    %v2025 = vunpack.c.l.b16 %v1811
    %v2026 = vunpack.c.l.b16 %v1814
    %v2027 = vunpack.c.l.b16 %v1818
    %v2028 = vunpack.c.l.b16 %v1821
    %v2029 = vunpack.c.l.b16 %v1825
    %v2030 = vunpack.c.l.b16 %v1828
    %v2031 = vunpack.c.l.b16 %v1832
    %v2032 = vunpack.c.l.b16 %v1835
    %v2033 = vunpack.c.l.b16 %v1839
    %v2034 = vunpack.c.l.b16 %v1842
    %v2035 = vunpack.c.l.b16 %v1846
    %v2036 = vunpack.c.l.b16 %v1849
    %v2037 = vunpack.c.l.b16 %v1853
    %v2038 = vunpack.c.l.b16 %v1856
    %v2039 = vunpack.c.l.b16 %v1860
    %v2040 = vunpack.c.l.b16 %v1863
    %v2041 = vunpack.c.l.b16 %v1867
    %v2042 = vunpack.c.l.b16 %v1870
    %v2043 = vunpack.c.l.b16 %v1874
    %v2044 = vunpack.c.l.b16 %v1877
    %v2045 = vunpack.c.l.b16 %v1881
    %v2046 = vunpack.c.l.b16 %v1884
    %v2047 = vunpack.c.l.b16 %v1888
    %v2048 = vunpack.c.l.b16 %v1891
    %v2049 = vunpack.c.l.b16 %v1895
    %v2050 = vunpack.c.l.b16 %v1898
    %v2051 = vunpack.c.l.b16 %v1902
    %v2052 = vunpack.c.l.b16 %v1905
    %v2053 = vunpack.c.l.b16 %v1909
    %v2054 = vunpack.c.l.b16 %v1912
    %v2055 = vunpack.c.l.b16 %v1916
    %v2056 = vunpack.c.l.b16 %v1919
    %v2057 = vunpack.c.l.b16 %v1923
    %v2058 = vunpack.c.l.b16 %v1926
    %v2059 = vunpack.c.l.b16 %v1930
    %v2060 = vunpack.c.l.b16 %v1933
    %v2061 = vunpack.c.l.b16 %v1937
    %v2062 = vunpack.c.l.b16 %v1940
    %v2063 = vunpack.c.l.b16 %v1944
    %v2064 = vunpack.c.l.b16 %v1947
    %v2065 = vunpack.c.l.b16 %v1951
    %v2066 = vunpack.c.l.b16 %v1954
    %v2067 = vunpack.c.l.b16 %v1958
    %v2068 = vunpack.c.l.b16 %v1961
    %v2069 = vunpack.c.l.b16 %v1965
    %v2070 = vunpack.c.l.b16 %v1968
    %v2071 = vunpack.c.l.b16 %v1972
    %v2072 = vunpack.c.l.b16 %v1975
    %v2073 = vunpack.c.l.b16 %v1979
    %v2074 = vunpack.c.l.b16 %v1982
    %v2075 = vunpack.c.l.b16 %v1986
    %v2076 = vunpack.c.l.b16 %v1989
    %v2077 = vunpack.c.l.b16 %v1993
    %v2078 = vunpack.c.l.b16 %v1996
    %v2079 = vunpack.c.l.b16 %v2000
    %v2080 = vunpack.c.l.b16 %v2003
    %v2081 = vunpack.c.l.b16 %v2007
    %v2082 = vunpack.c.l.b16 %v2010
    %v2083 = vpack.c.b16 %v2020, %v2019
    %v2084 = vpack.c.b16 %v2022, %v2021
    %v2085 = vpack.c.b16 %v2024, %v2023
    %v2086 = vpack.c.b16 %v2026, %v2025
    %v2087 = vpack.c.b16 %v2028, %v2027
    %v2088 = vpack.c.b16 %v2030, %v2029
    %v2089 = vpack.c.b16 %v2032, %v2031
    %v2090 = vpack.c.b16 %v2034, %v2033
    %v2091 = vpack.c.b16 %v2036, %v2035
    %v2092 = vpack.c.b16 %v2038, %v2037
    %v2093 = vpack.c.b16 %v2040, %v2039
    %v2094 = vpack.c.b16 %v2042, %v2041
    %v2095 = vpack.c.b16 %v2044, %v2043
    %v2096 = vpack.c.b16 %v2046, %v2045
    %v2097 = vpack.c.b16 %v2048, %v2047
    %v2098 = vpack.c.b16 %v2050, %v2049
    %v2099 = vpack.c.b16 %v2052, %v2051
    %v2100 = vpack.c.b16 %v2054, %v2053
    %v2101 = vpack.c.b16 %v2056, %v2055
    %v2102 = vpack.c.b16 %v2058, %v2057
    %v2103 = vpack.c.b16 %v2060, %v2059
    %v2104 = vpack.c.b16 %v2062, %v2061
    %v2105 = vpack.c.b16 %v2064, %v2063
    %v2106 = vpack.c.b16 %v2066, %v2065
    %v2107 = vpack.c.b16 %v2068, %v2067
    %v2108 = vpack.c.b16 %v2070, %v2069
    %v2109 = vpack.c.b16 %v2072, %v2071
    %v2110 = vpack.c.b16 %v2074, %v2073
    %v2111 = vpack.c.b16 %v2076, %v2075
    %v2112 = vpack.c.b16 %v2078, %v2077
    %v2113 = vpack.c.b16 %v2080, %v2079
    %v2114 = vpack.c.b16 %v2082, %v2081
    %v2123 = vunpack.c.l.b16 %v2011
    %v2124 = vunpack.c.l.b16 %v2012
    %v2125 = vunpack.c.l.b16 %v2013
    %v2126 = vunpack.c.l.b16 %v2014
    %v2127 = vunpack.c.l.b16 %v2015
    %v2128 = vunpack.c.l.b16 %v2016
    %v2129 = vunpack.c.l.b16 %v2017
    %v2130 = vunpack.c.l.b16 %v2018
    %v2131 = vpack.c.b16 %v2124, %v2123
    %v2132 = vpack.c.b16 %v2126, %v2125
    %v2133 = vpack.c.b16 %v2128, %v2127
    %v2134 = vpack.c.b16 %v2130, %v2129
    %v2140 = vsel %vm1037, %v2083, 0
    %v2143 = vsel %vm1037, %v2084, 0
    %v2146 = vsel %vm1037, %v2085, 0
    %v2149 = vsel %vm1037, %v2086, 0
    %v2152 = vsel %vm1037, %v2087, 0
    %v2155 = vsel %vm1037, %v2088, 0
    %v2158 = vsel %vm1037, %v2089, 0
    %v2161 = vsel %vm1037, %v2090, 0
    %v2164 = vsel %vm1037, %v2091, 0
    %v2167 = vsel %vm1037, %v2092, 0
    %v2170 = vsel %vm1037, %v2093, 0
    %v2173 = vsel %vm1037, %v2094, 0
    %v2176 = vsel %vm1037, %v2095, 0
    %v2179 = vsel %vm1037, %v2096, 0
    %v2182 = vsel %vm1037, %v2097, 0
    %v2185 = vsel %vm1037, %v2098, 0
    %v2188 = vsel %vm1037, %v2099, 0
    %v2191 = vsel %vm1037, %v2100, 0
    %v2194 = vsel %vm1037, %v2101, 0
    %v2197 = vsel %vm1037, %v2102, 0
    %v2200 = vsel %vm1037, %v2103, 0
    %v2203 = vsel %vm1037, %v2104, 0
    %v2206 = vsel %vm1037, %v2105, 0
    %v2209 = vsel %vm1037, %v2106, 0
    %v2212 = vsel %vm1037, %v2107, 0
    %v2215 = vsel %vm1037, %v2108, 0
    %v2218 = vsel %vm1037, %v2109, 0
    %v2221 = vsel %vm1037, %v2110, 0
    %v2224 = vsel %vm1037, %v2111, 0
    %v2227 = vsel %vm1037, %v2112, 0
    %v2230 = vsel %vm1037, %v2113, 0
    %v2233 = vsel %vm1037, %v2114, 0
    %2235 = vmatpush.bf16.msra.mxu0 0
    %2236 = vmatpush.bf16.msra.mxu0 0
    %2237 = vmatpush.bf16.msra.mxu0 0
    %2238 = vmatpush.bf16.msra.mxu0 0
    %2239 = vmatpush.bf16.msra.mxu0 %v2134
    %2240 = vmatpush.bf16.msra.mxu0 %v2133
    %2241 = vmatpush.bf16.msra.mxu0 %v2132
    %2242 = vmatpush.bf16.msra.mxu0 %v2131
    %2243 = vmatmul.bf16.gmra.mxu0 %v2140
    %v2244 = vpop.f32.mrf.mxu0
    %v2245 = vadd.f32 0.0, %v2244
    %v2246 = vpop.f32.mrf.mxu0
    %v2247 = vadd.f32 0.0, %v2246
    %2248 = vmatmul.bf16.gmra.mxu0 %v2143
    %v2249 = vpop.f32.mrf.mxu0
    %v2250 = vadd.f32 0.0, %v2249
    %v2251 = vpop.f32.mrf.mxu0
    %v2252 = vadd.f32 0.0, %v2251
    %2253 = vmatmul.bf16.gmra.mxu0 %v2146
    %v2254 = vpop.f32.mrf.mxu0
    %v2255 = vadd.f32 0.0, %v2254
    %v2256 = vpop.f32.mrf.mxu0
    %v2257 = vadd.f32 0.0, %v2256
    %2258 = vmatmul.bf16.gmra.mxu0 %v2149
    %v2259 = vpop.f32.mrf.mxu0
    %v2260 = vadd.f32 0.0, %v2259
    %v2261 = vpop.f32.mrf.mxu0
    %v2262 = vadd.f32 0.0, %v2261
    %2263 = vmatmul.bf16.gmra.mxu0 %v2152
    %v2264 = vpop.f32.mrf.mxu0
    %v2265 = vadd.f32 0.0, %v2264
    %v2266 = vpop.f32.mrf.mxu0
    %v2267 = vadd.f32 0.0, %v2266
    %2268 = vmatmul.bf16.gmra.mxu0 %v2155
    %v2269 = vpop.f32.mrf.mxu0
    %v2270 = vadd.f32 0.0, %v2269
    %v2271 = vpop.f32.mrf.mxu0
    %v2272 = vadd.f32 0.0, %v2271
    %2273 = vmatmul.bf16.gmra.mxu0 %v2158
    %v2274 = vpop.f32.mrf.mxu0
    %v2275 = vadd.f32 0.0, %v2274
    %v2276 = vpop.f32.mrf.mxu0
    %v2277 = vadd.f32 0.0, %v2276
    %2278 = vmatmul.bf16.gmra.mxu0 %v2161
    %v2279 = vpop.f32.mrf.mxu0
    %v2280 = vadd.f32 0.0, %v2279
    %v2281 = vpop.f32.mrf.mxu0
    %v2282 = vadd.f32 0.0, %v2281
    %2283 = vmatmul.bf16.gmra.mxu0 %v2164
    %v2284 = vpop.f32.mrf.mxu0
    %v2285 = vadd.f32 0.0, %v2284
    %v2286 = vpop.f32.mrf.mxu0
    %v2287 = vadd.f32 0.0, %v2286
    %2288 = vmatmul.bf16.gmra.mxu0 %v2167
    %v2289 = vpop.f32.mrf.mxu0
    %v2290 = vadd.f32 0.0, %v2289
    %v2291 = vpop.f32.mrf.mxu0
    %v2292 = vadd.f32 0.0, %v2291
    %2293 = vmatmul.bf16.gmra.mxu0 %v2170
    %v2294 = vpop.f32.mrf.mxu0
    %v2295 = vadd.f32 0.0, %v2294
    %v2296 = vpop.f32.mrf.mxu0
    %v2297 = vadd.f32 0.0, %v2296
    %2298 = vmatmul.bf16.gmra.mxu0 %v2173
    %v2299 = vpop.f32.mrf.mxu0
    %v2300 = vadd.f32 0.0, %v2299
    %v2301 = vpop.f32.mrf.mxu0
    %v2302 = vadd.f32 0.0, %v2301
    %2303 = vmatmul.bf16.gmra.mxu0 %v2176
    %v2304 = vpop.f32.mrf.mxu0
    %v2305 = vadd.f32 0.0, %v2304
    %v2306 = vpop.f32.mrf.mxu0
    %v2307 = vadd.f32 0.0, %v2306
    %2308 = vmatmul.bf16.gmra.mxu0 %v2179
    %v2309 = vpop.f32.mrf.mxu0
    %v2310 = vadd.f32 0.0, %v2309
    %v2311 = vpop.f32.mrf.mxu0
    %v2312 = vadd.f32 0.0, %v2311
    %2313 = vmatmul.bf16.gmra.mxu0 %v2182
    %v2314 = vpop.f32.mrf.mxu0
    %v2315 = vadd.f32 0.0, %v2314
    %v2316 = vpop.f32.mrf.mxu0
    %v2317 = vadd.f32 0.0, %v2316
    %2318 = vmatmul.bf16.gmra.mxu0 %v2185
    %v2319 = vpop.f32.mrf.mxu0
    %v2320 = vadd.f32 0.0, %v2319
    %v2321 = vpop.f32.mrf.mxu0
    %v2322 = vadd.f32 0.0, %v2321
    %2323 = vmatmul.bf16.gmra.mxu0 %v2188
    %v2324 = vpop.f32.mrf.mxu0
    %v2325 = vadd.f32 0.0, %v2324
    %v2326 = vpop.f32.mrf.mxu0
    %v2327 = vadd.f32 0.0, %v2326
    %2328 = vmatmul.bf16.gmra.mxu0 %v2191
    %v2329 = vpop.f32.mrf.mxu0
    %v2330 = vadd.f32 0.0, %v2329
    %v2331 = vpop.f32.mrf.mxu0
    %v2332 = vadd.f32 0.0, %v2331
    %2333 = vmatmul.bf16.gmra.mxu0 %v2194
    %v2334 = vpop.f32.mrf.mxu0
    %v2335 = vadd.f32 0.0, %v2334
    %v2336 = vpop.f32.mrf.mxu0
    %v2337 = vadd.f32 0.0, %v2336
    %2338 = vmatmul.bf16.gmra.mxu0 %v2197
    %v2339 = vpop.f32.mrf.mxu0
    %v2340 = vadd.f32 0.0, %v2339
    %v2341 = vpop.f32.mrf.mxu0
    %v2342 = vadd.f32 0.0, %v2341
    %2343 = vmatmul.bf16.gmra.mxu0 %v2200
    %v2344 = vpop.f32.mrf.mxu0
    %v2345 = vadd.f32 0.0, %v2344
    %v2346 = vpop.f32.mrf.mxu0
    %v2347 = vadd.f32 0.0, %v2346
    %2348 = vmatmul.bf16.gmra.mxu0 %v2203
    %v2349 = vpop.f32.mrf.mxu0
    %v2350 = vadd.f32 0.0, %v2349
    %v2351 = vpop.f32.mrf.mxu0
    %v2352 = vadd.f32 0.0, %v2351
    %2353 = vmatmul.bf16.gmra.mxu0 %v2206
    %v2354 = vpop.f32.mrf.mxu0
    %v2355 = vadd.f32 0.0, %v2354
    %v2356 = vpop.f32.mrf.mxu0
    %v2357 = vadd.f32 0.0, %v2356
    %2358 = vmatmul.bf16.gmra.mxu0 %v2209
    %v2359 = vpop.f32.mrf.mxu0
    %v2360 = vadd.f32 0.0, %v2359
    %v2361 = vpop.f32.mrf.mxu0
    %v2362 = vadd.f32 0.0, %v2361
    %2363 = vmatmul.bf16.gmra.mxu0 %v2212
    %v2364 = vpop.f32.mrf.mxu0
    %v2365 = vadd.f32 0.0, %v2364
    %v2366 = vpop.f32.mrf.mxu0
    %v2367 = vadd.f32 0.0, %v2366
    %2368 = vmatmul.bf16.gmra.mxu0 %v2215
    %v2369 = vpop.f32.mrf.mxu0
    %v2370 = vadd.f32 0.0, %v2369
    %v2371 = vpop.f32.mrf.mxu0
    %v2372 = vadd.f32 0.0, %v2371
    %2373 = vmatmul.bf16.gmra.mxu0 %v2218
    %v2374 = vpop.f32.mrf.mxu0
    %v2375 = vadd.f32 0.0, %v2374
    %v2376 = vpop.f32.mrf.mxu0
    %v2377 = vadd.f32 0.0, %v2376
    %2378 = vmatmul.bf16.gmra.mxu0 %v2221
    %v2379 = vpop.f32.mrf.mxu0
    %v2380 = vadd.f32 0.0, %v2379
    %v2381 = vpop.f32.mrf.mxu0
    %v2382 = vadd.f32 0.0, %v2381
    %2383 = vmatmul.bf16.gmra.mxu0 %v2224
    %v2384 = vpop.f32.mrf.mxu0
    %v2385 = vadd.f32 0.0, %v2384
    %v2386 = vpop.f32.mrf.mxu0
    %v2387 = vadd.f32 0.0, %v2386
    %2388 = vmatmul.bf16.gmra.mxu0 %v2227
    %v2389 = vpop.f32.mrf.mxu0
    %v2390 = vadd.f32 0.0, %v2389
    %v2391 = vpop.f32.mrf.mxu0
    %v2392 = vadd.f32 0.0, %v2391
    %2393 = vmatmul.bf16.gmra.mxu0 %v2230
    %v2394 = vpop.f32.mrf.mxu0
    %v2395 = vadd.f32 0.0, %v2394
    %v2396 = vpop.f32.mrf.mxu0
    %v2397 = vadd.f32 0.0, %v2396
    %2398 = vmatmul.bf16.gmra.mxu0 %v2233
    %v2399 = vpop.f32.mrf.mxu0
    %v2400 = vadd.f32 0.0, %v2399
    %v2401 = vpop.f32.mrf.mxu0
    %v2402 = vadd.f32 0.0, %v2401
    %2403 = vdwg.mxu0
    %v2404 = vadd.f32 %v1593, %v2245
    %v2405 = vadd.f32 %v1595, %v2247
    %v2406 = vadd.f32 %v1598, %v2250
    %v2407 = vadd.f32 %v1600, %v2252
    %v2408 = vadd.f32 %v1603, %v2255
    %v2409 = vadd.f32 %v1605, %v2257
    %v2410 = vadd.f32 %v1608, %v2260
    %v2411 = vadd.f32 %v1610, %v2262
    %v2412 = vadd.f32 %v1613, %v2265
    %v2413 = vadd.f32 %v1615, %v2267
    %v2414 = vadd.f32 %v1618, %v2270
    %v2415 = vadd.f32 %v1620, %v2272
    %v2416 = vadd.f32 %v1623, %v2275
    %v2417 = vadd.f32 %v1625, %v2277
    %v2418 = vadd.f32 %v1628, %v2280
    %v2419 = vadd.f32 %v1630, %v2282
    %v2420 = vadd.f32 %v1633, %v2285
    %v2421 = vadd.f32 %v1635, %v2287
    %v2422 = vadd.f32 %v1638, %v2290
    %v2423 = vadd.f32 %v1640, %v2292
    %v2424 = vadd.f32 %v1643, %v2295
    %v2425 = vadd.f32 %v1645, %v2297
    %v2426 = vadd.f32 %v1648, %v2300
    %v2427 = vadd.f32 %v1650, %v2302
    %v2428 = vadd.f32 %v1653, %v2305
    %v2429 = vadd.f32 %v1655, %v2307
    %v2430 = vadd.f32 %v1658, %v2310
    %v2431 = vadd.f32 %v1660, %v2312
    %v2432 = vadd.f32 %v1663, %v2315
    %v2433 = vadd.f32 %v1665, %v2317
    %v2434 = vadd.f32 %v1668, %v2320
    %v2435 = vadd.f32 %v1670, %v2322
    %v2436 = vadd.f32 %v1673, %v2325
    %v2437 = vadd.f32 %v1675, %v2327
    %v2438 = vadd.f32 %v1678, %v2330
    %v2439 = vadd.f32 %v1680, %v2332
    %v2440 = vadd.f32 %v1683, %v2335
    %v2441 = vadd.f32 %v1685, %v2337
    %v2442 = vadd.f32 %v1688, %v2340
    %v2443 = vadd.f32 %v1690, %v2342
    %v2444 = vadd.f32 %v1693, %v2345
    %v2445 = vadd.f32 %v1695, %v2347
    %v2446 = vadd.f32 %v1698, %v2350
    %v2447 = vadd.f32 %v1700, %v2352
    %v2448 = vadd.f32 %v1703, %v2355
    %v2449 = vadd.f32 %v1705, %v2357
    %v2450 = vadd.f32 %v1708, %v2360
    %v2451 = vadd.f32 %v1710, %v2362
    %v2452 = vadd.f32 %v1713, %v2365
    %v2453 = vadd.f32 %v1715, %v2367
    %v2454 = vadd.f32 %v1718, %v2370
    %v2455 = vadd.f32 %v1720, %v2372
    %v2456 = vadd.f32 %v1723, %v2375
    %v2457 = vadd.f32 %v1725, %v2377
    %v2458 = vadd.f32 %v1728, %v2380
    %v2459 = vadd.f32 %v1730, %v2382
    %v2460 = vadd.f32 %v1733, %v2385
    %v2461 = vadd.f32 %v1735, %v2387
    %v2462 = vadd.f32 %v1738, %v2390
    %v2463 = vadd.f32 %v1740, %v2392
    %v2464 = vadd.f32 %v1743, %v2395
    %v2465 = vadd.f32 %v1745, %v2397
    %v2466 = vadd.f32 %v1748, %v2400
    %v2467 = vadd.f32 %v1750, %v2402
    %v2468 = vld [vmem:[%s1 + $0x60] sm:$0xf]
    %v2469 = vld [vmem:[%s1 + $0x64] sm:$0xf]
    %v2470 = vld [vmem:[%s1 + $0x68] sm:$0xf]
    %v2471 = vld [vmem:[%s1 + $0x6c] sm:$0xf]
    %v2472 = vld [vmem:[%s1 + $0x70] sm:$0xf]
    %v2473 = vld [vmem:[%s1 + $0x74] sm:$0xf]
    %v2474 = vld [vmem:[%s1 + $0x78] sm:$0xf]
    %v2475 = vld [vmem:[%s1 + $0x7c] sm:$0xf]
    %v2480 = vunpack.c.l.b16 %v70
    %v2481 = vunpack.c.l.b16 %v71
    %v2482 = vunpack.c.l.b16 %v124
    %v2483 = vunpack.c.l.b16 %v125
    %v2484 = vpack.c.b16 %v2481, %v2480
    %v2485 = vpack.c.b16 %v2483, %v2482
    %v2494 = vunpack.c.l.b16 %v2468
    %v2495 = vunpack.c.l.b16 %v2469
    %v2496 = vunpack.c.l.b16 %v2470
    %v2497 = vunpack.c.l.b16 %v2471
    %v2498 = vunpack.c.l.b16 %v2472
    %v2499 = vunpack.c.l.b16 %v2473
    %v2500 = vunpack.c.l.b16 %v2474
    %v2501 = vunpack.c.l.b16 %v2475
    %v2502 = vpack.c.b16 %v2495, %v2494
    %v2503 = vpack.c.b16 %v2497, %v2496
    %v2504 = vpack.c.b16 %v2499, %v2498
    %v2505 = vpack.c.b16 %v2501, %v2500
    %v2511 = vsel %vm1037, %v2484, 0
    %v2514 = vsel %vm1037, %v2485, 0
    %2516 = vmatpush.bf16.msra.mxu0 0
    %2517 = vmatpush.bf16.msra.mxu0 0
    %2518 = vmatpush.bf16.msra.mxu0 0
    %2519 = vmatpush.bf16.msra.mxu0 0
    %2520 = vmatpush.bf16.msra.mxu0 %v2505
    %2521 = vmatpush.bf16.msra.mxu0 %v2504
    %2522 = vmatpush.bf16.msra.mxu0 %v2503
    %2523 = vmatpush.bf16.msra.mxu0 %v2502
    %2524 = vmatmul.bf16.gmra.mxu0 %v1491
    %v2525 = vpop.f32.mrf.mxu0
    %v2526 = vadd.f32 0.0, %v2525
    %v2527 = vpop.f32.mrf.mxu0
    %v2528 = vadd.f32 0.0, %v2527
    %2529 = vmatmul.bf16.gmra.mxu0 %v1494
    %v2530 = vpop.f32.mrf.mxu0
    %v2531 = vadd.f32 0.0, %v2530
    %v2532 = vpop.f32.mrf.mxu0
    %v2533 = vadd.f32 0.0, %v2532
    %2534 = vmatmul.bf16.gmra.mxu0 %v1497
    %v2535 = vpop.f32.mrf.mxu0
    %v2536 = vadd.f32 0.0, %v2535
    %v2537 = vpop.f32.mrf.mxu0
    %v2538 = vadd.f32 0.0, %v2537
    %2539 = vmatmul.bf16.gmra.mxu0 %v1500
    %v2540 = vpop.f32.mrf.mxu0
    %v2541 = vadd.f32 0.0, %v2540
    %v2542 = vpop.f32.mrf.mxu0
    %v2543 = vadd.f32 0.0, %v2542
    %2544 = vmatmul.bf16.gmra.mxu0 %v1503
    %v2545 = vpop.f32.mrf.mxu0
    %v2546 = vadd.f32 0.0, %v2545
    %v2547 = vpop.f32.mrf.mxu0
    %v2548 = vadd.f32 0.0, %v2547
    %2549 = vmatmul.bf16.gmra.mxu0 %v1506
    %v2550 = vpop.f32.mrf.mxu0
    %v2551 = vadd.f32 0.0, %v2550
    %v2552 = vpop.f32.mrf.mxu0
    %v2553 = vadd.f32 0.0, %v2552
    %2554 = vmatmul.bf16.gmra.mxu0 %v1509
    %v2555 = vpop.f32.mrf.mxu0
    %v2556 = vadd.f32 0.0, %v2555
    %v2557 = vpop.f32.mrf.mxu0
    %v2558 = vadd.f32 0.0, %v2557
    %2559 = vmatmul.bf16.gmra.mxu0 %v1512
    %v2560 = vpop.f32.mrf.mxu0
    %v2561 = vadd.f32 0.0, %v2560
    %v2562 = vpop.f32.mrf.mxu0
    %v2563 = vadd.f32 0.0, %v2562
    %2564 = vmatmul.bf16.gmra.mxu0 %v1515
    %v2565 = vpop.f32.mrf.mxu0
    %v2566 = vadd.f32 0.0, %v2565
    %v2567 = vpop.f32.mrf.mxu0
    %v2568 = vadd.f32 0.0, %v2567
    %2569 = vmatmul.bf16.gmra.mxu0 %v1518
    %v2570 = vpop.f32.mrf.mxu0
    %v2571 = vadd.f32 0.0, %v2570
    %v2572 = vpop.f32.mrf.mxu0
    %v2573 = vadd.f32 0.0, %v2572
    %2574 = vmatmul.bf16.gmra.mxu0 %v1521
    %v2575 = vpop.f32.mrf.mxu0
    %v2576 = vadd.f32 0.0, %v2575
    %v2577 = vpop.f32.mrf.mxu0
    %v2578 = vadd.f32 0.0, %v2577
    %2579 = vmatmul.bf16.gmra.mxu0 %v1524
    %v2580 = vpop.f32.mrf.mxu0
    %v2581 = vadd.f32 0.0, %v2580
    %v2582 = vpop.f32.mrf.mxu0
    %v2583 = vadd.f32 0.0, %v2582
    %2584 = vmatmul.bf16.gmra.mxu0 %v1527
    %v2585 = vpop.f32.mrf.mxu0
    %v2586 = vadd.f32 0.0, %v2585
    %v2587 = vpop.f32.mrf.mxu0
    %v2588 = vadd.f32 0.0, %v2587
    %2589 = vmatmul.bf16.gmra.mxu0 %v1530
    %v2590 = vpop.f32.mrf.mxu0
    %v2591 = vadd.f32 0.0, %v2590
    %v2592 = vpop.f32.mrf.mxu0
    %v2593 = vadd.f32 0.0, %v2592
    %2594 = vmatmul.bf16.gmra.mxu0 %v1533
    %v2595 = vpop.f32.mrf.mxu0
    %v2596 = vadd.f32 0.0, %v2595
    %v2597 = vpop.f32.mrf.mxu0
    %v2598 = vadd.f32 0.0, %v2597
    %2599 = vmatmul.bf16.gmra.mxu0 %v2511
    %v2600 = vpop.f32.mrf.mxu0
    %v2601 = vadd.f32 0.0, %v2600
    %v2602 = vpop.f32.mrf.mxu0
    %v2603 = vadd.f32 0.0, %v2602
    %2604 = vmatmul.bf16.gmra.mxu0 %v1539
    %v2605 = vpop.f32.mrf.mxu0
    %v2606 = vadd.f32 0.0, %v2605
    %v2607 = vpop.f32.mrf.mxu0
    %v2608 = vadd.f32 0.0, %v2607
    %2609 = vmatmul.bf16.gmra.mxu0 %v1542
    %v2610 = vpop.f32.mrf.mxu0
    %v2611 = vadd.f32 0.0, %v2610
    %v2612 = vpop.f32.mrf.mxu0
    %v2613 = vadd.f32 0.0, %v2612
    %2614 = vmatmul.bf16.gmra.mxu0 %v1545
    %v2615 = vpop.f32.mrf.mxu0
    %v2616 = vadd.f32 0.0, %v2615
    %v2617 = vpop.f32.mrf.mxu0
    %v2618 = vadd.f32 0.0, %v2617
    %2619 = vmatmul.bf16.gmra.mxu0 %v1548
    %v2620 = vpop.f32.mrf.mxu0
    %v2621 = vadd.f32 0.0, %v2620
    %v2622 = vpop.f32.mrf.mxu0
    %v2623 = vadd.f32 0.0, %v2622
    %2624 = vmatmul.bf16.gmra.mxu0 %v1551
    %v2625 = vpop.f32.mrf.mxu0
    %v2626 = vadd.f32 0.0, %v2625
    %v2627 = vpop.f32.mrf.mxu0
    %v2628 = vadd.f32 0.0, %v2627
    %2629 = vmatmul.bf16.gmra.mxu0 %v1554
    %v2630 = vpop.f32.mrf.mxu0
    %v2631 = vadd.f32 0.0, %v2630
    %v2632 = vpop.f32.mrf.mxu0
    %v2633 = vadd.f32 0.0, %v2632
    %2634 = vmatmul.bf16.gmra.mxu0 %v1557
    %v2635 = vpop.f32.mrf.mxu0
    %v2636 = vadd.f32 0.0, %v2635
    %v2637 = vpop.f32.mrf.mxu0
    %v2638 = vadd.f32 0.0, %v2637
    %2639 = vmatmul.bf16.gmra.mxu0 %v1560
    %v2640 = vpop.f32.mrf.mxu0
    %v2641 = vadd.f32 0.0, %v2640
    %v2642 = vpop.f32.mrf.mxu0
    %v2643 = vadd.f32 0.0, %v2642
    %2644 = vmatmul.bf16.gmra.mxu0 %v1563
    %v2645 = vpop.f32.mrf.mxu0
    %v2646 = vadd.f32 0.0, %v2645
    %v2647 = vpop.f32.mrf.mxu0
    %v2648 = vadd.f32 0.0, %v2647
    %2649 = vmatmul.bf16.gmra.mxu0 %v1566
    %v2650 = vpop.f32.mrf.mxu0
    %v2651 = vadd.f32 0.0, %v2650
    %v2652 = vpop.f32.mrf.mxu0
    %v2653 = vadd.f32 0.0, %v2652
    %2654 = vmatmul.bf16.gmra.mxu0 %v1569
    %v2655 = vpop.f32.mrf.mxu0
    %v2656 = vadd.f32 0.0, %v2655
    %v2657 = vpop.f32.mrf.mxu0
    %v2658 = vadd.f32 0.0, %v2657
    %2659 = vmatmul.bf16.gmra.mxu0 %v1572
    %v2660 = vpop.f32.mrf.mxu0
    %v2661 = vadd.f32 0.0, %v2660
    %v2662 = vpop.f32.mrf.mxu0
    %v2663 = vadd.f32 0.0, %v2662
    %2664 = vmatmul.bf16.gmra.mxu0 %v1575
    %v2665 = vpop.f32.mrf.mxu0
    %v2666 = vadd.f32 0.0, %v2665
    %v2667 = vpop.f32.mrf.mxu0
    %v2668 = vadd.f32 0.0, %v2667
    %2669 = vmatmul.bf16.gmra.mxu0 %v1578
    %v2670 = vpop.f32.mrf.mxu0
    %v2671 = vadd.f32 0.0, %v2670
    %v2672 = vpop.f32.mrf.mxu0
    %v2673 = vadd.f32 0.0, %v2672
    %2674 = vmatmul.bf16.gmra.mxu0 %v1581
    %v2675 = vpop.f32.mrf.mxu0
    %v2676 = vadd.f32 0.0, %v2675
    %v2677 = vpop.f32.mrf.mxu0
    %v2678 = vadd.f32 0.0, %v2677
    %2679 = vmatmul.bf16.gmra.mxu0 %v2514
    %v2680 = vpop.f32.mrf.mxu0
    %v2681 = vadd.f32 0.0, %v2680
    %v2682 = vpop.f32.mrf.mxu0
    %v2683 = vadd.f32 0.0, %v2682
    %2684 = vdwg.mxu0
    %v2685 = vadd.f32 %v2404, %v2526
    %v2686 = vadd.f32 %v2405, %v2528
    %v2687 = vadd.f32 %v2406, %v2531
    %v2688 = vadd.f32 %v2407, %v2533
    %v2689 = vadd.f32 %v2408, %v2536
    %v2690 = vadd.f32 %v2409, %v2538
    %v2691 = vadd.f32 %v2410, %v2541
    %v2692 = vadd.f32 %v2411, %v2543
    %v2693 = vadd.f32 %v2412, %v2546
    %v2694 = vadd.f32 %v2413, %v2548
    %v2695 = vadd.f32 %v2414, %v2551
    %v2696 = vadd.f32 %v2415, %v2553
    %v2697 = vadd.f32 %v2416, %v2556
    %v2698 = vadd.f32 %v2417, %v2558
    %v2699 = vadd.f32 %v2418, %v2561
    %v2700 = vadd.f32 %v2419, %v2563
    %v2701 = vadd.f32 %v2420, %v2566
    %v2702 = vadd.f32 %v2421, %v2568
    %v2703 = vadd.f32 %v2422, %v2571
    %v2704 = vadd.f32 %v2423, %v2573
    %v2705 = vadd.f32 %v2424, %v2576
    %v2706 = vadd.f32 %v2425, %v2578
    %v2707 = vadd.f32 %v2426, %v2581
    %v2708 = vadd.f32 %v2427, %v2583
    %v2709 = vadd.f32 %v2428, %v2586
    %v2710 = vadd.f32 %v2429, %v2588
    %v2711 = vadd.f32 %v2430, %v2591
    %v2712 = vadd.f32 %v2431, %v2593
    %v2713 = vadd.f32 %v2432, %v2596
    %v2714 = vadd.f32 %v2433, %v2598
    %v2715 = vadd.f32 %v2434, %v2601
    %v2716 = vadd.f32 %v2435, %v2603
    %v2717 = vadd.f32 %v2436, %v2606
    %v2718 = vadd.f32 %v2437, %v2608
    %v2719 = vadd.f32 %v2438, %v2611
    %v2720 = vadd.f32 %v2439, %v2613
    %v2721 = vadd.f32 %v2440, %v2616
    %v2722 = vadd.f32 %v2441, %v2618
    %v2723 = vadd.f32 %v2442, %v2621
    %v2724 = vadd.f32 %v2443, %v2623
    %v2725 = vadd.f32 %v2444, %v2626
    %v2726 = vadd.f32 %v2445, %v2628
    %v2727 = vadd.f32 %v2446, %v2631
    %v2728 = vadd.f32 %v2447, %v2633
    %v2729 = vadd.f32 %v2448, %v2636
    %v2730 = vadd.f32 %v2449, %v2638
    %v2731 = vadd.f32 %v2450, %v2641
    %v2732 = vadd.f32 %v2451, %v2643
    %v2733 = vadd.f32 %v2452, %v2646
    %v2734 = vadd.f32 %v2453, %v2648
    %v2735 = vadd.f32 %v2454, %v2651
    %v2736 = vadd.f32 %v2455, %v2653
    %v2737 = vadd.f32 %v2456, %v2656
    %v2738 = vadd.f32 %v2457, %v2658
    %v2739 = vadd.f32 %v2458, %v2661
    %v2740 = vadd.f32 %v2459, %v2663
    %v2741 = vadd.f32 %v2460, %v2666
    %v2742 = vadd.f32 %v2461, %v2668
    %v2743 = vadd.f32 %v2462, %v2671
    %v2744 = vadd.f32 %v2463, %v2673
    %v2745 = vadd.f32 %v2464, %v2676
    %v2746 = vadd.f32 %v2465, %v2678
    %v2747 = vadd.f32 %v2466, %v2681
    %v2748 = vadd.f32 %v2467, %v2683
    %v2750 = vshrl.u32 %v70, 16
    %v2752 = vrot.slane %v2750, 4
    %v2753 = vshll.u32 %v70, 16
    %v2755 = vrot.slane %v2753, 5
    %v2756 = vor.u32 %v2752, %v2755
    %v2757 = vrot.slane %v2756, 4
    %v2759 = vshll.u32 %v71, 16
    %v2761 = vrot.slane %v2759, 5
    %v2762 = vsel %vm140, %v2757, %v2761
    %v2763 = vshrl.u32 %v71, 16
    %v2765 = vrot.slane %v2763, 4
    %v2766 = vor.u32 %v2765, %v2761
    %v2767 = vrot.slane %v2766, 4
    %v2769 = vshll.u32 %v72, 16
    %v2771 = vrot.slane %v2769, 5
    %v2772 = vsel %vm140, %v2767, %v2771
    %v2774 = vshrl.u32 %v124, 16
    %v2776 = vrot.slane %v2774, 4
    %v2777 = vshll.u32 %v124, 16
    %v2779 = vrot.slane %v2777, 5
    %v2780 = vor.u32 %v2776, %v2779
    %v2781 = vrot.slane %v2780, 4
    %v2783 = vshll.u32 %v125, 16
    %v2785 = vrot.slane %v2783, 5
    %v2786 = vsel %vm140, %v2781, %v2785
    %v2787 = vshrl.u32 %v125, 16
    %v2789 = vrot.slane %v2787, 4
    %v2790 = vor.u32 %v2789, %v2785
    %v2791 = vrot.slane %v2790, 4
    %v2793 = vshll.u32 %v126, 16
    %v2795 = vrot.slane %v2793, 5
    %v2796 = vsel %vm140, %v2791, %v2795
    %v2797 = vld [vmem:[%s1 + $0x80] sm:$0xf]
    %v2798 = vld [vmem:[%s1 + $0x84] sm:$0xf]
    %v2799 = vld [vmem:[%s1 + $0x88] sm:$0xf]
    %v2800 = vld [vmem:[%s1 + $0x8c] sm:$0xf]
    %v2801 = vld [vmem:[%s1 + $0x90] sm:$0xf]
    %v2802 = vld [vmem:[%s1 + $0x94] sm:$0xf]
    %v2803 = vld [vmem:[%s1 + $0x98] sm:$0xf]
    %v2804 = vld [vmem:[%s1 + $0x9c] sm:$0xf]
    %v2805 = vunpack.c.l.b16 %v2762
    %v2806 = vunpack.c.l.b16 %v2772
    %v2807 = vunpack.c.l.b16 %v2786
    %v2808 = vunpack.c.l.b16 %v2796
    %v2809 = vpack.c.b16 %v2806, %v2805
    %v2810 = vpack.c.b16 %v2808, %v2807
    %v2819 = vunpack.c.l.b16 %v2797
    %v2820 = vunpack.c.l.b16 %v2798
    %v2821 = vunpack.c.l.b16 %v2799
    %v2822 = vunpack.c.l.b16 %v2800
    %v2823 = vunpack.c.l.b16 %v2801
    %v2824 = vunpack.c.l.b16 %v2802
    %v2825 = vunpack.c.l.b16 %v2803
    %v2826 = vunpack.c.l.b16 %v2804
    %v2827 = vpack.c.b16 %v2820, %v2819
    %v2828 = vpack.c.b16 %v2822, %v2821
    %v2829 = vpack.c.b16 %v2824, %v2823
    %v2830 = vpack.c.b16 %v2826, %v2825
    %v2836 = vsel %vm1037, %v2809, 0
    %v2839 = vsel %vm1037, %v2810, 0
    %2841 = vmatpush.bf16.msra.mxu0 0
    %2842 = vmatpush.bf16.msra.mxu0 0
    %2843 = vmatpush.bf16.msra.mxu0 0
    %2844 = vmatpush.bf16.msra.mxu0 0
    %2845 = vmatpush.bf16.msra.mxu0 %v2830
    %2846 = vmatpush.bf16.msra.mxu0 %v2829
    %2847 = vmatpush.bf16.msra.mxu0 %v2828
    %2848 = vmatpush.bf16.msra.mxu0 %v2827
    %2849 = vmatmul.bf16.gmra.mxu0 %v1042
    %v2850 = vpop.f32.mrf.mxu0
    %v2851 = vadd.f32 0.0, %v2850
    %v2852 = vpop.f32.mrf.mxu0
    %v2853 = vadd.f32 0.0, %v2852
    %2854 = vmatmul.bf16.gmra.mxu0 %v1045
    %v2855 = vpop.f32.mrf.mxu0
    %v2856 = vadd.f32 0.0, %v2855
    %v2857 = vpop.f32.mrf.mxu0
    %v2858 = vadd.f32 0.0, %v2857
    %2859 = vmatmul.bf16.gmra.mxu0 %v1048
    %v2860 = vpop.f32.mrf.mxu0
    %v2861 = vadd.f32 0.0, %v2860
    %v2862 = vpop.f32.mrf.mxu0
    %v2863 = vadd.f32 0.0, %v2862
    %2864 = vmatmul.bf16.gmra.mxu0 %v1051
    %v2865 = vpop.f32.mrf.mxu0
    %v2866 = vadd.f32 0.0, %v2865
    %v2867 = vpop.f32.mrf.mxu0
    %v2868 = vadd.f32 0.0, %v2867
    %2869 = vmatmul.bf16.gmra.mxu0 %v1054
    %v2870 = vpop.f32.mrf.mxu0
    %v2871 = vadd.f32 0.0, %v2870
    %v2872 = vpop.f32.mrf.mxu0
    %v2873 = vadd.f32 0.0, %v2872
    %2874 = vmatmul.bf16.gmra.mxu0 %v1057
    %v2875 = vpop.f32.mrf.mxu0
    %v2876 = vadd.f32 0.0, %v2875
    %v2877 = vpop.f32.mrf.mxu0
    %v2878 = vadd.f32 0.0, %v2877
    %2879 = vmatmul.bf16.gmra.mxu0 %v1060
    %v2880 = vpop.f32.mrf.mxu0
    %v2881 = vadd.f32 0.0, %v2880
    %v2882 = vpop.f32.mrf.mxu0
    %v2883 = vadd.f32 0.0, %v2882
    %2884 = vmatmul.bf16.gmra.mxu0 %v1063
    %v2885 = vpop.f32.mrf.mxu0
    %v2886 = vadd.f32 0.0, %v2885
    %v2887 = vpop.f32.mrf.mxu0
    %v2888 = vadd.f32 0.0, %v2887
    %2889 = vmatmul.bf16.gmra.mxu0 %v1066
    %v2890 = vpop.f32.mrf.mxu0
    %v2891 = vadd.f32 0.0, %v2890
    %v2892 = vpop.f32.mrf.mxu0
    %v2893 = vadd.f32 0.0, %v2892
    %2894 = vmatmul.bf16.gmra.mxu0 %v1069
    %v2895 = vpop.f32.mrf.mxu0
    %v2896 = vadd.f32 0.0, %v2895
    %v2897 = vpop.f32.mrf.mxu0
    %v2898 = vadd.f32 0.0, %v2897
    %2899 = vmatmul.bf16.gmra.mxu0 %v1072
    %v2900 = vpop.f32.mrf.mxu0
    %v2901 = vadd.f32 0.0, %v2900
    %v2902 = vpop.f32.mrf.mxu0
    %v2903 = vadd.f32 0.0, %v2902
    %2904 = vmatmul.bf16.gmra.mxu0 %v1075
    %v2905 = vpop.f32.mrf.mxu0
    %v2906 = vadd.f32 0.0, %v2905
    %v2907 = vpop.f32.mrf.mxu0
    %v2908 = vadd.f32 0.0, %v2907
    %2909 = vmatmul.bf16.gmra.mxu0 %v1078
    %v2910 = vpop.f32.mrf.mxu0
    %v2911 = vadd.f32 0.0, %v2910
    %v2912 = vpop.f32.mrf.mxu0
    %v2913 = vadd.f32 0.0, %v2912
    %2914 = vmatmul.bf16.gmra.mxu0 %v1081
    %v2915 = vpop.f32.mrf.mxu0
    %v2916 = vadd.f32 0.0, %v2915
    %v2917 = vpop.f32.mrf.mxu0
    %v2918 = vadd.f32 0.0, %v2917
    %2919 = vmatmul.bf16.gmra.mxu0 %v1084
    %v2920 = vpop.f32.mrf.mxu0
    %v2921 = vadd.f32 0.0, %v2920
    %v2922 = vpop.f32.mrf.mxu0
    %v2923 = vadd.f32 0.0, %v2922
    %2924 = vmatmul.bf16.gmra.mxu0 %v2836
    %v2925 = vpop.f32.mrf.mxu0
    %v2926 = vadd.f32 0.0, %v2925
    %v2927 = vpop.f32.mrf.mxu0
    %v2928 = vadd.f32 0.0, %v2927
    %2929 = vmatmul.bf16.gmra.mxu0 %v1090
    %v2930 = vpop.f32.mrf.mxu0
    %v2931 = vadd.f32 0.0, %v2930
    %v2932 = vpop.f32.mrf.mxu0
    %v2933 = vadd.f32 0.0, %v2932
    %2934 = vmatmul.bf16.gmra.mxu0 %v1093
    %v2935 = vpop.f32.mrf.mxu0
    %v2936 = vadd.f32 0.0, %v2935
    %v2937 = vpop.f32.mrf.mxu0
    %v2938 = vadd.f32 0.0, %v2937
    %2939 = vmatmul.bf16.gmra.mxu0 %v1096
    %v2940 = vpop.f32.mrf.mxu0
    %v2941 = vadd.f32 0.0, %v2940
    %v2942 = vpop.f32.mrf.mxu0
    %v2943 = vadd.f32 0.0, %v2942
    %2944 = vmatmul.bf16.gmra.mxu0 %v1099
    %v2945 = vpop.f32.mrf.mxu0
    %v2946 = vadd.f32 0.0, %v2945
    %v2947 = vpop.f32.mrf.mxu0
    %v2948 = vadd.f32 0.0, %v2947
    %2949 = vmatmul.bf16.gmra.mxu0 %v1102
    %v2950 = vpop.f32.mrf.mxu0
    %v2951 = vadd.f32 0.0, %v2950
    %v2952 = vpop.f32.mrf.mxu0
    %v2953 = vadd.f32 0.0, %v2952
    %2954 = vmatmul.bf16.gmra.mxu0 %v1105
    %v2955 = vpop.f32.mrf.mxu0
    %v2956 = vadd.f32 0.0, %v2955
    %v2957 = vpop.f32.mrf.mxu0
    %v2958 = vadd.f32 0.0, %v2957
    %2959 = vmatmul.bf16.gmra.mxu0 %v1108
    %v2960 = vpop.f32.mrf.mxu0
    %v2961 = vadd.f32 0.0, %v2960
    %v2962 = vpop.f32.mrf.mxu0
    %v2963 = vadd.f32 0.0, %v2962
    %2964 = vmatmul.bf16.gmra.mxu0 %v1111
    %v2965 = vpop.f32.mrf.mxu0
    %v2966 = vadd.f32 0.0, %v2965
    %v2967 = vpop.f32.mrf.mxu0
    %v2968 = vadd.f32 0.0, %v2967
    %2969 = vmatmul.bf16.gmra.mxu0 %v1114
    %v2970 = vpop.f32.mrf.mxu0
    %v2971 = vadd.f32 0.0, %v2970
    %v2972 = vpop.f32.mrf.mxu0
    %v2973 = vadd.f32 0.0, %v2972
    %2974 = vmatmul.bf16.gmra.mxu0 %v1117
    %v2975 = vpop.f32.mrf.mxu0
    %v2976 = vadd.f32 0.0, %v2975
    %v2977 = vpop.f32.mrf.mxu0
    %v2978 = vadd.f32 0.0, %v2977
    %2979 = vmatmul.bf16.gmra.mxu0 %v1120
    %v2980 = vpop.f32.mrf.mxu0
    %v2981 = vadd.f32 0.0, %v2980
    %v2982 = vpop.f32.mrf.mxu0
    %v2983 = vadd.f32 0.0, %v2982
    %2984 = vmatmul.bf16.gmra.mxu0 %v1123
    %v2985 = vpop.f32.mrf.mxu0
    %v2986 = vadd.f32 0.0, %v2985
    %v2987 = vpop.f32.mrf.mxu0
    %v2988 = vadd.f32 0.0, %v2987
    %2989 = vmatmul.bf16.gmra.mxu0 %v1126
    %v2990 = vpop.f32.mrf.mxu0
    %v2991 = vadd.f32 0.0, %v2990
    %v2992 = vpop.f32.mrf.mxu0
    %v2993 = vadd.f32 0.0, %v2992
    %2994 = vmatmul.bf16.gmra.mxu0 %v1129
    %v2995 = vpop.f32.mrf.mxu0
    %v2996 = vadd.f32 0.0, %v2995
    %v2997 = vpop.f32.mrf.mxu0
    %v2998 = vadd.f32 0.0, %v2997
    %2999 = vmatmul.bf16.gmra.mxu0 %v1132
    %v3000 = vpop.f32.mrf.mxu0
    %v3001 = vadd.f32 0.0, %v3000
    %v3002 = vpop.f32.mrf.mxu0
    %v3003 = vadd.f32 0.0, %v3002
    %3004 = vmatmul.bf16.gmra.mxu0 %v2839
    %v3005 = vpop.f32.mrf.mxu0
    %v3006 = vadd.f32 0.0, %v3005
    %v3007 = vpop.f32.mrf.mxu0
    %v3008 = vadd.f32 0.0, %v3007
    %3009 = vdwg.mxu0
    %v3010 = vadd.f32 %v2685, %v2851
    %v3011 = vadd.f32 %v2686, %v2853
    %v3012 = vadd.f32 %v2687, %v2856
    %v3013 = vadd.f32 %v2688, %v2858
    %v3014 = vadd.f32 %v2689, %v2861
    %v3015 = vadd.f32 %v2690, %v2863
    %v3016 = vadd.f32 %v2691, %v2866
    %v3017 = vadd.f32 %v2692, %v2868
    %v3018 = vadd.f32 %v2693, %v2871
    %v3019 = vadd.f32 %v2694, %v2873
    %v3020 = vadd.f32 %v2695, %v2876
    %v3021 = vadd.f32 %v2696, %v2878
    %v3022 = vadd.f32 %v2697, %v2881
    %v3023 = vadd.f32 %v2698, %v2883
    %v3024 = vadd.f32 %v2699, %v2886
    %v3025 = vadd.f32 %v2700, %v2888
    %v3026 = vadd.f32 %v2701, %v2891
    %v3027 = vadd.f32 %v2702, %v2893
    %v3028 = vadd.f32 %v2703, %v2896
    %v3029 = vadd.f32 %v2704, %v2898
    %v3030 = vadd.f32 %v2705, %v2901
    %v3031 = vadd.f32 %v2706, %v2903
    %v3032 = vadd.f32 %v2707, %v2906
    %v3033 = vadd.f32 %v2708, %v2908
    %v3034 = vadd.f32 %v2709, %v2911
    %v3035 = vadd.f32 %v2710, %v2913
    %v3036 = vadd.f32 %v2711, %v2916
    %v3037 = vadd.f32 %v2712, %v2918
    %v3038 = vadd.f32 %v2713, %v2921
    %v3039 = vadd.f32 %v2714, %v2923
    %v3040 = vadd.f32 %v2715, %v2926
    %v3041 = vadd.f32 %v2716, %v2928
    %v3042 = vadd.f32 %v2717, %v2931
    %v3043 = vadd.f32 %v2718, %v2933
    %v3044 = vadd.f32 %v2719, %v2936
    %v3045 = vadd.f32 %v2720, %v2938
    %v3046 = vadd.f32 %v2721, %v2941
    %v3047 = vadd.f32 %v2722, %v2943
    %v3048 = vadd.f32 %v2723, %v2946
    %v3049 = vadd.f32 %v2724, %v2948
    %v3050 = vadd.f32 %v2725, %v2951
    %v3051 = vadd.f32 %v2726, %v2953
    %v3052 = vadd.f32 %v2727, %v2956
    %v3053 = vadd.f32 %v2728, %v2958
    %v3054 = vadd.f32 %v2729, %v2961
    %v3055 = vadd.f32 %v2730, %v2963
    %v3056 = vadd.f32 %v2731, %v2966
    %v3057 = vadd.f32 %v2732, %v2968
    %v3058 = vadd.f32 %v2733, %v2971
    %v3059 = vadd.f32 %v2734, %v2973
    %v3060 = vadd.f32 %v2735, %v2976
    %v3061 = vadd.f32 %v2736, %v2978
    %v3062 = vadd.f32 %v2737, %v2981
    %v3063 = vadd.f32 %v2738, %v2983
    %v3064 = vadd.f32 %v2739, %v2986
    %v3065 = vadd.f32 %v2740, %v2988
    %v3066 = vadd.f32 %v2741, %v2991
    %v3067 = vadd.f32 %v2742, %v2993
    %v3068 = vadd.f32 %v2743, %v2996
    %v3069 = vadd.f32 %v2744, %v2998
    %v3070 = vadd.f32 %v2745, %v3001
    %v3071 = vadd.f32 %v2746, %v3003
    %v3072 = vadd.f32 %v2747, %v3006
    %v3073 = vadd.f32 %v2748, %v3008
    %v3076 = vrot.slane %v70, 5
    %v3077 = vrot.slane %v3076, 4
    %v3078 = vrot.slane %v71, 5
    %v3079 = vsel %vm1786, %v3077, %v3078
    %v3080 = vrot.slane %v3078, 4
    %v3081 = vrot.slane %v72, 5
    %v3082 = vsel %vm1786, %v3080, %v3081
    %v3083 = vrot.slane %v124, 5
    %v3084 = vrot.slane %v3083, 4
    %v3085 = vrot.slane %v125, 5
    %v3086 = vsel %vm1786, %v3084, %v3085
    %v3087 = vrot.slane %v3085, 4
    %v3088 = vrot.slane %v126, 5
    %v3089 = vsel %vm1786, %v3087, %v3088
    %v3090 = vld [vmem:[%s1 + $0xa0] sm:$0xf]
    %v3091 = vld [vmem:[%s1 + $0xa4] sm:$0xf]
    %v3092 = vld [vmem:[%s1 + $0xa8] sm:$0xf]
    %v3093 = vld [vmem:[%s1 + $0xac] sm:$0xf]
    %v3094 = vld [vmem:[%s1 + $0xb0] sm:$0xf]
    %v3095 = vld [vmem:[%s1 + $0xb4] sm:$0xf]
    %v3096 = vld [vmem:[%s1 + $0xb8] sm:$0xf]
    %v3097 = vld [vmem:[%s1 + $0xbc] sm:$0xf]
    %v3098 = vunpack.c.l.b16 %v3079
    %v3099 = vunpack.c.l.b16 %v3082
    %v3100 = vunpack.c.l.b16 %v3086
    %v3101 = vunpack.c.l.b16 %v3089
    %v3102 = vpack.c.b16 %v3099, %v3098
    %v3103 = vpack.c.b16 %v3101, %v3100
    %v3112 = vunpack.c.l.b16 %v3090
    %v3113 = vunpack.c.l.b16 %v3091
    %v3114 = vunpack.c.l.b16 %v3092
    %v3115 = vunpack.c.l.b16 %v3093
    %v3116 = vunpack.c.l.b16 %v3094
    %v3117 = vunpack.c.l.b16 %v3095
    %v3118 = vunpack.c.l.b16 %v3096
    %v3119 = vunpack.c.l.b16 %v3097
    %v3120 = vpack.c.b16 %v3113, %v3112
    %v3121 = vpack.c.b16 %v3115, %v3114
    %v3122 = vpack.c.b16 %v3117, %v3116
    %v3123 = vpack.c.b16 %v3119, %v3118
    %v3129 = vsel %vm1037, %v3102, 0
    %v3132 = vsel %vm1037, %v3103, 0
    %3134 = vmatpush.bf16.msra.mxu0 0
    %3135 = vmatpush.bf16.msra.mxu0 0
    %3136 = vmatpush.bf16.msra.mxu0 0
    %3137 = vmatpush.bf16.msra.mxu0 0
    %3138 = vmatpush.bf16.msra.mxu0 %v3123
    %3139 = vmatpush.bf16.msra.mxu0 %v3122
    %3140 = vmatpush.bf16.msra.mxu0 %v3121
    %3141 = vmatpush.bf16.msra.mxu0 %v3120
    %3142 = vmatmul.bf16.gmra.mxu0 %v2143
    %v3143 = vpop.f32.mrf.mxu0
    %v3144 = vadd.f32 0.0, %v3143
    %v3145 = vpop.f32.mrf.mxu0
    %v3146 = vadd.f32 0.0, %v3145
    %3147 = vmatmul.bf16.gmra.mxu0 %v2146
    %v3148 = vpop.f32.mrf.mxu0
    %v3149 = vadd.f32 0.0, %v3148
    %v3150 = vpop.f32.mrf.mxu0
    %v3151 = vadd.f32 0.0, %v3150
    %3152 = vmatmul.bf16.gmra.mxu0 %v2149
    %v3153 = vpop.f32.mrf.mxu0
    %v3154 = vadd.f32 0.0, %v3153
    %v3155 = vpop.f32.mrf.mxu0
    %v3156 = vadd.f32 0.0, %v3155
    %3157 = vmatmul.bf16.gmra.mxu0 %v2152
    %v3158 = vpop.f32.mrf.mxu0
    %v3159 = vadd.f32 0.0, %v3158
    %v3160 = vpop.f32.mrf.mxu0
    %v3161 = vadd.f32 0.0, %v3160
    %3162 = vmatmul.bf16.gmra.mxu0 %v2155
    %v3163 = vpop.f32.mrf.mxu0
    %v3164 = vadd.f32 0.0, %v3163
    %v3165 = vpop.f32.mrf.mxu0
    %v3166 = vadd.f32 0.0, %v3165
    %3167 = vmatmul.bf16.gmra.mxu0 %v2158
    %v3168 = vpop.f32.mrf.mxu0
    %v3169 = vadd.f32 0.0, %v3168
    %v3170 = vpop.f32.mrf.mxu0
    %v3171 = vadd.f32 0.0, %v3170
    %3172 = vmatmul.bf16.gmra.mxu0 %v2161
    %v3173 = vpop.f32.mrf.mxu0
    %v3174 = vadd.f32 0.0, %v3173
    %v3175 = vpop.f32.mrf.mxu0
    %v3176 = vadd.f32 0.0, %v3175
    %3177 = vmatmul.bf16.gmra.mxu0 %v2164
    %v3178 = vpop.f32.mrf.mxu0
    %v3179 = vadd.f32 0.0, %v3178
    %v3180 = vpop.f32.mrf.mxu0
    %v3181 = vadd.f32 0.0, %v3180
    %3182 = vmatmul.bf16.gmra.mxu0 %v2167
    %v3183 = vpop.f32.mrf.mxu0
    %v3184 = vadd.f32 0.0, %v3183
    %v3185 = vpop.f32.mrf.mxu0
    %v3186 = vadd.f32 0.0, %v3185
    %3187 = vmatmul.bf16.gmra.mxu0 %v2170
    %v3188 = vpop.f32.mrf.mxu0
    %v3189 = vadd.f32 0.0, %v3188
    %v3190 = vpop.f32.mrf.mxu0
    %v3191 = vadd.f32 0.0, %v3190
    %3192 = vmatmul.bf16.gmra.mxu0 %v2173
    %v3193 = vpop.f32.mrf.mxu0
    %v3194 = vadd.f32 0.0, %v3193
    %v3195 = vpop.f32.mrf.mxu0
    %v3196 = vadd.f32 0.0, %v3195
    %3197 = vmatmul.bf16.gmra.mxu0 %v2176
    %v3198 = vpop.f32.mrf.mxu0
    %v3199 = vadd.f32 0.0, %v3198
    %v3200 = vpop.f32.mrf.mxu0
    %v3201 = vadd.f32 0.0, %v3200
    %3202 = vmatmul.bf16.gmra.mxu0 %v2179
    %v3203 = vpop.f32.mrf.mxu0
    %v3204 = vadd.f32 0.0, %v3203
    %v3205 = vpop.f32.mrf.mxu0
    %v3206 = vadd.f32 0.0, %v3205
    %3207 = vmatmul.bf16.gmra.mxu0 %v2182
    %v3208 = vpop.f32.mrf.mxu0
    %v3209 = vadd.f32 0.0, %v3208
    %v3210 = vpop.f32.mrf.mxu0
    %v3211 = vadd.f32 0.0, %v3210
    %3212 = vmatmul.bf16.gmra.mxu0 %v2185
    %v3213 = vpop.f32.mrf.mxu0
    %v3214 = vadd.f32 0.0, %v3213
    %v3215 = vpop.f32.mrf.mxu0
    %v3216 = vadd.f32 0.0, %v3215
    %3217 = vmatmul.bf16.gmra.mxu0 %v3129
    %v3218 = vpop.f32.mrf.mxu0
    %v3219 = vadd.f32 0.0, %v3218
    %v3220 = vpop.f32.mrf.mxu0
    %v3221 = vadd.f32 0.0, %v3220
    %3222 = vmatmul.bf16.gmra.mxu0 %v2191
    %v3223 = vpop.f32.mrf.mxu0
    %v3224 = vadd.f32 0.0, %v3223
    %v3225 = vpop.f32.mrf.mxu0
    %v3226 = vadd.f32 0.0, %v3225
    %3227 = vmatmul.bf16.gmra.mxu0 %v2194
    %v3228 = vpop.f32.mrf.mxu0
    %v3229 = vadd.f32 0.0, %v3228
    %v3230 = vpop.f32.mrf.mxu0
    %v3231 = vadd.f32 0.0, %v3230
    %3232 = vmatmul.bf16.gmra.mxu0 %v2197
    %v3233 = vpop.f32.mrf.mxu0
    %v3234 = vadd.f32 0.0, %v3233
    %v3235 = vpop.f32.mrf.mxu0
    %v3236 = vadd.f32 0.0, %v3235
    %3237 = vmatmul.bf16.gmra.mxu0 %v2200
    %v3238 = vpop.f32.mrf.mxu0
    %v3239 = vadd.f32 0.0, %v3238
    %v3240 = vpop.f32.mrf.mxu0
    %v3241 = vadd.f32 0.0, %v3240
    %3242 = vmatmul.bf16.gmra.mxu0 %v2203
    %v3243 = vpop.f32.mrf.mxu0
    %v3244 = vadd.f32 0.0, %v3243
    %v3245 = vpop.f32.mrf.mxu0
    %v3246 = vadd.f32 0.0, %v3245
    %3247 = vmatmul.bf16.gmra.mxu0 %v2206
    %v3248 = vpop.f32.mrf.mxu0
    %v3249 = vadd.f32 0.0, %v3248
    %v3250 = vpop.f32.mrf.mxu0
    %v3251 = vadd.f32 0.0, %v3250
    %3252 = vmatmul.bf16.gmra.mxu0 %v2209
    %v3253 = vpop.f32.mrf.mxu0
    %v3254 = vadd.f32 0.0, %v3253
    %v3255 = vpop.f32.mrf.mxu0
    %v3256 = vadd.f32 0.0, %v3255
    %3257 = vmatmul.bf16.gmra.mxu0 %v2212
    %v3258 = vpop.f32.mrf.mxu0
    %v3259 = vadd.f32 0.0, %v3258
    %v3260 = vpop.f32.mrf.mxu0
    %v3261 = vadd.f32 0.0, %v3260
    %3262 = vmatmul.bf16.gmra.mxu0 %v2215
    %v3263 = vpop.f32.mrf.mxu0
    %v3264 = vadd.f32 0.0, %v3263
    %v3265 = vpop.f32.mrf.mxu0
    %v3266 = vadd.f32 0.0, %v3265
    %3267 = vmatmul.bf16.gmra.mxu0 %v2218
    %v3268 = vpop.f32.mrf.mxu0
    %v3269 = vadd.f32 0.0, %v3268
    %v3270 = vpop.f32.mrf.mxu0
    %v3271 = vadd.f32 0.0, %v3270
    %3272 = vmatmul.bf16.gmra.mxu0 %v2221
    %v3273 = vpop.f32.mrf.mxu0
    %v3274 = vadd.f32 0.0, %v3273
    %v3275 = vpop.f32.mrf.mxu0
    %v3276 = vadd.f32 0.0, %v3275
    %3277 = vmatmul.bf16.gmra.mxu0 %v2224
    %v3278 = vpop.f32.mrf.mxu0
    %v3279 = vadd.f32 0.0, %v3278
    %v3280 = vpop.f32.mrf.mxu0
    %v3281 = vadd.f32 0.0, %v3280
    %3282 = vmatmul.bf16.gmra.mxu0 %v2227
    %v3283 = vpop.f32.mrf.mxu0
    %v3284 = vadd.f32 0.0, %v3283
    %v3285 = vpop.f32.mrf.mxu0
    %v3286 = vadd.f32 0.0, %v3285
    %3287 = vmatmul.bf16.gmra.mxu0 %v2230
    %v3288 = vpop.f32.mrf.mxu0
    %v3289 = vadd.f32 0.0, %v3288
    %v3290 = vpop.f32.mrf.mxu0
    %v3291 = vadd.f32 0.0, %v3290
    %3292 = vmatmul.bf16.gmra.mxu0 %v2233
    %v3293 = vpop.f32.mrf.mxu0
    %v3294 = vadd.f32 0.0, %v3293
    %v3295 = vpop.f32.mrf.mxu0
    %v3296 = vadd.f32 0.0, %v3295
    %3297 = vmatmul.bf16.gmra.mxu0 %v3132
    %v3298 = vpop.f32.mrf.mxu0
    %v3299 = vadd.f32 0.0, %v3298
    %v3300 = vpop.f32.mrf.mxu0
    %v3301 = vadd.f32 0.0, %v3300
    %3302 = vdwg.mxu0
    %v3303 = vadd.f32 %v3010, %v3144
    %v3304 = vadd.f32 %v3011, %v3146
    %v3305 = vadd.f32 %v3012, %v3149
    %v3306 = vadd.f32 %v3013, %v3151
    %v3307 = vadd.f32 %v3014, %v3154
    %v3308 = vadd.f32 %v3015, %v3156
    %v3309 = vadd.f32 %v3016, %v3159
    %v3310 = vadd.f32 %v3017, %v3161
    %v3311 = vadd.f32 %v3018, %v3164
    %v3312 = vadd.f32 %v3019, %v3166
    %v3313 = vadd.f32 %v3020, %v3169
    %v3314 = vadd.f32 %v3021, %v3171
    %v3315 = vadd.f32 %v3022, %v3174
    %v3316 = vadd.f32 %v3023, %v3176
    %v3317 = vadd.f32 %v3024, %v3179
    %v3318 = vadd.f32 %v3025, %v3181
    %v3319 = vadd.f32 %v3026, %v3184
    %v3320 = vadd.f32 %v3027, %v3186
    %v3321 = vadd.f32 %v3028, %v3189
    %v3322 = vadd.f32 %v3029, %v3191
    %v3323 = vadd.f32 %v3030, %v3194
    %v3324 = vadd.f32 %v3031, %v3196
    %v3325 = vadd.f32 %v3032, %v3199
    %v3326 = vadd.f32 %v3033, %v3201
    %v3327 = vadd.f32 %v3034, %v3204
    %v3328 = vadd.f32 %v3035, %v3206
    %v3329 = vadd.f32 %v3036, %v3209
    %v3330 = vadd.f32 %v3037, %v3211
    %v3331 = vadd.f32 %v3038, %v3214
    %v3332 = vadd.f32 %v3039, %v3216
    %v3333 = vadd.f32 %v3040, %v3219
    %v3334 = vadd.f32 %v3041, %v3221
    %v3335 = vadd.f32 %v3042, %v3224
    %v3336 = vadd.f32 %v3043, %v3226
    %v3337 = vadd.f32 %v3044, %v3229
    %v3338 = vadd.f32 %v3045, %v3231
    %v3339 = vadd.f32 %v3046, %v3234
    %v3340 = vadd.f32 %v3047, %v3236
    %v3341 = vadd.f32 %v3048, %v3239
    %v3342 = vadd.f32 %v3049, %v3241
    %v3343 = vadd.f32 %v3050, %v3244
    %v3344 = vadd.f32 %v3051, %v3246
    %v3345 = vadd.f32 %v3052, %v3249
    %v3346 = vadd.f32 %v3053, %v3251
    %v3347 = vadd.f32 %v3054, %v3254
    %v3348 = vadd.f32 %v3055, %v3256
    %v3349 = vadd.f32 %v3056, %v3259
    %v3350 = vadd.f32 %v3057, %v3261
    %v3351 = vadd.f32 %v3058, %v3264
    %v3352 = vadd.f32 %v3059, %v3266
    %v3353 = vadd.f32 %v3060, %v3269
    %v3354 = vadd.f32 %v3061, %v3271
    %v3355 = vadd.f32 %v3062, %v3274
    %v3356 = vadd.f32 %v3063, %v3276
    %v3357 = vadd.f32 %v3064, %v3279
    %v3358 = vadd.f32 %v3065, %v3281
    %v3359 = vadd.f32 %v3066, %v3284
    %v3360 = vadd.f32 %v3067, %v3286
    %v3361 = vadd.f32 %v3068, %v3289
    %v3362 = vadd.f32 %v3069, %v3291
    %v3363 = vadd.f32 %v3070, %v3294
    %v3364 = vadd.f32 %v3071, %v3296
    %v3365 = vadd.f32 %v3072, %v3299
    %v3366 = vadd.f32 %v3073, %v3301
    %v3367 = vld [vmem:[%s1 + $0xc0] sm:$0xf]
    %v3368 = vld [vmem:[%s1 + $0xc4] sm:$0xf]
    %v3369 = vld [vmem:[%s1 + $0xc8] sm:$0xf]
    %v3370 = vld [vmem:[%s1 + $0xcc] sm:$0xf]
    %v3371 = vld [vmem:[%s1 + $0xd0] sm:$0xf]
    %v3372 = vld [vmem:[%s1 + $0xd4] sm:$0xf]
    %v3373 = vld [vmem:[%s1 + $0xd8] sm:$0xf]
    %v3374 = vld [vmem:[%s1 + $0xdc] sm:$0xf]
    %v3379 = vunpack.c.l.b16 %v73
    %v3380 = vunpack.c.l.b16 %v74
    %v3381 = vunpack.c.l.b16 %v127
    %v3382 = vunpack.c.l.b16 %v128
    %v3383 = vpack.c.b16 %v3380, %v3379
    %v3384 = vpack.c.b16 %v3382, %v3381
    %v3393 = vunpack.c.l.b16 %v3367
    %v3394 = vunpack.c.l.b16 %v3368
    %v3395 = vunpack.c.l.b16 %v3369
    %v3396 = vunpack.c.l.b16 %v3370
    %v3397 = vunpack.c.l.b16 %v3371
    %v3398 = vunpack.c.l.b16 %v3372
    %v3399 = vunpack.c.l.b16 %v3373
    %v3400 = vunpack.c.l.b16 %v3374
    %v3401 = vpack.c.b16 %v3394, %v3393
    %v3402 = vpack.c.b16 %v3396, %v3395
    %v3403 = vpack.c.b16 %v3398, %v3397
    %v3404 = vpack.c.b16 %v3400, %v3399
    %v3410 = vsel %vm1037, %v3383, 0
    %v3413 = vsel %vm1037, %v3384, 0
    %3415 = vmatpush.bf16.msra.mxu0 0
    %3416 = vmatpush.bf16.msra.mxu0 0
    %3417 = vmatpush.bf16.msra.mxu0 0
    %3418 = vmatpush.bf16.msra.mxu0 0
    %3419 = vmatpush.bf16.msra.mxu0 %v3404
    %3420 = vmatpush.bf16.msra.mxu0 %v3403
    %3421 = vmatpush.bf16.msra.mxu0 %v3402
    %3422 = vmatpush.bf16.msra.mxu0 %v3401
    %3423 = vmatmul.bf16.gmra.mxu0 %v1494
    %v3424 = vpop.f32.mrf.mxu0
    %v3425 = vadd.f32 0.0, %v3424
    %v3426 = vpop.f32.mrf.mxu0
    %v3427 = vadd.f32 0.0, %v3426
    %3428 = vmatmul.bf16.gmra.mxu0 %v1497
    %v3429 = vpop.f32.mrf.mxu0
    %v3430 = vadd.f32 0.0, %v3429
    %v3431 = vpop.f32.mrf.mxu0
    %v3432 = vadd.f32 0.0, %v3431
    %3433 = vmatmul.bf16.gmra.mxu0 %v1500
    %v3434 = vpop.f32.mrf.mxu0
    %v3435 = vadd.f32 0.0, %v3434
    %v3436 = vpop.f32.mrf.mxu0
    %v3437 = vadd.f32 0.0, %v3436
    %3438 = vmatmul.bf16.gmra.mxu0 %v1503
    %v3439 = vpop.f32.mrf.mxu0
    %v3440 = vadd.f32 0.0, %v3439
    %v3441 = vpop.f32.mrf.mxu0
    %v3442 = vadd.f32 0.0, %v3441
    %3443 = vmatmul.bf16.gmra.mxu0 %v1506
    %v3444 = vpop.f32.mrf.mxu0
    %v3445 = vadd.f32 0.0, %v3444
    %v3446 = vpop.f32.mrf.mxu0
    %v3447 = vadd.f32 0.0, %v3446
    %3448 = vmatmul.bf16.gmra.mxu0 %v1509
    %v3449 = vpop.f32.mrf.mxu0
    %v3450 = vadd.f32 0.0, %v3449
    %v3451 = vpop.f32.mrf.mxu0
    %v3452 = vadd.f32 0.0, %v3451
    %3453 = vmatmul.bf16.gmra.mxu0 %v1512
    %v3454 = vpop.f32.mrf.mxu0
    %v3455 = vadd.f32 0.0, %v3454
    %v3456 = vpop.f32.mrf.mxu0
    %v3457 = vadd.f32 0.0, %v3456
    %3458 = vmatmul.bf16.gmra.mxu0 %v1515
    %v3459 = vpop.f32.mrf.mxu0
    %v3460 = vadd.f32 0.0, %v3459
    %v3461 = vpop.f32.mrf.mxu0
    %v3462 = vadd.f32 0.0, %v3461
    %3463 = vmatmul.bf16.gmra.mxu0 %v1518
    %v3464 = vpop.f32.mrf.mxu0
    %v3465 = vadd.f32 0.0, %v3464
    %v3466 = vpop.f32.mrf.mxu0
    %v3467 = vadd.f32 0.0, %v3466
    %3468 = vmatmul.bf16.gmra.mxu0 %v1521
    %v3469 = vpop.f32.mrf.mxu0
    %v3470 = vadd.f32 0.0, %v3469
    %v3471 = vpop.f32.mrf.mxu0
    %v3472 = vadd.f32 0.0, %v3471
    %3473 = vmatmul.bf16.gmra.mxu0 %v1524
    %v3474 = vpop.f32.mrf.mxu0
    %v3475 = vadd.f32 0.0, %v3474
    %v3476 = vpop.f32.mrf.mxu0
    %v3477 = vadd.f32 0.0, %v3476
    %3478 = vmatmul.bf16.gmra.mxu0 %v1527
    %v3479 = vpop.f32.mrf.mxu0
    %v3480 = vadd.f32 0.0, %v3479
    %v3481 = vpop.f32.mrf.mxu0
    %v3482 = vadd.f32 0.0, %v3481
    %3483 = vmatmul.bf16.gmra.mxu0 %v1530
    %v3484 = vpop.f32.mrf.mxu0
    %v3485 = vadd.f32 0.0, %v3484
    %v3486 = vpop.f32.mrf.mxu0
    %v3487 = vadd.f32 0.0, %v3486
    %3488 = vmatmul.bf16.gmra.mxu0 %v1533
    %v3489 = vpop.f32.mrf.mxu0
    %v3490 = vadd.f32 0.0, %v3489
    %v3491 = vpop.f32.mrf.mxu0
    %v3492 = vadd.f32 0.0, %v3491
    %3493 = vmatmul.bf16.gmra.mxu0 %v2511
    %v3494 = vpop.f32.mrf.mxu0
    %v3495 = vadd.f32 0.0, %v3494
    %v3496 = vpop.f32.mrf.mxu0
    %v3497 = vadd.f32 0.0, %v3496
    %3498 = vmatmul.bf16.gmra.mxu0 %v3410
    %v3499 = vpop.f32.mrf.mxu0
    %v3500 = vadd.f32 0.0, %v3499
    %v3501 = vpop.f32.mrf.mxu0
    %v3502 = vadd.f32 0.0, %v3501
    %3503 = vmatmul.bf16.gmra.mxu0 %v1542
    %v3504 = vpop.f32.mrf.mxu0
    %v3505 = vadd.f32 0.0, %v3504
    %v3506 = vpop.f32.mrf.mxu0
    %v3507 = vadd.f32 0.0, %v3506
    %3508 = vmatmul.bf16.gmra.mxu0 %v1545
    %v3509 = vpop.f32.mrf.mxu0
    %v3510 = vadd.f32 0.0, %v3509
    %v3511 = vpop.f32.mrf.mxu0
    %v3512 = vadd.f32 0.0, %v3511
    %3513 = vmatmul.bf16.gmra.mxu0 %v1548
    %v3514 = vpop.f32.mrf.mxu0
    %v3515 = vadd.f32 0.0, %v3514
    %v3516 = vpop.f32.mrf.mxu0
    %v3517 = vadd.f32 0.0, %v3516
    %3518 = vmatmul.bf16.gmra.mxu0 %v1551
    %v3519 = vpop.f32.mrf.mxu0
    %v3520 = vadd.f32 0.0, %v3519
    %v3521 = vpop.f32.mrf.mxu0
    %v3522 = vadd.f32 0.0, %v3521
    %3523 = vmatmul.bf16.gmra.mxu0 %v1554
    %v3524 = vpop.f32.mrf.mxu0
    %v3525 = vadd.f32 0.0, %v3524
    %v3526 = vpop.f32.mrf.mxu0
    %v3527 = vadd.f32 0.0, %v3526
    %3528 = vmatmul.bf16.gmra.mxu0 %v1557
    %v3529 = vpop.f32.mrf.mxu0
    %v3530 = vadd.f32 0.0, %v3529
    %v3531 = vpop.f32.mrf.mxu0
    %v3532 = vadd.f32 0.0, %v3531
    %3533 = vmatmul.bf16.gmra.mxu0 %v1560
    %v3534 = vpop.f32.mrf.mxu0
    %v3535 = vadd.f32 0.0, %v3534
    %v3536 = vpop.f32.mrf.mxu0
    %v3537 = vadd.f32 0.0, %v3536
    %3538 = vmatmul.bf16.gmra.mxu0 %v1563
    %v3539 = vpop.f32.mrf.mxu0
    %v3540 = vadd.f32 0.0, %v3539
    %v3541 = vpop.f32.mrf.mxu0
    %v3542 = vadd.f32 0.0, %v3541
    %3543 = vmatmul.bf16.gmra.mxu0 %v1566
    %v3544 = vpop.f32.mrf.mxu0
    %v3545 = vadd.f32 0.0, %v3544
    %v3546 = vpop.f32.mrf.mxu0
    %v3547 = vadd.f32 0.0, %v3546
    %3548 = vmatmul.bf16.gmra.mxu0 %v1569
    %v3549 = vpop.f32.mrf.mxu0
    %v3550 = vadd.f32 0.0, %v3549
    %v3551 = vpop.f32.mrf.mxu0
    %v3552 = vadd.f32 0.0, %v3551
    %3553 = vmatmul.bf16.gmra.mxu0 %v1572
    %v3554 = vpop.f32.mrf.mxu0
    %v3555 = vadd.f32 0.0, %v3554
    %v3556 = vpop.f32.mrf.mxu0
    %v3557 = vadd.f32 0.0, %v3556
    %3558 = vmatmul.bf16.gmra.mxu0 %v1575
    %v3559 = vpop.f32.mrf.mxu0
    %v3560 = vadd.f32 0.0, %v3559
    %v3561 = vpop.f32.mrf.mxu0
    %v3562 = vadd.f32 0.0, %v3561
    %3563 = vmatmul.bf16.gmra.mxu0 %v1578
    %v3564 = vpop.f32.mrf.mxu0
    %v3565 = vadd.f32 0.0, %v3564
    %v3566 = vpop.f32.mrf.mxu0
    %v3567 = vadd.f32 0.0, %v3566
    %3568 = vmatmul.bf16.gmra.mxu0 %v1581
    %v3569 = vpop.f32.mrf.mxu0
    %v3570 = vadd.f32 0.0, %v3569
    %v3571 = vpop.f32.mrf.mxu0
    %v3572 = vadd.f32 0.0, %v3571
    %3573 = vmatmul.bf16.gmra.mxu0 %v2514
    %v3574 = vpop.f32.mrf.mxu0
    %v3575 = vadd.f32 0.0, %v3574
    %v3576 = vpop.f32.mrf.mxu0
    %v3577 = vadd.f32 0.0, %v3576
    %3578 = vmatmul.bf16.gmra.mxu0 %v3413
    %v3579 = vpop.f32.mrf.mxu0
    %v3580 = vadd.f32 0.0, %v3579
    %v3581 = vpop.f32.mrf.mxu0
    %v3582 = vadd.f32 0.0, %v3581
    %3583 = vdwg.mxu0
    %v3584 = vadd.f32 %v3303, %v3425
    %v3585 = vadd.f32 %v3304, %v3427
    %v3586 = vadd.f32 %v3305, %v3430
    %v3587 = vadd.f32 %v3306, %v3432
    %v3588 = vadd.f32 %v3307, %v3435
    %v3589 = vadd.f32 %v3308, %v3437
    %v3590 = vadd.f32 %v3309, %v3440
    %v3591 = vadd.f32 %v3310, %v3442
    %v3592 = vadd.f32 %v3311, %v3445
    %v3593 = vadd.f32 %v3312, %v3447
    %v3594 = vadd.f32 %v3313, %v3450
    %v3595 = vadd.f32 %v3314, %v3452
    %v3596 = vadd.f32 %v3315, %v3455
    %v3597 = vadd.f32 %v3316, %v3457
    %v3598 = vadd.f32 %v3317, %v3460
    %v3599 = vadd.f32 %v3318, %v3462
    %v3600 = vadd.f32 %v3319, %v3465
    %v3601 = vadd.f32 %v3320, %v3467
    %v3602 = vadd.f32 %v3321, %v3470
    %v3603 = vadd.f32 %v3322, %v3472
    %v3604 = vadd.f32 %v3323, %v3475
    %v3605 = vadd.f32 %v3324, %v3477
    %v3606 = vadd.f32 %v3325, %v3480
    %v3607 = vadd.f32 %v3326, %v3482
    %v3608 = vadd.f32 %v3327, %v3485
    %v3609 = vadd.f32 %v3328, %v3487
    %v3610 = vadd.f32 %v3329, %v3490
    %v3611 = vadd.f32 %v3330, %v3492
    %v3612 = vadd.f32 %v3331, %v3495
    %v3613 = vadd.f32 %v3332, %v3497
    %v3614 = vadd.f32 %v3333, %v3500
    %v3615 = vadd.f32 %v3334, %v3502
    %v3616 = vadd.f32 %v3335, %v3505
    %v3617 = vadd.f32 %v3336, %v3507
    %v3618 = vadd.f32 %v3337, %v3510
    %v3619 = vadd.f32 %v3338, %v3512
    %v3620 = vadd.f32 %v3339, %v3515
    %v3621 = vadd.f32 %v3340, %v3517
    %v3622 = vadd.f32 %v3341, %v3520
    %v3623 = vadd.f32 %v3342, %v3522
    %v3624 = vadd.f32 %v3343, %v3525
    %v3625 = vadd.f32 %v3344, %v3527
    %v3626 = vadd.f32 %v3345, %v3530
    %v3627 = vadd.f32 %v3346, %v3532
    %v3628 = vadd.f32 %v3347, %v3535
    %v3629 = vadd.f32 %v3348, %v3537
    %v3630 = vadd.f32 %v3349, %v3540
    %v3631 = vadd.f32 %v3350, %v3542
    %v3632 = vadd.f32 %v3351, %v3545
    %v3633 = vadd.f32 %v3352, %v3547
    %v3634 = vadd.f32 %v3353, %v3550
    %v3635 = vadd.f32 %v3354, %v3552
    %v3636 = vadd.f32 %v3355, %v3555
    %v3637 = vadd.f32 %v3356, %v3557
    %v3638 = vadd.f32 %v3357, %v3560
    %v3639 = vadd.f32 %v3358, %v3562
    %v3640 = vadd.f32 %v3359, %v3565
    %v3641 = vadd.f32 %v3360, %v3567
    %v3642 = vadd.f32 %v3361, %v3570
    %v3643 = vadd.f32 %v3362, %v3572
    %v3644 = vadd.f32 %v3363, %v3575
    %v3645 = vadd.f32 %v3364, %v3577
    %v3646 = vadd.f32 %v3365, %v3580
    %v3647 = vadd.f32 %v3366, %v3582
    %v3649 = vshrl.u32 %v73, 16
    %v3651 = vrot.slane %v3649, 4
    %v3652 = vshll.u32 %v73, 16
    %v3654 = vrot.slane %v3652, 5
    %v3655 = vor.u32 %v3651, %v3654
    %v3656 = vrot.slane %v3655, 4
    %v3658 = vshll.u32 %v74, 16
    %v3660 = vrot.slane %v3658, 5
    %v3661 = vsel %vm140, %v3656, %v3660
    %v3662 = vshrl.u32 %v74, 16
    %v3664 = vrot.slane %v3662, 4
    %v3665 = vor.u32 %v3664, %v3660
    %v3666 = vrot.slane %v3665, 4
    %v3668 = vshll.u32 %v75, 16
    %v3670 = vrot.slane %v3668, 5
    %v3671 = vsel %vm140, %v3666, %v3670
    %v3673 = vshrl.u32 %v127, 16
    %v3675 = vrot.slane %v3673, 4
    %v3676 = vshll.u32 %v127, 16
    %v3678 = vrot.slane %v3676, 5
    %v3679 = vor.u32 %v3675, %v3678
    %v3680 = vrot.slane %v3679, 4
    %v3682 = vshll.u32 %v128, 16
    %v3684 = vrot.slane %v3682, 5
    %v3685 = vsel %vm140, %v3680, %v3684
    %v3686 = vshrl.u32 %v128, 16
    %v3688 = vrot.slane %v3686, 4
    %v3689 = vor.u32 %v3688, %v3684
    %v3690 = vrot.slane %v3689, 4
    %v3692 = vshll.u32 %v129, 16
    %v3694 = vrot.slane %v3692, 5
    %v3695 = vsel %vm140, %v3690, %v3694
    %v3696 = vld [vmem:[%s1 + $0xe0] sm:$0xf]
    %v3697 = vld [vmem:[%s1 + $0xe4] sm:$0xf]
    %v3698 = vld [vmem:[%s1 + $0xe8] sm:$0xf]
    %v3699 = vld [vmem:[%s1 + $0xec] sm:$0xf]
    %v3700 = vld [vmem:[%s1 + $0xf0] sm:$0xf]
    %v3701 = vld [vmem:[%s1 + $0xf4] sm:$0xf]
    %v3702 = vld [vmem:[%s1 + $0xf8] sm:$0xf]
    %v3703 = vld [vmem:[%s1 + $0xfc] sm:$0xf]
    %v3704 = vunpack.c.l.b16 %v3661
    %v3705 = vunpack.c.l.b16 %v3671
    %v3706 = vunpack.c.l.b16 %v3685
    %v3707 = vunpack.c.l.b16 %v3695
    %v3708 = vpack.c.b16 %v3705, %v3704
    %v3709 = vpack.c.b16 %v3707, %v3706
    %v3718 = vunpack.c.l.b16 %v3696
    %v3719 = vunpack.c.l.b16 %v3697
    %v3720 = vunpack.c.l.b16 %v3698
    %v3721 = vunpack.c.l.b16 %v3699
    %v3722 = vunpack.c.l.b16 %v3700
    %v3723 = vunpack.c.l.b16 %v3701
    %v3724 = vunpack.c.l.b16 %v3702
    %v3725 = vunpack.c.l.b16 %v3703
    %v3726 = vpack.c.b16 %v3719, %v3718
    %v3727 = vpack.c.b16 %v3721, %v3720
    %v3728 = vpack.c.b16 %v3723, %v3722
    %v3729 = vpack.c.b16 %v3725, %v3724
    %v3735 = vsel %vm1037, %v3708, 0
    %v3738 = vsel %vm1037, %v3709, 0
    %3740 = vmatpush.bf16.msra.mxu0 0
    %3741 = vmatpush.bf16.msra.mxu0 0
    %3742 = vmatpush.bf16.msra.mxu0 0
    %3743 = vmatpush.bf16.msra.mxu0 0
    %3744 = vmatpush.bf16.msra.mxu0 %v3729
    %3745 = vmatpush.bf16.msra.mxu0 %v3728
    %3746 = vmatpush.bf16.msra.mxu0 %v3727
    %3747 = vmatpush.bf16.msra.mxu0 %v3726
    %3748 = vmatmul.bf16.gmra.mxu0 %v1045
    %v3749 = vpop.f32.mrf.mxu0
    %v3750 = vadd.f32 0.0, %v3749
    %v3751 = vpop.f32.mrf.mxu0
    %v3752 = vadd.f32 0.0, %v3751
    %3753 = vmatmul.bf16.gmra.mxu0 %v1048
    %v3754 = vpop.f32.mrf.mxu0
    %v3755 = vadd.f32 0.0, %v3754
    %v3756 = vpop.f32.mrf.mxu0
    %v3757 = vadd.f32 0.0, %v3756
    %3758 = vmatmul.bf16.gmra.mxu0 %v1051
    %v3759 = vpop.f32.mrf.mxu0
    %v3760 = vadd.f32 0.0, %v3759
    %v3761 = vpop.f32.mrf.mxu0
    %v3762 = vadd.f32 0.0, %v3761
    %3763 = vmatmul.bf16.gmra.mxu0 %v1054
    %v3764 = vpop.f32.mrf.mxu0
    %v3765 = vadd.f32 0.0, %v3764
    %v3766 = vpop.f32.mrf.mxu0
    %v3767 = vadd.f32 0.0, %v3766
    %3768 = vmatmul.bf16.gmra.mxu0 %v1057
    %v3769 = vpop.f32.mrf.mxu0
    %v3770 = vadd.f32 0.0, %v3769
    %v3771 = vpop.f32.mrf.mxu0
    %v3772 = vadd.f32 0.0, %v3771
    %3773 = vmatmul.bf16.gmra.mxu0 %v1060
    %v3774 = vpop.f32.mrf.mxu0
    %v3775 = vadd.f32 0.0, %v3774
    %v3776 = vpop.f32.mrf.mxu0
    %v3777 = vadd.f32 0.0, %v3776
    %3778 = vmatmul.bf16.gmra.mxu0 %v1063
    %v3779 = vpop.f32.mrf.mxu0
    %v3780 = vadd.f32 0.0, %v3779
    %v3781 = vpop.f32.mrf.mxu0
    %v3782 = vadd.f32 0.0, %v3781
    %3783 = vmatmul.bf16.gmra.mxu0 %v1066
    %v3784 = vpop.f32.mrf.mxu0
    %v3785 = vadd.f32 0.0, %v3784
    %v3786 = vpop.f32.mrf.mxu0
    %v3787 = vadd.f32 0.0, %v3786
    %3788 = vmatmul.bf16.gmra.mxu0 %v1069
    %v3789 = vpop.f32.mrf.mxu0
    %v3790 = vadd.f32 0.0, %v3789
    %v3791 = vpop.f32.mrf.mxu0
    %v3792 = vadd.f32 0.0, %v3791
    %3793 = vmatmul.bf16.gmra.mxu0 %v1072
    %v3794 = vpop.f32.mrf.mxu0
    %v3795 = vadd.f32 0.0, %v3794
    %v3796 = vpop.f32.mrf.mxu0
    %v3797 = vadd.f32 0.0, %v3796
    %3798 = vmatmul.bf16.gmra.mxu0 %v1075
    %v3799 = vpop.f32.mrf.mxu0
    %v3800 = vadd.f32 0.0, %v3799
    %v3801 = vpop.f32.mrf.mxu0
    %v3802 = vadd.f32 0.0, %v3801
    %3803 = vmatmul.bf16.gmra.mxu0 %v1078
    %v3804 = vpop.f32.mrf.mxu0
    %v3805 = vadd.f32 0.0, %v3804
    %v3806 = vpop.f32.mrf.mxu0
    %v3807 = vadd.f32 0.0, %v3806
    %3808 = vmatmul.bf16.gmra.mxu0 %v1081
    %v3809 = vpop.f32.mrf.mxu0
    %v3810 = vadd.f32 0.0, %v3809
    %v3811 = vpop.f32.mrf.mxu0
    %v3812 = vadd.f32 0.0, %v3811
    %3813 = vmatmul.bf16.gmra.mxu0 %v1084
    %v3814 = vpop.f32.mrf.mxu0
    %v3815 = vadd.f32 0.0, %v3814
    %v3816 = vpop.f32.mrf.mxu0
    %v3817 = vadd.f32 0.0, %v3816
    %3818 = vmatmul.bf16.gmra.mxu0 %v2836
    %v3819 = vpop.f32.mrf.mxu0
    %v3820 = vadd.f32 0.0, %v3819
    %v3821 = vpop.f32.mrf.mxu0
    %v3822 = vadd.f32 0.0, %v3821
    %3823 = vmatmul.bf16.gmra.mxu0 %v3735
    %v3824 = vpop.f32.mrf.mxu0
    %v3825 = vadd.f32 0.0, %v3824
    %v3826 = vpop.f32.mrf.mxu0
    %v3827 = vadd.f32 0.0, %v3826
    %3828 = vmatmul.bf16.gmra.mxu0 %v1093
    %v3829 = vpop.f32.mrf.mxu0
    %v3830 = vadd.f32 0.0, %v3829
    %v3831 = vpop.f32.mrf.mxu0
    %v3832 = vadd.f32 0.0, %v3831
    %3833 = vmatmul.bf16.gmra.mxu0 %v1096
    %v3834 = vpop.f32.mrf.mxu0
    %v3835 = vadd.f32 0.0, %v3834
    %v3836 = vpop.f32.mrf.mxu0
    %v3837 = vadd.f32 0.0, %v3836
    %3838 = vmatmul.bf16.gmra.mxu0 %v1099
    %v3839 = vpop.f32.mrf.mxu0
    %v3840 = vadd.f32 0.0, %v3839
    %v3841 = vpop.f32.mrf.mxu0
    %v3842 = vadd.f32 0.0, %v3841
    %3843 = vmatmul.bf16.gmra.mxu0 %v1102
    %v3844 = vpop.f32.mrf.mxu0
    %v3845 = vadd.f32 0.0, %v3844
    %v3846 = vpop.f32.mrf.mxu0
    %v3847 = vadd.f32 0.0, %v3846
    %3848 = vmatmul.bf16.gmra.mxu0 %v1105
    %v3849 = vpop.f32.mrf.mxu0
    %v3850 = vadd.f32 0.0, %v3849
    %v3851 = vpop.f32.mrf.mxu0
    %v3852 = vadd.f32 0.0, %v3851
    %3853 = vmatmul.bf16.gmra.mxu0 %v1108
    %v3854 = vpop.f32.mrf.mxu0
    %v3855 = vadd.f32 0.0, %v3854
    %v3856 = vpop.f32.mrf.mxu0
    %v3857 = vadd.f32 0.0, %v3856
    %3858 = vmatmul.bf16.gmra.mxu0 %v1111
    %v3859 = vpop.f32.mrf.mxu0
    %v3860 = vadd.f32 0.0, %v3859
    %v3861 = vpop.f32.mrf.mxu0
    %v3862 = vadd.f32 0.0, %v3861
    %3863 = vmatmul.bf16.gmra.mxu0 %v1114
    %v3864 = vpop.f32.mrf.mxu0
    %v3865 = vadd.f32 0.0, %v3864
    %v3866 = vpop.f32.mrf.mxu0
    %v3867 = vadd.f32 0.0, %v3866
    %3868 = vmatmul.bf16.gmra.mxu0 %v1117
    %v3869 = vpop.f32.mrf.mxu0
    %v3870 = vadd.f32 0.0, %v3869
    %v3871 = vpop.f32.mrf.mxu0
    %v3872 = vadd.f32 0.0, %v3871
    %3873 = vmatmul.bf16.gmra.mxu0 %v1120
    %v3874 = vpop.f32.mrf.mxu0
    %v3875 = vadd.f32 0.0, %v3874
    %v3876 = vpop.f32.mrf.mxu0
    %v3877 = vadd.f32 0.0, %v3876
    %3878 = vmatmul.bf16.gmra.mxu0 %v1123
    %v3879 = vpop.f32.mrf.mxu0
    %v3880 = vadd.f32 0.0, %v3879
    %v3881 = vpop.f32.mrf.mxu0
    %v3882 = vadd.f32 0.0, %v3881
    %3883 = vmatmul.bf16.gmra.mxu0 %v1126
    %v3884 = vpop.f32.mrf.mxu0
    %v3885 = vadd.f32 0.0, %v3884
    %v3886 = vpop.f32.mrf.mxu0
    %v3887 = vadd.f32 0.0, %v3886
    %3888 = vmatmul.bf16.gmra.mxu0 %v1129
    %v3889 = vpop.f32.mrf.mxu0
    %v3890 = vadd.f32 0.0, %v3889
    %v3891 = vpop.f32.mrf.mxu0
    %v3892 = vadd.f32 0.0, %v3891
    %3893 = vmatmul.bf16.gmra.mxu0 %v1132
    %v3894 = vpop.f32.mrf.mxu0
    %v3895 = vadd.f32 0.0, %v3894
    %v3896 = vpop.f32.mrf.mxu0
    %v3897 = vadd.f32 0.0, %v3896
    %3898 = vmatmul.bf16.gmra.mxu0 %v2839
    %v3899 = vpop.f32.mrf.mxu0
    %v3900 = vadd.f32 0.0, %v3899
    %v3901 = vpop.f32.mrf.mxu0
    %v3902 = vadd.f32 0.0, %v3901
    %3903 = vmatmul.bf16.gmra.mxu0 %v3738
    %v3904 = vpop.f32.mrf.mxu0
    %v3905 = vadd.f32 0.0, %v3904
    %v3906 = vpop.f32.mrf.mxu0
    %v3907 = vadd.f32 0.0, %v3906
    %3908 = vdwg.mxu0
    %v3909 = vadd.f32 %v3584, %v3750
    %v3910 = vadd.f32 %v3585, %v3752
    %v3911 = vadd.f32 %v3586, %v3755
    %v3912 = vadd.f32 %v3587, %v3757
    %v3913 = vadd.f32 %v3588, %v3760
    %v3914 = vadd.f32 %v3589, %v3762
    %v3915 = vadd.f32 %v3590, %v3765
    %v3916 = vadd.f32 %v3591, %v3767
    %v3917 = vadd.f32 %v3592, %v3770
    %v3918 = vadd.f32 %v3593, %v3772
    %v3919 = vadd.f32 %v3594, %v3775
    %v3920 = vadd.f32 %v3595, %v3777
    %v3921 = vadd.f32 %v3596, %v3780
    %v3922 = vadd.f32 %v3597, %v3782
    %v3923 = vadd.f32 %v3598, %v3785
    %v3924 = vadd.f32 %v3599, %v3787
    %v3925 = vadd.f32 %v3600, %v3790
    %v3926 = vadd.f32 %v3601, %v3792
    %v3927 = vadd.f32 %v3602, %v3795
    %v3928 = vadd.f32 %v3603, %v3797
    %v3929 = vadd.f32 %v3604, %v3800
    %v3930 = vadd.f32 %v3605, %v3802
    %v3931 = vadd.f32 %v3606, %v3805
    %v3932 = vadd.f32 %v3607, %v3807
    %v3933 = vadd.f32 %v3608, %v3810
    %v3934 = vadd.f32 %v3609, %v3812
    %v3935 = vadd.f32 %v3610, %v3815
    %v3936 = vadd.f32 %v3611, %v3817
    %v3937 = vadd.f32 %v3612, %v3820
    %v3938 = vadd.f32 %v3613, %v3822
    %v3939 = vadd.f32 %v3614, %v3825
    %v3940 = vadd.f32 %v3615, %v3827
    %v3941 = vadd.f32 %v3616, %v3830
    %v3942 = vadd.f32 %v3617, %v3832
    %v3943 = vadd.f32 %v3618, %v3835
    %v3944 = vadd.f32 %v3619, %v3837
    %v3945 = vadd.f32 %v3620, %v3840
    %v3946 = vadd.f32 %v3621, %v3842
    %v3947 = vadd.f32 %v3622, %v3845
    %v3948 = vadd.f32 %v3623, %v3847
    %v3949 = vadd.f32 %v3624, %v3850
    %v3950 = vadd.f32 %v3625, %v3852
    %v3951 = vadd.f32 %v3626, %v3855
    %v3952 = vadd.f32 %v3627, %v3857
    %v3953 = vadd.f32 %v3628, %v3860
    %v3954 = vadd.f32 %v3629, %v3862
    %v3955 = vadd.f32 %v3630, %v3865
    %v3956 = vadd.f32 %v3631, %v3867
    %v3957 = vadd.f32 %v3632, %v3870
    %v3958 = vadd.f32 %v3633, %v3872
    %v3959 = vadd.f32 %v3634, %v3875
    %v3960 = vadd.f32 %v3635, %v3877
    %v3961 = vadd.f32 %v3636, %v3880
    %v3962 = vadd.f32 %v3637, %v3882
    %v3963 = vadd.f32 %v3638, %v3885
    %v3964 = vadd.f32 %v3639, %v3887
    %v3965 = vadd.f32 %v3640, %v3890
    %v3966 = vadd.f32 %v3641, %v3892
    %v3967 = vadd.f32 %v3642, %v3895
    %v3968 = vadd.f32 %v3643, %v3897
    %v3969 = vadd.f32 %v3644, %v3900
    %v3970 = vadd.f32 %v3645, %v3902
    %v3971 = vadd.f32 %v3646, %v3905
    %v3972 = vadd.f32 %v3647, %v3907
    %v3975 = vrot.slane %v73, 5
    %v3976 = vrot.slane %v3975, 4
    %v3977 = vrot.slane %v74, 5
    %v3978 = vsel %vm1786, %v3976, %v3977
    %v3979 = vrot.slane %v3977, 4
    %v3980 = vrot.slane %v75, 5
    %v3981 = vsel %vm1786, %v3979, %v3980
    %v3982 = vrot.slane %v127, 5
    %v3983 = vrot.slane %v3982, 4
    %v3984 = vrot.slane %v128, 5
    %v3985 = vsel %vm1786, %v3983, %v3984
    %v3986 = vrot.slane %v3984, 4
    %v3987 = vrot.slane %v129, 5
    %v3988 = vsel %vm1786, %v3986, %v3987
    %v3989 = vld [vmem:[%s1 + $0x100] sm:$0xf]
    %v3990 = vld [vmem:[%s1 + $0x104] sm:$0xf]
    %v3991 = vld [vmem:[%s1 + $0x108] sm:$0xf]
    %v3992 = vld [vmem:[%s1 + $0x10c] sm:$0xf]
    %v3993 = vld [vmem:[%s1 + $0x110] sm:$0xf]
    %v3994 = vld [vmem:[%s1 + $0x114] sm:$0xf]
    %v3995 = vld [vmem:[%s1 + $0x118] sm:$0xf]
    %v3996 = vld [vmem:[%s1 + $0x11c] sm:$0xf]
    %v3997 = vunpack.c.l.b16 %v3978
    %v3998 = vunpack.c.l.b16 %v3981
    %v3999 = vunpack.c.l.b16 %v3985
    %v4000 = vunpack.c.l.b16 %v3988
    %v4001 = vpack.c.b16 %v3998, %v3997
    %v4002 = vpack.c.b16 %v4000, %v3999
    %v4011 = vunpack.c.l.b16 %v3989
    %v4012 = vunpack.c.l.b16 %v3990
    %v4013 = vunpack.c.l.b16 %v3991
    %v4014 = vunpack.c.l.b16 %v3992
    %v4015 = vunpack.c.l.b16 %v3993
    %v4016 = vunpack.c.l.b16 %v3994
    %v4017 = vunpack.c.l.b16 %v3995
    %v4018 = vunpack.c.l.b16 %v3996
    %v4019 = vpack.c.b16 %v4012, %v4011
    %v4020 = vpack.c.b16 %v4014, %v4013
    %v4021 = vpack.c.b16 %v4016, %v4015
    %v4022 = vpack.c.b16 %v4018, %v4017
    %v4028 = vsel %vm1037, %v4001, 0
    %v4031 = vsel %vm1037, %v4002, 0
    %4033 = vmatpush.bf16.msra.mxu0 0
    %4034 = vmatpush.bf16.msra.mxu0 0
    %4035 = vmatpush.bf16.msra.mxu0 0
    %4036 = vmatpush.bf16.msra.mxu0 0
    %4037 = vmatpush.bf16.msra.mxu0 %v4022
    %4038 = vmatpush.bf16.msra.mxu0 %v4021
    %4039 = vmatpush.bf16.msra.mxu0 %v4020
    %4040 = vmatpush.bf16.msra.mxu0 %v4019
    %4041 = vmatmul.bf16.gmra.mxu0 %v2146
    %v4042 = vpop.f32.mrf.mxu0
    %v4043 = vadd.f32 0.0, %v4042
    %v4044 = vpop.f32.mrf.mxu0
    %v4045 = vadd.f32 0.0, %v4044
    %4046 = vmatmul.bf16.gmra.mxu0 %v2149
    %v4047 = vpop.f32.mrf.mxu0
    %v4048 = vadd.f32 0.0, %v4047
    %v4049 = vpop.f32.mrf.mxu0
    %v4050 = vadd.f32 0.0, %v4049
    %4051 = vmatmul.bf16.gmra.mxu0 %v2152
    %v4052 = vpop.f32.mrf.mxu0
    %v4053 = vadd.f32 0.0, %v4052
    %v4054 = vpop.f32.mrf.mxu0
    %v4055 = vadd.f32 0.0, %v4054
    %4056 = vmatmul.bf16.gmra.mxu0 %v2155
    %v4057 = vpop.f32.mrf.mxu0
    %v4058 = vadd.f32 0.0, %v4057
    %v4059 = vpop.f32.mrf.mxu0
    %v4060 = vadd.f32 0.0, %v4059
    %4061 = vmatmul.bf16.gmra.mxu0 %v2158
    %v4062 = vpop.f32.mrf.mxu0
    %v4063 = vadd.f32 0.0, %v4062
    %v4064 = vpop.f32.mrf.mxu0
    %v4065 = vadd.f32 0.0, %v4064
    %4066 = vmatmul.bf16.gmra.mxu0 %v2161
    %v4067 = vpop.f32.mrf.mxu0
    %v4068 = vadd.f32 0.0, %v4067
    %v4069 = vpop.f32.mrf.mxu0
    %v4070 = vadd.f32 0.0, %v4069
    %4071 = vmatmul.bf16.gmra.mxu0 %v2164
    %v4072 = vpop.f32.mrf.mxu0
    %v4073 = vadd.f32 0.0, %v4072
    %v4074 = vpop.f32.mrf.mxu0
    %v4075 = vadd.f32 0.0, %v4074
    %4076 = vmatmul.bf16.gmra.mxu0 %v2167
    %v4077 = vpop.f32.mrf.mxu0
    %v4078 = vadd.f32 0.0, %v4077
    %v4079 = vpop.f32.mrf.mxu0
    %v4080 = vadd.f32 0.0, %v4079
    %4081 = vmatmul.bf16.gmra.mxu0 %v2170
    %v4082 = vpop.f32.mrf.mxu0
    %v4083 = vadd.f32 0.0, %v4082
    %v4084 = vpop.f32.mrf.mxu0
    %v4085 = vadd.f32 0.0, %v4084
    %4086 = vmatmul.bf16.gmra.mxu0 %v2173
    %v4087 = vpop.f32.mrf.mxu0
    %v4088 = vadd.f32 0.0, %v4087
    %v4089 = vpop.f32.mrf.mxu0
    %v4090 = vadd.f32 0.0, %v4089
    %4091 = vmatmul.bf16.gmra.mxu0 %v2176
    %v4092 = vpop.f32.mrf.mxu0
    %v4093 = vadd.f32 0.0, %v4092
    %v4094 = vpop.f32.mrf.mxu0
    %v4095 = vadd.f32 0.0, %v4094
    %4096 = vmatmul.bf16.gmra.mxu0 %v2179
    %v4097 = vpop.f32.mrf.mxu0
    %v4098 = vadd.f32 0.0, %v4097
    %v4099 = vpop.f32.mrf.mxu0
    %v4100 = vadd.f32 0.0, %v4099
    %4101 = vmatmul.bf16.gmra.mxu0 %v2182
    %v4102 = vpop.f32.mrf.mxu0
    %v4103 = vadd.f32 0.0, %v4102
    %v4104 = vpop.f32.mrf.mxu0
    %v4105 = vadd.f32 0.0, %v4104
    %4106 = vmatmul.bf16.gmra.mxu0 %v2185
    %v4107 = vpop.f32.mrf.mxu0
    %v4108 = vadd.f32 0.0, %v4107
    %v4109 = vpop.f32.mrf.mxu0
    %v4110 = vadd.f32 0.0, %v4109
    %4111 = vmatmul.bf16.gmra.mxu0 %v3129
    %v4112 = vpop.f32.mrf.mxu0
    %v4113 = vadd.f32 0.0, %v4112
    %v4114 = vpop.f32.mrf.mxu0
    %v4115 = vadd.f32 0.0, %v4114
    %4116 = vmatmul.bf16.gmra.mxu0 %v4028
    %v4117 = vpop.f32.mrf.mxu0
    %v4118 = vadd.f32 0.0, %v4117
    %v4119 = vpop.f32.mrf.mxu0
    %v4120 = vadd.f32 0.0, %v4119
    %4121 = vmatmul.bf16.gmra.mxu0 %v2194
    %v4122 = vpop.f32.mrf.mxu0
    %v4123 = vadd.f32 0.0, %v4122
    %v4124 = vpop.f32.mrf.mxu0
    %v4125 = vadd.f32 0.0, %v4124
    %4126 = vmatmul.bf16.gmra.mxu0 %v2197
    %v4127 = vpop.f32.mrf.mxu0
    %v4128 = vadd.f32 0.0, %v4127
    %v4129 = vpop.f32.mrf.mxu0
    %v4130 = vadd.f32 0.0, %v4129
    %4131 = vmatmul.bf16.gmra.mxu0 %v2200
    %v4132 = vpop.f32.mrf.mxu0
    %v4133 = vadd.f32 0.0, %v4132
    %v4134 = vpop.f32.mrf.mxu0
    %v4135 = vadd.f32 0.0, %v4134
    %4136 = vmatmul.bf16.gmra.mxu0 %v2203
    %v4137 = vpop.f32.mrf.mxu0
    %v4138 = vadd.f32 0.0, %v4137
    %v4139 = vpop.f32.mrf.mxu0
    %v4140 = vadd.f32 0.0, %v4139
    %4141 = vmatmul.bf16.gmra.mxu0 %v2206
    %v4142 = vpop.f32.mrf.mxu0
    %v4143 = vadd.f32 0.0, %v4142
    %v4144 = vpop.f32.mrf.mxu0
    %v4145 = vadd.f32 0.0, %v4144
    %4146 = vmatmul.bf16.gmra.mxu0 %v2209
    %v4147 = vpop.f32.mrf.mxu0
    %v4148 = vadd.f32 0.0, %v4147
    %v4149 = vpop.f32.mrf.mxu0
    %v4150 = vadd.f32 0.0, %v4149
    %4151 = vmatmul.bf16.gmra.mxu0 %v2212
    %v4152 = vpop.f32.mrf.mxu0
    %v4153 = vadd.f32 0.0, %v4152
    %v4154 = vpop.f32.mrf.mxu0
    %v4155 = vadd.f32 0.0, %v4154
    %4156 = vmatmul.bf16.gmra.mxu0 %v2215
    %v4157 = vpop.f32.mrf.mxu0
    %v4158 = vadd.f32 0.0, %v4157
    %v4159 = vpop.f32.mrf.mxu0
    %v4160 = vadd.f32 0.0, %v4159
    %4161 = vmatmul.bf16.gmra.mxu0 %v2218
    %v4162 = vpop.f32.mrf.mxu0
    %v4163 = vadd.f32 0.0, %v4162
    %v4164 = vpop.f32.mrf.mxu0
    %v4165 = vadd.f32 0.0, %v4164
    %4166 = vmatmul.bf16.gmra.mxu0 %v2221
    %v4167 = vpop.f32.mrf.mxu0
    %v4168 = vadd.f32 0.0, %v4167
    %v4169 = vpop.f32.mrf.mxu0
    %v4170 = vadd.f32 0.0, %v4169
    %4171 = vmatmul.bf16.gmra.mxu0 %v2224
    %v4172 = vpop.f32.mrf.mxu0
    %v4173 = vadd.f32 0.0, %v4172
    %v4174 = vpop.f32.mrf.mxu0
    %v4175 = vadd.f32 0.0, %v4174
    %4176 = vmatmul.bf16.gmra.mxu0 %v2227
    %v4177 = vpop.f32.mrf.mxu0
    %v4178 = vadd.f32 0.0, %v4177
    %v4179 = vpop.f32.mrf.mxu0
    %v4180 = vadd.f32 0.0, %v4179
    %4181 = vmatmul.bf16.gmra.mxu0 %v2230
    %v4182 = vpop.f32.mrf.mxu0
    %v4183 = vadd.f32 0.0, %v4182
    %v4184 = vpop.f32.mrf.mxu0
    %v4185 = vadd.f32 0.0, %v4184
    %4186 = vmatmul.bf16.gmra.mxu0 %v2233
    %v4187 = vpop.f32.mrf.mxu0
    %v4188 = vadd.f32 0.0, %v4187
    %v4189 = vpop.f32.mrf.mxu0
    %v4190 = vadd.f32 0.0, %v4189
    %4191 = vmatmul.bf16.gmra.mxu0 %v3132
    %v4192 = vpop.f32.mrf.mxu0
    %v4193 = vadd.f32 0.0, %v4192
    %v4194 = vpop.f32.mrf.mxu0
    %v4195 = vadd.f32 0.0, %v4194
    %4196 = vmatmul.bf16.gmra.mxu0 %v4031
    %v4197 = vpop.f32.mrf.mxu0
    %v4198 = vadd.f32 0.0, %v4197
    %v4199 = vpop.f32.mrf.mxu0
    %v4200 = vadd.f32 0.0, %v4199
    %4201 = vdwg.mxu0
    %v4202 = vadd.f32 %v3909, %v4043
    %v4203 = vadd.f32 %v3910, %v4045
    %v4204 = vadd.f32 %v3911, %v4048
    %v4205 = vadd.f32 %v3912, %v4050
    %v4206 = vadd.f32 %v3913, %v4053
    %v4207 = vadd.f32 %v3914, %v4055
    %v4208 = vadd.f32 %v3915, %v4058
    %v4209 = vadd.f32 %v3916, %v4060
    %v4210 = vadd.f32 %v3917, %v4063
    %v4211 = vadd.f32 %v3918, %v4065
    %v4212 = vadd.f32 %v3919, %v4068
    %v4213 = vadd.f32 %v3920, %v4070
    %v4214 = vadd.f32 %v3921, %v4073
    %v4215 = vadd.f32 %v3922, %v4075
    %v4216 = vadd.f32 %v3923, %v4078
    %v4217 = vadd.f32 %v3924, %v4080
    %v4218 = vadd.f32 %v3925, %v4083
    %v4219 = vadd.f32 %v3926, %v4085
    %v4220 = vadd.f32 %v3927, %v4088
    %v4221 = vadd.f32 %v3928, %v4090
    %v4222 = vadd.f32 %v3929, %v4093
    %v4223 = vadd.f32 %v3930, %v4095
    %v4224 = vadd.f32 %v3931, %v4098
    %v4225 = vadd.f32 %v3932, %v4100
    %v4226 = vadd.f32 %v3933, %v4103
    %v4227 = vadd.f32 %v3934, %v4105
    %v4228 = vadd.f32 %v3935, %v4108
    %v4229 = vadd.f32 %v3936, %v4110
    %v4230 = vadd.f32 %v3937, %v4113
    %v4231 = vadd.f32 %v3938, %v4115
    %v4232 = vadd.f32 %v3939, %v4118
    %v4233 = vadd.f32 %v3940, %v4120
    %v4234 = vadd.f32 %v3941, %v4123
    %v4235 = vadd.f32 %v3942, %v4125
    %v4236 = vadd.f32 %v3943, %v4128
    %v4237 = vadd.f32 %v3944, %v4130
    %v4238 = vadd.f32 %v3945, %v4133
    %v4239 = vadd.f32 %v3946, %v4135
    %v4240 = vadd.f32 %v3947, %v4138
    %v4241 = vadd.f32 %v3948, %v4140
    %v4242 = vadd.f32 %v3949, %v4143
    %v4243 = vadd.f32 %v3950, %v4145
    %v4244 = vadd.f32 %v3951, %v4148
    %v4245 = vadd.f32 %v3952, %v4150
    %v4246 = vadd.f32 %v3953, %v4153
    %v4247 = vadd.f32 %v3954, %v4155
    %v4248 = vadd.f32 %v3955, %v4158
    %v4249 = vadd.f32 %v3956, %v4160
    %v4250 = vadd.f32 %v3957, %v4163
    %v4251 = vadd.f32 %v3958, %v4165
    %v4252 = vadd.f32 %v3959, %v4168
    %v4253 = vadd.f32 %v3960, %v4170
    %v4254 = vadd.f32 %v3961, %v4173
    %v4255 = vadd.f32 %v3962, %v4175
    %v4256 = vadd.f32 %v3963, %v4178
    %v4257 = vadd.f32 %v3964, %v4180
    %v4258 = vadd.f32 %v3965, %v4183
    %v4259 = vadd.f32 %v3966, %v4185
    %v4260 = vadd.f32 %v3967, %v4188
    %v4261 = vadd.f32 %v3968, %v4190
    %v4262 = vadd.f32 %v3969, %v4193
    %v4263 = vadd.f32 %v3970, %v4195
    %v4264 = vadd.f32 %v3971, %v4198
    %v4265 = vadd.f32 %v3972, %v4200
    %v4266 = vld [vmem:[%s2] sm:$0x1]
    %v4268 = vperm.slane %v4266, 0
    %v4270 = vadd.f32 %v4202, %v4268
    %v4271 = vadd.f32 %v4203, %v4268
    %v4272 = vadd.f32 %v4204, %v4268
    %v4273 = vadd.f32 %v4205, %v4268
    %v4274 = vadd.f32 %v4206, %v4268
    %v4275 = vadd.f32 %v4207, %v4268
    %v4276 = vadd.f32 %v4208, %v4268
    %v4277 = vadd.f32 %v4209, %v4268
    %v4278 = vadd.f32 %v4210, %v4268
    %v4279 = vadd.f32 %v4211, %v4268
    %v4280 = vadd.f32 %v4212, %v4268
    %v4281 = vadd.f32 %v4213, %v4268
    %v4282 = vadd.f32 %v4214, %v4268
    %v4283 = vadd.f32 %v4215, %v4268
    %v4284 = vadd.f32 %v4216, %v4268
    %v4285 = vadd.f32 %v4217, %v4268
    %v4286 = vadd.f32 %v4218, %v4268
    %v4287 = vadd.f32 %v4219, %v4268
    %v4288 = vadd.f32 %v4220, %v4268
    %v4289 = vadd.f32 %v4221, %v4268
    %v4290 = vadd.f32 %v4222, %v4268
    %v4291 = vadd.f32 %v4223, %v4268
    %v4292 = vadd.f32 %v4224, %v4268
    %v4293 = vadd.f32 %v4225, %v4268
    %v4294 = vadd.f32 %v4226, %v4268
    %v4295 = vadd.f32 %v4227, %v4268
    %v4296 = vadd.f32 %v4228, %v4268
    %v4297 = vadd.f32 %v4229, %v4268
    %v4298 = vadd.f32 %v4230, %v4268
    %v4299 = vadd.f32 %v4231, %v4268
    %v4300 = vadd.f32 %v4232, %v4268
    %v4301 = vadd.f32 %v4233, %v4268
    %v4302 = vadd.f32 %v4234, %v4268
    %v4303 = vadd.f32 %v4235, %v4268
    %v4304 = vadd.f32 %v4236, %v4268
    %v4305 = vadd.f32 %v4237, %v4268
    %v4306 = vadd.f32 %v4238, %v4268
    %v4307 = vadd.f32 %v4239, %v4268
    %v4308 = vadd.f32 %v4240, %v4268
    %v4309 = vadd.f32 %v4241, %v4268
    %v4310 = vadd.f32 %v4242, %v4268
    %v4311 = vadd.f32 %v4243, %v4268
    %v4312 = vadd.f32 %v4244, %v4268
    %v4313 = vadd.f32 %v4245, %v4268
    %v4314 = vadd.f32 %v4246, %v4268
    %v4315 = vadd.f32 %v4247, %v4268
    %v4316 = vadd.f32 %v4248, %v4268
    %v4317 = vadd.f32 %v4249, %v4268
    %v4318 = vadd.f32 %v4250, %v4268
    %v4319 = vadd.f32 %v4251, %v4268
    %v4320 = vadd.f32 %v4252, %v4268
    %v4321 = vadd.f32 %v4253, %v4268
    %v4322 = vadd.f32 %v4254, %v4268
    %v4323 = vadd.f32 %v4255, %v4268
    %v4324 = vadd.f32 %v4256, %v4268
    %v4325 = vadd.f32 %v4257, %v4268
    %v4326 = vadd.f32 %v4258, %v4268
    %v4327 = vadd.f32 %v4259, %v4268
    %v4328 = vadd.f32 %v4260, %v4268
    %v4329 = vadd.f32 %v4261, %v4268
    %v4330 = vadd.f32 %v4262, %v4268
    %v4331 = vadd.f32 %v4263, %v4268
    %v4332 = vadd.f32 %v4264, %v4268
    %v4333 = vadd.f32 %v4265, %v4268
    %v4334 = vsel %vm1037, %v4270, 0.0
    %v4335 = vsel %vm1037, %v4271, 0.0
    %v4336 = vadd.f32 %v4334, %v4335
    %v4337 = vsel %vm1037, %v4272, 0.0
    %v4338 = vadd.f32 %v4336, %v4337
    %v4339 = vsel %vm1037, %v4273, 0.0
    %v4340 = vadd.f32 %v4338, %v4339
    %v4341 = vsel %vm1037, %v4274, 0.0
    %v4342 = vadd.f32 %v4340, %v4341
    %v4343 = vsel %vm1037, %v4275, 0.0
    %v4344 = vadd.f32 %v4342, %v4343
    %v4345 = vsel %vm1037, %v4276, 0.0
    %v4346 = vadd.f32 %v4344, %v4345
    %v4347 = vsel %vm1037, %v4277, 0.0
    %v4348 = vadd.f32 %v4346, %v4347
    %v4349 = vsel %vm1037, %v4278, 0.0
    %v4350 = vadd.f32 %v4348, %v4349
    %v4351 = vsel %vm1037, %v4279, 0.0
    %v4352 = vadd.f32 %v4350, %v4351
    %v4353 = vsel %vm1037, %v4280, 0.0
    %v4354 = vadd.f32 %v4352, %v4353
    %v4355 = vsel %vm1037, %v4281, 0.0
    %v4356 = vadd.f32 %v4354, %v4355
    %v4357 = vsel %vm1037, %v4282, 0.0
    %v4358 = vadd.f32 %v4356, %v4357
    %v4359 = vsel %vm1037, %v4283, 0.0
    %v4360 = vadd.f32 %v4358, %v4359
    %v4361 = vsel %vm1037, %v4284, 0.0
    %v4362 = vadd.f32 %v4360, %v4361
    %v4363 = vsel %vm1037, %v4285, 0.0
    %v4364 = vadd.f32 %v4362, %v4363
    %v4365 = vsel %vm1037, %v4286, 0.0
    %v4366 = vadd.f32 %v4364, %v4365
    %v4367 = vsel %vm1037, %v4287, 0.0
    %v4368 = vadd.f32 %v4366, %v4367
    %v4369 = vsel %vm1037, %v4288, 0.0
    %v4370 = vadd.f32 %v4368, %v4369
    %v4371 = vsel %vm1037, %v4289, 0.0
    %v4372 = vadd.f32 %v4370, %v4371
    %v4373 = vsel %vm1037, %v4290, 0.0
    %v4374 = vadd.f32 %v4372, %v4373
    %v4375 = vsel %vm1037, %v4291, 0.0
    %v4376 = vadd.f32 %v4374, %v4375
    %v4377 = vsel %vm1037, %v4292, 0.0
    %v4378 = vadd.f32 %v4376, %v4377
    %v4379 = vsel %vm1037, %v4293, 0.0
    %v4380 = vadd.f32 %v4378, %v4379
    %v4381 = vsel %vm1037, %v4294, 0.0
    %v4382 = vadd.f32 %v4380, %v4381
    %v4383 = vsel %vm1037, %v4295, 0.0
    %v4384 = vadd.f32 %v4382, %v4383
    %v4385 = vsel %vm1037, %v4296, 0.0
    %v4386 = vadd.f32 %v4384, %v4385
    %v4387 = vsel %vm1037, %v4297, 0.0
    %v4388 = vadd.f32 %v4386, %v4387
    %v4389 = vsel %vm1037, %v4298, 0.0
    %v4390 = vadd.f32 %v4388, %v4389
    %v4391 = vsel %vm1037, %v4299, 0.0
    %v4392 = vadd.f32 %v4390, %v4391
    %v4393 = vsel %vm1037, %v4300, 0.0
    %v4394 = vadd.f32 %v4392, %v4393
    %v4395 = vsel %vm1037, %v4301, 0.0
    %v4396 = vadd.f32 %v4394, %v4395
    %v4397 = vsel %vm1037, %v4302, 0.0
    %v4398 = vadd.f32 %v4396, %v4397
    %v4399 = vsel %vm1037, %v4303, 0.0
    %v4400 = vadd.f32 %v4398, %v4399
    %v4401 = vsel %vm1037, %v4304, 0.0
    %v4402 = vadd.f32 %v4400, %v4401
    %v4403 = vsel %vm1037, %v4305, 0.0
    %v4404 = vadd.f32 %v4402, %v4403
    %v4405 = vsel %vm1037, %v4306, 0.0
    %v4406 = vadd.f32 %v4404, %v4405
    %v4407 = vsel %vm1037, %v4307, 0.0
    %v4408 = vadd.f32 %v4406, %v4407
    %v4409 = vsel %vm1037, %v4308, 0.0
    %v4410 = vadd.f32 %v4408, %v4409
    %v4411 = vsel %vm1037, %v4309, 0.0
    %v4412 = vadd.f32 %v4410, %v4411
    %v4413 = vsel %vm1037, %v4310, 0.0
    %v4414 = vadd.f32 %v4412, %v4413
    %v4415 = vsel %vm1037, %v4311, 0.0
    %v4416 = vadd.f32 %v4414, %v4415
    %v4417 = vsel %vm1037, %v4312, 0.0
    %v4418 = vadd.f32 %v4416, %v4417
    %v4419 = vsel %vm1037, %v4313, 0.0
    %v4420 = vadd.f32 %v4418, %v4419
    %v4421 = vsel %vm1037, %v4314, 0.0
    %v4422 = vadd.f32 %v4420, %v4421
    %v4423 = vsel %vm1037, %v4315, 0.0
    %v4424 = vadd.f32 %v4422, %v4423
    %v4425 = vsel %vm1037, %v4316, 0.0
    %v4426 = vadd.f32 %v4424, %v4425
    %v4427 = vsel %vm1037, %v4317, 0.0
    %v4428 = vadd.f32 %v4426, %v4427
    %v4429 = vsel %vm1037, %v4318, 0.0
    %v4430 = vadd.f32 %v4428, %v4429
    %v4431 = vsel %vm1037, %v4319, 0.0
    %v4432 = vadd.f32 %v4430, %v4431
    %v4433 = vsel %vm1037, %v4320, 0.0
    %v4434 = vadd.f32 %v4432, %v4433
    %v4435 = vsel %vm1037, %v4321, 0.0
    %v4436 = vadd.f32 %v4434, %v4435
    %v4437 = vsel %vm1037, %v4322, 0.0
    %v4438 = vadd.f32 %v4436, %v4437
    %v4439 = vsel %vm1037, %v4323, 0.0
    %v4440 = vadd.f32 %v4438, %v4439
    %v4441 = vsel %vm1037, %v4324, 0.0
    %v4442 = vadd.f32 %v4440, %v4441
    %v4443 = vsel %vm1037, %v4325, 0.0
    %v4444 = vadd.f32 %v4442, %v4443
    %v4445 = vsel %vm1037, %v4326, 0.0
    %v4446 = vadd.f32 %v4444, %v4445
    %v4447 = vsel %vm1037, %v4327, 0.0
    %v4448 = vadd.f32 %v4446, %v4447
    %v4449 = vsel %vm1037, %v4328, 0.0
    %v4450 = vadd.f32 %v4448, %v4449
    %v4451 = vsel %vm1037, %v4329, 0.0
    %v4452 = vadd.f32 %v4450, %v4451
    %v4453 = vsel %vm1037, %v4330, 0.0
    %v4454 = vadd.f32 %v4452, %v4453
    %v4455 = vsel %vm1037, %v4331, 0.0
    %v4456 = vadd.f32 %v4454, %v4455
    %v4457 = vsel %vm1037, %v4332, 0.0
    %v4458 = vadd.f32 %v4456, %v4457
    %v4459 = vsel %vm1037, %v4333, 0.0
    %v4460 = vadd.f32 %v4458, %v4459
    %v4461 = vrot.slane %v4460, 4
    %v4462 = vadd.f32 %v4460, %v4461
    %v4463 = vrot.slane %v4462, 2
    %v4464 = vadd.f32 %v4462, %v4463
    %v4465 = vrot.slane %v4464, 1
    %v4466 = vadd.f32 %v4464, %v4465
    %v4467 = vmul.f32 %v4466, 0.001953125
    %v4468 = vsub.f32 %v4270, %v4467
    %v4469 = vsub.f32 %v4271, %v4467
    %v4470 = vsub.f32 %v4272, %v4467
    %v4471 = vsub.f32 %v4273, %v4467
    %v4472 = vsub.f32 %v4274, %v4467
    %v4473 = vsub.f32 %v4275, %v4467
    %v4474 = vsub.f32 %v4276, %v4467
    %v4475 = vsub.f32 %v4277, %v4467
    %v4476 = vsub.f32 %v4278, %v4467
    %v4477 = vsub.f32 %v4279, %v4467
    %v4478 = vsub.f32 %v4280, %v4467
    %v4479 = vsub.f32 %v4281, %v4467
    %v4480 = vsub.f32 %v4282, %v4467
    %v4481 = vsub.f32 %v4283, %v4467
    %v4482 = vsub.f32 %v4284, %v4467
    %v4483 = vsub.f32 %v4285, %v4467
    %v4484 = vsub.f32 %v4286, %v4467
    %v4485 = vsub.f32 %v4287, %v4467
    %v4486 = vsub.f32 %v4288, %v4467
    %v4487 = vsub.f32 %v4289, %v4467
    %v4488 = vsub.f32 %v4290, %v4467
    %v4489 = vsub.f32 %v4291, %v4467
    %v4490 = vsub.f32 %v4292, %v4467
    %v4491 = vsub.f32 %v4293, %v4467
    %v4492 = vsub.f32 %v4294, %v4467
    %v4493 = vsub.f32 %v4295, %v4467
    %v4494 = vsub.f32 %v4296, %v4467
    %v4495 = vsub.f32 %v4297, %v4467
    %v4496 = vsub.f32 %v4298, %v4467
    %v4497 = vsub.f32 %v4299, %v4467
    %v4498 = vsub.f32 %v4300, %v4467
    %v4499 = vsub.f32 %v4301, %v4467
    %v4500 = vsub.f32 %v4302, %v4467
    %v4501 = vsub.f32 %v4303, %v4467
    %v4502 = vsub.f32 %v4304, %v4467
    %v4503 = vsub.f32 %v4305, %v4467
    %v4504 = vsub.f32 %v4306, %v4467
    %v4505 = vsub.f32 %v4307, %v4467
    %v4506 = vsub.f32 %v4308, %v4467
    %v4507 = vsub.f32 %v4309, %v4467
    %v4508 = vsub.f32 %v4310, %v4467
    %v4509 = vsub.f32 %v4311, %v4467
    %v4510 = vsub.f32 %v4312, %v4467
    %v4511 = vsub.f32 %v4313, %v4467
    %v4512 = vsub.f32 %v4314, %v4467
    %v4513 = vsub.f32 %v4315, %v4467
    %v4514 = vsub.f32 %v4316, %v4467
    %v4515 = vsub.f32 %v4317, %v4467
    %v4516 = vsub.f32 %v4318, %v4467
    %v4517 = vsub.f32 %v4319, %v4467
    %v4518 = vsub.f32 %v4320, %v4467
    %v4519 = vsub.f32 %v4321, %v4467
    %v4520 = vsub.f32 %v4322, %v4467
    %v4521 = vsub.f32 %v4323, %v4467
    %v4522 = vsub.f32 %v4324, %v4467
    %v4523 = vsub.f32 %v4325, %v4467
    %v4524 = vsub.f32 %v4326, %v4467
    %v4525 = vsub.f32 %v4327, %v4467
    %v4526 = vsub.f32 %v4328, %v4467
    %v4527 = vsub.f32 %v4329, %v4467
    %v4528 = vsub.f32 %v4330, %v4467
    %v4529 = vsub.f32 %v4331, %v4467
    %v4530 = vsub.f32 %v4332, %v4467
    %v4531 = vsub.f32 %v4333, %v4467
    %v4532 = vmul.f32 %v4468, %v4468
    %v4533 = vmul.f32 %v4469, %v4469
    %v4534 = vmul.f32 %v4470, %v4470
    %v4535 = vmul.f32 %v4471, %v4471
    %v4536 = vmul.f32 %v4472, %v4472
    %v4537 = vmul.f32 %v4473, %v4473
    %v4538 = vmul.f32 %v4474, %v4474
    %v4539 = vmul.f32 %v4475, %v4475
    %v4540 = vmul.f32 %v4476, %v4476
    %v4541 = vmul.f32 %v4477, %v4477
    %v4542 = vmul.f32 %v4478, %v4478
    %v4543 = vmul.f32 %v4479, %v4479
    %v4544 = vmul.f32 %v4480, %v4480
    %v4545 = vmul.f32 %v4481, %v4481
    %v4546 = vmul.f32 %v4482, %v4482
    %v4547 = vmul.f32 %v4483, %v4483
    %v4548 = vmul.f32 %v4484, %v4484
    %v4549 = vmul.f32 %v4485, %v4485
    %v4550 = vmul.f32 %v4486, %v4486
    %v4551 = vmul.f32 %v4487, %v4487
    %v4552 = vmul.f32 %v4488, %v4488
    %v4553 = vmul.f32 %v4489, %v4489
    %v4554 = vmul.f32 %v4490, %v4490
    %v4555 = vmul.f32 %v4491, %v4491
    %v4556 = vmul.f32 %v4492, %v4492
    %v4557 = vmul.f32 %v4493, %v4493
    %v4558 = vmul.f32 %v4494, %v4494
    %v4559 = vmul.f32 %v4495, %v4495
    %v4560 = vmul.f32 %v4496, %v4496
    %v4561 = vmul.f32 %v4497, %v4497
    %v4562 = vmul.f32 %v4498, %v4498
    %v4563 = vmul.f32 %v4499, %v4499
    %v4564 = vmul.f32 %v4500, %v4500
    %v4565 = vmul.f32 %v4501, %v4501
    %v4566 = vmul.f32 %v4502, %v4502
    %v4567 = vmul.f32 %v4503, %v4503
    %v4568 = vmul.f32 %v4504, %v4504
    %v4569 = vmul.f32 %v4505, %v4505
    %v4570 = vmul.f32 %v4506, %v4506
    %v4571 = vmul.f32 %v4507, %v4507
    %v4572 = vmul.f32 %v4508, %v4508
    %v4573 = vmul.f32 %v4509, %v4509
    %v4574 = vmul.f32 %v4510, %v4510
    %v4575 = vmul.f32 %v4511, %v4511
    %v4576 = vmul.f32 %v4512, %v4512
    %v4577 = vmul.f32 %v4513, %v4513
    %v4578 = vmul.f32 %v4514, %v4514
    %v4579 = vmul.f32 %v4515, %v4515
    %v4580 = vmul.f32 %v4516, %v4516
    %v4581 = vmul.f32 %v4517, %v4517
    %v4582 = vmul.f32 %v4518, %v4518
    %v4583 = vmul.f32 %v4519, %v4519
    %v4584 = vmul.f32 %v4520, %v4520
    %v4585 = vmul.f32 %v4521, %v4521
    %v4586 = vmul.f32 %v4522, %v4522
    %v4587 = vmul.f32 %v4523, %v4523
    %v4588 = vmul.f32 %v4524, %v4524
    %v4589 = vmul.f32 %v4525, %v4525
    %v4590 = vmul.f32 %v4526, %v4526
    %v4591 = vmul.f32 %v4527, %v4527
    %v4592 = vmul.f32 %v4528, %v4528
    %v4593 = vmul.f32 %v4529, %v4529
    %v4594 = vmul.f32 %v4530, %v4530
    %v4595 = vmul.f32 %v4531, %v4531
    %v4596 = vsel %vm1037, %v4532, 0.0
    %v4597 = vsel %vm1037, %v4533, 0.0
    %v4598 = vadd.f32 %v4596, %v4597
    %v4599 = vsel %vm1037, %v4534, 0.0
    %v4600 = vadd.f32 %v4598, %v4599
    %v4601 = vsel %vm1037, %v4535, 0.0
    %v4602 = vadd.f32 %v4600, %v4601
    %v4603 = vsel %vm1037, %v4536, 0.0
    %v4604 = vadd.f32 %v4602, %v4603
    %v4605 = vsel %vm1037, %v4537, 0.0
    %v4606 = vadd.f32 %v4604, %v4605
    %v4607 = vsel %vm1037, %v4538, 0.0
    %v4608 = vadd.f32 %v4606, %v4607
    %v4609 = vsel %vm1037, %v4539, 0.0
    %v4610 = vadd.f32 %v4608, %v4609
    %v4611 = vsel %vm1037, %v4540, 0.0
    %v4612 = vadd.f32 %v4610, %v4611
    %v4613 = vsel %vm1037, %v4541, 0.0
    %v4614 = vadd.f32 %v4612, %v4613
    %v4615 = vsel %vm1037, %v4542, 0.0
    %v4616 = vadd.f32 %v4614, %v4615
    %v4617 = vsel %vm1037, %v4543, 0.0
    %v4618 = vadd.f32 %v4616, %v4617
    %v4619 = vsel %vm1037, %v4544, 0.0
    %v4620 = vadd.f32 %v4618, %v4619
    %v4621 = vsel %vm1037, %v4545, 0.0
    %v4622 = vadd.f32 %v4620, %v4621
    %v4623 = vsel %vm1037, %v4546, 0.0
    %v4624 = vadd.f32 %v4622, %v4623
    %v4625 = vsel %vm1037, %v4547, 0.0
    %v4626 = vadd.f32 %v4624, %v4625
    %v4627 = vsel %vm1037, %v4548, 0.0
    %v4628 = vadd.f32 %v4626, %v4627
    %v4629 = vsel %vm1037, %v4549, 0.0
    %v4630 = vadd.f32 %v4628, %v4629
    %v4631 = vsel %vm1037, %v4550, 0.0
    %v4632 = vadd.f32 %v4630, %v4631
    %v4633 = vsel %vm1037, %v4551, 0.0
    %v4634 = vadd.f32 %v4632, %v4633
    %v4635 = vsel %vm1037, %v4552, 0.0
    %v4636 = vadd.f32 %v4634, %v4635
    %v4637 = vsel %vm1037, %v4553, 0.0
    %v4638 = vadd.f32 %v4636, %v4637
    %v4639 = vsel %vm1037, %v4554, 0.0
    %v4640 = vadd.f32 %v4638, %v4639
    %v4641 = vsel %vm1037, %v4555, 0.0
    %v4642 = vadd.f32 %v4640, %v4641
    %v4643 = vsel %vm1037, %v4556, 0.0
    %v4644 = vadd.f32 %v4642, %v4643
    %v4645 = vsel %vm1037, %v4557, 0.0
    %v4646 = vadd.f32 %v4644, %v4645
    %v4647 = vsel %vm1037, %v4558, 0.0
    %v4648 = vadd.f32 %v4646, %v4647
    %v4649 = vsel %vm1037, %v4559, 0.0
    %v4650 = vadd.f32 %v4648, %v4649
    %v4651 = vsel %vm1037, %v4560, 0.0
    %v4652 = vadd.f32 %v4650, %v4651
    %v4653 = vsel %vm1037, %v4561, 0.0
    %v4654 = vadd.f32 %v4652, %v4653
    %v4655 = vsel %vm1037, %v4562, 0.0
    %v4656 = vadd.f32 %v4654, %v4655
    %v4657 = vsel %vm1037, %v4563, 0.0
    %v4658 = vadd.f32 %v4656, %v4657
    %v4659 = vsel %vm1037, %v4564, 0.0
    %v4660 = vadd.f32 %v4658, %v4659
    %v4661 = vsel %vm1037, %v4565, 0.0
    %v4662 = vadd.f32 %v4660, %v4661
    %v4663 = vsel %vm1037, %v4566, 0.0
    %v4664 = vadd.f32 %v4662, %v4663
    %v4665 = vsel %vm1037, %v4567, 0.0
    %v4666 = vadd.f32 %v4664, %v4665
    %v4667 = vsel %vm1037, %v4568, 0.0
    %v4668 = vadd.f32 %v4666, %v4667
    %v4669 = vsel %vm1037, %v4569, 0.0
    %v4670 = vadd.f32 %v4668, %v4669
    %v4671 = vsel %vm1037, %v4570, 0.0
    %v4672 = vadd.f32 %v4670, %v4671
    %v4673 = vsel %vm1037, %v4571, 0.0
    %v4674 = vadd.f32 %v4672, %v4673
    %v4675 = vsel %vm1037, %v4572, 0.0
    %v4676 = vadd.f32 %v4674, %v4675
    %v4677 = vsel %vm1037, %v4573, 0.0
    %v4678 = vadd.f32 %v4676, %v4677
    %v4679 = vsel %vm1037, %v4574, 0.0
    %v4680 = vadd.f32 %v4678, %v4679
    %v4681 = vsel %vm1037, %v4575, 0.0
    %v4682 = vadd.f32 %v4680, %v4681
    %v4683 = vsel %vm1037, %v4576, 0.0
    %v4684 = vadd.f32 %v4682, %v4683
    %v4685 = vsel %vm1037, %v4577, 0.0
    %v4686 = vadd.f32 %v4684, %v4685
    %v4687 = vsel %vm1037, %v4578, 0.0
    %v4688 = vadd.f32 %v4686, %v4687
    %v4689 = vsel %vm1037, %v4579, 0.0
    %v4690 = vadd.f32 %v4688, %v4689
    %v4691 = vsel %vm1037, %v4580, 0.0
    %v4692 = vadd.f32 %v4690, %v4691
    %v4693 = vsel %vm1037, %v4581, 0.0
    %v4694 = vadd.f32 %v4692, %v4693
    %v4695 = vsel %vm1037, %v4582, 0.0
    %v4696 = vadd.f32 %v4694, %v4695
    %v4697 = vsel %vm1037, %v4583, 0.0
    %v4698 = vadd.f32 %v4696, %v4697
    %v4699 = vsel %vm1037, %v4584, 0.0
    %v4700 = vadd.f32 %v4698, %v4699
    %v4701 = vsel %vm1037, %v4585, 0.0
    %v4702 = vadd.f32 %v4700, %v4701
    %v4703 = vsel %vm1037, %v4586, 0.0
    %v4704 = vadd.f32 %v4702, %v4703
    %v4705 = vsel %vm1037, %v4587, 0.0
    %v4706 = vadd.f32 %v4704, %v4705
    %v4707 = vsel %vm1037, %v4588, 0.0
    %v4708 = vadd.f32 %v4706, %v4707
    %v4709 = vsel %vm1037, %v4589, 0.0
    %v4710 = vadd.f32 %v4708, %v4709
    %v4711 = vsel %vm1037, %v4590, 0.0
    %v4712 = vadd.f32 %v4710, %v4711
    %v4713 = vsel %vm1037, %v4591, 0.0
    %v4714 = vadd.f32 %v4712, %v4713
    %v4715 = vsel %vm1037, %v4592, 0.0
    %v4716 = vadd.f32 %v4714, %v4715
    %v4717 = vsel %vm1037, %v4593, 0.0
    %v4718 = vadd.f32 %v4716, %v4717
    %v4719 = vsel %vm1037, %v4594, 0.0
    %v4720 = vadd.f32 %v4718, %v4719
    %v4721 = vsel %vm1037, %v4595, 0.0
    %v4722 = vadd.f32 %v4720, %v4721
    %v4723 = vrot.slane %v4722, 4
    %v4724 = vadd.f32 %v4722, %v4723
    %v4725 = vrot.slane %v4724, 2
    %v4726 = vadd.f32 %v4724, %v4725
    %v4727 = vrot.slane %v4726, 1
    %v4728 = vadd.f32 %v4726, %v4727
    %v4729 = vmul.f32 %v4728, 0.001953125
    %v4730 = vld [vmem:[%s3] sm:$0x1]
    %v4731 = vadd.f32 %v4729, 1e-05
    %v4732 = vrsqrt.pop %v4731
    %v4733 = vmul.f32 %v4732, %v4731
    %v4734 = vmul.f32 %v4733, %v4732
    %v4735 = vmul.f32 0.5, %v4734
    %v4736 = vsub.f32 1.5, %v4735
    %v4737 = vmul.f32 %v4732, %v4736
    %vm4738 = vweird.f32 %v4731
    %vm4739 = vweird.f32 %v4732
    %vm4740 = vmor %vm4738, %vm4739
    %v4741 = vsel %vm4740, %v4732, %v4737
    %v4742 = vmul.f32 %v4730, %v4741
    %v4744 = vperm.slane %v4742, 0
    %v4746 = vmul.f32 %v4468, %v4744
    %v4747 = vmul.f32 %v4469, %v4744
    %v4748 = vmul.f32 %v4470, %v4744
    %v4749 = vmul.f32 %v4471, %v4744
    %v4750 = vmul.f32 %v4472, %v4744
    %v4751 = vmul.f32 %v4473, %v4744
    %v4752 = vmul.f32 %v4474, %v4744
    %v4753 = vmul.f32 %v4475, %v4744
    %v4754 = vmul.f32 %v4476, %v4744
    %v4755 = vmul.f32 %v4477, %v4744
    %v4756 = vmul.f32 %v4478, %v4744
    %v4757 = vmul.f32 %v4479, %v4744
    %v4758 = vmul.f32 %v4480, %v4744
    %v4759 = vmul.f32 %v4481, %v4744
    %v4760 = vmul.f32 %v4482, %v4744
    %v4761 = vmul.f32 %v4483, %v4744
    %v4762 = vmul.f32 %v4484, %v4744
    %v4763 = vmul.f32 %v4485, %v4744
    %v4764 = vmul.f32 %v4486, %v4744
    %v4765 = vmul.f32 %v4487, %v4744
    %v4766 = vmul.f32 %v4488, %v4744
    %v4767 = vmul.f32 %v4489, %v4744
    %v4768 = vmul.f32 %v4490, %v4744
    %v4769 = vmul.f32 %v4491, %v4744
    %v4770 = vmul.f32 %v4492, %v4744
    %v4771 = vmul.f32 %v4493, %v4744
    %v4772 = vmul.f32 %v4494, %v4744
    %v4773 = vmul.f32 %v4495, %v4744
    %v4774 = vmul.f32 %v4496, %v4744
    %v4775 = vmul.f32 %v4497, %v4744
    %v4776 = vmul.f32 %v4498, %v4744
    %v4777 = vmul.f32 %v4499, %v4744
    %v4778 = vmul.f32 %v4500, %v4744
    %v4779 = vmul.f32 %v4501, %v4744
    %v4780 = vmul.f32 %v4502, %v4744
    %v4781 = vmul.f32 %v4503, %v4744
    %v4782 = vmul.f32 %v4504, %v4744
    %v4783 = vmul.f32 %v4505, %v4744
    %v4784 = vmul.f32 %v4506, %v4744
    %v4785 = vmul.f32 %v4507, %v4744
    %v4786 = vmul.f32 %v4508, %v4744
    %v4787 = vmul.f32 %v4509, %v4744
    %v4788 = vmul.f32 %v4510, %v4744
    %v4789 = vmul.f32 %v4511, %v4744
    %v4790 = vmul.f32 %v4512, %v4744
    %v4791 = vmul.f32 %v4513, %v4744
    %v4792 = vmul.f32 %v4514, %v4744
    %v4793 = vmul.f32 %v4515, %v4744
    %v4794 = vmul.f32 %v4516, %v4744
    %v4795 = vmul.f32 %v4517, %v4744
    %v4796 = vmul.f32 %v4518, %v4744
    %v4797 = vmul.f32 %v4519, %v4744
    %v4798 = vmul.f32 %v4520, %v4744
    %v4799 = vmul.f32 %v4521, %v4744
    %v4800 = vmul.f32 %v4522, %v4744
    %v4801 = vmul.f32 %v4523, %v4744
    %v4802 = vmul.f32 %v4524, %v4744
    %v4803 = vmul.f32 %v4525, %v4744
    %v4804 = vmul.f32 %v4526, %v4744
    %v4805 = vmul.f32 %v4527, %v4744
    %v4806 = vmul.f32 %v4528, %v4744
    %v4807 = vmul.f32 %v4529, %v4744
    %v4808 = vmul.f32 %v4530, %v4744
    %v4809 = vmul.f32 %v4531, %v4744
    %v4810 = vld [vmem:[%s4] sm:$0x1]
    %v4812 = vperm.slane %v4810, 0
    %v4814 = vadd.f32 %v4746, %v4812
    %v4815 = vadd.f32 %v4747, %v4812
    %v4816 = vadd.f32 %v4748, %v4812
    %v4817 = vadd.f32 %v4749, %v4812
    %v4818 = vadd.f32 %v4750, %v4812
    %v4819 = vadd.f32 %v4751, %v4812
    %v4820 = vadd.f32 %v4752, %v4812
    %v4821 = vadd.f32 %v4753, %v4812
    %v4822 = vadd.f32 %v4754, %v4812
    %v4823 = vadd.f32 %v4755, %v4812
    %v4824 = vadd.f32 %v4756, %v4812
    %v4825 = vadd.f32 %v4757, %v4812
    %v4826 = vadd.f32 %v4758, %v4812
    %v4827 = vadd.f32 %v4759, %v4812
    %v4828 = vadd.f32 %v4760, %v4812
    %v4829 = vadd.f32 %v4761, %v4812
    %v4830 = vadd.f32 %v4762, %v4812
    %v4831 = vadd.f32 %v4763, %v4812
    %v4832 = vadd.f32 %v4764, %v4812
    %v4833 = vadd.f32 %v4765, %v4812
    %v4834 = vadd.f32 %v4766, %v4812
    %v4835 = vadd.f32 %v4767, %v4812
    %v4836 = vadd.f32 %v4768, %v4812
    %v4837 = vadd.f32 %v4769, %v4812
    %v4838 = vadd.f32 %v4770, %v4812
    %v4839 = vadd.f32 %v4771, %v4812
    %v4840 = vadd.f32 %v4772, %v4812
    %v4841 = vadd.f32 %v4773, %v4812
    %v4842 = vadd.f32 %v4774, %v4812
    %v4843 = vadd.f32 %v4775, %v4812
    %v4844 = vadd.f32 %v4776, %v4812
    %v4845 = vadd.f32 %v4777, %v4812
    %v4846 = vadd.f32 %v4778, %v4812
    %v4847 = vadd.f32 %v4779, %v4812
    %v4848 = vadd.f32 %v4780, %v4812
    %v4849 = vadd.f32 %v4781, %v4812
    %v4850 = vadd.f32 %v4782, %v4812
    %v4851 = vadd.f32 %v4783, %v4812
    %v4852 = vadd.f32 %v4784, %v4812
    %v4853 = vadd.f32 %v4785, %v4812
    %v4854 = vadd.f32 %v4786, %v4812
    %v4855 = vadd.f32 %v4787, %v4812
    %v4856 = vadd.f32 %v4788, %v4812
    %v4857 = vadd.f32 %v4789, %v4812
    %v4858 = vadd.f32 %v4790, %v4812
    %v4859 = vadd.f32 %v4791, %v4812
    %v4860 = vadd.f32 %v4792, %v4812
    %v4861 = vadd.f32 %v4793, %v4812
    %v4862 = vadd.f32 %v4794, %v4812
    %v4863 = vadd.f32 %v4795, %v4812
    %v4864 = vadd.f32 %v4796, %v4812
    %v4865 = vadd.f32 %v4797, %v4812
    %v4866 = vadd.f32 %v4798, %v4812
    %v4867 = vadd.f32 %v4799, %v4812
    %v4868 = vadd.f32 %v4800, %v4812
    %v4869 = vadd.f32 %v4801, %v4812
    %v4870 = vadd.f32 %v4802, %v4812
    %v4871 = vadd.f32 %v4803, %v4812
    %v4872 = vadd.f32 %v4804, %v4812
    %v4873 = vadd.f32 %v4805, %v4812
    %v4874 = vadd.f32 %v4806, %v4812
    %v4875 = vadd.f32 %v4807, %v4812
    %v4876 = vadd.f32 %v4808, %v4812
    %v4877 = vadd.f32 %v4809, %v4812
    %v4878 = vmax.f32 %v4814, 0.0
    %v4879 = vmax.f32 %v4815, 0.0
    %v4880 = vmax.f32 %v4816, 0.0
    %v4881 = vmax.f32 %v4817, 0.0
    %v4882 = vmax.f32 %v4818, 0.0
    %v4883 = vmax.f32 %v4819, 0.0
    %v4884 = vmax.f32 %v4820, 0.0
    %v4885 = vmax.f32 %v4821, 0.0
    %v4886 = vmax.f32 %v4822, 0.0
    %v4887 = vmax.f32 %v4823, 0.0
    %v4888 = vmax.f32 %v4824, 0.0
    %v4889 = vmax.f32 %v4825, 0.0
    %v4890 = vmax.f32 %v4826, 0.0
    %v4891 = vmax.f32 %v4827, 0.0
    %v4892 = vmax.f32 %v4828, 0.0
    %v4893 = vmax.f32 %v4829, 0.0
    %v4894 = vmax.f32 %v4830, 0.0
    %v4895 = vmax.f32 %v4831, 0.0
    %v4896 = vmax.f32 %v4832, 0.0
    %v4897 = vmax.f32 %v4833, 0.0
    %v4898 = vmax.f32 %v4834, 0.0
    %v4899 = vmax.f32 %v4835, 0.0
    %v4900 = vmax.f32 %v4836, 0.0
    %v4901 = vmax.f32 %v4837, 0.0
    %v4902 = vmax.f32 %v4838, 0.0
    %v4903 = vmax.f32 %v4839, 0.0
    %v4904 = vmax.f32 %v4840, 0.0
    %v4905 = vmax.f32 %v4841, 0.0
    %v4906 = vmax.f32 %v4842, 0.0
    %v4907 = vmax.f32 %v4843, 0.0
    %v4908 = vmax.f32 %v4844, 0.0
    %v4909 = vmax.f32 %v4845, 0.0
    %v4910 = vmax.f32 %v4846, 0.0
    %v4911 = vmax.f32 %v4847, 0.0
    %v4912 = vmax.f32 %v4848, 0.0
    %v4913 = vmax.f32 %v4849, 0.0
    %v4914 = vmax.f32 %v4850, 0.0
    %v4915 = vmax.f32 %v4851, 0.0
    %v4916 = vmax.f32 %v4852, 0.0
    %v4917 = vmax.f32 %v4853, 0.0
    %v4918 = vmax.f32 %v4854, 0.0
    %v4919 = vmax.f32 %v4855, 0.0
    %v4920 = vmax.f32 %v4856, 0.0
    %v4921 = vmax.f32 %v4857, 0.0
    %v4922 = vmax.f32 %v4858, 0.0
    %v4923 = vmax.f32 %v4859, 0.0
    %v4924 = vmax.f32 %v4860, 0.0
    %v4925 = vmax.f32 %v4861, 0.0
    %v4926 = vmax.f32 %v4862, 0.0
    %v4927 = vmax.f32 %v4863, 0.0
    %v4928 = vmax.f32 %v4864, 0.0
    %v4929 = vmax.f32 %v4865, 0.0
    %v4930 = vmax.f32 %v4866, 0.0
    %v4931 = vmax.f32 %v4867, 0.0
    %v4932 = vmax.f32 %v4868, 0.0
    %v4933 = vmax.f32 %v4869, 0.0
    %v4934 = vmax.f32 %v4870, 0.0
    %v4935 = vmax.f32 %v4871, 0.0
    %v4936 = vmax.f32 %v4872, 0.0
    %v4937 = vmax.f32 %v4873, 0.0
    %v4938 = vmax.f32 %v4874, 0.0
    %v4939 = vmax.f32 %v4875, 0.0
    %v4940 = vmax.f32 %v4876, 0.0
    %v4941 = vmax.f32 %v4877, 0.0
    %4942 = vst.msk [vmem:[#allocation2] sm:$0xff] %vm1037, %v4878
    %4943 = vst.msk [vmem:[#allocation2 + $0x8] sm:$0xff] %vm1037, %v4879
    %4944 = vst.msk [vmem:[#allocation2 + $0x10] sm:$0xff] %vm1037, %v4880
    %4945 = vst.msk [vmem:[#allocation2 + $0x18] sm:$0xff] %vm1037, %v4881
    %4946 = vst.msk [vmem:[#allocation2 + $0x20] sm:$0xff] %vm1037, %v4882
    %4947 = vst.msk [vmem:[#allocation2 + $0x28] sm:$0xff] %vm1037, %v4883
    %4948 = vst.msk [vmem:[#allocation2 + $0x30] sm:$0xff] %vm1037, %v4884
    %4949 = vst.msk [vmem:[#allocation2 + $0x38] sm:$0xff] %vm1037, %v4885
    %4950 = vst.msk [vmem:[#allocation2 + $0x40] sm:$0xff] %vm1037, %v4886
    %4951 = vst.msk [vmem:[#allocation2 + $0x48] sm:$0xff] %vm1037, %v4887
    %4952 = vst.msk [vmem:[#allocation2 + $0x50] sm:$0xff] %vm1037, %v4888
    %4953 = vst.msk [vmem:[#allocation2 + $0x58] sm:$0xff] %vm1037, %v4889
    %4954 = vst.msk [vmem:[#allocation2 + $0x60] sm:$0xff] %vm1037, %v4890
    %4955 = vst.msk [vmem:[#allocation2 + $0x68] sm:$0xff] %vm1037, %v4891
    %4956 = vst.msk [vmem:[#allocation2 + $0x70] sm:$0xff] %vm1037, %v4892
    %4957 = vst.msk [vmem:[#allocation2 + $0x78] sm:$0xff] %vm1037, %v4893
    %4958 = vst.msk [vmem:[#allocation2 + $0x80] sm:$0xff] %vm1037, %v4894
    %4959 = vst.msk [vmem:[#allocation2 + $0x88] sm:$0xff] %vm1037, %v4895
    %4960 = vst.msk [vmem:[#allocation2 + $0x90] sm:$0xff] %vm1037, %v4896
    %4961 = vst.msk [vmem:[#allocation2 + $0x98] sm:$0xff] %vm1037, %v4897
    %4962 = vst.msk [vmem:[#allocation2 + $0xa0] sm:$0xff] %vm1037, %v4898
    %4963 = vst.msk [vmem:[#allocation2 + $0xa8] sm:$0xff] %vm1037, %v4899
    %4964 = vst.msk [vmem:[#allocation2 + $0xb0] sm:$0xff] %vm1037, %v4900
    %4965 = vst.msk [vmem:[#allocation2 + $0xb8] sm:$0xff] %vm1037, %v4901
    %4966 = vst.msk [vmem:[#allocation2 + $0xc0] sm:$0xff] %vm1037, %v4902
    %4967 = vst.msk [vmem:[#allocation2 + $0xc8] sm:$0xff] %vm1037, %v4903
    %4968 = vst.msk [vmem:[#allocation2 + $0xd0] sm:$0xff] %vm1037, %v4904
    %4969 = vst.msk [vmem:[#allocation2 + $0xd8] sm:$0xff] %vm1037, %v4905
    %4970 = vst.msk [vmem:[#allocation2 + $0xe0] sm:$0xff] %vm1037, %v4906
    %4971 = vst.msk [vmem:[#allocation2 + $0xe8] sm:$0xff] %vm1037, %v4907
    %4972 = vst.msk [vmem:[#allocation2 + $0xf0] sm:$0xff] %vm1037, %v4908
    %4973 = vst.msk [vmem:[#allocation2 + $0xf8] sm:$0xff] %vm1037, %v4909
    %4974 = vst.msk [vmem:[#allocation2 + $0x100] sm:$0xff] %vm1037, %v4910
    %4975 = vst.msk [vmem:[#allocation2 + $0x108] sm:$0xff] %vm1037, %v4911
    %4976 = vst.msk [vmem:[#allocation2 + $0x110] sm:$0xff] %vm1037, %v4912
    %4977 = vst.msk [vmem:[#allocation2 + $0x118] sm:$0xff] %vm1037, %v4913
    %4978 = vst.msk [vmem:[#allocation2 + $0x120] sm:$0xff] %vm1037, %v4914
    %4979 = vst.msk [vmem:[#allocation2 + $0x128] sm:$0xff] %vm1037, %v4915
    %4980 = vst.msk [vmem:[#allocation2 + $0x130] sm:$0xff] %vm1037, %v4916
    %4981 = vst.msk [vmem:[#allocation2 + $0x138] sm:$0xff] %vm1037, %v4917
    %4982 = vst.msk [vmem:[#allocation2 + $0x140] sm:$0xff] %vm1037, %v4918
    %4983 = vst.msk [vmem:[#allocation2 + $0x148] sm:$0xff] %vm1037, %v4919
    %4984 = vst.msk [vmem:[#allocation2 + $0x150] sm:$0xff] %vm1037, %v4920
    %4985 = vst.msk [vmem:[#allocation2 + $0x158] sm:$0xff] %vm1037, %v4921
    %4986 = vst.msk [vmem:[#allocation2 + $0x160] sm:$0xff] %vm1037, %v4922
    %4987 = vst.msk [vmem:[#allocation2 + $0x168] sm:$0xff] %vm1037, %v4923
    %4988 = vst.msk [vmem:[#allocation2 + $0x170] sm:$0xff] %vm1037, %v4924
    %4989 = vst.msk [vmem:[#allocation2 + $0x178] sm:$0xff] %vm1037, %v4925
    %4990 = vst.msk [vmem:[#allocation2 + $0x180] sm:$0xff] %vm1037, %v4926
    %4991 = vst.msk [vmem:[#allocation2 + $0x188] sm:$0xff] %vm1037, %v4927
    %4992 = vst.msk [vmem:[#allocation2 + $0x190] sm:$0xff] %vm1037, %v4928
    %4993 = vst.msk [vmem:[#allocation2 + $0x198] sm:$0xff] %vm1037, %v4929
    %4994 = vst.msk [vmem:[#allocation2 + $0x1a0] sm:$0xff] %vm1037, %v4930
    %4995 = vst.msk [vmem:[#allocation2 + $0x1a8] sm:$0xff] %vm1037, %v4931
    %4996 = vst.msk [vmem:[#allocation2 + $0x1b0] sm:$0xff] %vm1037, %v4932
    %4997 = vst.msk [vmem:[#allocation2 + $0x1b8] sm:$0xff] %vm1037, %v4933
    %4998 = vst.msk [vmem:[#allocation2 + $0x1c0] sm:$0xff] %vm1037, %v4934
    %4999 = vst.msk [vmem:[#allocation2 + $0x1c8] sm:$0xff] %vm1037, %v4935
    %5000 = vst.msk [vmem:[#allocation2 + $0x1d0] sm:$0xff] %vm1037, %v4936
    %5001 = vst.msk [vmem:[#allocation2 + $0x1d8] sm:$0xff] %vm1037, %v4937
    %5002 = vst.msk [vmem:[#allocation2 + $0x1e0] sm:$0xff] %vm1037, %v4938
    %5003 = vst.msk [vmem:[#allocation2 + $0x1e8] sm:$0xff] %vm1037, %v4939
    %5004 = vst.msk [vmem:[#allocation2 + $0x1f0] sm:$0xff] %vm1037, %v4940
    %5005 = vst.msk [vmem:[#allocation2 + $0x1f8] sm:$0xff] %vm1037, %v4941
    // Predicated region
    $region22: #{conv_block_apply.3} parent=1 // pred_check
      _
    $region23: #{conv_block_apply.3} parent=1 // pred_check_branch
      %5007 = sbr.rel (0) target = $region25
    $region24: #{conv_block_apply.3} parent=1 // pred_region
      %5009 = vsyncadd [#allocation3], 0
      %s5010 = sshll.u32 [#allocation2], 4
      %s5011 = int_to_ptr.vmem [resolvable:$true] %s5010
      %s5012 = sshll.u32 %s5, 4
      %s5013 = int_to_ptr.hbm [resolvable:$true] %s5012
      %5018 = dma.vmem_to_hbm [thread:$0]  %s5011, 8192, %s5013, [#allocation3], 128, 128, 8
    $region25: #{conv_block_apply.3} parent=1 // pred_fallthru
      _
    // Predicated region
    $region26: #{conv_block_apply.3} parent=1 // pred_check
      _
    $region27: #{conv_block_apply.3} parent=1 // pred_check_branch
      %5020 = sbr.rel (0) target = $region29
    $region28: #{conv_block_apply.3} parent=1 // pred_region
      %5022 = dma.done [#allocation3], 8192
    $region29: #{conv_block_apply.3} parent=1 // pred_fallthru
      _
    %5023 = vsyncpa [#allocation3], 1

// kernel: conv_block_apply.2
$region0: #{conv_block_apply.2}
  #allocation0 [shape = 'u32[]', space=smem, size = 0x4, offset = 0x4, fixed_abs, tag = 'smem constant byte address 0x4 - core index']
  #allocation1 [shape = 'u32[72,128]{1,0:T(1,128)}', space=vmem, size = 0x9000, scoped, tag = 'internal scratch']
  %s0 = inlined_call_operand.vmem [shape: bf16[2,18,18,4], index: 0, kind: input, shape index: {}]
  %s1 = inlined_call_operand.vmem [shape: bf16[36,64], index: 1, kind: input, shape index: {}]
  %s2 = inlined_call_operand.vmem [shape: f32[1,64], index: 2, kind: input, shape index: {}]
  %s3 = inlined_call_operand.vmem [shape: f32[1,64], index: 3, kind: input, shape index: {}]
  %s4 = inlined_call_operand.vmem [shape: f32[1,64], index: 4, kind: input, shape index: {}]
  %s5 = inlined_call_operand.vmem [shape: bf16[512,64], index: 5, kind: output, shape index: {}]
  %s6 = sld [smem:[#allocation0]]
  $region30: #{conv_block_apply.2} parent=0
    _
  %s8 = ssub.s32 1, %s6
  %s9 = scalar_select 0, %s8, %s6
  // Predicated region
  $region2: #{conv_block_apply.2} parent=0 // pred_check
    _
  $region3: #{conv_block_apply.2} parent=0 // pred_check_branch
    %11 = sbr.rel (0) target = $region5
  $region4: #{conv_block_apply.2} parent=0 // pred_region
    _
  $region5: #{conv_block_apply.2} parent=0 // pred_fallthru
    _
  // Predicated region
  $region6: #{conv_block_apply.2} parent=0 // pred_check
    _
  $region7: #{conv_block_apply.2} parent=0 // pred_check_branch
    %13 = sbr.rel (0) target = $region9
  $region8: #{conv_block_apply.2} parent=0 // pred_region
    _
  $region9: #{conv_block_apply.2} parent=0 // pred_fallthru
    _
  // Predicated region
  $region10: #{conv_block_apply.2} parent=0 // pred_check
    _
  $region11: #{conv_block_apply.2} parent=0 // pred_check_branch
    %15 = sbr.rel (0) target = $region13
  $region12: #{conv_block_apply.2} parent=0 // pred_region
    _
  $region13: #{conv_block_apply.2} parent=0 // pred_fallthru
    _
  // Predicated region
  $region14: #{conv_block_apply.2} parent=0 // pred_check
    _
  $region15: #{conv_block_apply.2} parent=0 // pred_check_branch
    %17 = sbr.rel (0) target = $region17
  $region16: #{conv_block_apply.2} parent=0 // pred_region
    _
  $region17: #{conv_block_apply.2} parent=0 // pred_fallthru
    _
  // Predicated region
  $region18: #{conv_block_apply.2} parent=0 // pred_check
    _
  $region19: #{conv_block_apply.2} parent=0 // pred_check_branch
    %19 = sbr.rel (0) target = $region21
  $region20: #{conv_block_apply.2} parent=0 // pred_region
    _
  $region21: #{conv_block_apply.2} parent=0 // pred_fallthru
    _
  %v21 = vld [vmem:[%s0] sm:$0xf]
  %v22 = vld [vmem:[%s0 + $0x4] sm:$0xf]
  %v23 = vld [vmem:[%s0 + $0x8] sm:$0x1]
  %v24 = vld [vmem:[%s0 + $0xc] sm:$0xf]
  %v25 = vld [vmem:[%s0 + $0x10] sm:$0xf]
  %v26 = vld [vmem:[%s0 + $0x14] sm:$0x1]
  %v27 = vld [vmem:[%s0 + $0x18] sm:$0xf]
  %v28 = vld [vmem:[%s0 + $0x1c] sm:$0xf]
  %v29 = vld [vmem:[%s0 + $0x20] sm:$0x1]
  %v30 = vld [vmem:[%s0 + $0x24] sm:$0xf]
  %v31 = vld [vmem:[%s0 + $0x28] sm:$0xf]
  %v32 = vld [vmem:[%s0 + $0x2c] sm:$0x1]
  %v33 = vld [vmem:[%s0 + $0x30] sm:$0xf]
  %v34 = vld [vmem:[%s0 + $0x34] sm:$0xf]
  %v35 = vld [vmem:[%s0 + $0x38] sm:$0x1]
  %v36 = vld [vmem:[%s0 + $0x3c] sm:$0xf]
  %v37 = vld [vmem:[%s0 + $0x40] sm:$0xf]
  %v38 = vld [vmem:[%s0 + $0x44] sm:$0x1]
  %v39 = vld [vmem:[%s0 + $0x48] sm:$0xf]
  %v40 = vld [vmem:[%s0 + $0x4c] sm:$0xf]
  %v41 = vld [vmem:[%s0 + $0x50] sm:$0x1]
  %v42 = vld [vmem:[%s0 + $0x54] sm:$0xf]
  %v43 = vld [vmem:[%s0 + $0x58] sm:$0xf]
  %v44 = vld [vmem:[%s0 + $0x5c] sm:$0x1]
  %v45 = vld [vmem:[%s0 + $0x60] sm:$0xf]
  %v46 = vld [vmem:[%s0 + $0x64] sm:$0xf]
  %v47 = vld [vmem:[%s0 + $0x68] sm:$0x1]
  %v48 = vld [vmem:[%s0 + $0x6c] sm:$0xf]
  %v49 = vld [vmem:[%s0 + $0x70] sm:$0xf]
  %v50 = vld [vmem:[%s0 + $0x74] sm:$0x1]
  %v51 = vld [vmem:[%s0 + $0x78] sm:$0xf]
  %v52 = vld [vmem:[%s0 + $0x7c] sm:$0xf]
  %v53 = vld [vmem:[%s0 + $0x80] sm:$0x1]
  %v54 = vld [vmem:[%s0 + $0x84] sm:$0xf]
  %v55 = vld [vmem:[%s0 + $0x88] sm:$0xf]
  %v56 = vld [vmem:[%s0 + $0x8c] sm:$0x1]
  %v57 = vld [vmem:[%s0 + $0x90] sm:$0xf]
  %v58 = vld [vmem:[%s0 + $0x94] sm:$0xf]
  %v59 = vld [vmem:[%s0 + $0x98] sm:$0x1]
  %v60 = vld [vmem:[%s0 + $0x9c] sm:$0xf]
  %v61 = vld [vmem:[%s0 + $0xa0] sm:$0xf]
  %v62 = vld [vmem:[%s0 + $0xa4] sm:$0x1]
  %v63 = vld [vmem:[%s0 + $0xa8] sm:$0xf]
  %v64 = vld [vmem:[%s0 + $0xac] sm:$0xf]
  %v65 = vld [vmem:[%s0 + $0xb0] sm:$0x1]
  %v66 = vld [vmem:[%s0 + $0xb4] sm:$0xf]
  %v67 = vld [vmem:[%s0 + $0xb8] sm:$0xf]
  %v68 = vld [vmem:[%s0 + $0xbc] sm:$0x1]
  %v69 = vld [vmem:[%s0 + $0xc0] sm:$0xf]
  %v70 = vld [vmem:[%s0 + $0xc4] sm:$0xf]
  %v71 = vld [vmem:[%s0 + $0xc8] sm:$0x1]
  %v72 = vld [vmem:[%s0 + $0xcc] sm:$0xf]
  %v73 = vld [vmem:[%s0 + $0xd0] sm:$0xf]
  %v74 = vld [vmem:[%s0 + $0xd4] sm:$0x1]
  %v75 = vld [vmem:[%s0 + $0xd8] sm:$0xf]
  %v76 = vld [vmem:[%s0 + $0xdc] sm:$0xf]
  %v77 = vld [vmem:[%s0 + $0xe0] sm:$0x1]
  %v78 = vld [vmem:[%s0 + $0xe4] sm:$0xf]
  %v79 = vld [vmem:[%s0 + $0xe8] sm:$0xf]
  %v80 = vld [vmem:[%s0 + $0xec] sm:$0x1]
  %v81 = vld [vmem:[%s0 + $0xf0] sm:$0xf]
  %v82 = vld [vmem:[%s0 + $0xf4] sm:$0xf]
  %v83 = vld [vmem:[%s0 + $0xf8] sm:$0x1]
  %v84 = vld [vmem:[%s0 + $0xfc] sm:$0xf]
  %v85 = vld [vmem:[%s0 + $0x100] sm:$0xf]
  %v86 = vld [vmem:[%s0 + $0x104] sm:$0x1]
  %v87 = vld [vmem:[%s0 + $0x108] sm:$0xf]
  %v88 = vld [vmem:[%s0 + $0x10c] sm:$0xf]
  %v89 = vld [vmem:[%s0 + $0x110] sm:$0x1]
  %v90 = vld [vmem:[%s0 + $0x114] sm:$0xf]
  %v91 = vld [vmem:[%s0 + $0x118] sm:$0xf]
  %v92 = vld [vmem:[%s0 + $0x11c] sm:$0x1]
  %v93 = vld [vmem:[%s0 + $0x120] sm:$0xf]
  %v94 = vld [vmem:[%s0 + $0x124] sm:$0xf]
  %v95 = vld [vmem:[%s0 + $0x128] sm:$0x1]
  %v96 = vld [vmem:[%s0 + $0x12c] sm:$0xf]
  %v97 = vld [vmem:[%s0 + $0x130] sm:$0xf]
  %v98 = vld [vmem:[%s0 + $0x134] sm:$0x1]
  %v99 = vld [vmem:[%s0 + $0x138] sm:$0xf]
  %v100 = vld [vmem:[%s0 + $0x13c] sm:$0xf]
  %v101 = vld [vmem:[%s0 + $0x140] sm:$0x1]
  %v102 = vld [vmem:[%s0 + $0x144] sm:$0xf]
  %v103 = vld [vmem:[%s0 + $0x148] sm:$0xf]
  %v104 = vld [vmem:[%s0 + $0x14c] sm:$0x1]
  %v105 = vld [vmem:[%s0 + $0x150] sm:$0xf]
  %v106 = vld [vmem:[%s0 + $0x154] sm:$0xf]
  %v107 = vld [vmem:[%s0 + $0x158] sm:$0x1]
  %v108 = vld [vmem:[%s0 + $0x15c] sm:$0xf]
  %v109 = vld [vmem:[%s0 + $0x160] sm:$0xf]
  %v110 = vld [vmem:[%s0 + $0x164] sm:$0x1]
  %v111 = vld [vmem:[%s0 + $0x168] sm:$0xf]
  %v112 = vld [vmem:[%s0 + $0x16c] sm:$0xf]
  %v113 = vld [vmem:[%s0 + $0x170] sm:$0x1]
  %v114 = vld [vmem:[%s0 + $0x174] sm:$0xf]
  %v115 = vld [vmem:[%s0 + $0x178] sm:$0xf]
  %v116 = vld [vmem:[%s0 + $0x17c] sm:$0x1]
  %v117 = vld [vmem:[%s0 + $0x180] sm:$0xf]
  %v118 = vld [vmem:[%s0 + $0x184] sm:$0xf]
  %v119 = vld [vmem:[%s0 + $0x188] sm:$0x1]
  %v120 = vld [vmem:[%s0 + $0x18c] sm:$0xf]
  %v121 = vld [vmem:[%s0 + $0x190] sm:$0xf]
  %v122 = vld [vmem:[%s0 + $0x194] sm:$0x1]
  %v123 = vld [vmem:[%s0 + $0x198] sm:$0xf]
  %v124 = vld [vmem:[%s0 + $0x19c] sm:$0xf]
  %v125 = vld [vmem:[%s0 + $0x1a0] sm:$0x1]
  %v126 = vld [vmem:[%s0 + $0x1a4] sm:$0xf]
  %v127 = vld [vmem:[%s0 + $0x1a8] sm:$0xf]
  %v128 = vld [vmem:[%s0 + $0x1ac] sm:$0x1]
  %v129 = vld [vmem:[%s1] sm:$0x3]
  %vm130 = vsmask.f32 3328
  %vm131 = vsmask.f32 7440
  %vm132 = vmor %vm130, %vm131
  %v134 = vshrl.u32 %v21, 16
  %v136 = vrot.slane %v134, 4
  %v137 = vshll.u32 %v21, 16
  %v139 = vrot.slane %v137, 5
  %v140 = vor.u32 %v136, %v139
  %v141 = vrot.slane %v140, 4
  %v143 = vshll.u32 %v22, 16
  %v145 = vrot.slane %v143, 5
  %v146 = vsel %vm132, %v141, %v145
  %v147 = vshrl.u32 %v22, 16
  %v149 = vrot.slane %v147, 4
  %v150 = vor.u32 %v149, %v145
  %v151 = vrot.slane %v150, 4
  %v153 = vshll.u32 %v23, 16
  %v155 = vrot.slane %v153, 5
  %v156 = vsel %vm132, %v151, %v155
  %v158 = vshrl.u32 %v24, 16
  %v160 = vrot.slane %v158, 4
  %v161 = vshll.u32 %v24, 16
  %v163 = vrot.slane %v161, 5
  %v164 = vor.u32 %v160, %v163
  %v165 = vrot.slane %v164, 4
  %v167 = vshll.u32 %v25, 16
  %v169 = vrot.slane %v167, 5
  %v170 = vsel %vm132, %v165, %v169
  %v171 = vshrl.u32 %v25, 16
  %v173 = vrot.slane %v171, 4
  %v174 = vor.u32 %v173, %v169
  %v175 = vrot.slane %v174, 4
  %v177 = vshll.u32 %v26, 16
  %v179 = vrot.slane %v177, 5
  %v180 = vsel %vm132, %v175, %v179
  %v182 = vshrl.u32 %v27, 16
  %v184 = vrot.slane %v182, 4
  %v185 = vshll.u32 %v27, 16
  %v187 = vrot.slane %v185, 5
  %v188 = vor.u32 %v184, %v187
  %v189 = vrot.slane %v188, 4
  %v191 = vshll.u32 %v28, 16
  %v193 = vrot.slane %v191, 5
  %v194 = vsel %vm132, %v189, %v193
  %v195 = vshrl.u32 %v28, 16
  %v197 = vrot.slane %v195, 4
  %v198 = vor.u32 %v197, %v193
  %v199 = vrot.slane %v198, 4
  %v201 = vshll.u32 %v29, 16
  %v203 = vrot.slane %v201, 5
  %v204 = vsel %vm132, %v199, %v203
  %v206 = vshrl.u32 %v30, 16
  %v208 = vrot.slane %v206, 4
  %v209 = vshll.u32 %v30, 16
  %v211 = vrot.slane %v209, 5
  %v212 = vor.u32 %v208, %v211
  %v213 = vrot.slane %v212, 4
  %v215 = vshll.u32 %v31, 16
  %v217 = vrot.slane %v215, 5
  %v218 = vsel %vm132, %v213, %v217
  %v219 = vshrl.u32 %v31, 16
  %v221 = vrot.slane %v219, 4
  %v222 = vor.u32 %v221, %v217
  %v223 = vrot.slane %v222, 4
  %v225 = vshll.u32 %v32, 16
  %v227 = vrot.slane %v225, 5
  %v228 = vsel %vm132, %v223, %v227
  %v230 = vshrl.u32 %v33, 16
  %v232 = vrot.slane %v230, 4
  %v233 = vshll.u32 %v33, 16
  %v235 = vrot.slane %v233, 5
  %v236 = vor.u32 %v232, %v235
  %v237 = vrot.slane %v236, 4
  %v239 = vshll.u32 %v34, 16
  %v241 = vrot.slane %v239, 5
  %v242 = vsel %vm132, %v237, %v241
  %v243 = vshrl.u32 %v34, 16
  %v245 = vrot.slane %v243, 4
  %v246 = vor.u32 %v245, %v241
  %v247 = vrot.slane %v246, 4
  %v249 = vshll.u32 %v35, 16
  %v251 = vrot.slane %v249, 5
  %v252 = vsel %vm132, %v247, %v251
  %v254 = vshrl.u32 %v36, 16
  %v256 = vrot.slane %v254, 4
  %v257 = vshll.u32 %v36, 16
  %v259 = vrot.slane %v257, 5
  %v260 = vor.u32 %v256, %v259
  %v261 = vrot.slane %v260, 4
  %v263 = vshll.u32 %v37, 16
  %v265 = vrot.slane %v263, 5
  %v266 = vsel %vm132, %v261, %v265
  %v267 = vshrl.u32 %v37, 16
  %v269 = vrot.slane %v267, 4
  %v270 = vor.u32 %v269, %v265
  %v271 = vrot.slane %v270, 4
  %v273 = vshll.u32 %v38, 16
  %v275 = vrot.slane %v273, 5
  %v276 = vsel %vm132, %v271, %v275
  %v278 = vshrl.u32 %v39, 16
  %v280 = vrot.slane %v278, 4
  %v281 = vshll.u32 %v39, 16
  %v283 = vrot.slane %v281, 5
  %v284 = vor.u32 %v280, %v283
  %v285 = vrot.slane %v284, 4
  %v287 = vshll.u32 %v40, 16
  %v289 = vrot.slane %v287, 5
  %v290 = vsel %vm132, %v285, %v289
  %v291 = vshrl.u32 %v40, 16
  %v293 = vrot.slane %v291, 4
  %v294 = vor.u32 %v293, %v289
  %v295 = vrot.slane %v294, 4
  %v297 = vshll.u32 %v41, 16
  %v299 = vrot.slane %v297, 5
  %v300 = vsel %vm132, %v295, %v299
  %v302 = vshrl.u32 %v42, 16
  %v304 = vrot.slane %v302, 4
  %v305 = vshll.u32 %v42, 16
  %v307 = vrot.slane %v305, 5
  %v308 = vor.u32 %v304, %v307
  %v309 = vrot.slane %v308, 4
  %v311 = vshll.u32 %v43, 16
  %v313 = vrot.slane %v311, 5
  %v314 = vsel %vm132, %v309, %v313
  %v315 = vshrl.u32 %v43, 16
  %v317 = vrot.slane %v315, 4
  %v318 = vor.u32 %v317, %v313
  %v319 = vrot.slane %v318, 4
  %v321 = vshll.u32 %v44, 16
  %v323 = vrot.slane %v321, 5
  %v324 = vsel %vm132, %v319, %v323
  %v326 = vshrl.u32 %v45, 16
  %v328 = vrot.slane %v326, 4
  %v329 = vshll.u32 %v45, 16
  %v331 = vrot.slane %v329, 5
  %v332 = vor.u32 %v328, %v331
  %v333 = vrot.slane %v332, 4
  %v335 = vshll.u32 %v46, 16
  %v337 = vrot.slane %v335, 5
  %v338 = vsel %vm132, %v333, %v337
  %v339 = vshrl.u32 %v46, 16
  %v341 = vrot.slane %v339, 4
  %v342 = vor.u32 %v341, %v337
  %v343 = vrot.slane %v342, 4
  %v345 = vshll.u32 %v47, 16
  %v347 = vrot.slane %v345, 5
  %v348 = vsel %vm132, %v343, %v347
  %v350 = vshrl.u32 %v48, 16
  %v352 = vrot.slane %v350, 4
  %v353 = vshll.u32 %v48, 16
  %v355 = vrot.slane %v353, 5
  %v356 = vor.u32 %v352, %v355
  %v357 = vrot.slane %v356, 4
  %v359 = vshll.u32 %v49, 16
  %v361 = vrot.slane %v359, 5
  %v362 = vsel %vm132, %v357, %v361
  %v363 = vshrl.u32 %v49, 16
  %v365 = vrot.slane %v363, 4
  %v366 = vor.u32 %v365, %v361
  %v367 = vrot.slane %v366, 4
  %v369 = vshll.u32 %v50, 16
  %v371 = vrot.slane %v369, 5
  %v372 = vsel %vm132, %v367, %v371
  %v374 = vshrl.u32 %v51, 16
  %v376 = vrot.slane %v374, 4
  %v377 = vshll.u32 %v51, 16
  %v379 = vrot.slane %v377, 5
  %v380 = vor.u32 %v376, %v379
  %v381 = vrot.slane %v380, 4
  %v383 = vshll.u32 %v52, 16
  %v385 = vrot.slane %v383, 5
  %v386 = vsel %vm132, %v381, %v385
  %v387 = vshrl.u32 %v52, 16
  %v389 = vrot.slane %v387, 4
  %v390 = vor.u32 %v389, %v385
  %v391 = vrot.slane %v390, 4
  %v393 = vshll.u32 %v53, 16
  %v395 = vrot.slane %v393, 5
  %v396 = vsel %vm132, %v391, %v395
  %v398 = vshrl.u32 %v54, 16
  %v400 = vrot.slane %v398, 4
  %v401 = vshll.u32 %v54, 16
  %v403 = vrot.slane %v401, 5
  %v404 = vor.u32 %v400, %v403
  %v405 = vrot.slane %v404, 4
  %v407 = vshll.u32 %v55, 16
  %v409 = vrot.slane %v407, 5
  %v410 = vsel %vm132, %v405, %v409
  %v411 = vshrl.u32 %v55, 16
  %v413 = vrot.slane %v411, 4
  %v414 = vor.u32 %v413, %v409
  %v415 = vrot.slane %v414, 4
  %v417 = vshll.u32 %v56, 16
  %v419 = vrot.slane %v417, 5
  %v420 = vsel %vm132, %v415, %v419
  %v422 = vshrl.u32 %v57, 16
  %v424 = vrot.slane %v422, 4
  %v425 = vshll.u32 %v57, 16
  %v427 = vrot.slane %v425, 5
  %v428 = vor.u32 %v424, %v427
  %v429 = vrot.slane %v428, 4
  %v431 = vshll.u32 %v58, 16
  %v433 = vrot.slane %v431, 5
  %v434 = vsel %vm132, %v429, %v433
  %v435 = vshrl.u32 %v58, 16
  %v437 = vrot.slane %v435, 4
  %v438 = vor.u32 %v437, %v433
  %v439 = vrot.slane %v438, 4
  %v441 = vshll.u32 %v59, 16
  %v443 = vrot.slane %v441, 5
  %v444 = vsel %vm132, %v439, %v443
  %v446 = vshrl.u32 %v60, 16
  %v448 = vrot.slane %v446, 4
  %v449 = vshll.u32 %v60, 16
  %v451 = vrot.slane %v449, 5
  %v452 = vor.u32 %v448, %v451
  %v453 = vrot.slane %v452, 4
  %v455 = vshll.u32 %v61, 16
  %v457 = vrot.slane %v455, 5
  %v458 = vsel %vm132, %v453, %v457
  %v459 = vshrl.u32 %v61, 16
  %v461 = vrot.slane %v459, 4
  %v462 = vor.u32 %v461, %v457
  %v463 = vrot.slane %v462, 4
  %v465 = vshll.u32 %v62, 16
  %v467 = vrot.slane %v465, 5
  %v468 = vsel %vm132, %v463, %v467
  %v470 = vshrl.u32 %v63, 16
  %v472 = vrot.slane %v470, 4
  %v473 = vshll.u32 %v63, 16
  %v475 = vrot.slane %v473, 5
  %v476 = vor.u32 %v472, %v475
  %v477 = vrot.slane %v476, 4
  %v479 = vshll.u32 %v64, 16
  %v481 = vrot.slane %v479, 5
  %v482 = vsel %vm132, %v477, %v481
  %v483 = vshrl.u32 %v64, 16
  %v485 = vrot.slane %v483, 4
  %v486 = vor.u32 %v485, %v481
  %v487 = vrot.slane %v486, 4
  %v489 = vshll.u32 %v65, 16
  %v491 = vrot.slane %v489, 5
  %v492 = vsel %vm132, %v487, %v491
  %v494 = vshrl.u32 %v66, 16
  %v496 = vrot.slane %v494, 4
  %v497 = vshll.u32 %v66, 16
  %v499 = vrot.slane %v497, 5
  %v500 = vor.u32 %v496, %v499
  %v501 = vrot.slane %v500, 4
  %v503 = vshll.u32 %v67, 16
  %v505 = vrot.slane %v503, 5
  %v506 = vsel %vm132, %v501, %v505
  %v507 = vshrl.u32 %v67, 16
  %v509 = vrot.slane %v507, 4
  %v510 = vor.u32 %v509, %v505
  %v511 = vrot.slane %v510, 4
  %v513 = vshll.u32 %v68, 16
  %v515 = vrot.slane %v513, 5
  %v516 = vsel %vm132, %v511, %v515
  %v518 = vshrl.u32 %v75, 16
  %v520 = vrot.slane %v518, 4
  %v521 = vshll.u32 %v75, 16
  %v523 = vrot.slane %v521, 5
  %v524 = vor.u32 %v520, %v523
  %v525 = vrot.slane %v524, 4
  %v527 = vshll.u32 %v76, 16
  %v529 = vrot.slane %v527, 5
  %v530 = vsel %vm132, %v525, %v529
  %v531 = vshrl.u32 %v76, 16
  %v533 = vrot.slane %v531, 4
  %v534 = vor.u32 %v533, %v529
  %v535 = vrot.slane %v534, 4
  %v537 = vshll.u32 %v77, 16
  %v539 = vrot.slane %v537, 5
  %v540 = vsel %vm132, %v535, %v539
  %v542 = vshrl.u32 %v78, 16
  %v544 = vrot.slane %v542, 4
  %v545 = vshll.u32 %v78, 16
  %v547 = vrot.slane %v545, 5
  %v548 = vor.u32 %v544, %v547
  %v549 = vrot.slane %v548, 4
  %v551 = vshll.u32 %v79, 16
  %v553 = vrot.slane %v551, 5
  %v554 = vsel %vm132, %v549, %v553
  %v555 = vshrl.u32 %v79, 16
  %v557 = vrot.slane %v555, 4
  %v558 = vor.u32 %v557, %v553
  %v559 = vrot.slane %v558, 4
  %v561 = vshll.u32 %v80, 16
  %v563 = vrot.slane %v561, 5
  %v564 = vsel %vm132, %v559, %v563
  %v566 = vshrl.u32 %v81, 16
  %v568 = vrot.slane %v566, 4
  %v569 = vshll.u32 %v81, 16
  %v571 = vrot.slane %v569, 5
  %v572 = vor.u32 %v568, %v571
  %v573 = vrot.slane %v572, 4
  %v575 = vshll.u32 %v82, 16
  %v577 = vrot.slane %v575, 5
  %v578 = vsel %vm132, %v573, %v577
  %v579 = vshrl.u32 %v82, 16
  %v581 = vrot.slane %v579, 4
  %v582 = vor.u32 %v581, %v577
  %v583 = vrot.slane %v582, 4
  %v585 = vshll.u32 %v83, 16
  %v587 = vrot.slane %v585, 5
  %v588 = vsel %vm132, %v583, %v587
  %v590 = vshrl.u32 %v84, 16
  %v592 = vrot.slane %v590, 4
  %v593 = vshll.u32 %v84, 16
  %v595 = vrot.slane %v593, 5
  %v596 = vor.u32 %v592, %v595
  %v597 = vrot.slane %v596, 4
  %v599 = vshll.u32 %v85, 16
  %v601 = vrot.slane %v599, 5
  %v602 = vsel %vm132, %v597, %v601
  %v603 = vshrl.u32 %v85, 16
  %v605 = vrot.slane %v603, 4
  %v606 = vor.u32 %v605, %v601
  %v607 = vrot.slane %v606, 4
  %v609 = vshll.u32 %v86, 16
  %v611 = vrot.slane %v609, 5
  %v612 = vsel %vm132, %v607, %v611
  %v614 = vshrl.u32 %v87, 16
  %v616 = vrot.slane %v614, 4
  %v617 = vshll.u32 %v87, 16
  %v619 = vrot.slane %v617, 5
  %v620 = vor.u32 %v616, %v619
  %v621 = vrot.slane %v620, 4
  %v623 = vshll.u32 %v88, 16
  %v625 = vrot.slane %v623, 5
  %v626 = vsel %vm132, %v621, %v625
  %v627 = vshrl.u32 %v88, 16
  %v629 = vrot.slane %v627, 4
  %v630 = vor.u32 %v629, %v625
  %v631 = vrot.slane %v630, 4
  %v633 = vshll.u32 %v89, 16
  %v635 = vrot.slane %v633, 5
  %v636 = vsel %vm132, %v631, %v635
  %v638 = vshrl.u32 %v90, 16
  %v640 = vrot.slane %v638, 4
  %v641 = vshll.u32 %v90, 16
  %v643 = vrot.slane %v641, 5
  %v644 = vor.u32 %v640, %v643
  %v645 = vrot.slane %v644, 4
  %v647 = vshll.u32 %v91, 16
  %v649 = vrot.slane %v647, 5
  %v650 = vsel %vm132, %v645, %v649
  %v651 = vshrl.u32 %v91, 16
  %v653 = vrot.slane %v651, 4
  %v654 = vor.u32 %v653, %v649
  %v655 = vrot.slane %v654, 4
  %v657 = vshll.u32 %v92, 16
  %v659 = vrot.slane %v657, 5
  %v660 = vsel %vm132, %v655, %v659
  %v662 = vshrl.u32 %v93, 16
  %v664 = vrot.slane %v662, 4
  %v665 = vshll.u32 %v93, 16
  %v667 = vrot.slane %v665, 5
  %v668 = vor.u32 %v664, %v667
  %v669 = vrot.slane %v668, 4
  %v671 = vshll.u32 %v94, 16
  %v673 = vrot.slane %v671, 5
  %v674 = vsel %vm132, %v669, %v673
  %v675 = vshrl.u32 %v94, 16
  %v677 = vrot.slane %v675, 4
  %v678 = vor.u32 %v677, %v673
  %v679 = vrot.slane %v678, 4
  %v681 = vshll.u32 %v95, 16
  %v683 = vrot.slane %v681, 5
  %v684 = vsel %vm132, %v679, %v683
  %v686 = vshrl.u32 %v96, 16
  %v688 = vrot.slane %v686, 4
  %v689 = vshll.u32 %v96, 16
  %v691 = vrot.slane %v689, 5
  %v692 = vor.u32 %v688, %v691
  %v693 = vrot.slane %v692, 4
  %v695 = vshll.u32 %v97, 16
  %v697 = vrot.slane %v695, 5
  %v698 = vsel %vm132, %v693, %v697
  %v699 = vshrl.u32 %v97, 16
  %v701 = vrot.slane %v699, 4
  %v702 = vor.u32 %v701, %v697
  %v703 = vrot.slane %v702, 4
  %v705 = vshll.u32 %v98, 16
  %v707 = vrot.slane %v705, 5
  %v708 = vsel %vm132, %v703, %v707
  %v710 = vshrl.u32 %v99, 16
  %v712 = vrot.slane %v710, 4
  %v713 = vshll.u32 %v99, 16
  %v715 = vrot.slane %v713, 5
  %v716 = vor.u32 %v712, %v715
  %v717 = vrot.slane %v716, 4
  %v719 = vshll.u32 %v100, 16
  %v721 = vrot.slane %v719, 5
  %v722 = vsel %vm132, %v717, %v721
  %v723 = vshrl.u32 %v100, 16
  %v725 = vrot.slane %v723, 4
  %v726 = vor.u32 %v725, %v721
  %v727 = vrot.slane %v726, 4
  %v729 = vshll.u32 %v101, 16
  %v731 = vrot.slane %v729, 5
  %v732 = vsel %vm132, %v727, %v731
  %v734 = vshrl.u32 %v102, 16
  %v736 = vrot.slane %v734, 4
  %v737 = vshll.u32 %v102, 16
  %v739 = vrot.slane %v737, 5
  %v740 = vor.u32 %v736, %v739
  %v741 = vrot.slane %v740, 4
  %v743 = vshll.u32 %v103, 16
  %v745 = vrot.slane %v743, 5
  %v746 = vsel %vm132, %v741, %v745
  %v747 = vshrl.u32 %v103, 16
  %v749 = vrot.slane %v747, 4
  %v750 = vor.u32 %v749, %v745
  %v751 = vrot.slane %v750, 4
  %v753 = vshll.u32 %v104, 16
  %v755 = vrot.slane %v753, 5
  %v756 = vsel %vm132, %v751, %v755
  %v758 = vshrl.u32 %v105, 16
  %v760 = vrot.slane %v758, 4
  %v761 = vshll.u32 %v105, 16
  %v763 = vrot.slane %v761, 5
  %v764 = vor.u32 %v760, %v763
  %v765 = vrot.slane %v764, 4
  %v767 = vshll.u32 %v106, 16
  %v769 = vrot.slane %v767, 5
  %v770 = vsel %vm132, %v765, %v769
  %v771 = vshrl.u32 %v106, 16
  %v773 = vrot.slane %v771, 4
  %v774 = vor.u32 %v773, %v769
  %v775 = vrot.slane %v774, 4
  %v777 = vshll.u32 %v107, 16
  %v779 = vrot.slane %v777, 5
  %v780 = vsel %vm132, %v775, %v779
  %v782 = vshrl.u32 %v108, 16
  %v784 = vrot.slane %v782, 4
  %v785 = vshll.u32 %v108, 16
  %v787 = vrot.slane %v785, 5
  %v788 = vor.u32 %v784, %v787
  %v789 = vrot.slane %v788, 4
  %v791 = vshll.u32 %v109, 16
  %v793 = vrot.slane %v791, 5
  %v794 = vsel %vm132, %v789, %v793
  %v795 = vshrl.u32 %v109, 16
  %v797 = vrot.slane %v795, 4
  %v798 = vor.u32 %v797, %v793
  %v799 = vrot.slane %v798, 4
  %v801 = vshll.u32 %v110, 16
  %v803 = vrot.slane %v801, 5
  %v804 = vsel %vm132, %v799, %v803
  %v806 = vshrl.u32 %v111, 16
  %v808 = vrot.slane %v806, 4
  %v809 = vshll.u32 %v111, 16
  %v811 = vrot.slane %v809, 5
  %v812 = vor.u32 %v808, %v811
  %v813 = vrot.slane %v812, 4
  %v815 = vshll.u32 %v112, 16
  %v817 = vrot.slane %v815, 5
  %v818 = vsel %vm132, %v813, %v817
  %v819 = vshrl.u32 %v112, 16
  %v821 = vrot.slane %v819, 4
  %v822 = vor.u32 %v821, %v817
  %v823 = vrot.slane %v822, 4
  %v825 = vshll.u32 %v113, 16
  %v827 = vrot.slane %v825, 5
  %v828 = vsel %vm132, %v823, %v827
  %v830 = vshrl.u32 %v114, 16
  %v832 = vrot.slane %v830, 4
  %v833 = vshll.u32 %v114, 16
  %v835 = vrot.slane %v833, 5
  %v836 = vor.u32 %v832, %v835
  %v837 = vrot.slane %v836, 4
  %v839 = vshll.u32 %v115, 16
  %v841 = vrot.slane %v839, 5
  %v842 = vsel %vm132, %v837, %v841
  %v843 = vshrl.u32 %v115, 16
  %v845 = vrot.slane %v843, 4
  %v846 = vor.u32 %v845, %v841
  %v847 = vrot.slane %v846, 4
  %v849 = vshll.u32 %v116, 16
  %v851 = vrot.slane %v849, 5
  %v852 = vsel %vm132, %v847, %v851
  %v854 = vshrl.u32 %v117, 16
  %v856 = vrot.slane %v854, 4
  %v857 = vshll.u32 %v117, 16
  %v859 = vrot.slane %v857, 5
  %v860 = vor.u32 %v856, %v859
  %v861 = vrot.slane %v860, 4
  %v863 = vshll.u32 %v118, 16
  %v865 = vrot.slane %v863, 5
  %v866 = vsel %vm132, %v861, %v865
  %v867 = vshrl.u32 %v118, 16
  %v869 = vrot.slane %v867, 4
  %v870 = vor.u32 %v869, %v865
  %v871 = vrot.slane %v870, 4
  %v873 = vshll.u32 %v119, 16
  %v875 = vrot.slane %v873, 5
  %v876 = vsel %vm132, %v871, %v875
  %v878 = vshrl.u32 %v120, 16
  %v880 = vrot.slane %v878, 4
  %v881 = vshll.u32 %v120, 16
  %v883 = vrot.slane %v881, 5
  %v884 = vor.u32 %v880, %v883
  %v885 = vrot.slane %v884, 4
  %v887 = vshll.u32 %v121, 16
  %v889 = vrot.slane %v887, 5
  %v890 = vsel %vm132, %v885, %v889
  %v891 = vshrl.u32 %v121, 16
  %v893 = vrot.slane %v891, 4
  %v894 = vor.u32 %v893, %v889
  %v895 = vrot.slane %v894, 4
  %v897 = vshll.u32 %v122, 16
  %v899 = vrot.slane %v897, 5
  %v900 = vsel %vm132, %v895, %v899
  %v901 = vld [vmem:[%s1] sm:$0xc]
  %v902 = vunpack.c.l.b16 %v146
  %v903 = vunpack.c.l.b16 %v156
  %v904 = vunpack.c.l.b16 %v170
  %v905 = vunpack.c.l.b16 %v180
  %v906 = vunpack.c.l.b16 %v194
  %v907 = vunpack.c.l.b16 %v204
  %v908 = vunpack.c.l.b16 %v218
  %v909 = vunpack.c.l.b16 %v228
  %v910 = vunpack.c.l.b16 %v242
  %v911 = vunpack.c.l.b16 %v252
  %v912 = vunpack.c.l.b16 %v266
  %v913 = vunpack.c.l.b16 %v276
  %v914 = vunpack.c.l.b16 %v290
  %v915 = vunpack.c.l.b16 %v300
  %v916 = vunpack.c.l.b16 %v314
  %v917 = vunpack.c.l.b16 %v324
  %v918 = vunpack.c.l.b16 %v338
  %v919 = vunpack.c.l.b16 %v348
  %v920 = vunpack.c.l.b16 %v362
  %v921 = vunpack.c.l.b16 %v372
  %v922 = vunpack.c.l.b16 %v386
  %v923 = vunpack.c.l.b16 %v396
  %v924 = vunpack.c.l.b16 %v410
  %v925 = vunpack.c.l.b16 %v420
  %v926 = vunpack.c.l.b16 %v434
  %v927 = vunpack.c.l.b16 %v444
  %v928 = vunpack.c.l.b16 %v458
  %v929 = vunpack.c.l.b16 %v468
  %v930 = vunpack.c.l.b16 %v482
  %v931 = vunpack.c.l.b16 %v492
  %v932 = vunpack.c.l.b16 %v506
  %v933 = vunpack.c.l.b16 %v516
  %v934 = vunpack.c.l.b16 %v530
  %v935 = vunpack.c.l.b16 %v540
  %v936 = vunpack.c.l.b16 %v554
  %v937 = vunpack.c.l.b16 %v564
  %v938 = vunpack.c.l.b16 %v578
  %v939 = vunpack.c.l.b16 %v588
  %v940 = vunpack.c.l.b16 %v602
  %v941 = vunpack.c.l.b16 %v612
  %v942 = vunpack.c.l.b16 %v626
  %v943 = vunpack.c.l.b16 %v636
  %v944 = vunpack.c.l.b16 %v650
  %v945 = vunpack.c.l.b16 %v660
  %v946 = vunpack.c.l.b16 %v674
  %v947 = vunpack.c.l.b16 %v684
  %v948 = vunpack.c.l.b16 %v698
  %v949 = vunpack.c.l.b16 %v708
  %v950 = vunpack.c.l.b16 %v722
  %v951 = vunpack.c.l.b16 %v732
  %v952 = vunpack.c.l.b16 %v746
  %v953 = vunpack.c.l.b16 %v756
  %v954 = vunpack.c.l.b16 %v770
  %v955 = vunpack.c.l.b16 %v780
  %v956 = vunpack.c.l.b16 %v794
  %v957 = vunpack.c.l.b16 %v804
  %v958 = vunpack.c.l.b16 %v818
  %v959 = vunpack.c.l.b16 %v828
  %v960 = vunpack.c.l.b16 %v842
  %v961 = vunpack.c.l.b16 %v852
  %v962 = vunpack.c.l.b16 %v866
  %v963 = vunpack.c.l.b16 %v876
  %v964 = vunpack.c.l.b16 %v890
  %v965 = vunpack.c.l.b16 %v900
  %v966 = vpack.c.b16 %v903, %v902
  %v967 = vpack.c.b16 %v905, %v904
  %v968 = vpack.c.b16 %v907, %v906
  %v969 = vpack.c.b16 %v909, %v908
  %v970 = vpack.c.b16 %v911, %v910
  %v971 = vpack.c.b16 %v913, %v912
  %v972 = vpack.c.b16 %v915, %v914
  %v973 = vpack.c.b16 %v917, %v916
  %v974 = vpack.c.b16 %v919, %v918
  %v975 = vpack.c.b16 %v921, %v920
  %v976 = vpack.c.b16 %v923, %v922
  %v977 = vpack.c.b16 %v925, %v924
  %v978 = vpack.c.b16 %v927, %v926
  %v979 = vpack.c.b16 %v929, %v928
  %v980 = vpack.c.b16 %v931, %v930
  %v981 = vpack.c.b16 %v933, %v932
  %v982 = vpack.c.b16 %v935, %v934
  %v983 = vpack.c.b16 %v937, %v936
  %v984 = vpack.c.b16 %v939, %v938
  %v985 = vpack.c.b16 %v941, %v940
  %v986 = vpack.c.b16 %v943, %v942
  %v987 = vpack.c.b16 %v945, %v944
  %v988 = vpack.c.b16 %v947, %v946
  %v989 = vpack.c.b16 %v949, %v948
  %v990 = vpack.c.b16 %v951, %v950
  %v991 = vpack.c.b16 %v953, %v952
  %v992 = vpack.c.b16 %v955, %v954
  %v993 = vpack.c.b16 %v957, %v956
  %v994 = vpack.c.b16 %v959, %v958
  %v995 = vpack.c.b16 %v961, %v960
  %v996 = vpack.c.b16 %v963, %v962
  %v997 = vpack.c.b16 %v965, %v964
  %v999 = vunpack.c.l.b16 %v901
  %v1000 = vpack.c.b16 %v999, %v999
  %v1001 = vrot.slane %v1000, 2
  %vm1002 = vcmask 31744
  %v1004 = vsel %vm1002, %v966, 0
  %v1007 = vsel %vm1002, %v967, 0
  %v1010 = vsel %vm1002, %v968, 0
  %v1013 = vsel %vm1002, %v969, 0
  %v1016 = vsel %vm1002, %v970, 0
  %v1019 = vsel %vm1002, %v971, 0
  %v1022 = vsel %vm1002, %v972, 0
  %v1025 = vsel %vm1002, %v973, 0
  %v1028 = vsel %vm1002, %v974, 0
  %v1031 = vsel %vm1002, %v975, 0
  %v1034 = vsel %vm1002, %v976, 0
  %v1037 = vsel %vm1002, %v977, 0
  %v1040 = vsel %vm1002, %v978, 0
  %v1043 = vsel %vm1002, %v979, 0
  %v1046 = vsel %vm1002, %v980, 0
  %v1049 = vsel %vm1002, %v981, 0
  %v1052 = vsel %vm1002, %v982, 0
  %v1055 = vsel %vm1002, %v983, 0
  %v1058 = vsel %vm1002, %v984, 0
  %v1061 = vsel %vm1002, %v985, 0
  %v1064 = vsel %vm1002, %v986, 0
  %v1067 = vsel %vm1002, %v987, 0
  %v1070 = vsel %vm1002, %v988, 0
  %v1073 = vsel %vm1002, %v989, 0
  %v1076 = vsel %vm1002, %v990, 0
  %v1079 = vsel %vm1002, %v991, 0
  %v1082 = vsel %vm1002, %v992, 0
  %v1085 = vsel %vm1002, %v993, 0
  %v1088 = vsel %vm1002, %v994, 0
  %v1091 = vsel %vm1002, %v995, 0
  %v1094 = vsel %vm1002, %v996, 0
  %v1097 = vsel %vm1002, %v997, 0
  %vm1099 = vcmask 1041408
  %v1101 = vsel %vm1099, %v1001, 0
  %1103 = vmatpush.bf16.msra.mxu0 0
  %1104 = vmatpush.bf16.msra.mxu0 0
  %1105 = vmatpush.bf16.msra.mxu0 0
  %1106 = vmatpush.bf16.msra.mxu0 0
  %1107 = vmatpush.bf16.msra.mxu0 0
  %1108 = vmatpush.bf16.msra.mxu0 0
  %1109 = vmatpush.bf16.msra.mxu0 0
  %1110 = vmatpush.bf16.msra.mxu0 %v1101
  %1111 = vmatmul.bf16.gmra.mxu0 %v1004
  %v1112 = vpop.f32.mrf.mxu0
  %v1113 = vadd.f32 0.0, %v1112
  %v1114 = vpop.f32.mrf.mxu0
  %v1115 = vadd.f32 0.0, %v1114
  %1116 = vmatmul.bf16.gmra.mxu0 %v1007
  %v1117 = vpop.f32.mrf.mxu0
  %v1118 = vadd.f32 0.0, %v1117
  %v1119 = vpop.f32.mrf.mxu0
  %v1120 = vadd.f32 0.0, %v1119
  %1121 = vmatmul.bf16.gmra.mxu0 %v1010
  %v1122 = vpop.f32.mrf.mxu0
  %v1123 = vadd.f32 0.0, %v1122
  %v1124 = vpop.f32.mrf.mxu0
  %v1125 = vadd.f32 0.0, %v1124
  %1126 = vmatmul.bf16.gmra.mxu0 %v1013
  %v1127 = vpop.f32.mrf.mxu0
  %v1128 = vadd.f32 0.0, %v1127
  %v1129 = vpop.f32.mrf.mxu0
  %v1130 = vadd.f32 0.0, %v1129
  %1131 = vmatmul.bf16.gmra.mxu0 %v1016
  %v1132 = vpop.f32.mrf.mxu0
  %v1133 = vadd.f32 0.0, %v1132
  %v1134 = vpop.f32.mrf.mxu0
  %v1135 = vadd.f32 0.0, %v1134
  %1136 = vmatmul.bf16.gmra.mxu0 %v1019
  %v1137 = vpop.f32.mrf.mxu0
  %v1138 = vadd.f32 0.0, %v1137
  %v1139 = vpop.f32.mrf.mxu0
  %v1140 = vadd.f32 0.0, %v1139
  %1141 = vmatmul.bf16.gmra.mxu0 %v1022
  %v1142 = vpop.f32.mrf.mxu0
  %v1143 = vadd.f32 0.0, %v1142
  %v1144 = vpop.f32.mrf.mxu0
  %v1145 = vadd.f32 0.0, %v1144
  %1146 = vmatmul.bf16.gmra.mxu0 %v1025
  %v1147 = vpop.f32.mrf.mxu0
  %v1148 = vadd.f32 0.0, %v1147
  %v1149 = vpop.f32.mrf.mxu0
  %v1150 = vadd.f32 0.0, %v1149
  %1151 = vmatmul.bf16.gmra.mxu0 %v1028
  %v1152 = vpop.f32.mrf.mxu0
  %v1153 = vadd.f32 0.0, %v1152
  %v1154 = vpop.f32.mrf.mxu0
  %v1155 = vadd.f32 0.0, %v1154
  %1156 = vmatmul.bf16.gmra.mxu0 %v1031
  %v1157 = vpop.f32.mrf.mxu0
  %v1158 = vadd.f32 0.0, %v1157
  %v1159 = vpop.f32.mrf.mxu0
  %v1160 = vadd.f32 0.0, %v1159
  %1161 = vmatmul.bf16.gmra.mxu0 %v1034
  %v1162 = vpop.f32.mrf.mxu0
  %v1163 = vadd.f32 0.0, %v1162
  %v1164 = vpop.f32.mrf.mxu0
  %v1165 = vadd.f32 0.0, %v1164
  %1166 = vmatmul.bf16.gmra.mxu0 %v1037
  %v1167 = vpop.f32.mrf.mxu0
  %v1168 = vadd.f32 0.0, %v1167
  %v1169 = vpop.f32.mrf.mxu0
  %v1170 = vadd.f32 0.0, %v1169
  %1171 = vmatmul.bf16.gmra.mxu0 %v1040
  %v1172 = vpop.f32.mrf.mxu0
  %v1173 = vadd.f32 0.0, %v1172
  %v1174 = vpop.f32.mrf.mxu0
  %v1175 = vadd.f32 0.0, %v1174
  %1176 = vmatmul.bf16.gmra.mxu0 %v1043
  %v1177 = vpop.f32.mrf.mxu0
  %v1178 = vadd.f32 0.0, %v1177
  %v1179 = vpop.f32.mrf.mxu0
  %v1180 = vadd.f32 0.0, %v1179
  %1181 = vmatmul.bf16.gmra.mxu0 %v1046
  %v1182 = vpop.f32.mrf.mxu0
  %v1183 = vadd.f32 0.0, %v1182
  %v1184 = vpop.f32.mrf.mxu0
  %v1185 = vadd.f32 0.0, %v1184
  %1186 = vmatmul.bf16.gmra.mxu0 %v1049
  %v1187 = vpop.f32.mrf.mxu0
  %v1188 = vadd.f32 0.0, %v1187
  %v1189 = vpop.f32.mrf.mxu0
  %v1190 = vadd.f32 0.0, %v1189
  %1191 = vmatmul.bf16.gmra.mxu0 %v1052
  %v1192 = vpop.f32.mrf.mxu0
  %v1193 = vadd.f32 0.0, %v1192
  %v1194 = vpop.f32.mrf.mxu0
  %v1195 = vadd.f32 0.0, %v1194
  %1196 = vmatmul.bf16.gmra.mxu0 %v1055
  %v1197 = vpop.f32.mrf.mxu0
  %v1198 = vadd.f32 0.0, %v1197
  %v1199 = vpop.f32.mrf.mxu0
  %v1200 = vadd.f32 0.0, %v1199
  %1201 = vmatmul.bf16.gmra.mxu0 %v1058
  %v1202 = vpop.f32.mrf.mxu0
  %v1203 = vadd.f32 0.0, %v1202
  %v1204 = vpop.f32.mrf.mxu0
  %v1205 = vadd.f32 0.0, %v1204
  %1206 = vmatmul.bf16.gmra.mxu0 %v1061
  %v1207 = vpop.f32.mrf.mxu0
  %v1208 = vadd.f32 0.0, %v1207
  %v1209 = vpop.f32.mrf.mxu0
  %v1210 = vadd.f32 0.0, %v1209
  %1211 = vmatmul.bf16.gmra.mxu0 %v1064
  %v1212 = vpop.f32.mrf.mxu0
  %v1213 = vadd.f32 0.0, %v1212
  %v1214 = vpop.f32.mrf.mxu0
  %v1215 = vadd.f32 0.0, %v1214
  %1216 = vmatmul.bf16.gmra.mxu0 %v1067
  %v1217 = vpop.f32.mrf.mxu0
  %v1218 = vadd.f32 0.0, %v1217
  %v1219 = vpop.f32.mrf.mxu0
  %v1220 = vadd.f32 0.0, %v1219
  %1221 = vmatmul.bf16.gmra.mxu0 %v1070
  %v1222 = vpop.f32.mrf.mxu0
  %v1223 = vadd.f32 0.0, %v1222
  %v1224 = vpop.f32.mrf.mxu0
  %v1225 = vadd.f32 0.0, %v1224
  %1226 = vmatmul.bf16.gmra.mxu0 %v1073
  %v1227 = vpop.f32.mrf.mxu0
  %v1228 = vadd.f32 0.0, %v1227
  %v1229 = vpop.f32.mrf.mxu0
  %v1230 = vadd.f32 0.0, %v1229
  %1231 = vmatmul.bf16.gmra.mxu0 %v1076
  %v1232 = vpop.f32.mrf.mxu0
  %v1233 = vadd.f32 0.0, %v1232
  %v1234 = vpop.f32.mrf.mxu0
  %v1235 = vadd.f32 0.0, %v1234
  %1236 = vmatmul.bf16.gmra.mxu0 %v1079
  %v1237 = vpop.f32.mrf.mxu0
  %v1238 = vadd.f32 0.0, %v1237
  %v1239 = vpop.f32.mrf.mxu0
  %v1240 = vadd.f32 0.0, %v1239
  %1241 = vmatmul.bf16.gmra.mxu0 %v1082
  %v1242 = vpop.f32.mrf.mxu0
  %v1243 = vadd.f32 0.0, %v1242
  %v1244 = vpop.f32.mrf.mxu0
  %v1245 = vadd.f32 0.0, %v1244
  %1246 = vmatmul.bf16.gmra.mxu0 %v1085
  %v1247 = vpop.f32.mrf.mxu0
  %v1248 = vadd.f32 0.0, %v1247
  %v1249 = vpop.f32.mrf.mxu0
  %v1250 = vadd.f32 0.0, %v1249
  %1251 = vmatmul.bf16.gmra.mxu0 %v1088
  %v1252 = vpop.f32.mrf.mxu0
  %v1253 = vadd.f32 0.0, %v1252
  %v1254 = vpop.f32.mrf.mxu0
  %v1255 = vadd.f32 0.0, %v1254
  %1256 = vmatmul.bf16.gmra.mxu0 %v1091
  %v1257 = vpop.f32.mrf.mxu0
  %v1258 = vadd.f32 0.0, %v1257
  %v1259 = vpop.f32.mrf.mxu0
  %v1260 = vadd.f32 0.0, %v1259
  %1261 = vmatmul.bf16.gmra.mxu0 %v1094
  %v1262 = vpop.f32.mrf.mxu0
  %v1263 = vadd.f32 0.0, %v1262
  %v1264 = vpop.f32.mrf.mxu0
  %v1265 = vadd.f32 0.0, %v1264
  %1266 = vmatmul.bf16.gmra.mxu0 %v1097
  %v1267 = vpop.f32.mrf.mxu0
  %v1268 = vadd.f32 0.0, %v1267
  %v1269 = vpop.f32.mrf.mxu0
  %v1270 = vadd.f32 0.0, %v1269
  %1271 = vdwg.mxu0
  %v1336 = vunpack.c.l.b16 %v21
  %v1337 = vunpack.c.l.b16 %v22
  %v1338 = vunpack.c.l.b16 %v24
  %v1339 = vunpack.c.l.b16 %v25
  %v1340 = vunpack.c.l.b16 %v27
  %v1341 = vunpack.c.l.b16 %v28
  %v1342 = vunpack.c.l.b16 %v30
  %v1343 = vunpack.c.l.b16 %v31
  %v1344 = vunpack.c.l.b16 %v33
  %v1345 = vunpack.c.l.b16 %v34
  %v1346 = vunpack.c.l.b16 %v36
  %v1347 = vunpack.c.l.b16 %v37
  %v1348 = vunpack.c.l.b16 %v39
  %v1349 = vunpack.c.l.b16 %v40
  %v1350 = vunpack.c.l.b16 %v42
  %v1351 = vunpack.c.l.b16 %v43
  %v1352 = vunpack.c.l.b16 %v45
  %v1353 = vunpack.c.l.b16 %v46
  %v1354 = vunpack.c.l.b16 %v48
  %v1355 = vunpack.c.l.b16 %v49
  %v1356 = vunpack.c.l.b16 %v51
  %v1357 = vunpack.c.l.b16 %v52
  %v1358 = vunpack.c.l.b16 %v54
  %v1359 = vunpack.c.l.b16 %v55
  %v1360 = vunpack.c.l.b16 %v57
  %v1361 = vunpack.c.l.b16 %v58
  %v1362 = vunpack.c.l.b16 %v60
  %v1363 = vunpack.c.l.b16 %v61
  %v1364 = vunpack.c.l.b16 %v63
  %v1365 = vunpack.c.l.b16 %v64
  %v1366 = vunpack.c.l.b16 %v66
  %v1367 = vunpack.c.l.b16 %v67
  %v1368 = vunpack.c.l.b16 %v75
  %v1369 = vunpack.c.l.b16 %v76
  %v1370 = vunpack.c.l.b16 %v78
  %v1371 = vunpack.c.l.b16 %v79
  %v1372 = vunpack.c.l.b16 %v81
  %v1373 = vunpack.c.l.b16 %v82
  %v1374 = vunpack.c.l.b16 %v84
  %v1375 = vunpack.c.l.b16 %v85
  %v1376 = vunpack.c.l.b16 %v87
  %v1377 = vunpack.c.l.b16 %v88
  %v1378 = vunpack.c.l.b16 %v90
  %v1379 = vunpack.c.l.b16 %v91
  %v1380 = vunpack.c.l.b16 %v93
  %v1381 = vunpack.c.l.b16 %v94
  %v1382 = vunpack.c.l.b16 %v96
  %v1383 = vunpack.c.l.b16 %v97
  %v1384 = vunpack.c.l.b16 %v99
  %v1385 = vunpack.c.l.b16 %v100
  %v1386 = vunpack.c.l.b16 %v102
  %v1387 = vunpack.c.l.b16 %v103
  %v1388 = vunpack.c.l.b16 %v105
  %v1389 = vunpack.c.l.b16 %v106
  %v1390 = vunpack.c.l.b16 %v108
  %v1391 = vunpack.c.l.b16 %v109
  %v1392 = vunpack.c.l.b16 %v111
  %v1393 = vunpack.c.l.b16 %v112
  %v1394 = vunpack.c.l.b16 %v114
  %v1395 = vunpack.c.l.b16 %v115
  %v1396 = vunpack.c.l.b16 %v117
  %v1397 = vunpack.c.l.b16 %v118
  %v1398 = vunpack.c.l.b16 %v120
  %v1399 = vunpack.c.l.b16 %v121
  %v1400 = vpack.c.b16 %v1337, %v1336
  %v1401 = vpack.c.b16 %v1339, %v1338
  %v1402 = vpack.c.b16 %v1341, %v1340
  %v1403 = vpack.c.b16 %v1343, %v1342
  %v1404 = vpack.c.b16 %v1345, %v1344
  %v1405 = vpack.c.b16 %v1347, %v1346
  %v1406 = vpack.c.b16 %v1349, %v1348
  %v1407 = vpack.c.b16 %v1351, %v1350
  %v1408 = vpack.c.b16 %v1353, %v1352
  %v1409 = vpack.c.b16 %v1355, %v1354
  %v1410 = vpack.c.b16 %v1357, %v1356
  %v1411 = vpack.c.b16 %v1359, %v1358
  %v1412 = vpack.c.b16 %v1361, %v1360
  %v1413 = vpack.c.b16 %v1363, %v1362
  %v1414 = vpack.c.b16 %v1365, %v1364
  %v1415 = vpack.c.b16 %v1367, %v1366
  %v1416 = vpack.c.b16 %v1369, %v1368
  %v1417 = vpack.c.b16 %v1371, %v1370
  %v1418 = vpack.c.b16 %v1373, %v1372
  %v1419 = vpack.c.b16 %v1375, %v1374
  %v1420 = vpack.c.b16 %v1377, %v1376
  %v1421 = vpack.c.b16 %v1379, %v1378
  %v1422 = vpack.c.b16 %v1381, %v1380
  %v1423 = vpack.c.b16 %v1383, %v1382
  %v1424 = vpack.c.b16 %v1385, %v1384
  %v1425 = vpack.c.b16 %v1387, %v1386
  %v1426 = vpack.c.b16 %v1389, %v1388
  %v1427 = vpack.c.b16 %v1391, %v1390
  %v1428 = vpack.c.b16 %v1393, %v1392
  %v1429 = vpack.c.b16 %v1395, %v1394
  %v1430 = vpack.c.b16 %v1397, %v1396
  %v1431 = vpack.c.b16 %v1399, %v1398
  %v1433 = vsel %vm1002, %v1400, 0
  %v1436 = vsel %vm1002, %v1401, 0
  %v1439 = vsel %vm1002, %v1402, 0
  %v1442 = vsel %vm1002, %v1403, 0
  %v1445 = vsel %vm1002, %v1404, 0
  %v1448 = vsel %vm1002, %v1405, 0
  %v1451 = vsel %vm1002, %v1406, 0
  %v1454 = vsel %vm1002, %v1407, 0
  %v1457 = vsel %vm1002, %v1408, 0
  %v1460 = vsel %vm1002, %v1409, 0
  %v1463 = vsel %vm1002, %v1410, 0
  %v1466 = vsel %vm1002, %v1411, 0
  %v1469 = vsel %vm1002, %v1412, 0
  %v1472 = vsel %vm1002, %v1413, 0
  %v1475 = vsel %vm1002, %v1414, 0
  %v1478 = vsel %vm1002, %v1415, 0
  %v1481 = vsel %vm1002, %v1416, 0
  %v1484 = vsel %vm1002, %v1417, 0
  %v1487 = vsel %vm1002, %v1418, 0
  %v1490 = vsel %vm1002, %v1419, 0
  %v1493 = vsel %vm1002, %v1420, 0
  %v1496 = vsel %vm1002, %v1421, 0
  %v1499 = vsel %vm1002, %v1422, 0
  %v1502 = vsel %vm1002, %v1423, 0
  %v1505 = vsel %vm1002, %v1424, 0
  %v1508 = vsel %vm1002, %v1425, 0
  %v1511 = vsel %vm1002, %v1426, 0
  %v1514 = vsel %vm1002, %v1427, 0
  %v1517 = vsel %vm1002, %v1428, 0
  %v1520 = vsel %vm1002, %v1429, 0
  %v1523 = vsel %vm1002, %v1430, 0
  %v1526 = vsel %vm1002, %v1431, 0
  %v1529 = vsel %vm1099, %v129, 0
  %1531 = vmatpush.bf16.msra.mxu0 0
  %1532 = vmatpush.bf16.msra.mxu0 0
  %1533 = vmatpush.bf16.msra.mxu0 0
  %1534 = vmatpush.bf16.msra.mxu0 0
  %1535 = vmatpush.bf16.msra.mxu0 0
  %1536 = vmatpush.bf16.msra.mxu0 0
  %1537 = vmatpush.bf16.msra.mxu0 0
  %1538 = vmatpush.bf16.msra.mxu0 %v1529
  %1539 = vmatmul.bf16.gmra.mxu0 %v1433
  %v1540 = vpop.f32.mrf.mxu0
  %v1541 = vadd.f32 %v1113, %v1540
  %v1542 = vpop.f32.mrf.mxu0
  %v1543 = vadd.f32 %v1115, %v1542
  %1544 = vmatmul.bf16.gmra.mxu0 %v1436
  %v1545 = vpop.f32.mrf.mxu0
  %v1546 = vadd.f32 %v1118, %v1545
  %v1547 = vpop.f32.mrf.mxu0
  %v1548 = vadd.f32 %v1120, %v1547
  %1549 = vmatmul.bf16.gmra.mxu0 %v1439
  %v1550 = vpop.f32.mrf.mxu0
  %v1551 = vadd.f32 %v1123, %v1550
  %v1552 = vpop.f32.mrf.mxu0
  %v1553 = vadd.f32 %v1125, %v1552
  %1554 = vmatmul.bf16.gmra.mxu0 %v1442
  %v1555 = vpop.f32.mrf.mxu0
  %v1556 = vadd.f32 %v1128, %v1555
  %v1557 = vpop.f32.mrf.mxu0
  %v1558 = vadd.f32 %v1130, %v1557
  %1559 = vmatmul.bf16.gmra.mxu0 %v1445
  %v1560 = vpop.f32.mrf.mxu0
  %v1561 = vadd.f32 %v1133, %v1560
  %v1562 = vpop.f32.mrf.mxu0
  %v1563 = vadd.f32 %v1135, %v1562
  %1564 = vmatmul.bf16.gmra.mxu0 %v1448
  %v1565 = vpop.f32.mrf.mxu0
  %v1566 = vadd.f32 %v1138, %v1565
  %v1567 = vpop.f32.mrf.mxu0
  %v1568 = vadd.f32 %v1140, %v1567
  %1569 = vmatmul.bf16.gmra.mxu0 %v1451
  %v1570 = vpop.f32.mrf.mxu0
  %v1571 = vadd.f32 %v1143, %v1570
  %v1572 = vpop.f32.mrf.mxu0
  %v1573 = vadd.f32 %v1145, %v1572
  %1574 = vmatmul.bf16.gmra.mxu0 %v1454
  %v1575 = vpop.f32.mrf.mxu0
  %v1576 = vadd.f32 %v1148, %v1575
  %v1577 = vpop.f32.mrf.mxu0
  %v1578 = vadd.f32 %v1150, %v1577
  %1579 = vmatmul.bf16.gmra.mxu0 %v1457
  %v1580 = vpop.f32.mrf.mxu0
  %v1581 = vadd.f32 %v1153, %v1580
  %v1582 = vpop.f32.mrf.mxu0
  %v1583 = vadd.f32 %v1155, %v1582
  %1584 = vmatmul.bf16.gmra.mxu0 %v1460
  %v1585 = vpop.f32.mrf.mxu0
  %v1586 = vadd.f32 %v1158, %v1585
  %v1587 = vpop.f32.mrf.mxu0
  %v1588 = vadd.f32 %v1160, %v1587
  %1589 = vmatmul.bf16.gmra.mxu0 %v1463
  %v1590 = vpop.f32.mrf.mxu0
  %v1591 = vadd.f32 %v1163, %v1590
  %v1592 = vpop.f32.mrf.mxu0
  %v1593 = vadd.f32 %v1165, %v1592
  %1594 = vmatmul.bf16.gmra.mxu0 %v1466
  %v1595 = vpop.f32.mrf.mxu0
  %v1596 = vadd.f32 %v1168, %v1595
  %v1597 = vpop.f32.mrf.mxu0
  %v1598 = vadd.f32 %v1170, %v1597
  %1599 = vmatmul.bf16.gmra.mxu0 %v1469
  %v1600 = vpop.f32.mrf.mxu0
  %v1601 = vadd.f32 %v1173, %v1600
  %v1602 = vpop.f32.mrf.mxu0
  %v1603 = vadd.f32 %v1175, %v1602
  %1604 = vmatmul.bf16.gmra.mxu0 %v1472
  %v1605 = vpop.f32.mrf.mxu0
  %v1606 = vadd.f32 %v1178, %v1605
  %v1607 = vpop.f32.mrf.mxu0
  %v1608 = vadd.f32 %v1180, %v1607
  %1609 = vmatmul.bf16.gmra.mxu0 %v1475
  %v1610 = vpop.f32.mrf.mxu0
  %v1611 = vadd.f32 %v1183, %v1610
  %v1612 = vpop.f32.mrf.mxu0
  %v1613 = vadd.f32 %v1185, %v1612
  %1614 = vmatmul.bf16.gmra.mxu0 %v1478
  %v1615 = vpop.f32.mrf.mxu0
  %v1616 = vadd.f32 %v1188, %v1615
  %v1617 = vpop.f32.mrf.mxu0
  %v1618 = vadd.f32 %v1190, %v1617
  %1619 = vmatmul.bf16.gmra.mxu0 %v1481
  %v1620 = vpop.f32.mrf.mxu0
  %v1621 = vadd.f32 %v1193, %v1620
  %v1622 = vpop.f32.mrf.mxu0
  %v1623 = vadd.f32 %v1195, %v1622
  %1624 = vmatmul.bf16.gmra.mxu0 %v1484
  %v1625 = vpop.f32.mrf.mxu0
  %v1626 = vadd.f32 %v1198, %v1625
  %v1627 = vpop.f32.mrf.mxu0
  %v1628 = vadd.f32 %v1200, %v1627
  %1629 = vmatmul.bf16.gmra.mxu0 %v1487
  %v1630 = vpop.f32.mrf.mxu0
  %v1631 = vadd.f32 %v1203, %v1630
  %v1632 = vpop.f32.mrf.mxu0
  %v1633 = vadd.f32 %v1205, %v1632
  %1634 = vmatmul.bf16.gmra.mxu0 %v1490
  %v1635 = vpop.f32.mrf.mxu0
  %v1636 = vadd.f32 %v1208, %v1635
  %v1637 = vpop.f32.mrf.mxu0
  %v1638 = vadd.f32 %v1210, %v1637
  %1639 = vmatmul.bf16.gmra.mxu0 %v1493
  %v1640 = vpop.f32.mrf.mxu0
  %v1641 = vadd.f32 %v1213, %v1640
  %v1642 = vpop.f32.mrf.mxu0
  %v1643 = vadd.f32 %v1215, %v1642
  %1644 = vmatmul.bf16.gmra.mxu0 %v1496
  %v1645 = vpop.f32.mrf.mxu0
  %v1646 = vadd.f32 %v1218, %v1645
  %v1647 = vpop.f32.mrf.mxu0
  %v1648 = vadd.f32 %v1220, %v1647
  %1649 = vmatmul.bf16.gmra.mxu0 %v1499
  %v1650 = vpop.f32.mrf.mxu0
  %v1651 = vadd.f32 %v1223, %v1650
  %v1652 = vpop.f32.mrf.mxu0
  %v1653 = vadd.f32 %v1225, %v1652
  %1654 = vmatmul.bf16.gmra.mxu0 %v1502
  %v1655 = vpop.f32.mrf.mxu0
  %v1656 = vadd.f32 %v1228, %v1655
  %v1657 = vpop.f32.mrf.mxu0
  %v1658 = vadd.f32 %v1230, %v1657
  %1659 = vmatmul.bf16.gmra.mxu0 %v1505
  %v1660 = vpop.f32.mrf.mxu0
  %v1661 = vadd.f32 %v1233, %v1660
  %v1662 = vpop.f32.mrf.mxu0
  %v1663 = vadd.f32 %v1235, %v1662
  %1664 = vmatmul.bf16.gmra.mxu0 %v1508
  %v1665 = vpop.f32.mrf.mxu0
  %v1666 = vadd.f32 %v1238, %v1665
  %v1667 = vpop.f32.mrf.mxu0
  %v1668 = vadd.f32 %v1240, %v1667
  %1669 = vmatmul.bf16.gmra.mxu0 %v1511
  %v1670 = vpop.f32.mrf.mxu0
  %v1671 = vadd.f32 %v1243, %v1670
  %v1672 = vpop.f32.mrf.mxu0
  %v1673 = vadd.f32 %v1245, %v1672
  %1674 = vmatmul.bf16.gmra.mxu0 %v1514
  %v1675 = vpop.f32.mrf.mxu0
  %v1676 = vadd.f32 %v1248, %v1675
  %v1677 = vpop.f32.mrf.mxu0
  %v1678 = vadd.f32 %v1250, %v1677
  %1679 = vmatmul.bf16.gmra.mxu0 %v1517
  %v1680 = vpop.f32.mrf.mxu0
  %v1681 = vadd.f32 %v1253, %v1680
  %v1682 = vpop.f32.mrf.mxu0
  %v1683 = vadd.f32 %v1255, %v1682
  %1684 = vmatmul.bf16.gmra.mxu0 %v1520
  %v1685 = vpop.f32.mrf.mxu0
  %v1686 = vadd.f32 %v1258, %v1685
  %v1687 = vpop.f32.mrf.mxu0
  %v1688 = vadd.f32 %v1260, %v1687
  %1689 = vmatmul.bf16.gmra.mxu0 %v1523
  %v1690 = vpop.f32.mrf.mxu0
  %v1691 = vadd.f32 %v1263, %v1690
  %v1692 = vpop.f32.mrf.mxu0
  %v1693 = vadd.f32 %v1265, %v1692
  %1694 = vmatmul.bf16.gmra.mxu0 %v1526
  %v1695 = vpop.f32.mrf.mxu0
  %v1696 = vadd.f32 %v1268, %v1695
  %v1697 = vpop.f32.mrf.mxu0
  %v1698 = vadd.f32 %v1270, %v1697
  %1699 = vdwg.mxu0
  %vm1732 = vcmask 1042432
  %vm1733 = vcmask 1046532
  %vm1734 = vmor %vm1732, %vm1733
  %v1735 = vrot.slane %v21, 5
  %v1736 = vrot.slane %v1735, 4
  %v1737 = vrot.slane %v22, 5
  %v1738 = vsel %vm1734, %v1736, %v1737
  %v1739 = vrot.slane %v1737, 4
  %v1740 = vrot.slane %v23, 5
  %v1741 = vsel %vm1734, %v1739, %v1740
  %v1742 = vrot.slane %v24, 5
  %v1743 = vrot.slane %v1742, 4
  %v1744 = vrot.slane %v25, 5
  %v1745 = vsel %vm1734, %v1743, %v1744
  %v1746 = vrot.slane %v1744, 4
  %v1747 = vrot.slane %v26, 5
  %v1748 = vsel %vm1734, %v1746, %v1747
  %v1749 = vrot.slane %v27, 5
  %v1750 = vrot.slane %v1749, 4
  %v1751 = vrot.slane %v28, 5
  %v1752 = vsel %vm1734, %v1750, %v1751
  %v1753 = vrot.slane %v1751, 4
  %v1754 = vrot.slane %v29, 5
  %v1755 = vsel %vm1734, %v1753, %v1754
  %v1756 = vrot.slane %v30, 5
  %v1757 = vrot.slane %v1756, 4
  %v1758 = vrot.slane %v31, 5
  %v1759 = vsel %vm1734, %v1757, %v1758
  %v1760 = vrot.slane %v1758, 4
  %v1761 = vrot.slane %v32, 5
  %v1762 = vsel %vm1734, %v1760, %v1761
  %v1763 = vrot.slane %v33, 5
  %v1764 = vrot.slane %v1763, 4
  %v1765 = vrot.slane %v34, 5
  %v1766 = vsel %vm1734, %v1764, %v1765
  %v1767 = vrot.slane %v1765, 4
  %v1768 = vrot.slane %v35, 5
  %v1769 = vsel %vm1734, %v1767, %v1768
  %v1770 = vrot.slane %v36, 5
  %v1771 = vrot.slane %v1770, 4
  %v1772 = vrot.slane %v37, 5
  %v1773 = vsel %vm1734, %v1771, %v1772
  %v1774 = vrot.slane %v1772, 4
  %v1775 = vrot.slane %v38, 5
  %v1776 = vsel %vm1734, %v1774, %v1775
  %v1777 = vrot.slane %v39, 5
  %v1778 = vrot.slane %v1777, 4
  %v1779 = vrot.slane %v40, 5
  %v1780 = vsel %vm1734, %v1778, %v1779
  %v1781 = vrot.slane %v1779, 4
  %v1782 = vrot.slane %v41, 5
  %v1783 = vsel %vm1734, %v1781, %v1782
  %v1784 = vrot.slane %v42, 5
  %v1785 = vrot.slane %v1784, 4
  %v1786 = vrot.slane %v43, 5
  %v1787 = vsel %vm1734, %v1785, %v1786
  %v1788 = vrot.slane %v1786, 4
  %v1789 = vrot.slane %v44, 5
  %v1790 = vsel %vm1734, %v1788, %v1789
  %v1791 = vrot.slane %v45, 5
  %v1792 = vrot.slane %v1791, 4
  %v1793 = vrot.slane %v46, 5
  %v1794 = vsel %vm1734, %v1792, %v1793
  %v1795 = vrot.slane %v1793, 4
  %v1796 = vrot.slane %v47, 5
  %v1797 = vsel %vm1734, %v1795, %v1796
  %v1798 = vrot.slane %v48, 5
  %v1799 = vrot.slane %v1798, 4
  %v1800 = vrot.slane %v49, 5
  %v1801 = vsel %vm1734, %v1799, %v1800
  %v1802 = vrot.slane %v1800, 4
  %v1803 = vrot.slane %v50, 5
  %v1804 = vsel %vm1734, %v1802, %v1803
  %v1805 = vrot.slane %v51, 5
  %v1806 = vrot.slane %v1805, 4
  %v1807 = vrot.slane %v52, 5
  %v1808 = vsel %vm1734, %v1806, %v1807
  %v1809 = vrot.slane %v1807, 4
  %v1810 = vrot.slane %v53, 5
  %v1811 = vsel %vm1734, %v1809, %v1810
  %v1812 = vrot.slane %v54, 5
  %v1813 = vrot.slane %v1812, 4
  %v1814 = vrot.slane %v55, 5
  %v1815 = vsel %vm1734, %v1813, %v1814
  %v1816 = vrot.slane %v1814, 4
  %v1817 = vrot.slane %v56, 5
  %v1818 = vsel %vm1734, %v1816, %v1817
  %v1819 = vrot.slane %v57, 5
  %v1820 = vrot.slane %v1819, 4
  %v1821 = vrot.slane %v58, 5
  %v1822 = vsel %vm1734, %v1820, %v1821
  %v1823 = vrot.slane %v1821, 4
  %v1824 = vrot.slane %v59, 5
  %v1825 = vsel %vm1734, %v1823, %v1824
  %v1826 = vrot.slane %v60, 5
  %v1827 = vrot.slane %v1826, 4
  %v1828 = vrot.slane %v61, 5
  %v1829 = vsel %vm1734, %v1827, %v1828
  %v1830 = vrot.slane %v1828, 4
  %v1831 = vrot.slane %v62, 5
  %v1832 = vsel %vm1734, %v1830, %v1831
  %v1833 = vrot.slane %v63, 5
  %v1834 = vrot.slane %v1833, 4
  %v1835 = vrot.slane %v64, 5
  %v1836 = vsel %vm1734, %v1834, %v1835
  %v1837 = vrot.slane %v1835, 4
  %v1838 = vrot.slane %v65, 5
  %v1839 = vsel %vm1734, %v1837, %v1838
  %v1840 = vrot.slane %v66, 5
  %v1841 = vrot.slane %v1840, 4
  %v1842 = vrot.slane %v67, 5
  %v1843 = vsel %vm1734, %v1841, %v1842
  %v1844 = vrot.slane %v1842, 4
  %v1845 = vrot.slane %v68, 5
  %v1846 = vsel %vm1734, %v1844, %v1845
  %v1847 = vrot.slane %v75, 5
  %v1848 = vrot.slane %v1847, 4
  %v1849 = vrot.slane %v76, 5
  %v1850 = vsel %vm1734, %v1848, %v1849
  %v1851 = vrot.slane %v1849, 4
  %v1852 = vrot.slane %v77, 5
  %v1853 = vsel %vm1734, %v1851, %v1852
  %v1854 = vrot.slane %v78, 5
  %v1855 = vrot.slane %v1854, 4
  %v1856 = vrot.slane %v79, 5
  %v1857 = vsel %vm1734, %v1855, %v1856
  %v1858 = vrot.slane %v1856, 4
  %v1859 = vrot.slane %v80, 5
  %v1860 = vsel %vm1734, %v1858, %v1859
  %v1861 = vrot.slane %v81, 5
  %v1862 = vrot.slane %v1861, 4
  %v1863 = vrot.slane %v82, 5
  %v1864 = vsel %vm1734, %v1862, %v1863
  %v1865 = vrot.slane %v1863, 4
  %v1866 = vrot.slane %v83, 5
  %v1867 = vsel %vm1734, %v1865, %v1866
  %v1868 = vrot.slane %v84, 5
  %v1869 = vrot.slane %v1868, 4
  %v1870 = vrot.slane %v85, 5
  %v1871 = vsel %vm1734, %v1869, %v1870
  %v1872 = vrot.slane %v1870, 4
  %v1873 = vrot.slane %v86, 5
  %v1874 = vsel %vm1734, %v1872, %v1873
  %v1875 = vrot.slane %v87, 5
  %v1876 = vrot.slane %v1875, 4
  %v1877 = vrot.slane %v88, 5
  %v1878 = vsel %vm1734, %v1876, %v1877
  %v1879 = vrot.slane %v1877, 4
  %v1880 = vrot.slane %v89, 5
  %v1881 = vsel %vm1734, %v1879, %v1880
  %v1882 = vrot.slane %v90, 5
  %v1883 = vrot.slane %v1882, 4
  %v1884 = vrot.slane %v91, 5
  %v1885 = vsel %vm1734, %v1883, %v1884
  %v1886 = vrot.slane %v1884, 4
  %v1887 = vrot.slane %v92, 5
  %v1888 = vsel %vm1734, %v1886, %v1887
  %v1889 = vrot.slane %v93, 5
  %v1890 = vrot.slane %v1889, 4
  %v1891 = vrot.slane %v94, 5
  %v1892 = vsel %vm1734, %v1890, %v1891
  %v1893 = vrot.slane %v1891, 4
  %v1894 = vrot.slane %v95, 5
  %v1895 = vsel %vm1734, %v1893, %v1894
  %v1896 = vrot.slane %v96, 5
  %v1897 = vrot.slane %v1896, 4
  %v1898 = vrot.slane %v97, 5
  %v1899 = vsel %vm1734, %v1897, %v1898
  %v1900 = vrot.slane %v1898, 4
  %v1901 = vrot.slane %v98, 5
  %v1902 = vsel %vm1734, %v1900, %v1901
  %v1903 = vrot.slane %v99, 5
  %v1904 = vrot.slane %v1903, 4
  %v1905 = vrot.slane %v100, 5
  %v1906 = vsel %vm1734, %v1904, %v1905
  %v1907 = vrot.slane %v1905, 4
  %v1908 = vrot.slane %v101, 5
  %v1909 = vsel %vm1734, %v1907, %v1908
  %v1910 = vrot.slane %v102, 5
  %v1911 = vrot.slane %v1910, 4
  %v1912 = vrot.slane %v103, 5
  %v1913 = vsel %vm1734, %v1911, %v1912
  %v1914 = vrot.slane %v1912, 4
  %v1915 = vrot.slane %v104, 5
  %v1916 = vsel %vm1734, %v1914, %v1915
  %v1917 = vrot.slane %v105, 5
  %v1918 = vrot.slane %v1917, 4
  %v1919 = vrot.slane %v106, 5
  %v1920 = vsel %vm1734, %v1918, %v1919
  %v1921 = vrot.slane %v1919, 4
  %v1922 = vrot.slane %v107, 5
  %v1923 = vsel %vm1734, %v1921, %v1922
  %v1924 = vrot.slane %v108, 5
  %v1925 = vrot.slane %v1924, 4
  %v1926 = vrot.slane %v109, 5
  %v1927 = vsel %vm1734, %v1925, %v1926
  %v1928 = vrot.slane %v1926, 4
  %v1929 = vrot.slane %v110, 5
  %v1930 = vsel %vm1734, %v1928, %v1929
  %v1931 = vrot.slane %v111, 5
  %v1932 = vrot.slane %v1931, 4
  %v1933 = vrot.slane %v112, 5
  %v1934 = vsel %vm1734, %v1932, %v1933
  %v1935 = vrot.slane %v1933, 4
  %v1936 = vrot.slane %v113, 5
  %v1937 = vsel %vm1734, %v1935, %v1936
  %v1938 = vrot.slane %v114, 5
  %v1939 = vrot.slane %v1938, 4
  %v1940 = vrot.slane %v115, 5
  %v1941 = vsel %vm1734, %v1939, %v1940
  %v1942 = vrot.slane %v1940, 4
  %v1943 = vrot.slane %v116, 5
  %v1944 = vsel %vm1734, %v1942, %v1943
  %v1945 = vrot.slane %v117, 5
  %v1946 = vrot.slane %v1945, 4
  %v1947 = vrot.slane %v118, 5
  %v1948 = vsel %vm1734, %v1946, %v1947
  %v1949 = vrot.slane %v1947, 4
  %v1950 = vrot.slane %v119, 5
  %v1951 = vsel %vm1734, %v1949, %v1950
  %v1952 = vrot.slane %v120, 5
  %v1953 = vrot.slane %v1952, 4
  %v1954 = vrot.slane %v121, 5
  %v1955 = vsel %vm1734, %v1953, %v1954
  %v1956 = vrot.slane %v1954, 4
  %v1957 = vrot.slane %v122, 5
  %v1958 = vsel %vm1734, %v1956, %v1957
  %v1959 = vld [vmem:[%s1 + $0x4] sm:$0x3]
  %v1960 = vunpack.c.l.b16 %v1738
  %v1961 = vunpack.c.l.b16 %v1741
  %v1962 = vunpack.c.l.b16 %v1745
  %v1963 = vunpack.c.l.b16 %v1748
  %v1964 = vunpack.c.l.b16 %v1752
  %v1965 = vunpack.c.l.b16 %v1755
  %v1966 = vunpack.c.l.b16 %v1759
  %v1967 = vunpack.c.l.b16 %v1762
  %v1968 = vunpack.c.l.b16 %v1766
  %v1969 = vunpack.c.l.b16 %v1769
  %v1970 = vunpack.c.l.b16 %v1773
  %v1971 = vunpack.c.l.b16 %v1776
  %v1972 = vunpack.c.l.b16 %v1780
  %v1973 = vunpack.c.l.b16 %v1783
  %v1974 = vunpack.c.l.b16 %v1787
  %v1975 = vunpack.c.l.b16 %v1790
  %v1976 = vunpack.c.l.b16 %v1794
  %v1977 = vunpack.c.l.b16 %v1797
  %v1978 = vunpack.c.l.b16 %v1801
  %v1979 = vunpack.c.l.b16 %v1804
  %v1980 = vunpack.c.l.b16 %v1808
  %v1981 = vunpack.c.l.b16 %v1811
  %v1982 = vunpack.c.l.b16 %v1815
  %v1983 = vunpack.c.l.b16 %v1818
  %v1984 = vunpack.c.l.b16 %v1822
  %v1985 = vunpack.c.l.b16 %v1825
  %v1986 = vunpack.c.l.b16 %v1829
  %v1987 = vunpack.c.l.b16 %v1832
  %v1988 = vunpack.c.l.b16 %v1836
  %v1989 = vunpack.c.l.b16 %v1839
  %v1990 = vunpack.c.l.b16 %v1843
  %v1991 = vunpack.c.l.b16 %v1846
  %v1992 = vunpack.c.l.b16 %v1850
  %v1993 = vunpack.c.l.b16 %v1853
  %v1994 = vunpack.c.l.b16 %v1857
  %v1995 = vunpack.c.l.b16 %v1860
  %v1996 = vunpack.c.l.b16 %v1864
  %v1997 = vunpack.c.l.b16 %v1867
  %v1998 = vunpack.c.l.b16 %v1871
  %v1999 = vunpack.c.l.b16 %v1874
  %v2000 = vunpack.c.l.b16 %v1878
  %v2001 = vunpack.c.l.b16 %v1881
  %v2002 = vunpack.c.l.b16 %v1885
  %v2003 = vunpack.c.l.b16 %v1888
  %v2004 = vunpack.c.l.b16 %v1892
  %v2005 = vunpack.c.l.b16 %v1895
  %v2006 = vunpack.c.l.b16 %v1899
  %v2007 = vunpack.c.l.b16 %v1902
  %v2008 = vunpack.c.l.b16 %v1906
  %v2009 = vunpack.c.l.b16 %v1909
  %v2010 = vunpack.c.l.b16 %v1913
  %v2011 = vunpack.c.l.b16 %v1916
  %v2012 = vunpack.c.l.b16 %v1920
  %v2013 = vunpack.c.l.b16 %v1923
  %v2014 = vunpack.c.l.b16 %v1927
  %v2015 = vunpack.c.l.b16 %v1930
  %v2016 = vunpack.c.l.b16 %v1934
  %v2017 = vunpack.c.l.b16 %v1937
  %v2018 = vunpack.c.l.b16 %v1941
  %v2019 = vunpack.c.l.b16 %v1944
  %v2020 = vunpack.c.l.b16 %v1948
  %v2021 = vunpack.c.l.b16 %v1951
  %v2022 = vunpack.c.l.b16 %v1955
  %v2023 = vunpack.c.l.b16 %v1958
  %v2024 = vpack.c.b16 %v1961, %v1960
  %v2025 = vpack.c.b16 %v1963, %v1962
  %v2026 = vpack.c.b16 %v1965, %v1964
  %v2027 = vpack.c.b16 %v1967, %v1966
  %v2028 = vpack.c.b16 %v1969, %v1968
  %v2029 = vpack.c.b16 %v1971, %v1970
  %v2030 = vpack.c.b16 %v1973, %v1972
  %v2031 = vpack.c.b16 %v1975, %v1974
  %v2032 = vpack.c.b16 %v1977, %v1976
  %v2033 = vpack.c.b16 %v1979, %v1978
  %v2034 = vpack.c.b16 %v1981, %v1980
  %v2035 = vpack.c.b16 %v1983, %v1982
  %v2036 = vpack.c.b16 %v1985, %v1984
  %v2037 = vpack.c.b16 %v1987, %v1986
  %v2038 = vpack.c.b16 %v1989, %v1988
  %v2039 = vpack.c.b16 %v1991, %v1990
  %v2040 = vpack.c.b16 %v1993, %v1992
  %v2041 = vpack.c.b16 %v1995, %v1994
  %v2042 = vpack.c.b16 %v1997, %v1996
  %v2043 = vpack.c.b16 %v1999, %v1998
  %v2044 = vpack.c.b16 %v2001, %v2000
  %v2045 = vpack.c.b16 %v2003, %v2002
  %v2046 = vpack.c.b16 %v2005, %v2004
  %v2047 = vpack.c.b16 %v2007, %v2006
  %v2048 = vpack.c.b16 %v2009, %v2008
  %v2049 = vpack.c.b16 %v2011, %v2010
  %v2050 = vpack.c.b16 %v2013, %v2012
  %v2051 = vpack.c.b16 %v2015, %v2014
  %v2052 = vpack.c.b16 %v2017, %v2016
  %v2053 = vpack.c.b16 %v2019, %v2018
  %v2054 = vpack.c.b16 %v2021, %v2020
  %v2055 = vpack.c.b16 %v2023, %v2022
  %v2057 = vsel %vm1002, %v2024, 0
  %v2060 = vsel %vm1002, %v2025, 0
  %v2063 = vsel %vm1002, %v2026, 0
  %v2066 = vsel %vm1002, %v2027, 0
  %v2069 = vsel %vm1002, %v2028, 0
  %v2072 = vsel %vm1002, %v2029, 0
  %v2075 = vsel %vm1002, %v2030, 0
  %v2078 = vsel %vm1002, %v2031, 0
  %v2081 = vsel %vm1002, %v2032, 0
  %v2084 = vsel %vm1002, %v2033, 0
  %v2087 = vsel %vm1002, %v2034, 0
  %v2090 = vsel %vm1002, %v2035, 0
  %v2093 = vsel %vm1002, %v2036, 0
  %v2096 = vsel %vm1002, %v2037, 0
  %v2099 = vsel %vm1002, %v2038, 0
  %v2102 = vsel %vm1002, %v2039, 0
  %v2105 = vsel %vm1002, %v2040, 0
  %v2108 = vsel %vm1002, %v2041, 0
  %v2111 = vsel %vm1002, %v2042, 0
  %v2114 = vsel %vm1002, %v2043, 0
  %v2117 = vsel %vm1002, %v2044, 0
  %v2120 = vsel %vm1002, %v2045, 0
  %v2123 = vsel %vm1002, %v2046, 0
  %v2126 = vsel %vm1002, %v2047, 0
  %v2129 = vsel %vm1002, %v2048, 0
  %v2132 = vsel %vm1002, %v2049, 0
  %v2135 = vsel %vm1002, %v2050, 0
  %v2138 = vsel %vm1002, %v2051, 0
  %v2141 = vsel %vm1002, %v2052, 0
  %v2144 = vsel %vm1002, %v2053, 0
  %v2147 = vsel %vm1002, %v2054, 0
  %v2150 = vsel %vm1002, %v2055, 0
  %v2153 = vsel %vm1099, %v1959, 0
  %2155 = vmatpush.bf16.msra.mxu0 0
  %2156 = vmatpush.bf16.msra.mxu0 0
  %2157 = vmatpush.bf16.msra.mxu0 0
  %2158 = vmatpush.bf16.msra.mxu0 0
  %2159 = vmatpush.bf16.msra.mxu0 0
  %2160 = vmatpush.bf16.msra.mxu0 0
  %2161 = vmatpush.bf16.msra.mxu0 0
  %2162 = vmatpush.bf16.msra.mxu0 %v2153
  %2163 = vmatmul.bf16.gmra.mxu0 %v2057
  %v2164 = vpop.f32.mrf.mxu0
  %v2165 = vadd.f32 0.0, %v2164
  %v2166 = vpop.f32.mrf.mxu0
  %v2167 = vadd.f32 0.0, %v2166
  %2168 = vmatmul.bf16.gmra.mxu0 %v2060
  %v2169 = vpop.f32.mrf.mxu0
  %v2170 = vadd.f32 0.0, %v2169
  %v2171 = vpop.f32.mrf.mxu0
  %v2172 = vadd.f32 0.0, %v2171
  %2173 = vmatmul.bf16.gmra.mxu0 %v2063
  %v2174 = vpop.f32.mrf.mxu0
  %v2175 = vadd.f32 0.0, %v2174
  %v2176 = vpop.f32.mrf.mxu0
  %v2177 = vadd.f32 0.0, %v2176
  %2178 = vmatmul.bf16.gmra.mxu0 %v2066
  %v2179 = vpop.f32.mrf.mxu0
  %v2180 = vadd.f32 0.0, %v2179
  %v2181 = vpop.f32.mrf.mxu0
  %v2182 = vadd.f32 0.0, %v2181
  %2183 = vmatmul.bf16.gmra.mxu0 %v2069
  %v2184 = vpop.f32.mrf.mxu0
  %v2185 = vadd.f32 0.0, %v2184
  %v2186 = vpop.f32.mrf.mxu0
  %v2187 = vadd.f32 0.0, %v2186
  %2188 = vmatmul.bf16.gmra.mxu0 %v2072
  %v2189 = vpop.f32.mrf.mxu0
  %v2190 = vadd.f32 0.0, %v2189
  %v2191 = vpop.f32.mrf.mxu0
  %v2192 = vadd.f32 0.0, %v2191
  %2193 = vmatmul.bf16.gmra.mxu0 %v2075
  %v2194 = vpop.f32.mrf.mxu0
  %v2195 = vadd.f32 0.0, %v2194
  %v2196 = vpop.f32.mrf.mxu0
  %v2197 = vadd.f32 0.0, %v2196
  %2198 = vmatmul.bf16.gmra.mxu0 %v2078
  %v2199 = vpop.f32.mrf.mxu0
  %v2200 = vadd.f32 0.0, %v2199
  %v2201 = vpop.f32.mrf.mxu0
  %v2202 = vadd.f32 0.0, %v2201
  %2203 = vmatmul.bf16.gmra.mxu0 %v2081
  %v2204 = vpop.f32.mrf.mxu0
  %v2205 = vadd.f32 0.0, %v2204
  %v2206 = vpop.f32.mrf.mxu0
  %v2207 = vadd.f32 0.0, %v2206
  %2208 = vmatmul.bf16.gmra.mxu0 %v2084
  %v2209 = vpop.f32.mrf.mxu0
  %v2210 = vadd.f32 0.0, %v2209
  %v2211 = vpop.f32.mrf.mxu0
  %v2212 = vadd.f32 0.0, %v2211
  %2213 = vmatmul.bf16.gmra.mxu0 %v2087
  %v2214 = vpop.f32.mrf.mxu0
  %v2215 = vadd.f32 0.0, %v2214
  %v2216 = vpop.f32.mrf.mxu0
  %v2217 = vadd.f32 0.0, %v2216
  %2218 = vmatmul.bf16.gmra.mxu0 %v2090
  %v2219 = vpop.f32.mrf.mxu0
  %v2220 = vadd.f32 0.0, %v2219
  %v2221 = vpop.f32.mrf.mxu0
  %v2222 = vadd.f32 0.0, %v2221
  %2223 = vmatmul.bf16.gmra.mxu0 %v2093
  %v2224 = vpop.f32.mrf.mxu0
  %v2225 = vadd.f32 0.0, %v2224
  %v2226 = vpop.f32.mrf.mxu0
  %v2227 = vadd.f32 0.0, %v2226
  %2228 = vmatmul.bf16.gmra.mxu0 %v2096
  %v2229 = vpop.f32.mrf.mxu0
  %v2230 = vadd.f32 0.0, %v2229
  %v2231 = vpop.f32.mrf.mxu0
  %v2232 = vadd.f32 0.0, %v2231
  %2233 = vmatmul.bf16.gmra.mxu0 %v2099
  %v2234 = vpop.f32.mrf.mxu0
  %v2235 = vadd.f32 0.0, %v2234
  %v2236 = vpop.f32.mrf.mxu0
  %v2237 = vadd.f32 0.0, %v2236
  %2238 = vmatmul.bf16.gmra.mxu0 %v2102
  %v2239 = vpop.f32.mrf.mxu0
  %v2240 = vadd.f32 0.0, %v2239
  %v2241 = vpop.f32.mrf.mxu0
  %v2242 = vadd.f32 0.0, %v2241
  %2243 = vmatmul.bf16.gmra.mxu0 %v2105
  %v2244 = vpop.f32.mrf.mxu0
  %v2245 = vadd.f32 0.0, %v2244
  %v2246 = vpop.f32.mrf.mxu0
  %v2247 = vadd.f32 0.0, %v2246
  %2248 = vmatmul.bf16.gmra.mxu0 %v2108
  %v2249 = vpop.f32.mrf.mxu0
  %v2250 = vadd.f32 0.0, %v2249
  %v2251 = vpop.f32.mrf.mxu0
  %v2252 = vadd.f32 0.0, %v2251
  %2253 = vmatmul.bf16.gmra.mxu0 %v2111
  %v2254 = vpop.f32.mrf.mxu0
  %v2255 = vadd.f32 0.0, %v2254
  %v2256 = vpop.f32.mrf.mxu0
  %v2257 = vadd.f32 0.0, %v2256
  %2258 = vmatmul.bf16.gmra.mxu0 %v2114
  %v2259 = vpop.f32.mrf.mxu0
  %v2260 = vadd.f32 0.0, %v2259
  %v2261 = vpop.f32.mrf.mxu0
  %v2262 = vadd.f32 0.0, %v2261
  %2263 = vmatmul.bf16.gmra.mxu0 %v2117
  %v2264 = vpop.f32.mrf.mxu0
  %v2265 = vadd.f32 0.0, %v2264
  %v2266 = vpop.f32.mrf.mxu0
  %v2267 = vadd.f32 0.0, %v2266
  %2268 = vmatmul.bf16.gmra.mxu0 %v2120
  %v2269 = vpop.f32.mrf.mxu0
  %v2270 = vadd.f32 0.0, %v2269
  %v2271 = vpop.f32.mrf.mxu0
  %v2272 = vadd.f32 0.0, %v2271
  %2273 = vmatmul.bf16.gmra.mxu0 %v2123
  %v2274 = vpop.f32.mrf.mxu0
  %v2275 = vadd.f32 0.0, %v2274
  %v2276 = vpop.f32.mrf.mxu0
  %v2277 = vadd.f32 0.0, %v2276
  %2278 = vmatmul.bf16.gmra.mxu0 %v2126
  %v2279 = vpop.f32.mrf.mxu0
  %v2280 = vadd.f32 0.0, %v2279
  %v2281 = vpop.f32.mrf.mxu0
  %v2282 = vadd.f32 0.0, %v2281
  %2283 = vmatmul.bf16.gmra.mxu0 %v2129
  %v2284 = vpop.f32.mrf.mxu0
  %v2285 = vadd.f32 0.0, %v2284
  %v2286 = vpop.f32.mrf.mxu0
  %v2287 = vadd.f32 0.0, %v2286
  %2288 = vmatmul.bf16.gmra.mxu0 %v2132
  %v2289 = vpop.f32.mrf.mxu0
  %v2290 = vadd.f32 0.0, %v2289
  %v2291 = vpop.f32.mrf.mxu0
  %v2292 = vadd.f32 0.0, %v2291
  %2293 = vmatmul.bf16.gmra.mxu0 %v2135
  %v2294 = vpop.f32.mrf.mxu0
  %v2295 = vadd.f32 0.0, %v2294
  %v2296 = vpop.f32.mrf.mxu0
  %v2297 = vadd.f32 0.0, %v2296
  %2298 = vmatmul.bf16.gmra.mxu0 %v2138
  %v2299 = vpop.f32.mrf.mxu0
  %v2300 = vadd.f32 0.0, %v2299
  %v2301 = vpop.f32.mrf.mxu0
  %v2302 = vadd.f32 0.0, %v2301
  %2303 = vmatmul.bf16.gmra.mxu0 %v2141
  %v2304 = vpop.f32.mrf.mxu0
  %v2305 = vadd.f32 0.0, %v2304
  %v2306 = vpop.f32.mrf.mxu0
  %v2307 = vadd.f32 0.0, %v2306
  %2308 = vmatmul.bf16.gmra.mxu0 %v2144
  %v2309 = vpop.f32.mrf.mxu0
  %v2310 = vadd.f32 0.0, %v2309
  %v2311 = vpop.f32.mrf.mxu0
  %v2312 = vadd.f32 0.0, %v2311
  %2313 = vmatmul.bf16.gmra.mxu0 %v2147
  %v2314 = vpop.f32.mrf.mxu0
  %v2315 = vadd.f32 0.0, %v2314
  %v2316 = vpop.f32.mrf.mxu0
  %v2317 = vadd.f32 0.0, %v2316
  %2318 = vmatmul.bf16.gmra.mxu0 %v2150
  %v2319 = vpop.f32.mrf.mxu0
  %v2320 = vadd.f32 0.0, %v2319
  %v2321 = vpop.f32.mrf.mxu0
  %v2322 = vadd.f32 0.0, %v2321
  %2323 = vdwg.mxu0
  %v2324 = vadd.f32 %v1541, %v2165
  %v2325 = vadd.f32 %v1543, %v2167
  %v2326 = vadd.f32 %v1546, %v2170
  %v2327 = vadd.f32 %v1548, %v2172
  %v2328 = vadd.f32 %v1551, %v2175
  %v2329 = vadd.f32 %v1553, %v2177
  %v2330 = vadd.f32 %v1556, %v2180
  %v2331 = vadd.f32 %v1558, %v2182
  %v2332 = vadd.f32 %v1561, %v2185
  %v2333 = vadd.f32 %v1563, %v2187
  %v2334 = vadd.f32 %v1566, %v2190
  %v2335 = vadd.f32 %v1568, %v2192
  %v2336 = vadd.f32 %v1571, %v2195
  %v2337 = vadd.f32 %v1573, %v2197
  %v2338 = vadd.f32 %v1576, %v2200
  %v2339 = vadd.f32 %v1578, %v2202
  %v2340 = vadd.f32 %v1581, %v2205
  %v2341 = vadd.f32 %v1583, %v2207
  %v2342 = vadd.f32 %v1586, %v2210
  %v2343 = vadd.f32 %v1588, %v2212
  %v2344 = vadd.f32 %v1591, %v2215
  %v2345 = vadd.f32 %v1593, %v2217
  %v2346 = vadd.f32 %v1596, %v2220
  %v2347 = vadd.f32 %v1598, %v2222
  %v2348 = vadd.f32 %v1601, %v2225
  %v2349 = vadd.f32 %v1603, %v2227
  %v2350 = vadd.f32 %v1606, %v2230
  %v2351 = vadd.f32 %v1608, %v2232
  %v2352 = vadd.f32 %v1611, %v2235
  %v2353 = vadd.f32 %v1613, %v2237
  %v2354 = vadd.f32 %v1616, %v2240
  %v2355 = vadd.f32 %v1618, %v2242
  %v2356 = vadd.f32 %v1621, %v2245
  %v2357 = vadd.f32 %v1623, %v2247
  %v2358 = vadd.f32 %v1626, %v2250
  %v2359 = vadd.f32 %v1628, %v2252
  %v2360 = vadd.f32 %v1631, %v2255
  %v2361 = vadd.f32 %v1633, %v2257
  %v2362 = vadd.f32 %v1636, %v2260
  %v2363 = vadd.f32 %v1638, %v2262
  %v2364 = vadd.f32 %v1641, %v2265
  %v2365 = vadd.f32 %v1643, %v2267
  %v2366 = vadd.f32 %v1646, %v2270
  %v2367 = vadd.f32 %v1648, %v2272
  %v2368 = vadd.f32 %v1651, %v2275
  %v2369 = vadd.f32 %v1653, %v2277
  %v2370 = vadd.f32 %v1656, %v2280
  %v2371 = vadd.f32 %v1658, %v2282
  %v2372 = vadd.f32 %v1661, %v2285
  %v2373 = vadd.f32 %v1663, %v2287
  %v2374 = vadd.f32 %v1666, %v2290
  %v2375 = vadd.f32 %v1668, %v2292
  %v2376 = vadd.f32 %v1671, %v2295
  %v2377 = vadd.f32 %v1673, %v2297
  %v2378 = vadd.f32 %v1676, %v2300
  %v2379 = vadd.f32 %v1678, %v2302
  %v2380 = vadd.f32 %v1681, %v2305
  %v2381 = vadd.f32 %v1683, %v2307
  %v2382 = vadd.f32 %v1686, %v2310
  %v2383 = vadd.f32 %v1688, %v2312
  %v2384 = vadd.f32 %v1691, %v2315
  %v2385 = vadd.f32 %v1693, %v2317
  %v2386 = vadd.f32 %v1696, %v2320
  %v2387 = vadd.f32 %v1698, %v2322
  %v2388 = vld [vmem:[%s1 + $0x4] sm:$0xc]
  %v2393 = vunpack.c.l.b16 %v69
  %v2394 = vunpack.c.l.b16 %v70
  %v2395 = vunpack.c.l.b16 %v123
  %v2396 = vunpack.c.l.b16 %v124
  %v2397 = vpack.c.b16 %v2394, %v2393
  %v2398 = vpack.c.b16 %v2396, %v2395
  %v2400 = vunpack.c.l.b16 %v2388
  %v2401 = vpack.c.b16 %v2400, %v2400
  %v2402 = vrot.slane %v2401, 2
  %v2404 = vsel %vm1002, %v2397, 0
  %v2407 = vsel %vm1002, %v2398, 0
  %v2410 = vsel %vm1099, %v2402, 0
  %2412 = vmatpush.bf16.msra.mxu0 0
  %2413 = vmatpush.bf16.msra.mxu0 0
  %2414 = vmatpush.bf16.msra.mxu0 0
  %2415 = vmatpush.bf16.msra.mxu0 0
  %2416 = vmatpush.bf16.msra.mxu0 0
  %2417 = vmatpush.bf16.msra.mxu0 0
  %2418 = vmatpush.bf16.msra.mxu0 0
  %2419 = vmatpush.bf16.msra.mxu0 %v2410
  %2420 = vmatmul.bf16.gmra.mxu0 %v1436
  %v2421 = vpop.f32.mrf.mxu0
  %v2422 = vadd.f32 0.0, %v2421
  %v2423 = vpop.f32.mrf.mxu0
  %v2424 = vadd.f32 0.0, %v2423
  %2425 = vmatmul.bf16.gmra.mxu0 %v1439
  %v2426 = vpop.f32.mrf.mxu0
  %v2427 = vadd.f32 0.0, %v2426
  %v2428 = vpop.f32.mrf.mxu0
  %v2429 = vadd.f32 0.0, %v2428
  %2430 = vmatmul.bf16.gmra.mxu0 %v1442
  %v2431 = vpop.f32.mrf.mxu0
  %v2432 = vadd.f32 0.0, %v2431
  %v2433 = vpop.f32.mrf.mxu0
  %v2434 = vadd.f32 0.0, %v2433
  %2435 = vmatmul.bf16.gmra.mxu0 %v1445
  %v2436 = vpop.f32.mrf.mxu0
  %v2437 = vadd.f32 0.0, %v2436
  %v2438 = vpop.f32.mrf.mxu0
  %v2439 = vadd.f32 0.0, %v2438
  %2440 = vmatmul.bf16.gmra.mxu0 %v1448
  %v2441 = vpop.f32.mrf.mxu0
  %v2442 = vadd.f32 0.0, %v2441
  %v2443 = vpop.f32.mrf.mxu0
  %v2444 = vadd.f32 0.0, %v2443
  %2445 = vmatmul.bf16.gmra.mxu0 %v1451
  %v2446 = vpop.f32.mrf.mxu0
  %v2447 = vadd.f32 0.0, %v2446
  %v2448 = vpop.f32.mrf.mxu0
  %v2449 = vadd.f32 0.0, %v2448
  %2450 = vmatmul.bf16.gmra.mxu0 %v1454
  %v2451 = vpop.f32.mrf.mxu0
  %v2452 = vadd.f32 0.0, %v2451
  %v2453 = vpop.f32.mrf.mxu0
  %v2454 = vadd.f32 0.0, %v2453
  %2455 = vmatmul.bf16.gmra.mxu0 %v1457
  %v2456 = vpop.f32.mrf.mxu0
  %v2457 = vadd.f32 0.0, %v2456
  %v2458 = vpop.f32.mrf.mxu0
  %v2459 = vadd.f32 0.0, %v2458
  %2460 = vmatmul.bf16.gmra.mxu0 %v1460
  %v2461 = vpop.f32.mrf.mxu0
  %v2462 = vadd.f32 0.0, %v2461
  %v2463 = vpop.f32.mrf.mxu0
  %v2464 = vadd.f32 0.0, %v2463
  %2465 = vmatmul.bf16.gmra.mxu0 %v1463
  %v2466 = vpop.f32.mrf.mxu0
  %v2467 = vadd.f32 0.0, %v2466
  %v2468 = vpop.f32.mrf.mxu0
  %v2469 = vadd.f32 0.0, %v2468
  %2470 = vmatmul.bf16.gmra.mxu0 %v1466
  %v2471 = vpop.f32.mrf.mxu0
  %v2472 = vadd.f32 0.0, %v2471
  %v2473 = vpop.f32.mrf.mxu0
  %v2474 = vadd.f32 0.0, %v2473
  %2475 = vmatmul.bf16.gmra.mxu0 %v1469
  %v2476 = vpop.f32.mrf.mxu0
  %v2477 = vadd.f32 0.0, %v2476
  %v2478 = vpop.f32.mrf.mxu0
  %v2479 = vadd.f32 0.0, %v2478
  %2480 = vmatmul.bf16.gmra.mxu0 %v1472
  %v2481 = vpop.f32.mrf.mxu0
  %v2482 = vadd.f32 0.0, %v2481
  %v2483 = vpop.f32.mrf.mxu0
  %v2484 = vadd.f32 0.0, %v2483
  %2485 = vmatmul.bf16.gmra.mxu0 %v1475
  %v2486 = vpop.f32.mrf.mxu0
  %v2487 = vadd.f32 0.0, %v2486
  %v2488 = vpop.f32.mrf.mxu0
  %v2489 = vadd.f32 0.0, %v2488
  %2490 = vmatmul.bf16.gmra.mxu0 %v1478
  %v2491 = vpop.f32.mrf.mxu0
  %v2492 = vadd.f32 0.0, %v2491
  %v2493 = vpop.f32.mrf.mxu0
  %v2494 = vadd.f32 0.0, %v2493
  %2495 = vmatmul.bf16.gmra.mxu0 %v2404
  %v2496 = vpop.f32.mrf.mxu0
  %v2497 = vadd.f32 0.0, %v2496
  %v2498 = vpop.f32.mrf.mxu0
  %v2499 = vadd.f32 0.0, %v2498
  %2500 = vmatmul.bf16.gmra.mxu0 %v1484
  %v2501 = vpop.f32.mrf.mxu0
  %v2502 = vadd.f32 0.0, %v2501
  %v2503 = vpop.f32.mrf.mxu0
  %v2504 = vadd.f32 0.0, %v2503
  %2505 = vmatmul.bf16.gmra.mxu0 %v1487
  %v2506 = vpop.f32.mrf.mxu0
  %v2507 = vadd.f32 0.0, %v2506
  %v2508 = vpop.f32.mrf.mxu0
  %v2509 = vadd.f32 0.0, %v2508
  %2510 = vmatmul.bf16.gmra.mxu0 %v1490
  %v2511 = vpop.f32.mrf.mxu0
  %v2512 = vadd.f32 0.0, %v2511
  %v2513 = vpop.f32.mrf.mxu0
  %v2514 = vadd.f32 0.0, %v2513
  %2515 = vmatmul.bf16.gmra.mxu0 %v1493
  %v2516 = vpop.f32.mrf.mxu0
  %v2517 = vadd.f32 0.0, %v2516
  %v2518 = vpop.f32.mrf.mxu0
  %v2519 = vadd.f32 0.0, %v2518
  %2520 = vmatmul.bf16.gmra.mxu0 %v1496
  %v2521 = vpop.f32.mrf.mxu0
  %v2522 = vadd.f32 0.0, %v2521
  %v2523 = vpop.f32.mrf.mxu0
  %v2524 = vadd.f32 0.0, %v2523
  %2525 = vmatmul.bf16.gmra.mxu0 %v1499
  %v2526 = vpop.f32.mrf.mxu0
  %v2527 = vadd.f32 0.0, %v2526
  %v2528 = vpop.f32.mrf.mxu0
  %v2529 = vadd.f32 0.0, %v2528
  %2530 = vmatmul.bf16.gmra.mxu0 %v1502
  %v2531 = vpop.f32.mrf.mxu0
  %v2532 = vadd.f32 0.0, %v2531
  %v2533 = vpop.f32.mrf.mxu0
  %v2534 = vadd.f32 0.0, %v2533
  %2535 = vmatmul.bf16.gmra.mxu0 %v1505
  %v2536 = vpop.f32.mrf.mxu0
  %v2537 = vadd.f32 0.0, %v2536
  %v2538 = vpop.f32.mrf.mxu0
  %v2539 = vadd.f32 0.0, %v2538
  %2540 = vmatmul.bf16.gmra.mxu0 %v1508
  %v2541 = vpop.f32.mrf.mxu0
  %v2542 = vadd.f32 0.0, %v2541
  %v2543 = vpop.f32.mrf.mxu0
  %v2544 = vadd.f32 0.0, %v2543
  %2545 = vmatmul.bf16.gmra.mxu0 %v1511
  %v2546 = vpop.f32.mrf.mxu0
  %v2547 = vadd.f32 0.0, %v2546
  %v2548 = vpop.f32.mrf.mxu0
  %v2549 = vadd.f32 0.0, %v2548
  %2550 = vmatmul.bf16.gmra.mxu0 %v1514
  %v2551 = vpop.f32.mrf.mxu0
  %v2552 = vadd.f32 0.0, %v2551
  %v2553 = vpop.f32.mrf.mxu0
  %v2554 = vadd.f32 0.0, %v2553
  %2555 = vmatmul.bf16.gmra.mxu0 %v1517
  %v2556 = vpop.f32.mrf.mxu0
  %v2557 = vadd.f32 0.0, %v2556
  %v2558 = vpop.f32.mrf.mxu0
  %v2559 = vadd.f32 0.0, %v2558
  %2560 = vmatmul.bf16.gmra.mxu0 %v1520
  %v2561 = vpop.f32.mrf.mxu0
  %v2562 = vadd.f32 0.0, %v2561
  %v2563 = vpop.f32.mrf.mxu0
  %v2564 = vadd.f32 0.0, %v2563
  %2565 = vmatmul.bf16.gmra.mxu0 %v1523
  %v2566 = vpop.f32.mrf.mxu0
  %v2567 = vadd.f32 0.0, %v2566
  %v2568 = vpop.f32.mrf.mxu0
  %v2569 = vadd.f32 0.0, %v2568
  %2570 = vmatmul.bf16.gmra.mxu0 %v1526
  %v2571 = vpop.f32.mrf.mxu0
  %v2572 = vadd.f32 0.0, %v2571
  %v2573 = vpop.f32.mrf.mxu0
  %v2574 = vadd.f32 0.0, %v2573
  %2575 = vmatmul.bf16.gmra.mxu0 %v2407
  %v2576 = vpop.f32.mrf.mxu0
  %v2577 = vadd.f32 0.0, %v2576
  %v2578 = vpop.f32.mrf.mxu0
  %v2579 = vadd.f32 0.0, %v2578
  %2580 = vdwg.mxu0
  %v2581 = vadd.f32 %v2324, %v2422
  %v2582 = vadd.f32 %v2325, %v2424
  %v2583 = vadd.f32 %v2326, %v2427
  %v2584 = vadd.f32 %v2327, %v2429
  %v2585 = vadd.f32 %v2328, %v2432
  %v2586 = vadd.f32 %v2329, %v2434
  %v2587 = vadd.f32 %v2330, %v2437
  %v2588 = vadd.f32 %v2331, %v2439
  %v2589 = vadd.f32 %v2332, %v2442
  %v2590 = vadd.f32 %v2333, %v2444
  %v2591 = vadd.f32 %v2334, %v2447
  %v2592 = vadd.f32 %v2335, %v2449
  %v2593 = vadd.f32 %v2336, %v2452
  %v2594 = vadd.f32 %v2337, %v2454
  %v2595 = vadd.f32 %v2338, %v2457
  %v2596 = vadd.f32 %v2339, %v2459
  %v2597 = vadd.f32 %v2340, %v2462
  %v2598 = vadd.f32 %v2341, %v2464
  %v2599 = vadd.f32 %v2342, %v2467
  %v2600 = vadd.f32 %v2343, %v2469
  %v2601 = vadd.f32 %v2344, %v2472
  %v2602 = vadd.f32 %v2345, %v2474
  %v2603 = vadd.f32 %v2346, %v2477
  %v2604 = vadd.f32 %v2347, %v2479
  %v2605 = vadd.f32 %v2348, %v2482
  %v2606 = vadd.f32 %v2349, %v2484
  %v2607 = vadd.f32 %v2350, %v2487
  %v2608 = vadd.f32 %v2351, %v2489
  %v2609 = vadd.f32 %v2352, %v2492
  %v2610 = vadd.f32 %v2353, %v2494
  %v2611 = vadd.f32 %v2354, %v2497
  %v2612 = vadd.f32 %v2355, %v2499
  %v2613 = vadd.f32 %v2356, %v2502
  %v2614 = vadd.f32 %v2357, %v2504
  %v2615 = vadd.f32 %v2358, %v2507
  %v2616 = vadd.f32 %v2359, %v2509
  %v2617 = vadd.f32 %v2360, %v2512
  %v2618 = vadd.f32 %v2361, %v2514
  %v2619 = vadd.f32 %v2362, %v2517
  %v2620 = vadd.f32 %v2363, %v2519
  %v2621 = vadd.f32 %v2364, %v2522
  %v2622 = vadd.f32 %v2365, %v2524
  %v2623 = vadd.f32 %v2366, %v2527
  %v2624 = vadd.f32 %v2367, %v2529
  %v2625 = vadd.f32 %v2368, %v2532
  %v2626 = vadd.f32 %v2369, %v2534
  %v2627 = vadd.f32 %v2370, %v2537
  %v2628 = vadd.f32 %v2371, %v2539
  %v2629 = vadd.f32 %v2372, %v2542
  %v2630 = vadd.f32 %v2373, %v2544
  %v2631 = vadd.f32 %v2374, %v2547
  %v2632 = vadd.f32 %v2375, %v2549
  %v2633 = vadd.f32 %v2376, %v2552
  %v2634 = vadd.f32 %v2377, %v2554
  %v2635 = vadd.f32 %v2378, %v2557
  %v2636 = vadd.f32 %v2379, %v2559
  %v2637 = vadd.f32 %v2380, %v2562
  %v2638 = vadd.f32 %v2381, %v2564
  %v2639 = vadd.f32 %v2382, %v2567
  %v2640 = vadd.f32 %v2383, %v2569
  %v2641 = vadd.f32 %v2384, %v2572
  %v2642 = vadd.f32 %v2385, %v2574
  %v2643 = vadd.f32 %v2386, %v2577
  %v2644 = vadd.f32 %v2387, %v2579
  %v2646 = vshrl.u32 %v69, 16
  %v2648 = vrot.slane %v2646, 4
  %v2649 = vshll.u32 %v69, 16
  %v2651 = vrot.slane %v2649, 5
  %v2652 = vor.u32 %v2648, %v2651
  %v2653 = vrot.slane %v2652, 4
  %v2655 = vshll.u32 %v70, 16
  %v2657 = vrot.slane %v2655, 5
  %v2658 = vsel %vm132, %v2653, %v2657
  %v2659 = vshrl.u32 %v70, 16
  %v2661 = vrot.slane %v2659, 4
  %v2662 = vor.u32 %v2661, %v2657
  %v2663 = vrot.slane %v2662, 4
  %v2665 = vshll.u32 %v71, 16
  %v2667 = vrot.slane %v2665, 5
  %v2668 = vsel %vm132, %v2663, %v2667
  %v2670 = vshrl.u32 %v123, 16
  %v2672 = vrot.slane %v2670, 4
  %v2673 = vshll.u32 %v123, 16
  %v2675 = vrot.slane %v2673, 5
  %v2676 = vor.u32 %v2672, %v2675
  %v2677 = vrot.slane %v2676, 4
  %v2679 = vshll.u32 %v124, 16
  %v2681 = vrot.slane %v2679, 5
  %v2682 = vsel %vm132, %v2677, %v2681
  %v2683 = vshrl.u32 %v124, 16
  %v2685 = vrot.slane %v2683, 4
  %v2686 = vor.u32 %v2685, %v2681
  %v2687 = vrot.slane %v2686, 4
  %v2689 = vshll.u32 %v125, 16
  %v2691 = vrot.slane %v2689, 5
  %v2692 = vsel %vm132, %v2687, %v2691
  %v2693 = vld [vmem:[%s1 + $0x8] sm:$0x3]
  %v2694 = vunpack.c.l.b16 %v2658
  %v2695 = vunpack.c.l.b16 %v2668
  %v2696 = vunpack.c.l.b16 %v2682
  %v2697 = vunpack.c.l.b16 %v2692
  %v2698 = vpack.c.b16 %v2695, %v2694
  %v2699 = vpack.c.b16 %v2697, %v2696
  %v2701 = vsel %vm1002, %v2698, 0
  %v2704 = vsel %vm1002, %v2699, 0
  %v2707 = vsel %vm1099, %v2693, 0
  %2709 = vmatpush.bf16.msra.mxu0 0
  %2710 = vmatpush.bf16.msra.mxu0 0
  %2711 = vmatpush.bf16.msra.mxu0 0
  %2712 = vmatpush.bf16.msra.mxu0 0
  %2713 = vmatpush.bf16.msra.mxu0 0
  %2714 = vmatpush.bf16.msra.mxu0 0
  %2715 = vmatpush.bf16.msra.mxu0 0
  %2716 = vmatpush.bf16.msra.mxu0 %v2707
  %2717 = vmatmul.bf16.gmra.mxu0 %v1007
  %v2718 = vpop.f32.mrf.mxu0
  %v2719 = vadd.f32 0.0, %v2718
  %v2720 = vpop.f32.mrf.mxu0
  %v2721 = vadd.f32 0.0, %v2720
  %2722 = vmatmul.bf16.gmra.mxu0 %v1010
  %v2723 = vpop.f32.mrf.mxu0
  %v2724 = vadd.f32 0.0, %v2723
  %v2725 = vpop.f32.mrf.mxu0
  %v2726 = vadd.f32 0.0, %v2725
  %2727 = vmatmul.bf16.gmra.mxu0 %v1013
  %v2728 = vpop.f32.mrf.mxu0
  %v2729 = vadd.f32 0.0, %v2728
  %v2730 = vpop.f32.mrf.mxu0
  %v2731 = vadd.f32 0.0, %v2730
  %2732 = vmatmul.bf16.gmra.mxu0 %v1016
  %v2733 = vpop.f32.mrf.mxu0
  %v2734 = vadd.f32 0.0, %v2733
  %v2735 = vpop.f32.mrf.mxu0
  %v2736 = vadd.f32 0.0, %v2735
  %2737 = vmatmul.bf16.gmra.mxu0 %v1019
  %v2738 = vpop.f32.mrf.mxu0
  %v2739 = vadd.f32 0.0, %v2738
  %v2740 = vpop.f32.mrf.mxu0
  %v2741 = vadd.f32 0.0, %v2740
  %2742 = vmatmul.bf16.gmra.mxu0 %v1022
  %v2743 = vpop.f32.mrf.mxu0
  %v2744 = vadd.f32 0.0, %v2743
  %v2745 = vpop.f32.mrf.mxu0
  %v2746 = vadd.f32 0.0, %v2745
  %2747 = vmatmul.bf16.gmra.mxu0 %v1025
  %v2748 = vpop.f32.mrf.mxu0
  %v2749 = vadd.f32 0.0, %v2748
  %v2750 = vpop.f32.mrf.mxu0
  %v2751 = vadd.f32 0.0, %v2750
  %2752 = vmatmul.bf16.gmra.mxu0 %v1028
  %v2753 = vpop.f32.mrf.mxu0
  %v2754 = vadd.f32 0.0, %v2753
  %v2755 = vpop.f32.mrf.mxu0
  %v2756 = vadd.f32 0.0, %v2755
  %2757 = vmatmul.bf16.gmra.mxu0 %v1031
  %v2758 = vpop.f32.mrf.mxu0
  %v2759 = vadd.f32 0.0, %v2758
  %v2760 = vpop.f32.mrf.mxu0
  %v2761 = vadd.f32 0.0, %v2760
  %2762 = vmatmul.bf16.gmra.mxu0 %v1034
  %v2763 = vpop.f32.mrf.mxu0
  %v2764 = vadd.f32 0.0, %v2763
  %v2765 = vpop.f32.mrf.mxu0
  %v2766 = vadd.f32 0.0, %v2765
  %2767 = vmatmul.bf16.gmra.mxu0 %v1037
  %v2768 = vpop.f32.mrf.mxu0
  %v2769 = vadd.f32 0.0, %v2768
  %v2770 = vpop.f32.mrf.mxu0
  %v2771 = vadd.f32 0.0, %v2770
  %2772 = vmatmul.bf16.gmra.mxu0 %v1040
  %v2773 = vpop.f32.mrf.mxu0
  %v2774 = vadd.f32 0.0, %v2773
  %v2775 = vpop.f32.mrf.mxu0
  %v2776 = vadd.f32 0.0, %v2775
  %2777 = vmatmul.bf16.gmra.mxu0 %v1043
  %v2778 = vpop.f32.mrf.mxu0
  %v2779 = vadd.f32 0.0, %v2778
  %v2780 = vpop.f32.mrf.mxu0
  %v2781 = vadd.f32 0.0, %v2780
  %2782 = vmatmul.bf16.gmra.mxu0 %v1046
  %v2783 = vpop.f32.mrf.mxu0
  %v2784 = vadd.f32 0.0, %v2783
  %v2785 = vpop.f32.mrf.mxu0
  %v2786 = vadd.f32 0.0, %v2785
  %2787 = vmatmul.bf16.gmra.mxu0 %v1049
  %v2788 = vpop.f32.mrf.mxu0
  %v2789 = vadd.f32 0.0, %v2788
  %v2790 = vpop.f32.mrf.mxu0
  %v2791 = vadd.f32 0.0, %v2790
  %2792 = vmatmul.bf16.gmra.mxu0 %v2701
  %v2793 = vpop.f32.mrf.mxu0
  %v2794 = vadd.f32 0.0, %v2793
  %v2795 = vpop.f32.mrf.mxu0
  %v2796 = vadd.f32 0.0, %v2795
  %2797 = vmatmul.bf16.gmra.mxu0 %v1055
  %v2798 = vpop.f32.mrf.mxu0
  %v2799 = vadd.f32 0.0, %v2798
  %v2800 = vpop.f32.mrf.mxu0
  %v2801 = vadd.f32 0.0, %v2800
  %2802 = vmatmul.bf16.gmra.mxu0 %v1058
  %v2803 = vpop.f32.mrf.mxu0
  %v2804 = vadd.f32 0.0, %v2803
  %v2805 = vpop.f32.mrf.mxu0
  %v2806 = vadd.f32 0.0, %v2805
  %2807 = vmatmul.bf16.gmra.mxu0 %v1061
  %v2808 = vpop.f32.mrf.mxu0
  %v2809 = vadd.f32 0.0, %v2808
  %v2810 = vpop.f32.mrf.mxu0
  %v2811 = vadd.f32 0.0, %v2810
  %2812 = vmatmul.bf16.gmra.mxu0 %v1064
  %v2813 = vpop.f32.mrf.mxu0
  %v2814 = vadd.f32 0.0, %v2813
  %v2815 = vpop.f32.mrf.mxu0
  %v2816 = vadd.f32 0.0, %v2815
  %2817 = vmatmul.bf16.gmra.mxu0 %v1067
  %v2818 = vpop.f32.mrf.mxu0
  %v2819 = vadd.f32 0.0, %v2818
  %v2820 = vpop.f32.mrf.mxu0
  %v2821 = vadd.f32 0.0, %v2820
  %2822 = vmatmul.bf16.gmra.mxu0 %v1070
  %v2823 = vpop.f32.mrf.mxu0
  %v2824 = vadd.f32 0.0, %v2823
  %v2825 = vpop.f32.mrf.mxu0
  %v2826 = vadd.f32 0.0, %v2825
  %2827 = vmatmul.bf16.gmra.mxu0 %v1073
  %v2828 = vpop.f32.mrf.mxu0
  %v2829 = vadd.f32 0.0, %v2828
  %v2830 = vpop.f32.mrf.mxu0
  %v2831 = vadd.f32 0.0, %v2830
  %2832 = vmatmul.bf16.gmra.mxu0 %v1076
  %v2833 = vpop.f32.mrf.mxu0
  %v2834 = vadd.f32 0.0, %v2833
  %v2835 = vpop.f32.mrf.mxu0
  %v2836 = vadd.f32 0.0, %v2835
  %2837 = vmatmul.bf16.gmra.mxu0 %v1079
  %v2838 = vpop.f32.mrf.mxu0
  %v2839 = vadd.f32 0.0, %v2838
  %v2840 = vpop.f32.mrf.mxu0
  %v2841 = vadd.f32 0.0, %v2840
  %2842 = vmatmul.bf16.gmra.mxu0 %v1082
  %v2843 = vpop.f32.mrf.mxu0
  %v2844 = vadd.f32 0.0, %v2843
  %v2845 = vpop.f32.mrf.mxu0
  %v2846 = vadd.f32 0.0, %v2845
  %2847 = vmatmul.bf16.gmra.mxu0 %v1085
  %v2848 = vpop.f32.mrf.mxu0
  %v2849 = vadd.f32 0.0, %v2848
  %v2850 = vpop.f32.mrf.mxu0
  %v2851 = vadd.f32 0.0, %v2850
  %2852 = vmatmul.bf16.gmra.mxu0 %v1088
  %v2853 = vpop.f32.mrf.mxu0
  %v2854 = vadd.f32 0.0, %v2853
  %v2855 = vpop.f32.mrf.mxu0
  %v2856 = vadd.f32 0.0, %v2855
  %2857 = vmatmul.bf16.gmra.mxu0 %v1091
  %v2858 = vpop.f32.mrf.mxu0
  %v2859 = vadd.f32 0.0, %v2858
  %v2860 = vpop.f32.mrf.mxu0
  %v2861 = vadd.f32 0.0, %v2860
  %2862 = vmatmul.bf16.gmra.mxu0 %v1094
  %v2863 = vpop.f32.mrf.mxu0
  %v2864 = vadd.f32 0.0, %v2863
  %v2865 = vpop.f32.mrf.mxu0
  %v2866 = vadd.f32 0.0, %v2865
  %2867 = vmatmul.bf16.gmra.mxu0 %v1097
  %v2868 = vpop.f32.mrf.mxu0
  %v2869 = vadd.f32 0.0, %v2868
  %v2870 = vpop.f32.mrf.mxu0
  %v2871 = vadd.f32 0.0, %v2870
  %2872 = vmatmul.bf16.gmra.mxu0 %v2704
  %v2873 = vpop.f32.mrf.mxu0
  %v2874 = vadd.f32 0.0, %v2873
  %v2875 = vpop.f32.mrf.mxu0
  %v2876 = vadd.f32 0.0, %v2875
  %2877 = vdwg.mxu0
  %v2878 = vadd.f32 %v2581, %v2719
  %v2879 = vadd.f32 %v2582, %v2721
  %v2880 = vadd.f32 %v2583, %v2724
  %v2881 = vadd.f32 %v2584, %v2726
  %v2882 = vadd.f32 %v2585, %v2729
  %v2883 = vadd.f32 %v2586, %v2731
  %v2884 = vadd.f32 %v2587, %v2734
  %v2885 = vadd.f32 %v2588, %v2736
  %v2886 = vadd.f32 %v2589, %v2739
  %v2887 = vadd.f32 %v2590, %v2741
  %v2888 = vadd.f32 %v2591, %v2744
  %v2889 = vadd.f32 %v2592, %v2746
  %v2890 = vadd.f32 %v2593, %v2749
  %v2891 = vadd.f32 %v2594, %v2751
  %v2892 = vadd.f32 %v2595, %v2754
  %v2893 = vadd.f32 %v2596, %v2756
  %v2894 = vadd.f32 %v2597, %v2759
  %v2895 = vadd.f32 %v2598, %v2761
  %v2896 = vadd.f32 %v2599, %v2764
  %v2897 = vadd.f32 %v2600, %v2766
  %v2898 = vadd.f32 %v2601, %v2769
  %v2899 = vadd.f32 %v2602, %v2771
  %v2900 = vadd.f32 %v2603, %v2774
  %v2901 = vadd.f32 %v2604, %v2776
  %v2902 = vadd.f32 %v2605, %v2779
  %v2903 = vadd.f32 %v2606, %v2781
  %v2904 = vadd.f32 %v2607, %v2784
  %v2905 = vadd.f32 %v2608, %v2786
  %v2906 = vadd.f32 %v2609, %v2789
  %v2907 = vadd.f32 %v2610, %v2791
  %v2908 = vadd.f32 %v2611, %v2794
  %v2909 = vadd.f32 %v2612, %v2796
  %v2910 = vadd.f32 %v2613, %v2799
  %v2911 = vadd.f32 %v2614, %v2801
  %v2912 = vadd.f32 %v2615, %v2804
  %v2913 = vadd.f32 %v2616, %v2806
  %v2914 = vadd.f32 %v2617, %v2809
  %v2915 = vadd.f32 %v2618, %v2811
  %v2916 = vadd.f32 %v2619, %v2814
  %v2917 = vadd.f32 %v2620, %v2816
  %v2918 = vadd.f32 %v2621, %v2819
  %v2919 = vadd.f32 %v2622, %v2821
  %v2920 = vadd.f32 %v2623, %v2824
  %v2921 = vadd.f32 %v2624, %v2826
  %v2922 = vadd.f32 %v2625, %v2829
  %v2923 = vadd.f32 %v2626, %v2831
  %v2924 = vadd.f32 %v2627, %v2834
  %v2925 = vadd.f32 %v2628, %v2836
  %v2926 = vadd.f32 %v2629, %v2839
  %v2927 = vadd.f32 %v2630, %v2841
  %v2928 = vadd.f32 %v2631, %v2844
  %v2929 = vadd.f32 %v2632, %v2846
  %v2930 = vadd.f32 %v2633, %v2849
  %v2931 = vadd.f32 %v2634, %v2851
  %v2932 = vadd.f32 %v2635, %v2854
  %v2933 = vadd.f32 %v2636, %v2856
  %v2934 = vadd.f32 %v2637, %v2859
  %v2935 = vadd.f32 %v2638, %v2861
  %v2936 = vadd.f32 %v2639, %v2864
  %v2937 = vadd.f32 %v2640, %v2866
  %v2938 = vadd.f32 %v2641, %v2869
  %v2939 = vadd.f32 %v2642, %v2871
  %v2940 = vadd.f32 %v2643, %v2874
  %v2941 = vadd.f32 %v2644, %v2876
  %v2944 = vrot.slane %v69, 5
  %v2945 = vrot.slane %v2944, 4
  %v2946 = vrot.slane %v70, 5
  %v2947 = vsel %vm1734, %v2945, %v2946
  %v2948 = vrot.slane %v2946, 4
  %v2949 = vrot.slane %v71, 5
  %v2950 = vsel %vm1734, %v2948, %v2949
  %v2951 = vrot.slane %v123, 5
  %v2952 = vrot.slane %v2951, 4
  %v2953 = vrot.slane %v124, 5
  %v2954 = vsel %vm1734, %v2952, %v2953
  %v2955 = vrot.slane %v2953, 4
  %v2956 = vrot.slane %v125, 5
  %v2957 = vsel %vm1734, %v2955, %v2956
  %v2958 = vld [vmem:[%s1 + $0x8] sm:$0xc]
  %v2959 = vunpack.c.l.b16 %v2947
  %v2960 = vunpack.c.l.b16 %v2950
  %v2961 = vunpack.c.l.b16 %v2954
  %v2962 = vunpack.c.l.b16 %v2957
  %v2963 = vpack.c.b16 %v2960, %v2959
  %v2964 = vpack.c.b16 %v2962, %v2961
  %v2966 = vunpack.c.l.b16 %v2958
  %v2967 = vpack.c.b16 %v2966, %v2966
  %v2968 = vrot.slane %v2967, 2
  %v2970 = vsel %vm1002, %v2963, 0
  %v2973 = vsel %vm1002, %v2964, 0
  %v2976 = vsel %vm1099, %v2968, 0
  %2978 = vmatpush.bf16.msra.mxu0 0
  %2979 = vmatpush.bf16.msra.mxu0 0
  %2980 = vmatpush.bf16.msra.mxu0 0
  %2981 = vmatpush.bf16.msra.mxu0 0
  %2982 = vmatpush.bf16.msra.mxu0 0
  %2983 = vmatpush.bf16.msra.mxu0 0
  %2984 = vmatpush.bf16.msra.mxu0 0
  %2985 = vmatpush.bf16.msra.mxu0 %v2976
  %2986 = vmatmul.bf16.gmra.mxu0 %v2060
  %v2987 = vpop.f32.mrf.mxu0
  %v2988 = vadd.f32 0.0, %v2987
  %v2989 = vpop.f32.mrf.mxu0
  %v2990 = vadd.f32 0.0, %v2989
  %2991 = vmatmul.bf16.gmra.mxu0 %v2063
  %v2992 = vpop.f32.mrf.mxu0
  %v2993 = vadd.f32 0.0, %v2992
  %v2994 = vpop.f32.mrf.mxu0
  %v2995 = vadd.f32 0.0, %v2994
  %2996 = vmatmul.bf16.gmra.mxu0 %v2066
  %v2997 = vpop.f32.mrf.mxu0
  %v2998 = vadd.f32 0.0, %v2997
  %v2999 = vpop.f32.mrf.mxu0
  %v3000 = vadd.f32 0.0, %v2999
  %3001 = vmatmul.bf16.gmra.mxu0 %v2069
  %v3002 = vpop.f32.mrf.mxu0
  %v3003 = vadd.f32 0.0, %v3002
  %v3004 = vpop.f32.mrf.mxu0
  %v3005 = vadd.f32 0.0, %v3004
  %3006 = vmatmul.bf16.gmra.mxu0 %v2072
  %v3007 = vpop.f32.mrf.mxu0
  %v3008 = vadd.f32 0.0, %v3007
  %v3009 = vpop.f32.mrf.mxu0
  %v3010 = vadd.f32 0.0, %v3009
  %3011 = vmatmul.bf16.gmra.mxu0 %v2075
  %v3012 = vpop.f32.mrf.mxu0
  %v3013 = vadd.f32 0.0, %v3012
  %v3014 = vpop.f32.mrf.mxu0
  %v3015 = vadd.f32 0.0, %v3014
  %3016 = vmatmul.bf16.gmra.mxu0 %v2078
  %v3017 = vpop.f32.mrf.mxu0
  %v3018 = vadd.f32 0.0, %v3017
  %v3019 = vpop.f32.mrf.mxu0
  %v3020 = vadd.f32 0.0, %v3019
  %3021 = vmatmul.bf16.gmra.mxu0 %v2081
  %v3022 = vpop.f32.mrf.mxu0
  %v3023 = vadd.f32 0.0, %v3022
  %v3024 = vpop.f32.mrf.mxu0
  %v3025 = vadd.f32 0.0, %v3024
  %3026 = vmatmul.bf16.gmra.mxu0 %v2084
  %v3027 = vpop.f32.mrf.mxu0
  %v3028 = vadd.f32 0.0, %v3027
  %v3029 = vpop.f32.mrf.mxu0
  %v3030 = vadd.f32 0.0, %v3029
  %3031 = vmatmul.bf16.gmra.mxu0 %v2087
  %v3032 = vpop.f32.mrf.mxu0
  %v3033 = vadd.f32 0.0, %v3032
  %v3034 = vpop.f32.mrf.mxu0
  %v3035 = vadd.f32 0.0, %v3034
  %3036 = vmatmul.bf16.gmra.mxu0 %v2090
  %v3037 = vpop.f32.mrf.mxu0
  %v3038 = vadd.f32 0.0, %v3037
  %v3039 = vpop.f32.mrf.mxu0
  %v3040 = vadd.f32 0.0, %v3039
  %3041 = vmatmul.bf16.gmra.mxu0 %v2093
  %v3042 = vpop.f32.mrf.mxu0
  %v3043 = vadd.f32 0.0, %v3042
  %v3044 = vpop.f32.mrf.mxu0
  %v3045 = vadd.f32 0.0, %v3044
  %3046 = vmatmul.bf16.gmra.mxu0 %v2096
  %v3047 = vpop.f32.mrf.mxu0
  %v3048 = vadd.f32 0.0, %v3047
  %v3049 = vpop.f32.mrf.mxu0
  %v3050 = vadd.f32 0.0, %v3049
  %3051 = vmatmul.bf16.gmra.mxu0 %v2099
  %v3052 = vpop.f32.mrf.mxu0
  %v3053 = vadd.f32 0.0, %v3052
  %v3054 = vpop.f32.mrf.mxu0
  %v3055 = vadd.f32 0.0, %v3054
  %3056 = vmatmul.bf16.gmra.mxu0 %v2102
  %v3057 = vpop.f32.mrf.mxu0
  %v3058 = vadd.f32 0.0, %v3057
  %v3059 = vpop.f32.mrf.mxu0
  %v3060 = vadd.f32 0.0, %v3059
  %3061 = vmatmul.bf16.gmra.mxu0 %v2970
  %v3062 = vpop.f32.mrf.mxu0
  %v3063 = vadd.f32 0.0, %v3062
  %v3064 = vpop.f32.mrf.mxu0
  %v3065 = vadd.f32 0.0, %v3064
  %3066 = vmatmul.bf16.gmra.mxu0 %v2108
  %v3067 = vpop.f32.mrf.mxu0
  %v3068 = vadd.f32 0.0, %v3067
  %v3069 = vpop.f32.mrf.mxu0
  %v3070 = vadd.f32 0.0, %v3069
  %3071 = vmatmul.bf16.gmra.mxu0 %v2111
  %v3072 = vpop.f32.mrf.mxu0
  %v3073 = vadd.f32 0.0, %v3072
  %v3074 = vpop.f32.mrf.mxu0
  %v3075 = vadd.f32 0.0, %v3074
  %3076 = vmatmul.bf16.gmra.mxu0 %v2114
  %v3077 = vpop.f32.mrf.mxu0
  %v3078 = vadd.f32 0.0, %v3077
  %v3079 = vpop.f32.mrf.mxu0
  %v3080 = vadd.f32 0.0, %v3079
  %3081 = vmatmul.bf16.gmra.mxu0 %v2117
  %v3082 = vpop.f32.mrf.mxu0
  %v3083 = vadd.f32 0.0, %v3082
  %v3084 = vpop.f32.mrf.mxu0
  %v3085 = vadd.f32 0.0, %v3084
  %3086 = vmatmul.bf16.gmra.mxu0 %v2120
  %v3087 = vpop.f32.mrf.mxu0
  %v3088 = vadd.f32 0.0, %v3087
  %v3089 = vpop.f32.mrf.mxu0
  %v3090 = vadd.f32 0.0, %v3089
  %3091 = vmatmul.bf16.gmra.mxu0 %v2123
  %v3092 = vpop.f32.mrf.mxu0
  %v3093 = vadd.f32 0.0, %v3092
  %v3094 = vpop.f32.mrf.mxu0
  %v3095 = vadd.f32 0.0, %v3094
  %3096 = vmatmul.bf16.gmra.mxu0 %v2126
  %v3097 = vpop.f32.mrf.mxu0
  %v3098 = vadd.f32 0.0, %v3097
  %v3099 = vpop.f32.mrf.mxu0
  %v3100 = vadd.f32 0.0, %v3099
  %3101 = vmatmul.bf16.gmra.mxu0 %v2129
  %v3102 = vpop.f32.mrf.mxu0
  %v3103 = vadd.f32 0.0, %v3102
  %v3104 = vpop.f32.mrf.mxu0
  %v3105 = vadd.f32 0.0, %v3104
  %3106 = vmatmul.bf16.gmra.mxu0 %v2132
  %v3107 = vpop.f32.mrf.mxu0
  %v3108 = vadd.f32 0.0, %v3107
  %v3109 = vpop.f32.mrf.mxu0
  %v3110 = vadd.f32 0.0, %v3109
  %3111 = vmatmul.bf16.gmra.mxu0 %v2135
  %v3112 = vpop.f32.mrf.mxu0
  %v3113 = vadd.f32 0.0, %v3112
  %v3114 = vpop.f32.mrf.mxu0
  %v3115 = vadd.f32 0.0, %v3114
  %3116 = vmatmul.bf16.gmra.mxu0 %v2138
  %v3117 = vpop.f32.mrf.mxu0
  %v3118 = vadd.f32 0.0, %v3117
  %v3119 = vpop.f32.mrf.mxu0
  %v3120 = vadd.f32 0.0, %v3119
  %3121 = vmatmul.bf16.gmra.mxu0 %v2141
  %v3122 = vpop.f32.mrf.mxu0
  %v3123 = vadd.f32 0.0, %v3122
  %v3124 = vpop.f32.mrf.mxu0
  %v3125 = vadd.f32 0.0, %v3124
  %3126 = vmatmul.bf16.gmra.mxu0 %v2144
  %v3127 = vpop.f32.mrf.mxu0
  %v3128 = vadd.f32 0.0, %v3127
  %v3129 = vpop.f32.mrf.mxu0
  %v3130 = vadd.f32 0.0, %v3129
  %3131 = vmatmul.bf16.gmra.mxu0 %v2147
  %v3132 = vpop.f32.mrf.mxu0
  %v3133 = vadd.f32 0.0, %v3132
  %v3134 = vpop.f32.mrf.mxu0
  %v3135 = vadd.f32 0.0, %v3134
  %3136 = vmatmul.bf16.gmra.mxu0 %v2150
  %v3137 = vpop.f32.mrf.mxu0
  %v3138 = vadd.f32 0.0, %v3137
  %v3139 = vpop.f32.mrf.mxu0
  %v3140 = vadd.f32 0.0, %v3139
  %3141 = vmatmul.bf16.gmra.mxu0 %v2973
  %v3142 = vpop.f32.mrf.mxu0
  %v3143 = vadd.f32 0.0, %v3142
  %v3144 = vpop.f32.mrf.mxu0
  %v3145 = vadd.f32 0.0, %v3144
  %3146 = vdwg.mxu0
  %v3147 = vadd.f32 %v2878, %v2988
  %v3148 = vadd.f32 %v2879, %v2990
  %v3149 = vadd.f32 %v2880, %v2993
  %v3150 = vadd.f32 %v2881, %v2995
  %v3151 = vadd.f32 %v2882, %v2998
  %v3152 = vadd.f32 %v2883, %v3000
  %v3153 = vadd.f32 %v2884, %v3003
  %v3154 = vadd.f32 %v2885, %v3005
  %v3155 = vadd.f32 %v2886, %v3008
  %v3156 = vadd.f32 %v2887, %v3010
  %v3157 = vadd.f32 %v2888, %v3013
  %v3158 = vadd.f32 %v2889, %v3015
  %v3159 = vadd.f32 %v2890, %v3018
  %v3160 = vadd.f32 %v2891, %v3020
  %v3161 = vadd.f32 %v2892, %v3023
  %v3162 = vadd.f32 %v2893, %v3025
  %v3163 = vadd.f32 %v2894, %v3028
  %v3164 = vadd.f32 %v2895, %v3030
  %v3165 = vadd.f32 %v2896, %v3033
  %v3166 = vadd.f32 %v2897, %v3035
  %v3167 = vadd.f32 %v2898, %v3038
  %v3168 = vadd.f32 %v2899, %v3040
  %v3169 = vadd.f32 %v2900, %v3043
  %v3170 = vadd.f32 %v2901, %v3045
  %v3171 = vadd.f32 %v2902, %v3048
  %v3172 = vadd.f32 %v2903, %v3050
  %v3173 = vadd.f32 %v2904, %v3053
  %v3174 = vadd.f32 %v2905, %v3055
  %v3175 = vadd.f32 %v2906, %v3058
  %v3176 = vadd.f32 %v2907, %v3060
  %v3177 = vadd.f32 %v2908, %v3063
  %v3178 = vadd.f32 %v2909, %v3065
  %v3179 = vadd.f32 %v2910, %v3068
  %v3180 = vadd.f32 %v2911, %v3070
  %v3181 = vadd.f32 %v2912, %v3073
  %v3182 = vadd.f32 %v2913, %v3075
  %v3183 = vadd.f32 %v2914, %v3078
  %v3184 = vadd.f32 %v2915, %v3080
  %v3185 = vadd.f32 %v2916, %v3083
  %v3186 = vadd.f32 %v2917, %v3085
  %v3187 = vadd.f32 %v2918, %v3088
  %v3188 = vadd.f32 %v2919, %v3090
  %v3189 = vadd.f32 %v2920, %v3093
  %v3190 = vadd.f32 %v2921, %v3095
  %v3191 = vadd.f32 %v2922, %v3098
  %v3192 = vadd.f32 %v2923, %v3100
  %v3193 = vadd.f32 %v2924, %v3103
  %v3194 = vadd.f32 %v2925, %v3105
  %v3195 = vadd.f32 %v2926, %v3108
  %v3196 = vadd.f32 %v2927, %v3110
  %v3197 = vadd.f32 %v2928, %v3113
  %v3198 = vadd.f32 %v2929, %v3115
  %v3199 = vadd.f32 %v2930, %v3118
  %v3200 = vadd.f32 %v2931, %v3120
  %v3201 = vadd.f32 %v2932, %v3123
  %v3202 = vadd.f32 %v2933, %v3125
  %v3203 = vadd.f32 %v2934, %v3128
  %v3204 = vadd.f32 %v2935, %v3130
  %v3205 = vadd.f32 %v2936, %v3133
  %v3206 = vadd.f32 %v2937, %v3135
  %v3207 = vadd.f32 %v2938, %v3138
  %v3208 = vadd.f32 %v2939, %v3140
  %v3209 = vadd.f32 %v2940, %v3143
  %v3210 = vadd.f32 %v2941, %v3145
  %v3211 = vld [vmem:[%s1 + $0xc] sm:$0x3]
  %v3216 = vunpack.c.l.b16 %v72
  %v3217 = vunpack.c.l.b16 %v73
  %v3218 = vunpack.c.l.b16 %v126
  %v3219 = vunpack.c.l.b16 %v127
  %v3220 = vpack.c.b16 %v3217, %v3216
  %v3221 = vpack.c.b16 %v3219, %v3218
  %v3223 = vsel %vm1002, %v3220, 0
  %v3226 = vsel %vm1002, %v3221, 0
  %v3229 = vsel %vm1099, %v3211, 0
  %3231 = vmatpush.bf16.msra.mxu0 0
  %3232 = vmatpush.bf16.msra.mxu0 0
  %3233 = vmatpush.bf16.msra.mxu0 0
  %3234 = vmatpush.bf16.msra.mxu0 0
  %3235 = vmatpush.bf16.msra.mxu0 0
  %3236 = vmatpush.bf16.msra.mxu0 0
  %3237 = vmatpush.bf16.msra.mxu0 0
  %3238 = vmatpush.bf16.msra.mxu0 %v3229
  %3239 = vmatmul.bf16.gmra.mxu0 %v1439
  %v3240 = vpop.f32.mrf.mxu0
  %v3241 = vadd.f32 0.0, %v3240
  %v3242 = vpop.f32.mrf.mxu0
  %v3243 = vadd.f32 0.0, %v3242
  %3244 = vmatmul.bf16.gmra.mxu0 %v1442
  %v3245 = vpop.f32.mrf.mxu0
  %v3246 = vadd.f32 0.0, %v3245
  %v3247 = vpop.f32.mrf.mxu0
  %v3248 = vadd.f32 0.0, %v3247
  %3249 = vmatmul.bf16.gmra.mxu0 %v1445
  %v3250 = vpop.f32.mrf.mxu0
  %v3251 = vadd.f32 0.0, %v3250
  %v3252 = vpop.f32.mrf.mxu0
  %v3253 = vadd.f32 0.0, %v3252
  %3254 = vmatmul.bf16.gmra.mxu0 %v1448
  %v3255 = vpop.f32.mrf.mxu0
  %v3256 = vadd.f32 0.0, %v3255
  %v3257 = vpop.f32.mrf.mxu0
  %v3258 = vadd.f32 0.0, %v3257
  %3259 = vmatmul.bf16.gmra.mxu0 %v1451
  %v3260 = vpop.f32.mrf.mxu0
  %v3261 = vadd.f32 0.0, %v3260
  %v3262 = vpop.f32.mrf.mxu0
  %v3263 = vadd.f32 0.0, %v3262
  %3264 = vmatmul.bf16.gmra.mxu0 %v1454
  %v3265 = vpop.f32.mrf.mxu0
  %v3266 = vadd.f32 0.0, %v3265
  %v3267 = vpop.f32.mrf.mxu0
  %v3268 = vadd.f32 0.0, %v3267
  %3269 = vmatmul.bf16.gmra.mxu0 %v1457
  %v3270 = vpop.f32.mrf.mxu0
  %v3271 = vadd.f32 0.0, %v3270
  %v3272 = vpop.f32.mrf.mxu0
  %v3273 = vadd.f32 0.0, %v3272
  %3274 = vmatmul.bf16.gmra.mxu0 %v1460
  %v3275 = vpop.f32.mrf.mxu0
  %v3276 = vadd.f32 0.0, %v3275
  %v3277 = vpop.f32.mrf.mxu0
  %v3278 = vadd.f32 0.0, %v3277
  %3279 = vmatmul.bf16.gmra.mxu0 %v1463
  %v3280 = vpop.f32.mrf.mxu0
  %v3281 = vadd.f32 0.0, %v3280
  %v3282 = vpop.f32.mrf.mxu0
  %v3283 = vadd.f32 0.0, %v3282
  %3284 = vmatmul.bf16.gmra.mxu0 %v1466
  %v3285 = vpop.f32.mrf.mxu0
  %v3286 = vadd.f32 0.0, %v3285
  %v3287 = vpop.f32.mrf.mxu0
  %v3288 = vadd.f32 0.0, %v3287
  %3289 = vmatmul.bf16.gmra.mxu0 %v1469
  %v3290 = vpop.f32.mrf.mxu0
  %v3291 = vadd.f32 0.0, %v3290
  %v3292 = vpop.f32.mrf.mxu0
  %v3293 = vadd.f32 0.0, %v3292
  %3294 = vmatmul.bf16.gmra.mxu0 %v1472
  %v3295 = vpop.f32.mrf.mxu0
  %v3296 = vadd.f32 0.0, %v3295
  %v3297 = vpop.f32.mrf.mxu0
  %v3298 = vadd.f32 0.0, %v3297
  %3299 = vmatmul.bf16.gmra.mxu0 %v1475
  %v3300 = vpop.f32.mrf.mxu0
  %v3301 = vadd.f32 0.0, %v3300
  %v3302 = vpop.f32.mrf.mxu0
  %v3303 = vadd.f32 0.0, %v3302
  %3304 = vmatmul.bf16.gmra.mxu0 %v1478
  %v3305 = vpop.f32.mrf.mxu0
  %v3306 = vadd.f32 0.0, %v3305
  %v3307 = vpop.f32.mrf.mxu0
  %v3308 = vadd.f32 0.0, %v3307
  %3309 = vmatmul.bf16.gmra.mxu0 %v2404
  %v3310 = vpop.f32.mrf.mxu0
  %v3311 = vadd.f32 0.0, %v3310
  %v3312 = vpop.f32.mrf.mxu0
  %v3313 = vadd.f32 0.0, %v3312
  %3314 = vmatmul.bf16.gmra.mxu0 %v3223
  %v3315 = vpop.f32.mrf.mxu0
  %v3316 = vadd.f32 0.0, %v3315
  %v3317 = vpop.f32.mrf.mxu0
  %v3318 = vadd.f32 0.0, %v3317
  %3319 = vmatmul.bf16.gmra.mxu0 %v1487
  %v3320 = vpop.f32.mrf.mxu0
  %v3321 = vadd.f32 0.0, %v3320
  %v3322 = vpop.f32.mrf.mxu0
  %v3323 = vadd.f32 0.0, %v3322
  %3324 = vmatmul.bf16.gmra.mxu0 %v1490
  %v3325 = vpop.f32.mrf.mxu0
  %v3326 = vadd.f32 0.0, %v3325
  %v3327 = vpop.f32.mrf.mxu0
  %v3328 = vadd.f32 0.0, %v3327
  %3329 = vmatmul.bf16.gmra.mxu0 %v1493
  %v3330 = vpop.f32.mrf.mxu0
  %v3331 = vadd.f32 0.0, %v3330
  %v3332 = vpop.f32.mrf.mxu0
  %v3333 = vadd.f32 0.0, %v3332
  %3334 = vmatmul.bf16.gmra.mxu0 %v1496
  %v3335 = vpop.f32.mrf.mxu0
  %v3336 = vadd.f32 0.0, %v3335
  %v3337 = vpop.f32.mrf.mxu0
  %v3338 = vadd.f32 0.0, %v3337
  %3339 = vmatmul.bf16.gmra.mxu0 %v1499
  %v3340 = vpop.f32.mrf.mxu0
  %v3341 = vadd.f32 0.0, %v3340
  %v3342 = vpop.f32.mrf.mxu0
  %v3343 = vadd.f32 0.0, %v3342
  %3344 = vmatmul.bf16.gmra.mxu0 %v1502
  %v3345 = vpop.f32.mrf.mxu0
  %v3346 = vadd.f32 0.0, %v3345
  %v3347 = vpop.f32.mrf.mxu0
  %v3348 = vadd.f32 0.0, %v3347
  %3349 = vmatmul.bf16.gmra.mxu0 %v1505
  %v3350 = vpop.f32.mrf.mxu0
  %v3351 = vadd.f32 0.0, %v3350
  %v3352 = vpop.f32.mrf.mxu0
  %v3353 = vadd.f32 0.0, %v3352
  %3354 = vmatmul.bf16.gmra.mxu0 %v1508
  %v3355 = vpop.f32.mrf.mxu0
  %v3356 = vadd.f32 0.0, %v3355
  %v3357 = vpop.f32.mrf.mxu0
  %v3358 = vadd.f32 0.0, %v3357
  %3359 = vmatmul.bf16.gmra.mxu0 %v1511
  %v3360 = vpop.f32.mrf.mxu0
  %v3361 = vadd.f32 0.0, %v3360
  %v3362 = vpop.f32.mrf.mxu0
  %v3363 = vadd.f32 0.0, %v3362
  %3364 = vmatmul.bf16.gmra.mxu0 %v1514
  %v3365 = vpop.f32.mrf.mxu0
  %v3366 = vadd.f32 0.0, %v3365
  %v3367 = vpop.f32.mrf.mxu0
  %v3368 = vadd.f32 0.0, %v3367
  %3369 = vmatmul.bf16.gmra.mxu0 %v1517
  %v3370 = vpop.f32.mrf.mxu0
  %v3371 = vadd.f32 0.0, %v3370
  %v3372 = vpop.f32.mrf.mxu0
  %v3373 = vadd.f32 0.0, %v3372
  %3374 = vmatmul.bf16.gmra.mxu0 %v1520
  %v3375 = vpop.f32.mrf.mxu0
  %v3376 = vadd.f32 0.0, %v3375
  %v3377 = vpop.f32.mrf.mxu0
  %v3378 = vadd.f32 0.0, %v3377
  %3379 = vmatmul.bf16.gmra.mxu0 %v1523
  %v3380 = vpop.f32.mrf.mxu0
  %v3381 = vadd.f32 0.0, %v3380
  %v3382 = vpop.f32.mrf.mxu0
  %v3383 = vadd.f32 0.0, %v3382
  %3384 = vmatmul.bf16.gmra.mxu0 %v1526
  %v3385 = vpop.f32.mrf.mxu0
  %v3386 = vadd.f32 0.0, %v3385
  %v3387 = vpop.f32.mrf.mxu0
  %v3388 = vadd.f32 0.0, %v3387
  %3389 = vmatmul.bf16.gmra.mxu0 %v2407
  %v3390 = vpop.f32.mrf.mxu0
  %v3391 = vadd.f32 0.0, %v3390
  %v3392 = vpop.f32.mrf.mxu0
  %v3393 = vadd.f32 0.0, %v3392
  %3394 = vmatmul.bf16.gmra.mxu0 %v3226
  %v3395 = vpop.f32.mrf.mxu0
  %v3396 = vadd.f32 0.0, %v3395
  %v3397 = vpop.f32.mrf.mxu0
  %v3398 = vadd.f32 0.0, %v3397
  %3399 = vdwg.mxu0
  %v3400 = vadd.f32 %v3147, %v3241
  %v3401 = vadd.f32 %v3148, %v3243
  %v3402 = vadd.f32 %v3149, %v3246
  %v3403 = vadd.f32 %v3150, %v3248
  %v3404 = vadd.f32 %v3151, %v3251
  %v3405 = vadd.f32 %v3152, %v3253
  %v3406 = vadd.f32 %v3153, %v3256
  %v3407 = vadd.f32 %v3154, %v3258
  %v3408 = vadd.f32 %v3155, %v3261
  %v3409 = vadd.f32 %v3156, %v3263
  %v3410 = vadd.f32 %v3157, %v3266
  %v3411 = vadd.f32 %v3158, %v3268
  %v3412 = vadd.f32 %v3159, %v3271
  %v3413 = vadd.f32 %v3160, %v3273
  %v3414 = vadd.f32 %v3161, %v3276
  %v3415 = vadd.f32 %v3162, %v3278
  %v3416 = vadd.f32 %v3163, %v3281
  %v3417 = vadd.f32 %v3164, %v3283
  %v3418 = vadd.f32 %v3165, %v3286
  %v3419 = vadd.f32 %v3166, %v3288
  %v3420 = vadd.f32 %v3167, %v3291
  %v3421 = vadd.f32 %v3168, %v3293
  %v3422 = vadd.f32 %v3169, %v3296
  %v3423 = vadd.f32 %v3170, %v3298
  %v3424 = vadd.f32 %v3171, %v3301
  %v3425 = vadd.f32 %v3172, %v3303
  %v3426 = vadd.f32 %v3173, %v3306
  %v3427 = vadd.f32 %v3174, %v3308
  %v3428 = vadd.f32 %v3175, %v3311
  %v3429 = vadd.f32 %v3176, %v3313
  %v3430 = vadd.f32 %v3177, %v3316
  %v3431 = vadd.f32 %v3178, %v3318
  %v3432 = vadd.f32 %v3179, %v3321
  %v3433 = vadd.f32 %v3180, %v3323
  %v3434 = vadd.f32 %v3181, %v3326
  %v3435 = vadd.f32 %v3182, %v3328
  %v3436 = vadd.f32 %v3183, %v3331
  %v3437 = vadd.f32 %v3184, %v3333
  %v3438 = vadd.f32 %v3185, %v3336
  %v3439 = vadd.f32 %v3186, %v3338
  %v3440 = vadd.f32 %v3187, %v3341
  %v3441 = vadd.f32 %v3188, %v3343
  %v3442 = vadd.f32 %v3189, %v3346
  %v3443 = vadd.f32 %v3190, %v3348
  %v3444 = vadd.f32 %v3191, %v3351
  %v3445 = vadd.f32 %v3192, %v3353
  %v3446 = vadd.f32 %v3193, %v3356
  %v3447 = vadd.f32 %v3194, %v3358
  %v3448 = vadd.f32 %v3195, %v3361
  %v3449 = vadd.f32 %v3196, %v3363
  %v3450 = vadd.f32 %v3197, %v3366
  %v3451 = vadd.f32 %v3198, %v3368
  %v3452 = vadd.f32 %v3199, %v3371
  %v3453 = vadd.f32 %v3200, %v3373
  %v3454 = vadd.f32 %v3201, %v3376
  %v3455 = vadd.f32 %v3202, %v3378
  %v3456 = vadd.f32 %v3203, %v3381
  %v3457 = vadd.f32 %v3204, %v3383
  %v3458 = vadd.f32 %v3205, %v3386
  %v3459 = vadd.f32 %v3206, %v3388
  %v3460 = vadd.f32 %v3207, %v3391
  %v3461 = vadd.f32 %v3208, %v3393
  %v3462 = vadd.f32 %v3209, %v3396
  %v3463 = vadd.f32 %v3210, %v3398
  %v3465 = vshrl.u32 %v72, 16
  %v3467 = vrot.slane %v3465, 4
  %v3468 = vshll.u32 %v72, 16
  %v3470 = vrot.slane %v3468, 5
  %v3471 = vor.u32 %v3467, %v3470
  %v3472 = vrot.slane %v3471, 4
  %v3474 = vshll.u32 %v73, 16
  %v3476 = vrot.slane %v3474, 5
  %v3477 = vsel %vm132, %v3472, %v3476
  %v3478 = vshrl.u32 %v73, 16
  %v3480 = vrot.slane %v3478, 4
  %v3481 = vor.u32 %v3480, %v3476
  %v3482 = vrot.slane %v3481, 4
  %v3484 = vshll.u32 %v74, 16
  %v3486 = vrot.slane %v3484, 5
  %v3487 = vsel %vm132, %v3482, %v3486
  %v3489 = vshrl.u32 %v126, 16
  %v3491 = vrot.slane %v3489, 4
  %v3492 = vshll.u32 %v126, 16
  %v3494 = vrot.slane %v3492, 5
  %v3495 = vor.u32 %v3491, %v3494
  %v3496 = vrot.slane %v3495, 4
  %v3498 = vshll.u32 %v127, 16
  %v3500 = vrot.slane %v3498, 5
  %v3501 = vsel %vm132, %v3496, %v3500
  %v3502 = vshrl.u32 %v127, 16
  %v3504 = vrot.slane %v3502, 4
  %v3505 = vor.u32 %v3504, %v3500
  %v3506 = vrot.slane %v3505, 4
  %v3508 = vshll.u32 %v128, 16
  %v3510 = vrot.slane %v3508, 5
  %v3511 = vsel %vm132, %v3506, %v3510
  %v3512 = vld [vmem:[%s1 + $0xc] sm:$0xc]
  %v3513 = vunpack.c.l.b16 %v3477
  %v3514 = vunpack.c.l.b16 %v3487
  %v3515 = vunpack.c.l.b16 %v3501
  %v3516 = vunpack.c.l.b16 %v3511
  %v3517 = vpack.c.b16 %v3514, %v3513
  %v3518 = vpack.c.b16 %v3516, %v3515
  %v3520 = vunpack.c.l.b16 %v3512
  %v3521 = vpack.c.b16 %v3520, %v3520
  %v3522 = vrot.slane %v3521, 2
  %v3524 = vsel %vm1002, %v3517, 0
  %v3527 = vsel %vm1002, %v3518, 0
  %v3530 = vsel %vm1099, %v3522, 0
  %3532 = vmatpush.bf16.msra.mxu0 0
  %3533 = vmatpush.bf16.msra.mxu0 0
  %3534 = vmatpush.bf16.msra.mxu0 0
  %3535 = vmatpush.bf16.msra.mxu0 0
  %3536 = vmatpush.bf16.msra.mxu0 0
  %3537 = vmatpush.bf16.msra.mxu0 0
  %3538 = vmatpush.bf16.msra.mxu0 0
  %3539 = vmatpush.bf16.msra.mxu0 %v3530
  %3540 = vmatmul.bf16.gmra.mxu0 %v1010
  %v3541 = vpop.f32.mrf.mxu0
  %v3542 = vadd.f32 0.0, %v3541
  %v3543 = vpop.f32.mrf.mxu0
  %v3544 = vadd.f32 0.0, %v3543
  %3545 = vmatmul.bf16.gmra.mxu0 %v1013
  %v3546 = vpop.f32.mrf.mxu0
  %v3547 = vadd.f32 0.0, %v3546
  %v3548 = vpop.f32.mrf.mxu0
  %v3549 = vadd.f32 0.0, %v3548
  %3550 = vmatmul.bf16.gmra.mxu0 %v1016
  %v3551 = vpop.f32.mrf.mxu0
  %v3552 = vadd.f32 0.0, %v3551
  %v3553 = vpop.f32.mrf.mxu0
  %v3554 = vadd.f32 0.0, %v3553
  %3555 = vmatmul.bf16.gmra.mxu0 %v1019
  %v3556 = vpop.f32.mrf.mxu0
  %v3557 = vadd.f32 0.0, %v3556
  %v3558 = vpop.f32.mrf.mxu0
  %v3559 = vadd.f32 0.0, %v3558
  %3560 = vmatmul.bf16.gmra.mxu0 %v1022
  %v3561 = vpop.f32.mrf.mxu0
  %v3562 = vadd.f32 0.0, %v3561
  %v3563 = vpop.f32.mrf.mxu0
  %v3564 = vadd.f32 0.0, %v3563
  %3565 = vmatmul.bf16.gmra.mxu0 %v1025
  %v3566 = vpop.f32.mrf.mxu0
  %v3567 = vadd.f32 0.0, %v3566
  %v3568 = vpop.f32.mrf.mxu0
  %v3569 = vadd.f32 0.0, %v3568
  %3570 = vmatmul.bf16.gmra.mxu0 %v1028
  %v3571 = vpop.f32.mrf.mxu0
  %v3572 = vadd.f32 0.0, %v3571
  %v3573 = vpop.f32.mrf.mxu0
  %v3574 = vadd.f32 0.0, %v3573
  %3575 = vmatmul.bf16.gmra.mxu0 %v1031
  %v3576 = vpop.f32.mrf.mxu0
  %v3577 = vadd.f32 0.0, %v3576
  %v3578 = vpop.f32.mrf.mxu0
  %v3579 = vadd.f32 0.0, %v3578
  %3580 = vmatmul.bf16.gmra.mxu0 %v1034
  %v3581 = vpop.f32.mrf.mxu0
  %v3582 = vadd.f32 0.0, %v3581
  %v3583 = vpop.f32.mrf.mxu0
  %v3584 = vadd.f32 0.0, %v3583
  %3585 = vmatmul.bf16.gmra.mxu0 %v1037
  %v3586 = vpop.f32.mrf.mxu0
  %v3587 = vadd.f32 0.0, %v3586
  %v3588 = vpop.f32.mrf.mxu0
  %v3589 = vadd.f32 0.0, %v3588
  %3590 = vmatmul.bf16.gmra.mxu0 %v1040
  %v3591 = vpop.f32.mrf.mxu0
  %v3592 = vadd.f32 0.0, %v3591
  %v3593 = vpop.f32.mrf.mxu0
  %v3594 = vadd.f32 0.0, %v3593
  %3595 = vmatmul.bf16.gmra.mxu0 %v1043
  %v3596 = vpop.f32.mrf.mxu0
  %v3597 = vadd.f32 0.0, %v3596
  %v3598 = vpop.f32.mrf.mxu0
  %v3599 = vadd.f32 0.0, %v3598
  %3600 = vmatmul.bf16.gmra.mxu0 %v1046
  %v3601 = vpop.f32.mrf.mxu0
  %v3602 = vadd.f32 0.0, %v3601
  %v3603 = vpop.f32.mrf.mxu0
  %v3604 = vadd.f32 0.0, %v3603
  %3605 = vmatmul.bf16.gmra.mxu0 %v1049
  %v3606 = vpop.f32.mrf.mxu0
  %v3607 = vadd.f32 0.0, %v3606
  %v3608 = vpop.f32.mrf.mxu0
  %v3609 = vadd.f32 0.0, %v3608
  %3610 = vmatmul.bf16.gmra.mxu0 %v2701
  %v3611 = vpop.f32.mrf.mxu0
  %v3612 = vadd.f32 0.0, %v3611
  %v3613 = vpop.f32.mrf.mxu0
  %v3614 = vadd.f32 0.0, %v3613
  %3615 = vmatmul.bf16.gmra.mxu0 %v3524
  %v3616 = vpop.f32.mrf.mxu0
  %v3617 = vadd.f32 0.0, %v3616
  %v3618 = vpop.f32.mrf.mxu0
  %v3619 = vadd.f32 0.0, %v3618
  %3620 = vmatmul.bf16.gmra.mxu0 %v1058
  %v3621 = vpop.f32.mrf.mxu0
  %v3622 = vadd.f32 0.0, %v3621
  %v3623 = vpop.f32.mrf.mxu0
  %v3624 = vadd.f32 0.0, %v3623
  %3625 = vmatmul.bf16.gmra.mxu0 %v1061
  %v3626 = vpop.f32.mrf.mxu0
  %v3627 = vadd.f32 0.0, %v3626
  %v3628 = vpop.f32.mrf.mxu0
  %v3629 = vadd.f32 0.0, %v3628
  %3630 = vmatmul.bf16.gmra.mxu0 %v1064
  %v3631 = vpop.f32.mrf.mxu0
  %v3632 = vadd.f32 0.0, %v3631
  %v3633 = vpop.f32.mrf.mxu0
  %v3634 = vadd.f32 0.0, %v3633
  %3635 = vmatmul.bf16.gmra.mxu0 %v1067
  %v3636 = vpop.f32.mrf.mxu0
  %v3637 = vadd.f32 0.0, %v3636
  %v3638 = vpop.f32.mrf.mxu0
  %v3639 = vadd.f32 0.0, %v3638
  %3640 = vmatmul.bf16.gmra.mxu0 %v1070
  %v3641 = vpop.f32.mrf.mxu0
  %v3642 = vadd.f32 0.0, %v3641
  %v3643 = vpop.f32.mrf.mxu0
  %v3644 = vadd.f32 0.0, %v3643
  %3645 = vmatmul.bf16.gmra.mxu0 %v1073
  %v3646 = vpop.f32.mrf.mxu0
  %v3647 = vadd.f32 0.0, %v3646
  %v3648 = vpop.f32.mrf.mxu0
  %v3649 = vadd.f32 0.0, %v3648
  %3650 = vmatmul.bf16.gmra.mxu0 %v1076
  %v3651 = vpop.f32.mrf.mxu0
  %v3652 = vadd.f32 0.0, %v3651
  %v3653 = vpop.f32.mrf.mxu0
  %v3654 = vadd.f32 0.0, %v3653
  %3655 = vmatmul.bf16.gmra.mxu0 %v1079
  %v3656 = vpop.f32.mrf.mxu0
  %v3657 = vadd.f32 0.0, %v3656
  %v3658 = vpop.f32.mrf.mxu0
  %v3659 = vadd.f32 0.0, %v3658
  %3660 = vmatmul.bf16.gmra.mxu0 %v1082
  %v3661 = vpop.f32.mrf.mxu0
  %v3662 = vadd.f32 0.0, %v3661
  %v3663 = vpop.f32.mrf.mxu0
  %v3664 = vadd.f32 0.0, %v3663
  %3665 = vmatmul.bf16.gmra.mxu0 %v1085
  %v3666 = vpop.f32.mrf.mxu0
  %v3667 = vadd.f32 0.0, %v3666
  %v3668 = vpop.f32.mrf.mxu0
  %v3669 = vadd.f32 0.0, %v3668
  %3670 = vmatmul.bf16.gmra.mxu0 %v1088
  %v3671 = vpop.f32.mrf.mxu0
  %v3672 = vadd.f32 0.0, %v3671
  %v3673 = vpop.f32.mrf.mxu0
  %v3674 = vadd.f32 0.0, %v3673
  %3675 = vmatmul.bf16.gmra.mxu0 %v1091
  %v3676 = vpop.f32.mrf.mxu0
  %v3677 = vadd.f32 0.0, %v3676
  %v3678 = vpop.f32.mrf.mxu0
  %v3679 = vadd.f32 0.0, %v3678
  %3680 = vmatmul.bf16.gmra.mxu0 %v1094
  %v3681 = vpop.f32.mrf.mxu0
  %v3682 = vadd.f32 0.0, %v3681
  %v3683 = vpop.f32.mrf.mxu0
  %v3684 = vadd.f32 0.0, %v3683
  %3685 = vmatmul.bf16.gmra.mxu0 %v1097
  %v3686 = vpop.f32.mrf.mxu0
  %v3687 = vadd.f32 0.0, %v3686
  %v3688 = vpop.f32.mrf.mxu0
  %v3689 = vadd.f32 0.0, %v3688
  %3690 = vmatmul.bf16.gmra.mxu0 %v2704
  %v3691 = vpop.f32.mrf.mxu0
  %v3692 = vadd.f32 0.0, %v3691
  %v3693 = vpop.f32.mrf.mxu0
  %v3694 = vadd.f32 0.0, %v3693
  %3695 = vmatmul.bf16.gmra.mxu0 %v3527
  %v3696 = vpop.f32.mrf.mxu0
  %v3697 = vadd.f32 0.0, %v3696
  %v3698 = vpop.f32.mrf.mxu0
  %v3699 = vadd.f32 0.0, %v3698
  %3700 = vdwg.mxu0
  %v3701 = vadd.f32 %v3400, %v3542
  %v3702 = vadd.f32 %v3401, %v3544
  %v3703 = vadd.f32 %v3402, %v3547
  %v3704 = vadd.f32 %v3403, %v3549
  %v3705 = vadd.f32 %v3404, %v3552
  %v3706 = vadd.f32 %v3405, %v3554
  %v3707 = vadd.f32 %v3406, %v3557
  %v3708 = vadd.f32 %v3407, %v3559
  %v3709 = vadd.f32 %v3408, %v3562
  %v3710 = vadd.f32 %v3409, %v3564
  %v3711 = vadd.f32 %v3410, %v3567
  %v3712 = vadd.f32 %v3411, %v3569
  %v3713 = vadd.f32 %v3412, %v3572
  %v3714 = vadd.f32 %v3413, %v3574
  %v3715 = vadd.f32 %v3414, %v3577
  %v3716 = vadd.f32 %v3415, %v3579
  %v3717 = vadd.f32 %v3416, %v3582
  %v3718 = vadd.f32 %v3417, %v3584
  %v3719 = vadd.f32 %v3418, %v3587
  %v3720 = vadd.f32 %v3419, %v3589
  %v3721 = vadd.f32 %v3420, %v3592
  %v3722 = vadd.f32 %v3421, %v3594
  %v3723 = vadd.f32 %v3422, %v3597
  %v3724 = vadd.f32 %v3423, %v3599
  %v3725 = vadd.f32 %v3424, %v3602
  %v3726 = vadd.f32 %v3425, %v3604
  %v3727 = vadd.f32 %v3426, %v3607
  %v3728 = vadd.f32 %v3427, %v3609
  %v3729 = vadd.f32 %v3428, %v3612
  %v3730 = vadd.f32 %v3429, %v3614
  %v3731 = vadd.f32 %v3430, %v3617
  %v3732 = vadd.f32 %v3431, %v3619
  %v3733 = vadd.f32 %v3432, %v3622
  %v3734 = vadd.f32 %v3433, %v3624
  %v3735 = vadd.f32 %v3434, %v3627
  %v3736 = vadd.f32 %v3435, %v3629
  %v3737 = vadd.f32 %v3436, %v3632
  %v3738 = vadd.f32 %v3437, %v3634
  %v3739 = vadd.f32 %v3438, %v3637
  %v3740 = vadd.f32 %v3439, %v3639
  %v3741 = vadd.f32 %v3440, %v3642
  %v3742 = vadd.f32 %v3441, %v3644
  %v3743 = vadd.f32 %v3442, %v3647
  %v3744 = vadd.f32 %v3443, %v3649
  %v3745 = vadd.f32 %v3444, %v3652
  %v3746 = vadd.f32 %v3445, %v3654
  %v3747 = vadd.f32 %v3446, %v3657
  %v3748 = vadd.f32 %v3447, %v3659
  %v3749 = vadd.f32 %v3448, %v3662
  %v3750 = vadd.f32 %v3449, %v3664
  %v3751 = vadd.f32 %v3450, %v3667
  %v3752 = vadd.f32 %v3451, %v3669
  %v3753 = vadd.f32 %v3452, %v3672
  %v3754 = vadd.f32 %v3453, %v3674
  %v3755 = vadd.f32 %v3454, %v3677
  %v3756 = vadd.f32 %v3455, %v3679
  %v3757 = vadd.f32 %v3456, %v3682
  %v3758 = vadd.f32 %v3457, %v3684
  %v3759 = vadd.f32 %v3458, %v3687
  %v3760 = vadd.f32 %v3459, %v3689
  %v3761 = vadd.f32 %v3460, %v3692
  %v3762 = vadd.f32 %v3461, %v3694
  %v3763 = vadd.f32 %v3462, %v3697
  %v3764 = vadd.f32 %v3463, %v3699
  %v3767 = vrot.slane %v72, 5
  %v3768 = vrot.slane %v3767, 4
  %v3769 = vrot.slane %v73, 5
  %v3770 = vsel %vm1734, %v3768, %v3769
  %v3771 = vrot.slane %v3769, 4
  %v3772 = vrot.slane %v74, 5
  %v3773 = vsel %vm1734, %v3771, %v3772
  %v3774 = vrot.slane %v126, 5
  %v3775 = vrot.slane %v3774, 4
  %v3776 = vrot.slane %v127, 5
  %v3777 = vsel %vm1734, %v3775, %v3776
  %v3778 = vrot.slane %v3776, 4
  %v3779 = vrot.slane %v128, 5
  %v3780 = vsel %vm1734, %v3778, %v3779
  %v3781 = vld [vmem:[%s1 + $0x10] sm:$0x3]
  %v3782 = vunpack.c.l.b16 %v3770
  %v3783 = vunpack.c.l.b16 %v3773
  %v3784 = vunpack.c.l.b16 %v3777
  %v3785 = vunpack.c.l.b16 %v3780
  %v3786 = vpack.c.b16 %v3783, %v3782
  %v3787 = vpack.c.b16 %v3785, %v3784
  %v3789 = vsel %vm1002, %v3786, 0
  %v3792 = vsel %vm1002, %v3787, 0
  %v3795 = vsel %vm1099, %v3781, 0
  %3797 = vmatpush.bf16.msra.mxu0 0
  %3798 = vmatpush.bf16.msra.mxu0 0
  %3799 = vmatpush.bf16.msra.mxu0 0
  %3800 = vmatpush.bf16.msra.mxu0 0
  %3801 = vmatpush.bf16.msra.mxu0 0
  %3802 = vmatpush.bf16.msra.mxu0 0
  %3803 = vmatpush.bf16.msra.mxu0 0
  %3804 = vmatpush.bf16.msra.mxu0 %v3795
  %3805 = vmatmul.bf16.gmra.mxu0 %v2063
  %v3806 = vpop.f32.mrf.mxu0
  %v3807 = vadd.f32 0.0, %v3806
  %v3808 = vpop.f32.mrf.mxu0
  %v3809 = vadd.f32 0.0, %v3808
  %3810 = vmatmul.bf16.gmra.mxu0 %v2066
  %v3811 = vpop.f32.mrf.mxu0
  %v3812 = vadd.f32 0.0, %v3811
  %v3813 = vpop.f32.mrf.mxu0
  %v3814 = vadd.f32 0.0, %v3813
  %3815 = vmatmul.bf16.gmra.mxu0 %v2069
  %v3816 = vpop.f32.mrf.mxu0
  %v3817 = vadd.f32 0.0, %v3816
  %v3818 = vpop.f32.mrf.mxu0
  %v3819 = vadd.f32 0.0, %v3818
  %3820 = vmatmul.bf16.gmra.mxu0 %v2072
  %v3821 = vpop.f32.mrf.mxu0
  %v3822 = vadd.f32 0.0, %v3821
  %v3823 = vpop.f32.mrf.mxu0
  %v3824 = vadd.f32 0.0, %v3823
  %3825 = vmatmul.bf16.gmra.mxu0 %v2075
  %v3826 = vpop.f32.mrf.mxu0
  %v3827 = vadd.f32 0.0, %v3826
  %v3828 = vpop.f32.mrf.mxu0
  %v3829 = vadd.f32 0.0, %v3828
  %3830 = vmatmul.bf16.gmra.mxu0 %v2078
  %v3831 = vpop.f32.mrf.mxu0
  %v3832 = vadd.f32 0.0, %v3831
  %v3833 = vpop.f32.mrf.mxu0
  %v3834 = vadd.f32 0.0, %v3833
  %3835 = vmatmul.bf16.gmra.mxu0 %v2081
  %v3836 = vpop.f32.mrf.mxu0
  %v3837 = vadd.f32 0.0, %v3836
  %v3838 = vpop.f32.mrf.mxu0
  %v3839 = vadd.f32 0.0, %v3838
  %3840 = vmatmul.bf16.gmra.mxu0 %v2084
  %v3841 = vpop.f32.mrf.mxu0
  %v3842 = vadd.f32 0.0, %v3841
  %v3843 = vpop.f32.mrf.mxu0
  %v3844 = vadd.f32 0.0, %v3843
  %3845 = vmatmul.bf16.gmra.mxu0 %v2087
  %v3846 = vpop.f32.mrf.mxu0
  %v3847 = vadd.f32 0.0, %v3846
  %v3848 = vpop.f32.mrf.mxu0
  %v3849 = vadd.f32 0.0, %v3848
  %3850 = vmatmul.bf16.gmra.mxu0 %v2090
  %v3851 = vpop.f32.mrf.mxu0
  %v3852 = vadd.f32 0.0, %v3851
  %v3853 = vpop.f32.mrf.mxu0
  %v3854 = vadd.f32 0.0, %v3853
  %3855 = vmatmul.bf16.gmra.mxu0 %v2093
  %v3856 = vpop.f32.mrf.mxu0
  %v3857 = vadd.f32 0.0, %v3856
  %v3858 = vpop.f32.mrf.mxu0
  %v3859 = vadd.f32 0.0, %v3858
  %3860 = vmatmul.bf16.gmra.mxu0 %v2096
  %v3861 = vpop.f32.mrf.mxu0
  %v3862 = vadd.f32 0.0, %v3861
  %v3863 = vpop.f32.mrf.mxu0
  %v3864 = vadd.f32 0.0, %v3863
  %3865 = vmatmul.bf16.gmra.mxu0 %v2099
  %v3866 = vpop.f32.mrf.mxu0
  %v3867 = vadd.f32 0.0, %v3866
  %v3868 = vpop.f32.mrf.mxu0
  %v3869 = vadd.f32 0.0, %v3868
  %3870 = vmatmul.bf16.gmra.mxu0 %v2102
  %v3871 = vpop.f32.mrf.mxu0
  %v3872 = vadd.f32 0.0, %v3871
  %v3873 = vpop.f32.mrf.mxu0
  %v3874 = vadd.f32 0.0, %v3873
  %3875 = vmatmul.bf16.gmra.mxu0 %v2970
  %v3876 = vpop.f32.mrf.mxu0
  %v3877 = vadd.f32 0.0, %v3876
  %v3878 = vpop.f32.mrf.mxu0
  %v3879 = vadd.f32 0.0, %v3878
  %3880 = vmatmul.bf16.gmra.mxu0 %v3789
  %v3881 = vpop.f32.mrf.mxu0
  %v3882 = vadd.f32 0.0, %v3881
  %v3883 = vpop.f32.mrf.mxu0
  %v3884 = vadd.f32 0.0, %v3883
  %3885 = vmatmul.bf16.gmra.mxu0 %v2111
  %v3886 = vpop.f32.mrf.mxu0
  %v3887 = vadd.f32 0.0, %v3886
  %v3888 = vpop.f32.mrf.mxu0
  %v3889 = vadd.f32 0.0, %v3888
  %3890 = vmatmul.bf16.gmra.mxu0 %v2114
  %v3891 = vpop.f32.mrf.mxu0
  %v3892 = vadd.f32 0.0, %v3891
  %v3893 = vpop.f32.mrf.mxu0
  %v3894 = vadd.f32 0.0, %v3893
  %3895 = vmatmul.bf16.gmra.mxu0 %v2117
  %v3896 = vpop.f32.mrf.mxu0
  %v3897 = vadd.f32 0.0, %v3896
  %v3898 = vpop.f32.mrf.mxu0
  %v3899 = vadd.f32 0.0, %v3898
  %3900 = vmatmul.bf16.gmra.mxu0 %v2120
  %v3901 = vpop.f32.mrf.mxu0
  %v3902 = vadd.f32 0.0, %v3901
  %v3903 = vpop.f32.mrf.mxu0
  %v3904 = vadd.f32 0.0, %v3903
  %3905 = vmatmul.bf16.gmra.mxu0 %v2123
  %v3906 = vpop.f32.mrf.mxu0
  %v3907 = vadd.f32 0.0, %v3906
  %v3908 = vpop.f32.mrf.mxu0
  %v3909 = vadd.f32 0.0, %v3908
  %3910 = vmatmul.bf16.gmra.mxu0 %v2126
  %v3911 = vpop.f32.mrf.mxu0
  %v3912 = vadd.f32 0.0, %v3911
  %v3913 = vpop.f32.mrf.mxu0
  %v3914 = vadd.f32 0.0, %v3913
  %3915 = vmatmul.bf16.gmra.mxu0 %v2129
  %v3916 = vpop.f32.mrf.mxu0
  %v3917 = vadd.f32 0.0, %v3916
  %v3918 = vpop.f32.mrf.mxu0
  %v3919 = vadd.f32 0.0, %v3918
  %3920 = vmatmul.bf16.gmra.mxu0 %v2132
  %v3921 = vpop.f32.mrf.mxu0
  %v3922 = vadd.f32 0.0, %v3921
  %v3923 = vpop.f32.mrf.mxu0
  %v3924 = vadd.f32 0.0, %v3923
  %3925 = vmatmul.bf16.gmra.mxu0 %v2135
  %v3926 = vpop.f32.mrf.mxu0
  %v3927 = vadd.f32 0.0, %v3926
  %v3928 = vpop.f32.mrf.mxu0
  %v3929 = vadd.f32 0.0, %v3928
  %3930 = vmatmul.bf16.gmra.mxu0 %v2138
  %v3931 = vpop.f32.mrf.mxu0
  %v3932 = vadd.f32 0.0, %v3931
  %v3933 = vpop.f32.mrf.mxu0
  %v3934 = vadd.f32 0.0, %v3933
  %3935 = vmatmul.bf16.gmra.mxu0 %v2141
  %v3936 = vpop.f32.mrf.mxu0
  %v3937 = vadd.f32 0.0, %v3936
  %v3938 = vpop.f32.mrf.mxu0
  %v3939 = vadd.f32 0.0, %v3938
  %3940 = vmatmul.bf16.gmra.mxu0 %v2144
  %v3941 = vpop.f32.mrf.mxu0
  %v3942 = vadd.f32 0.0, %v3941
  %v3943 = vpop.f32.mrf.mxu0
  %v3944 = vadd.f32 0.0, %v3943
  %3945 = vmatmul.bf16.gmra.mxu0 %v2147
  %v3946 = vpop.f32.mrf.mxu0
  %v3947 = vadd.f32 0.0, %v3946
  %v3948 = vpop.f32.mrf.mxu0
  %v3949 = vadd.f32 0.0, %v3948
  %3950 = vmatmul.bf16.gmra.mxu0 %v2150
  %v3951 = vpop.f32.mrf.mxu0
  %v3952 = vadd.f32 0.0, %v3951
  %v3953 = vpop.f32.mrf.mxu0
  %v3954 = vadd.f32 0.0, %v3953
  %3955 = vmatmul.bf16.gmra.mxu0 %v2973
  %v3956 = vpop.f32.mrf.mxu0
  %v3957 = vadd.f32 0.0, %v3956
  %v3958 = vpop.f32.mrf.mxu0
  %v3959 = vadd.f32 0.0, %v3958
  %3960 = vmatmul.bf16.gmra.mxu0 %v3792
  %v3961 = vpop.f32.mrf.mxu0
  %v3962 = vadd.f32 0.0, %v3961
  %v3963 = vpop.f32.mrf.mxu0
  %v3964 = vadd.f32 0.0, %v3963
  %3965 = vdwg.mxu0
  %v3966 = vadd.f32 %v3701, %v3807
  %v3967 = vadd.f32 %v3702, %v3809
  %v3968 = vadd.f32 %v3703, %v3812
  %v3969 = vadd.f32 %v3704, %v3814
  %v3970 = vadd.f32 %v3705, %v3817
  %v3971 = vadd.f32 %v3706, %v3819
  %v3972 = vadd.f32 %v3707, %v3822
  %v3973 = vadd.f32 %v3708, %v3824
  %v3974 = vadd.f32 %v3709, %v3827
  %v3975 = vadd.f32 %v3710, %v3829
  %v3976 = vadd.f32 %v3711, %v3832
  %v3977 = vadd.f32 %v3712, %v3834
  %v3978 = vadd.f32 %v3713, %v3837
  %v3979 = vadd.f32 %v3714, %v3839
  %v3980 = vadd.f32 %v3715, %v3842
  %v3981 = vadd.f32 %v3716, %v3844
  %v3982 = vadd.f32 %v3717, %v3847
  %v3983 = vadd.f32 %v3718, %v3849
  %v3984 = vadd.f32 %v3719, %v3852
  %v3985 = vadd.f32 %v3720, %v3854
  %v3986 = vadd.f32 %v3721, %v3857
  %v3987 = vadd.f32 %v3722, %v3859
  %v3988 = vadd.f32 %v3723, %v3862
  %v3989 = vadd.f32 %v3724, %v3864
  %v3990 = vadd.f32 %v3725, %v3867
  %v3991 = vadd.f32 %v3726, %v3869
  %v3992 = vadd.f32 %v3727, %v3872
  %v3993 = vadd.f32 %v3728, %v3874
  %v3994 = vadd.f32 %v3729, %v3877
  %v3995 = vadd.f32 %v3730, %v3879
  %v3996 = vadd.f32 %v3731, %v3882
  %v3997 = vadd.f32 %v3732, %v3884
  %v3998 = vadd.f32 %v3733, %v3887
  %v3999 = vadd.f32 %v3734, %v3889
  %v4000 = vadd.f32 %v3735, %v3892
  %v4001 = vadd.f32 %v3736, %v3894
  %v4002 = vadd.f32 %v3737, %v3897
  %v4003 = vadd.f32 %v3738, %v3899
  %v4004 = vadd.f32 %v3739, %v3902
  %v4005 = vadd.f32 %v3740, %v3904
  %v4006 = vadd.f32 %v3741, %v3907
  %v4007 = vadd.f32 %v3742, %v3909
  %v4008 = vadd.f32 %v3743, %v3912
  %v4009 = vadd.f32 %v3744, %v3914
  %v4010 = vadd.f32 %v3745, %v3917
  %v4011 = vadd.f32 %v3746, %v3919
  %v4012 = vadd.f32 %v3747, %v3922
  %v4013 = vadd.f32 %v3748, %v3924
  %v4014 = vadd.f32 %v3749, %v3927
  %v4015 = vadd.f32 %v3750, %v3929
  %v4016 = vadd.f32 %v3751, %v3932
  %v4017 = vadd.f32 %v3752, %v3934
  %v4018 = vadd.f32 %v3753, %v3937
  %v4019 = vadd.f32 %v3754, %v3939
  %v4020 = vadd.f32 %v3755, %v3942
  %v4021 = vadd.f32 %v3756, %v3944
  %v4022 = vadd.f32 %v3757, %v3947
  %v4023 = vadd.f32 %v3758, %v3949
  %v4024 = vadd.f32 %v3759, %v3952
  %v4025 = vadd.f32 %v3760, %v3954
  %v4026 = vadd.f32 %v3761, %v3957
  %v4027 = vadd.f32 %v3762, %v3959
  %v4028 = vadd.f32 %v3763, %v3962
  %v4029 = vadd.f32 %v3764, %v3964
  %v4030 = vld [vmem:[%s2] sm:$0x1]
  %v4032 = vperm.slane %v4030, 0
  %v4034 = vadd.f32 %v3966, %v4032
  %v4035 = vadd.f32 %v3967, %v4032
  %v4036 = vadd.f32 %v3968, %v4032
  %v4037 = vadd.f32 %v3969, %v4032
  %v4038 = vadd.f32 %v3970, %v4032
  %v4039 = vadd.f32 %v3971, %v4032
  %v4040 = vadd.f32 %v3972, %v4032
  %v4041 = vadd.f32 %v3973, %v4032
  %v4042 = vadd.f32 %v3974, %v4032
  %v4043 = vadd.f32 %v3975, %v4032
  %v4044 = vadd.f32 %v3976, %v4032
  %v4045 = vadd.f32 %v3977, %v4032
  %v4046 = vadd.f32 %v3978, %v4032
  %v4047 = vadd.f32 %v3979, %v4032
  %v4048 = vadd.f32 %v3980, %v4032
  %v4049 = vadd.f32 %v3981, %v4032
  %v4050 = vadd.f32 %v3982, %v4032
  %v4051 = vadd.f32 %v3983, %v4032
  %v4052 = vadd.f32 %v3984, %v4032
  %v4053 = vadd.f32 %v3985, %v4032
  %v4054 = vadd.f32 %v3986, %v4032
  %v4055 = vadd.f32 %v3987, %v4032
  %v4056 = vadd.f32 %v3988, %v4032
  %v4057 = vadd.f32 %v3989, %v4032
  %v4058 = vadd.f32 %v3990, %v4032
  %v4059 = vadd.f32 %v3991, %v4032
  %v4060 = vadd.f32 %v3992, %v4032
  %v4061 = vadd.f32 %v3993, %v4032
  %v4062 = vadd.f32 %v3994, %v4032
  %v4063 = vadd.f32 %v3995, %v4032
  %v4064 = vadd.f32 %v3996, %v4032
  %v4065 = vadd.f32 %v3997, %v4032
  %v4066 = vadd.f32 %v3998, %v4032
  %v4067 = vadd.f32 %v3999, %v4032
  %v4068 = vadd.f32 %v4000, %v4032
  %v4069 = vadd.f32 %v4001, %v4032
  %v4070 = vadd.f32 %v4002, %v4032
  %v4071 = vadd.f32 %v4003, %v4032
  %v4072 = vadd.f32 %v4004, %v4032
  %v4073 = vadd.f32 %v4005, %v4032
  %v4074 = vadd.f32 %v4006, %v4032
  %v4075 = vadd.f32 %v4007, %v4032
  %v4076 = vadd.f32 %v4008, %v4032
  %v4077 = vadd.f32 %v4009, %v4032
  %v4078 = vadd.f32 %v4010, %v4032
  %v4079 = vadd.f32 %v4011, %v4032
  %v4080 = vadd.f32 %v4012, %v4032
  %v4081 = vadd.f32 %v4013, %v4032
  %v4082 = vadd.f32 %v4014, %v4032
  %v4083 = vadd.f32 %v4015, %v4032
  %v4084 = vadd.f32 %v4016, %v4032
  %v4085 = vadd.f32 %v4017, %v4032
  %v4086 = vadd.f32 %v4018, %v4032
  %v4087 = vadd.f32 %v4019, %v4032
  %v4088 = vadd.f32 %v4020, %v4032
  %v4089 = vadd.f32 %v4021, %v4032
  %v4090 = vadd.f32 %v4022, %v4032
  %v4091 = vadd.f32 %v4023, %v4032
  %v4092 = vadd.f32 %v4024, %v4032
  %v4093 = vadd.f32 %v4025, %v4032
  %v4094 = vadd.f32 %v4026, %v4032
  %v4095 = vadd.f32 %v4027, %v4032
  %v4096 = vadd.f32 %v4028, %v4032
  %v4097 = vadd.f32 %v4029, %v4032
  %vm4098 = vcmask 523264
  %v4099 = vsel %vm4098, %v4034, 0.0
  %v4100 = vsel %vm4098, %v4035, 0.0
  %v4101 = vadd.f32 %v4099, %v4100
  %v4102 = vsel %vm4098, %v4036, 0.0
  %v4103 = vadd.f32 %v4101, %v4102
  %v4104 = vsel %vm4098, %v4037, 0.0
  %v4105 = vadd.f32 %v4103, %v4104
  %v4106 = vsel %vm4098, %v4038, 0.0
  %v4107 = vadd.f32 %v4105, %v4106
  %v4108 = vsel %vm4098, %v4039, 0.0
  %v4109 = vadd.f32 %v4107, %v4108
  %v4110 = vsel %vm4098, %v4040, 0.0
  %v4111 = vadd.f32 %v4109, %v4110
  %v4112 = vsel %vm4098, %v4041, 0.0
  %v4113 = vadd.f32 %v4111, %v4112
  %v4114 = vsel %vm4098, %v4042, 0.0
  %v4115 = vadd.f32 %v4113, %v4114
  %v4116 = vsel %vm4098, %v4043, 0.0
  %v4117 = vadd.f32 %v4115, %v4116
  %v4118 = vsel %vm4098, %v4044, 0.0
  %v4119 = vadd.f32 %v4117, %v4118
  %v4120 = vsel %vm4098, %v4045, 0.0
  %v4121 = vadd.f32 %v4119, %v4120
  %v4122 = vsel %vm4098, %v4046, 0.0
  %v4123 = vadd.f32 %v4121, %v4122
  %v4124 = vsel %vm4098, %v4047, 0.0
  %v4125 = vadd.f32 %v4123, %v4124
  %v4126 = vsel %vm4098, %v4048, 0.0
  %v4127 = vadd.f32 %v4125, %v4126
  %v4128 = vsel %vm4098, %v4049, 0.0
  %v4129 = vadd.f32 %v4127, %v4128
  %v4130 = vsel %vm4098, %v4050, 0.0
  %v4131 = vadd.f32 %v4129, %v4130
  %v4132 = vsel %vm4098, %v4051, 0.0
  %v4133 = vadd.f32 %v4131, %v4132
  %v4134 = vsel %vm4098, %v4052, 0.0
  %v4135 = vadd.f32 %v4133, %v4134
  %v4136 = vsel %vm4098, %v4053, 0.0
  %v4137 = vadd.f32 %v4135, %v4136
  %v4138 = vsel %vm4098, %v4054, 0.0
  %v4139 = vadd.f32 %v4137, %v4138
  %v4140 = vsel %vm4098, %v4055, 0.0
  %v4141 = vadd.f32 %v4139, %v4140
  %v4142 = vsel %vm4098, %v4056, 0.0
  %v4143 = vadd.f32 %v4141, %v4142
  %v4144 = vsel %vm4098, %v4057, 0.0
  %v4145 = vadd.f32 %v4143, %v4144
  %v4146 = vsel %vm4098, %v4058, 0.0
  %v4147 = vadd.f32 %v4145, %v4146
  %v4148 = vsel %vm4098, %v4059, 0.0
  %v4149 = vadd.f32 %v4147, %v4148
  %v4150 = vsel %vm4098, %v4060, 0.0
  %v4151 = vadd.f32 %v4149, %v4150
  %v4152 = vsel %vm4098, %v4061, 0.0
  %v4153 = vadd.f32 %v4151, %v4152
  %v4154 = vsel %vm4098, %v4062, 0.0
  %v4155 = vadd.f32 %v4153, %v4154
  %v4156 = vsel %vm4098, %v4063, 0.0
  %v4157 = vadd.f32 %v4155, %v4156
  %v4158 = vsel %vm4098, %v4064, 0.0
  %v4159 = vadd.f32 %v4157, %v4158
  %v4160 = vsel %vm4098, %v4065, 0.0
  %v4161 = vadd.f32 %v4159, %v4160
  %v4162 = vsel %vm4098, %v4066, 0.0
  %v4163 = vadd.f32 %v4161, %v4162
  %v4164 = vsel %vm4098, %v4067, 0.0
  %v4165 = vadd.f32 %v4163, %v4164
  %v4166 = vsel %vm4098, %v4068, 0.0
  %v4167 = vadd.f32 %v4165, %v4166
  %v4168 = vsel %vm4098, %v4069, 0.0
  %v4169 = vadd.f32 %v4167, %v4168
  %v4170 = vsel %vm4098, %v4070, 0.0
  %v4171 = vadd.f32 %v4169, %v4170
  %v4172 = vsel %vm4098, %v4071, 0.0
  %v4173 = vadd.f32 %v4171, %v4172
  %v4174 = vsel %vm4098, %v4072, 0.0
  %v4175 = vadd.f32 %v4173, %v4174
  %v4176 = vsel %vm4098, %v4073, 0.0
  %v4177 = vadd.f32 %v4175, %v4176
  %v4178 = vsel %vm4098, %v4074, 0.0
  %v4179 = vadd.f32 %v4177, %v4178
  %v4180 = vsel %vm4098, %v4075, 0.0
  %v4181 = vadd.f32 %v4179, %v4180
  %v4182 = vsel %vm4098, %v4076, 0.0
  %v4183 = vadd.f32 %v4181, %v4182
  %v4184 = vsel %vm4098, %v4077, 0.0
  %v4185 = vadd.f32 %v4183, %v4184
  %v4186 = vsel %vm4098, %v4078, 0.0
  %v4187 = vadd.f32 %v4185, %v4186
  %v4188 = vsel %vm4098, %v4079, 0.0
  %v4189 = vadd.f32 %v4187, %v4188
  %v4190 = vsel %vm4098, %v4080, 0.0
  %v4191 = vadd.f32 %v4189, %v4190
  %v4192 = vsel %vm4098, %v4081, 0.0
  %v4193 = vadd.f32 %v4191, %v4192
  %v4194 = vsel %vm4098, %v4082, 0.0
  %v4195 = vadd.f32 %v4193, %v4194
  %v4196 = vsel %vm4098, %v4083, 0.0
  %v4197 = vadd.f32 %v4195, %v4196
  %v4198 = vsel %vm4098, %v4084, 0.0
  %v4199 = vadd.f32 %v4197, %v4198
  %v4200 = vsel %vm4098, %v4085, 0.0
  %v4201 = vadd.f32 %v4199, %v4200
  %v4202 = vsel %vm4098, %v4086, 0.0
  %v4203 = vadd.f32 %v4201, %v4202
  %v4204 = vsel %vm4098, %v4087, 0.0
  %v4205 = vadd.f32 %v4203, %v4204
  %v4206 = vsel %vm4098, %v4088, 0.0
  %v4207 = vadd.f32 %v4205, %v4206
  %v4208 = vsel %vm4098, %v4089, 0.0
  %v4209 = vadd.f32 %v4207, %v4208
  %v4210 = vsel %vm4098, %v4090, 0.0
  %v4211 = vadd.f32 %v4209, %v4210
  %v4212 = vsel %vm4098, %v4091, 0.0
  %v4213 = vadd.f32 %v4211, %v4212
  %v4214 = vsel %vm4098, %v4092, 0.0
  %v4215 = vadd.f32 %v4213, %v4214
  %v4216 = vsel %vm4098, %v4093, 0.0
  %v4217 = vadd.f32 %v4215, %v4216
  %v4218 = vsel %vm4098, %v4094, 0.0
  %v4219 = vadd.f32 %v4217, %v4218
  %v4220 = vsel %vm4098, %v4095, 0.0
  %v4221 = vadd.f32 %v4219, %v4220
  %v4222 = vsel %vm4098, %v4096, 0.0
  %v4223 = vadd.f32 %v4221, %v4222
  %v4224 = vsel %vm4098, %v4097, 0.0
  %v4225 = vadd.f32 %v4223, %v4224
  %v4226 = vrot.slane %v4225, 4
  %v4227 = vadd.f32 %v4225, %v4226
  %v4228 = vrot.slane %v4227, 2
  %v4229 = vadd.f32 %v4227, %v4228
  %v4230 = vrot.slane %v4229, 1
  %v4231 = vadd.f32 %v4229, %v4230
  %v4232 = vmul.f32 %v4231, 0.001953125
  %v4233 = vsub.f32 %v4034, %v4232
  %v4234 = vsub.f32 %v4035, %v4232
  %v4235 = vsub.f32 %v4036, %v4232
  %v4236 = vsub.f32 %v4037, %v4232
  %v4237 = vsub.f32 %v4038, %v4232
  %v4238 = vsub.f32 %v4039, %v4232
  %v4239 = vsub.f32 %v4040, %v4232
  %v4240 = vsub.f32 %v4041, %v4232
  %v4241 = vsub.f32 %v4042, %v4232
  %v4242 = vsub.f32 %v4043, %v4232
  %v4243 = vsub.f32 %v4044, %v4232
  %v4244 = vsub.f32 %v4045, %v4232
  %v4245 = vsub.f32 %v4046, %v4232
  %v4246 = vsub.f32 %v4047, %v4232
  %v4247 = vsub.f32 %v4048, %v4232
  %v4248 = vsub.f32 %v4049, %v4232
  %v4249 = vsub.f32 %v4050, %v4232
  %v4250 = vsub.f32 %v4051, %v4232
  %v4251 = vsub.f32 %v4052, %v4232
  %v4252 = vsub.f32 %v4053, %v4232
  %v4253 = vsub.f32 %v4054, %v4232
  %v4254 = vsub.f32 %v4055, %v4232
  %v4255 = vsub.f32 %v4056, %v4232
  %v4256 = vsub.f32 %v4057, %v4232
  %v4257 = vsub.f32 %v4058, %v4232
  %v4258 = vsub.f32 %v4059, %v4232
  %v4259 = vsub.f32 %v4060, %v4232
  %v4260 = vsub.f32 %v4061, %v4232
  %v4261 = vsub.f32 %v4062, %v4232
  %v4262 = vsub.f32 %v4063, %v4232
  %v4263 = vsub.f32 %v4064, %v4232
  %v4264 = vsub.f32 %v4065, %v4232
  %v4265 = vsub.f32 %v4066, %v4232
  %v4266 = vsub.f32 %v4067, %v4232
  %v4267 = vsub.f32 %v4068, %v4232
  %v4268 = vsub.f32 %v4069, %v4232
  %v4269 = vsub.f32 %v4070, %v4232
  %v4270 = vsub.f32 %v4071, %v4232
  %v4271 = vsub.f32 %v4072, %v4232
  %v4272 = vsub.f32 %v4073, %v4232
  %v4273 = vsub.f32 %v4074, %v4232
  %v4274 = vsub.f32 %v4075, %v4232
  %v4275 = vsub.f32 %v4076, %v4232
  %v4276 = vsub.f32 %v4077, %v4232
  %v4277 = vsub.f32 %v4078, %v4232
  %v4278 = vsub.f32 %v4079, %v4232
  %v4279 = vsub.f32 %v4080, %v4232
  %v4280 = vsub.f32 %v4081, %v4232
  %v4281 = vsub.f32 %v4082, %v4232
  %v4282 = vsub.f32 %v4083, %v4232
  %v4283 = vsub.f32 %v4084, %v4232
  %v4284 = vsub.f32 %v4085, %v4232
  %v4285 = vsub.f32 %v4086, %v4232
  %v4286 = vsub.f32 %v4087, %v4232
  %v4287 = vsub.f32 %v4088, %v4232
  %v4288 = vsub.f32 %v4089, %v4232
  %v4289 = vsub.f32 %v4090, %v4232
  %v4290 = vsub.f32 %v4091, %v4232
  %v4291 = vsub.f32 %v4092, %v4232
  %v4292 = vsub.f32 %v4093, %v4232
  %v4293 = vsub.f32 %v4094, %v4232
  %v4294 = vsub.f32 %v4095, %v4232
  %v4295 = vsub.f32 %v4096, %v4232
  %v4296 = vsub.f32 %v4097, %v4232
  %v4297 = vmul.f32 %v4233, %v4233
  %v4298 = vmul.f32 %v4234, %v4234
  %v4299 = vmul.f32 %v4235, %v4235
  %v4300 = vmul.f32 %v4236, %v4236
  %v4301 = vmul.f32 %v4237, %v4237
  %v4302 = vmul.f32 %v4238, %v4238
  %v4303 = vmul.f32 %v4239, %v4239
  %v4304 = vmul.f32 %v4240, %v4240
  %v4305 = vmul.f32 %v4241, %v4241
  %v4306 = vmul.f32 %v4242, %v4242
  %v4307 = vmul.f32 %v4243, %v4243
  %v4308 = vmul.f32 %v4244, %v4244
  %v4309 = vmul.f32 %v4245, %v4245
  %v4310 = vmul.f32 %v4246, %v4246
  %v4311 = vmul.f32 %v4247, %v4247
  %v4312 = vmul.f32 %v4248, %v4248
  %v4313 = vmul.f32 %v4249, %v4249
  %v4314 = vmul.f32 %v4250, %v4250
  %v4315 = vmul.f32 %v4251, %v4251
  %v4316 = vmul.f32 %v4252, %v4252
  %v4317 = vmul.f32 %v4253, %v4253
  %v4318 = vmul.f32 %v4254, %v4254
  %v4319 = vmul.f32 %v4255, %v4255
  %v4320 = vmul.f32 %v4256, %v4256
  %v4321 = vmul.f32 %v4257, %v4257
  %v4322 = vmul.f32 %v4258, %v4258
  %v4323 = vmul.f32 %v4259, %v4259
  %v4324 = vmul.f32 %v4260, %v4260
  %v4325 = vmul.f32 %v4261, %v4261
  %v4326 = vmul.f32 %v4262, %v4262
  %v4327 = vmul.f32 %v4263, %v4263
  %v4328 = vmul.f32 %v4264, %v4264
  %v4329 = vmul.f32 %v4265, %v4265
  %v4330 = vmul.f32 %v4266, %v4266
  %v4331 = vmul.f32 %v4267, %v4267
  %v4332 = vmul.f32 %v4268, %v4268
  %v4333 = vmul.f32 %v4269, %v4269
  %v4334 = vmul.f32 %v4270, %v4270
  %v4335 = vmul.f32 %v4271, %v4271
  %v4336 = vmul.f32 %v4272, %v4272
  %v4337 = vmul.f32 %v4273, %v4273
  %v4338 = vmul.f32 %v4274, %v4274
  %v4339 = vmul.f32 %v4275, %v4275
  %v4340 = vmul.f32 %v4276, %v4276
  %v4341 = vmul.f32 %v4277, %v4277
  %v4342 = vmul.f32 %v4278, %v4278
  %v4343 = vmul.f32 %v4279, %v4279
  %v4344 = vmul.f32 %v4280, %v4280
  %v4345 = vmul.f32 %v4281, %v4281
  %v4346 = vmul.f32 %v4282, %v4282
  %v4347 = vmul.f32 %v4283, %v4283
  %v4348 = vmul.f32 %v4284, %v4284
  %v4349 = vmul.f32 %v4285, %v4285
  %v4350 = vmul.f32 %v4286, %v4286
  %v4351 = vmul.f32 %v4287, %v4287
  %v4352 = vmul.f32 %v4288, %v4288
  %v4353 = vmul.f32 %v4289, %v4289
  %v4354 = vmul.f32 %v4290, %v4290
  %v4355 = vmul.f32 %v4291, %v4291
  %v4356 = vmul.f32 %v4292, %v4292
  %v4357 = vmul.f32 %v4293, %v4293
  %v4358 = vmul.f32 %v4294, %v4294
  %v4359 = vmul.f32 %v4295, %v4295
  %v4360 = vmul.f32 %v4296, %v4296
  %v4361 = vsel %vm4098, %v4297, 0.0
  %v4362 = vsel %vm4098, %v4298, 0.0
  %v4363 = vadd.f32 %v4361, %v4362
  %v4364 = vsel %vm4098, %v4299, 0.0
  %v4365 = vadd.f32 %v4363, %v4364
  %v4366 = vsel %vm4098, %v4300, 0.0
  %v4367 = vadd.f32 %v4365, %v4366
  %v4368 = vsel %vm4098, %v4301, 0.0
  %v4369 = vadd.f32 %v4367, %v4368
  %v4370 = vsel %vm4098, %v4302, 0.0
  %v4371 = vadd.f32 %v4369, %v4370
  %v4372 = vsel %vm4098, %v4303, 0.0
  %v4373 = vadd.f32 %v4371, %v4372
  %v4374 = vsel %vm4098, %v4304, 0.0
  %v4375 = vadd.f32 %v4373, %v4374
  %v4376 = vsel %vm4098, %v4305, 0.0
  %v4377 = vadd.f32 %v4375, %v4376
  %v4378 = vsel %vm4098, %v4306, 0.0
  %v4379 = vadd.f32 %v4377, %v4378
  %v4380 = vsel %vm4098, %v4307, 0.0
  %v4381 = vadd.f32 %v4379, %v4380
  %v4382 = vsel %vm4098, %v4308, 0.0
  %v4383 = vadd.f32 %v4381, %v4382
  %v4384 = vsel %vm4098, %v4309, 0.0
  %v4385 = vadd.f32 %v4383, %v4384
  %v4386 = vsel %vm4098, %v4310, 0.0
  %v4387 = vadd.f32 %v4385, %v4386
  %v4388 = vsel %vm4098, %v4311, 0.0
  %v4389 = vadd.f32 %v4387, %v4388
  %v4390 = vsel %vm4098, %v4312, 0.0
  %v4391 = vadd.f32 %v4389, %v4390
  %v4392 = vsel %vm4098, %v4313, 0.0
  %v4393 = vadd.f32 %v4391, %v4392
  %v4394 = vsel %vm4098, %v4314, 0.0
  %v4395 = vadd.f32 %v4393, %v4394
  %v4396 = vsel %vm4098, %v4315, 0.0
  %v4397 = vadd.f32 %v4395, %v4396
  %v4398 = vsel %vm4098, %v4316, 0.0
  %v4399 = vadd.f32 %v4397, %v4398
  %v4400 = vsel %vm4098, %v4317, 0.0
  %v4401 = vadd.f32 %v4399, %v4400
  %v4402 = vsel %vm4098, %v4318, 0.0
  %v4403 = vadd.f32 %v4401, %v4402
  %v4404 = vsel %vm4098, %v4319, 0.0
  %v4405 = vadd.f32 %v4403, %v4404
  %v4406 = vsel %vm4098, %v4320, 0.0
  %v4407 = vadd.f32 %v4405, %v4406
  %v4408 = vsel %vm4098, %v4321, 0.0
  %v4409 = vadd.f32 %v4407, %v4408
  %v4410 = vsel %vm4098, %v4322, 0.0
  %v4411 = vadd.f32 %v4409, %v4410
  %v4412 = vsel %vm4098, %v4323, 0.0
  %v4413 = vadd.f32 %v4411, %v4412
  %v4414 = vsel %vm4098, %v4324, 0.0
  %v4415 = vadd.f32 %v4413, %v4414
  %v4416 = vsel %vm4098, %v4325, 0.0
  %v4417 = vadd.f32 %v4415, %v4416
  %v4418 = vsel %vm4098, %v4326, 0.0
  %v4419 = vadd.f32 %v4417, %v4418
  %v4420 = vsel %vm4098, %v4327, 0.0
  %v4421 = vadd.f32 %v4419, %v4420
  %v4422 = vsel %vm4098, %v4328, 0.0
  %v4423 = vadd.f32 %v4421, %v4422
  %v4424 = vsel %vm4098, %v4329, 0.0
  %v4425 = vadd.f32 %v4423, %v4424
  %v4426 = vsel %vm4098, %v4330, 0.0
  %v4427 = vadd.f32 %v4425, %v4426
  %v4428 = vsel %vm4098, %v4331, 0.0
  %v4429 = vadd.f32 %v4427, %v4428
  %v4430 = vsel %vm4098, %v4332, 0.0
  %v4431 = vadd.f32 %v4429, %v4430
  %v4432 = vsel %vm4098, %v4333, 0.0
  %v4433 = vadd.f32 %v4431, %v4432
  %v4434 = vsel %vm4098, %v4334, 0.0
  %v4435 = vadd.f32 %v4433, %v4434
  %v4436 = vsel %vm4098, %v4335, 0.0
  %v4437 = vadd.f32 %v4435, %v4436
  %v4438 = vsel %vm4098, %v4336, 0.0
  %v4439 = vadd.f32 %v4437, %v4438
  %v4440 = vsel %vm4098, %v4337, 0.0
  %v4441 = vadd.f32 %v4439, %v4440
  %v4442 = vsel %vm4098, %v4338, 0.0
  %v4443 = vadd.f32 %v4441, %v4442
  %v4444 = vsel %vm4098, %v4339, 0.0
  %v4445 = vadd.f32 %v4443, %v4444
  %v4446 = vsel %vm4098, %v4340, 0.0
  %v4447 = vadd.f32 %v4445, %v4446
  %v4448 = vsel %vm4098, %v4341, 0.0
  %v4449 = vadd.f32 %v4447, %v4448
  %v4450 = vsel %vm4098, %v4342, 0.0
  %v4451 = vadd.f32 %v4449, %v4450
  %v4452 = vsel %vm4098, %v4343, 0.0
  %v4453 = vadd.f32 %v4451, %v4452
  %v4454 = vsel %vm4098, %v4344, 0.0
  %v4455 = vadd.f32 %v4453, %v4454
  %v4456 = vsel %vm4098, %v4345, 0.0
  %v4457 = vadd.f32 %v4455, %v4456
  %v4458 = vsel %vm4098, %v4346, 0.0
  %v4459 = vadd.f32 %v4457, %v4458
  %v4460 = vsel %vm4098, %v4347, 0.0
  %v4461 = vadd.f32 %v4459, %v4460
  %v4462 = vsel %vm4098, %v4348, 0.0
  %v4463 = vadd.f32 %v4461, %v4462
  %v4464 = vsel %vm4098, %v4349, 0.0
  %v4465 = vadd.f32 %v4463, %v4464
  %v4466 = vsel %vm4098, %v4350, 0.0
  %v4467 = vadd.f32 %v4465, %v4466
  %v4468 = vsel %vm4098, %v4351, 0.0
  %v4469 = vadd.f32 %v4467, %v4468
  %v4470 = vsel %vm4098, %v4352, 0.0
  %v4471 = vadd.f32 %v4469, %v4470
  %v4472 = vsel %vm4098, %v4353, 0.0
  %v4473 = vadd.f32 %v4471, %v4472
  %v4474 = vsel %vm4098, %v4354, 0.0
  %v4475 = vadd.f32 %v4473, %v4474
  %v4476 = vsel %vm4098, %v4355, 0.0
  %v4477 = vadd.f32 %v4475, %v4476
  %v4478 = vsel %vm4098, %v4356, 0.0
  %v4479 = vadd.f32 %v4477, %v4478
  %v4480 = vsel %vm4098, %v4357, 0.0
  %v4481 = vadd.f32 %v4479, %v4480
  %v4482 = vsel %vm4098, %v4358, 0.0
  %v4483 = vadd.f32 %v4481, %v4482
  %v4484 = vsel %vm4098, %v4359, 0.0
  %v4485 = vadd.f32 %v4483, %v4484
  %v4486 = vsel %vm4098, %v4360, 0.0
  %v4487 = vadd.f32 %v4485, %v4486
  %v4488 = vrot.slane %v4487, 4
  %v4489 = vadd.f32 %v4487, %v4488
  %v4490 = vrot.slane %v4489, 2
  %v4491 = vadd.f32 %v4489, %v4490
  %v4492 = vrot.slane %v4491, 1
  %v4493 = vadd.f32 %v4491, %v4492
  %v4494 = vmul.f32 %v4493, 0.001953125
  %v4495 = vld [vmem:[%s3] sm:$0x1]
  %v4496 = vadd.f32 %v4494, 1e-05
  %v4497 = vrsqrt.pop %v4496
  %v4498 = vmul.f32 %v4497, %v4496
  %v4499 = vmul.f32 %v4498, %v4497
  %v4500 = vmul.f32 0.5, %v4499
  %v4501 = vsub.f32 1.5, %v4500
  %v4502 = vmul.f32 %v4497, %v4501
  %vm4503 = vweird.f32 %v4496
  %vm4504 = vweird.f32 %v4497
  %vm4505 = vmor %vm4503, %vm4504
  %v4506 = vsel %vm4505, %v4497, %v4502
  %v4507 = vmul.f32 %v4495, %v4506
  %v4509 = vperm.slane %v4507, 0
  %v4511 = vmul.f32 %v4233, %v4509
  %v4512 = vmul.f32 %v4234, %v4509
  %v4513 = vmul.f32 %v4235, %v4509
  %v4514 = vmul.f32 %v4236, %v4509
  %v4515 = vmul.f32 %v4237, %v4509
  %v4516 = vmul.f32 %v4238, %v4509
  %v4517 = vmul.f32 %v4239, %v4509
  %v4518 = vmul.f32 %v4240, %v4509
  %v4519 = vmul.f32 %v4241, %v4509
  %v4520 = vmul.f32 %v4242, %v4509
  %v4521 = vmul.f32 %v4243, %v4509
  %v4522 = vmul.f32 %v4244, %v4509
  %v4523 = vmul.f32 %v4245, %v4509
  %v4524 = vmul.f32 %v4246, %v4509
  %v4525 = vmul.f32 %v4247, %v4509
  %v4526 = vmul.f32 %v4248, %v4509
  %v4527 = vmul.f32 %v4249, %v4509
  %v4528 = vmul.f32 %v4250, %v4509
  %v4529 = vmul.f32 %v4251, %v4509
  %v4530 = vmul.f32 %v4252, %v4509
  %v4531 = vmul.f32 %v4253, %v4509
  %v4532 = vmul.f32 %v4254, %v4509
  %v4533 = vmul.f32 %v4255, %v4509
  %v4534 = vmul.f32 %v4256, %v4509
  %v4535 = vmul.f32 %v4257, %v4509
  %v4536 = vmul.f32 %v4258, %v4509
  %v4537 = vmul.f32 %v4259, %v4509
  %v4538 = vmul.f32 %v4260, %v4509
  %v4539 = vmul.f32 %v4261, %v4509
  %v4540 = vmul.f32 %v4262, %v4509
  %v4541 = vmul.f32 %v4263, %v4509
  %v4542 = vmul.f32 %v4264, %v4509
  %v4543 = vmul.f32 %v4265, %v4509
  %v4544 = vmul.f32 %v4266, %v4509
  %v4545 = vmul.f32 %v4267, %v4509
  %v4546 = vmul.f32 %v4268, %v4509
  %v4547 = vmul.f32 %v4269, %v4509
  %v4548 = vmul.f32 %v4270, %v4509
  %v4549 = vmul.f32 %v4271, %v4509
  %v4550 = vmul.f32 %v4272, %v4509
  %v4551 = vmul.f32 %v4273, %v4509
  %v4552 = vmul.f32 %v4274, %v4509
  %v4553 = vmul.f32 %v4275, %v4509
  %v4554 = vmul.f32 %v4276, %v4509
  %v4555 = vmul.f32 %v4277, %v4509
  %v4556 = vmul.f32 %v4278, %v4509
  %v4557 = vmul.f32 %v4279, %v4509
  %v4558 = vmul.f32 %v4280, %v4509
  %v4559 = vmul.f32 %v4281, %v4509
  %v4560 = vmul.f32 %v4282, %v4509
  %v4561 = vmul.f32 %v4283, %v4509
  %v4562 = vmul.f32 %v4284, %v4509
  %v4563 = vmul.f32 %v4285, %v4509
  %v4564 = vmul.f32 %v4286, %v4509
  %v4565 = vmul.f32 %v4287, %v4509
  %v4566 = vmul.f32 %v4288, %v4509
  %v4567 = vmul.f32 %v4289, %v4509
  %v4568 = vmul.f32 %v4290, %v4509
  %v4569 = vmul.f32 %v4291, %v4509
  %v4570 = vmul.f32 %v4292, %v4509
  %v4571 = vmul.f32 %v4293, %v4509
  %v4572 = vmul.f32 %v4294, %v4509
  %v4573 = vmul.f32 %v4295, %v4509
  %v4574 = vmul.f32 %v4296, %v4509
  %v4575 = vld [vmem:[%s4] sm:$0x1]
  %v4577 = vperm.slane %v4575, 0
  %v4579 = vadd.f32 %v4511, %v4577
  %v4580 = vadd.f32 %v4512, %v4577
  %v4581 = vadd.f32 %v4513, %v4577
  %v4582 = vadd.f32 %v4514, %v4577
  %v4583 = vadd.f32 %v4515, %v4577
  %v4584 = vadd.f32 %v4516, %v4577
  %v4585 = vadd.f32 %v4517, %v4577
  %v4586 = vadd.f32 %v4518, %v4577
  %v4587 = vadd.f32 %v4519, %v4577
  %v4588 = vadd.f32 %v4520, %v4577
  %v4589 = vadd.f32 %v4521, %v4577
  %v4590 = vadd.f32 %v4522, %v4577
  %v4591 = vadd.f32 %v4523, %v4577
  %v4592 = vadd.f32 %v4524, %v4577
  %v4593 = vadd.f32 %v4525, %v4577
  %v4594 = vadd.f32 %v4526, %v4577
  %v4595 = vadd.f32 %v4527, %v4577
  %v4596 = vadd.f32 %v4528, %v4577
  %v4597 = vadd.f32 %v4529, %v4577
  %v4598 = vadd.f32 %v4530, %v4577
  %v4599 = vadd.f32 %v4531, %v4577
  %v4600 = vadd.f32 %v4532, %v4577
  %v4601 = vadd.f32 %v4533, %v4577
  %v4602 = vadd.f32 %v4534, %v4577
  %v4603 = vadd.f32 %v4535, %v4577
  %v4604 = vadd.f32 %v4536, %v4577
  %v4605 = vadd.f32 %v4537, %v4577
  %v4606 = vadd.f32 %v4538, %v4577
  %v4607 = vadd.f32 %v4539, %v4577
  %v4608 = vadd.f32 %v4540, %v4577
  %v4609 = vadd.f32 %v4541, %v4577
  %v4610 = vadd.f32 %v4542, %v4577
  %v4611 = vadd.f32 %v4543, %v4577
  %v4612 = vadd.f32 %v4544, %v4577
  %v4613 = vadd.f32 %v4545, %v4577
  %v4614 = vadd.f32 %v4546, %v4577
  %v4615 = vadd.f32 %v4547, %v4577
  %v4616 = vadd.f32 %v4548, %v4577
  %v4617 = vadd.f32 %v4549, %v4577
  %v4618 = vadd.f32 %v4550, %v4577
  %v4619 = vadd.f32 %v4551, %v4577
  %v4620 = vadd.f32 %v4552, %v4577
  %v4621 = vadd.f32 %v4553, %v4577
  %v4622 = vadd.f32 %v4554, %v4577
  %v4623 = vadd.f32 %v4555, %v4577
  %v4624 = vadd.f32 %v4556, %v4577
  %v4625 = vadd.f32 %v4557, %v4577
  %v4626 = vadd.f32 %v4558, %v4577
  %v4627 = vadd.f32 %v4559, %v4577
  %v4628 = vadd.f32 %v4560, %v4577
  %v4629 = vadd.f32 %v4561, %v4577
  %v4630 = vadd.f32 %v4562, %v4577
  %v4631 = vadd.f32 %v4563, %v4577
  %v4632 = vadd.f32 %v4564, %v4577
  %v4633 = vadd.f32 %v4565, %v4577
  %v4634 = vadd.f32 %v4566, %v4577
  %v4635 = vadd.f32 %v4567, %v4577
  %v4636 = vadd.f32 %v4568, %v4577
  %v4637 = vadd.f32 %v4569, %v4577
  %v4638 = vadd.f32 %v4570, %v4577
  %v4639 = vadd.f32 %v4571, %v4577
  %v4640 = vadd.f32 %v4572, %v4577
  %v4641 = vadd.f32 %v4573, %v4577
  %v4642 = vadd.f32 %v4574, %v4577
  %v4643 = vmax.f32 %v4579, 0.0
  %v4644 = vmax.f32 %v4580, 0.0
  %v4645 = vmax.f32 %v4581, 0.0
  %v4646 = vmax.f32 %v4582, 0.0
  %v4647 = vmax.f32 %v4583, 0.0
  %v4648 = vmax.f32 %v4584, 0.0
  %v4649 = vmax.f32 %v4585, 0.0
  %v4650 = vmax.f32 %v4586, 0.0
  %v4651 = vmax.f32 %v4587, 0.0
  %v4652 = vmax.f32 %v4588, 0.0
  %v4653 = vmax.f32 %v4589, 0.0
  %v4654 = vmax.f32 %v4590, 0.0
  %v4655 = vmax.f32 %v4591, 0.0
  %v4656 = vmax.f32 %v4592, 0.0
  %v4657 = vmax.f32 %v4593, 0.0
  %v4658 = vmax.f32 %v4594, 0.0
  %v4659 = vmax.f32 %v4595, 0.0
  %v4660 = vmax.f32 %v4596, 0.0
  %v4661 = vmax.f32 %v4597, 0.0
  %v4662 = vmax.f32 %v4598, 0.0
  %v4663 = vmax.f32 %v4599, 0.0
  %v4664 = vmax.f32 %v4600, 0.0
  %v4665 = vmax.f32 %v4601, 0.0
  %v4666 = vmax.f32 %v4602, 0.0
  %v4667 = vmax.f32 %v4603, 0.0
  %v4668 = vmax.f32 %v4604, 0.0
  %v4669 = vmax.f32 %v4605, 0.0
  %v4670 = vmax.f32 %v4606, 0.0
  %v4671 = vmax.f32 %v4607, 0.0
  %v4672 = vmax.f32 %v4608, 0.0
  %v4673 = vmax.f32 %v4609, 0.0
  %v4674 = vmax.f32 %v4610, 0.0
  %v4675 = vmax.f32 %v4611, 0.0
  %v4676 = vmax.f32 %v4612, 0.0
  %v4677 = vmax.f32 %v4613, 0.0
  %v4678 = vmax.f32 %v4614, 0.0
  %v4679 = vmax.f32 %v4615, 0.0
  %v4680 = vmax.f32 %v4616, 0.0
  %v4681 = vmax.f32 %v4617, 0.0
  %v4682 = vmax.f32 %v4618, 0.0
  %v4683 = vmax.f32 %v4619, 0.0
  %v4684 = vmax.f32 %v4620, 0.0
  %v4685 = vmax.f32 %v4621, 0.0
  %v4686 = vmax.f32 %v4622, 0.0
  %v4687 = vmax.f32 %v4623, 0.0
  %v4688 = vmax.f32 %v4624, 0.0
  %v4689 = vmax.f32 %v4625, 0.0
  %v4690 = vmax.f32 %v4626, 0.0
  %v4691 = vmax.f32 %v4627, 0.0
  %v4692 = vmax.f32 %v4628, 0.0
  %v4693 = vmax.f32 %v4629, 0.0
  %v4694 = vmax.f32 %v4630, 0.0
  %v4695 = vmax.f32 %v4631, 0.0
  %v4696 = vmax.f32 %v4632, 0.0
  %v4697 = vmax.f32 %v4633, 0.0
  %v4698 = vmax.f32 %v4634, 0.0
  %v4699 = vmax.f32 %v4635, 0.0
  %v4700 = vmax.f32 %v4636, 0.0
  %v4701 = vmax.f32 %v4637, 0.0
  %v4702 = vmax.f32 %v4638, 0.0
  %v4703 = vmax.f32 %v4639, 0.0
  %v4704 = vmax.f32 %v4640, 0.0
  %v4705 = vmax.f32 %v4641, 0.0
  %v4706 = vmax.f32 %v4642, 0.0
  %v4707 = vpack.c.bf16 %v4643, %v4643
  %v4708 = vpack.c.bf16 %v4644, %v4644
  %v4709 = vpack.c.bf16 %v4645, %v4645
  %v4710 = vpack.c.bf16 %v4646, %v4646
  %v4711 = vpack.c.bf16 %v4647, %v4647
  %v4712 = vpack.c.bf16 %v4648, %v4648
  %v4713 = vpack.c.bf16 %v4649, %v4649
  %v4714 = vpack.c.bf16 %v4650, %v4650
  %v4715 = vpack.c.bf16 %v4651, %v4651
  %v4716 = vpack.c.bf16 %v4652, %v4652
  %v4717 = vpack.c.bf16 %v4653, %v4653
  %v4718 = vpack.c.bf16 %v4654, %v4654
  %v4719 = vpack.c.bf16 %v4655, %v4655
  %v4720 = vpack.c.bf16 %v4656, %v4656
  %v4721 = vpack.c.bf16 %v4657, %v4657
  %v4722 = vpack.c.bf16 %v4658, %v4658
  %v4723 = vpack.c.bf16 %v4659, %v4659
  %v4724 = vpack.c.bf16 %v4660, %v4660
  %v4725 = vpack.c.bf16 %v4661, %v4661
  %v4726 = vpack.c.bf16 %v4662, %v4662
  %v4727 = vpack.c.bf16 %v4663, %v4663
  %v4728 = vpack.c.bf16 %v4664, %v4664
  %v4729 = vpack.c.bf16 %v4665, %v4665
  %v4730 = vpack.c.bf16 %v4666, %v4666
  %v4731 = vpack.c.bf16 %v4667, %v4667
  %v4732 = vpack.c.bf16 %v4668, %v4668
  %v4733 = vpack.c.bf16 %v4669, %v4669
  %v4734 = vpack.c.bf16 %v4670, %v4670
  %v4735 = vpack.c.bf16 %v4671, %v4671
  %v4736 = vpack.c.bf16 %v4672, %v4672
  %v4737 = vpack.c.bf16 %v4673, %v4673
  %v4738 = vpack.c.bf16 %v4674, %v4674
  %v4739 = vpack.c.bf16 %v4675, %v4675
  %v4740 = vpack.c.bf16 %v4676, %v4676
  %v4741 = vpack.c.bf16 %v4677, %v4677
  %v4742 = vpack.c.bf16 %v4678, %v4678
  %v4743 = vpack.c.bf16 %v4679, %v4679
  %v4744 = vpack.c.bf16 %v4680, %v4680
  %v4745 = vpack.c.bf16 %v4681, %v4681
  %v4746 = vpack.c.bf16 %v4682, %v4682
  %v4747 = vpack.c.bf16 %v4683, %v4683
  %v4748 = vpack.c.bf16 %v4684, %v4684
  %v4749 = vpack.c.bf16 %v4685, %v4685
  %v4750 = vpack.c.bf16 %v4686, %v4686
  %v4751 = vpack.c.bf16 %v4687, %v4687
  %v4752 = vpack.c.bf16 %v4688, %v4688
  %v4753 = vpack.c.bf16 %v4689, %v4689
  %v4754 = vpack.c.bf16 %v4690, %v4690
  %v4755 = vpack.c.bf16 %v4691, %v4691
  %v4756 = vpack.c.bf16 %v4692, %v4692
  %v4757 = vpack.c.bf16 %v4693, %v4693
  %v4758 = vpack.c.bf16 %v4694, %v4694
  %v4759 = vpack.c.bf16 %v4695, %v4695
  %v4760 = vpack.c.bf16 %v4696, %v4696
  %v4761 = vpack.c.bf16 %v4697, %v4697
  %v4762 = vpack.c.bf16 %v4698, %v4698
  %v4763 = vpack.c.bf16 %v4699, %v4699
  %v4764 = vpack.c.bf16 %v4700, %v4700
  %v4765 = vpack.c.bf16 %v4701, %v4701
  %v4766 = vpack.c.bf16 %v4702, %v4702
  %v4767 = vpack.c.bf16 %v4703, %v4703
  %v4768 = vpack.c.bf16 %v4704, %v4704
  %v4769 = vpack.c.bf16 %v4705, %v4705
  %v4770 = vpack.c.bf16 %v4706, %v4706
  %vm4771 = vcmask 519168
  %4772 = vst.msk [vmem:[%s5] sm:$0xf] %vm4771, %v4707
  %4773 = vst.msk [vmem:[%s5 + $0x4] sm:$0xf] %vm4771, %v4708
  %4774 = vst.msk [vmem:[%s5 + $0x8] sm:$0xf] %vm4771, %v4709
  %4775 = vst.msk [vmem:[%s5 + $0xc] sm:$0xf] %vm4771, %v4710
  %4776 = vst.msk [vmem:[%s5 + $0x10] sm:$0xf] %vm4771, %v4711
  %4777 = vst.msk [vmem:[%s5 + $0x14] sm:$0xf] %vm4771, %v4712
  %4778 = vst.msk [vmem:[%s5 + $0x18] sm:$0xf] %vm4771, %v4713
  %4779 = vst.msk [vmem:[%s5 + $0x1c] sm:$0xf] %vm4771, %v4714
  %4780 = vst.msk [vmem:[%s5 + $0x20] sm:$0xf] %vm4771, %v4715
  %4781 = vst.msk [vmem:[%s5 + $0x24] sm:$0xf] %vm4771, %v4716
  %4782 = vst.msk [vmem:[%s5 + $0x28] sm:$0xf] %vm4771, %v4717
  %4783 = vst.msk [vmem:[%s5 + $0x2c] sm:$0xf] %vm4771, %v4718
  %4784 = vst.msk [vmem:[%s5 + $0x30] sm:$0xf] %vm4771, %v4719
  %4785 = vst.msk [vmem:[%s5 + $0x34] sm:$0xf] %vm4771, %v4720
  %4786 = vst.msk [vmem:[%s5 + $0x38] sm:$0xf] %vm4771, %v4721
  %4787 = vst.msk [vmem:[%s5 + $0x3c] sm:$0xf] %vm4771, %v4722
  %4788 = vst.msk [vmem:[%s5 + $0x40] sm:$0xf] %vm4771, %v4723
  %4789 = vst.msk [vmem:[%s5 + $0x44] sm:$0xf] %vm4771, %v4724
  %4790 = vst.msk [vmem:[%s5 + $0x48] sm:$0xf] %vm4771, %v4725
  %4791 = vst.msk [vmem:[%s5 + $0x4c] sm:$0xf] %vm4771, %v4726
  %4792 = vst.msk [vmem:[%s5 + $0x50] sm:$0xf] %vm4771, %v4727
  %4793 = vst.msk [vmem:[%s5 + $0x54] sm:$0xf] %vm4771, %v4728
  %4794 = vst.msk [vmem:[%s5 + $0x58] sm:$0xf] %vm4771, %v4729
  %4795 = vst.msk [vmem:[%s5 + $0x5c] sm:$0xf] %vm4771, %v4730
  %4796 = vst.msk [vmem:[%s5 + $0x60] sm:$0xf] %vm4771, %v4731
  %4797 = vst.msk [vmem:[%s5 + $0x64] sm:$0xf] %vm4771, %v4732
  %4798 = vst.msk [vmem:[%s5 + $0x68] sm:$0xf] %vm4771, %v4733
  %4799 = vst.msk [vmem:[%s5 + $0x6c] sm:$0xf] %vm4771, %v4734
  %4800 = vst.msk [vmem:[%s5 + $0x70] sm:$0xf] %vm4771, %v4735
  %4801 = vst.msk [vmem:[%s5 + $0x74] sm:$0xf] %vm4771, %v4736
  %4802 = vst.msk [vmem:[%s5 + $0x78] sm:$0xf] %vm4771, %v4737
  %4803 = vst.msk [vmem:[%s5 + $0x7c] sm:$0xf] %vm4771, %v4738
  %4804 = vst.msk [vmem:[%s5 + $0x80] sm:$0xf] %vm4771, %v4739
  %4805 = vst.msk [vmem:[%s5 + $0x84] sm:$0xf] %vm4771, %v4740
  %4806 = vst.msk [vmem:[%s5 + $0x88] sm:$0xf] %vm4771, %v4741
  %4807 = vst.msk [vmem:[%s5 + $0x8c] sm:$0xf] %vm4771, %v4742
  %4808 = vst.msk [vmem:[%s5 + $0x90] sm:$0xf] %vm4771, %v4743
  %4809 = vst.msk [vmem:[%s5 + $0x94] sm:$0xf] %vm4771, %v4744
  %4810 = vst.msk [vmem:[%s5 + $0x98] sm:$0xf] %vm4771, %v4745
  %4811 = vst.msk [vmem:[%s5 + $0x9c] sm:$0xf] %vm4771, %v4746
  %4812 = vst.msk [vmem:[%s5 + $0xa0] sm:$0xf] %vm4771, %v4747
  %4813 = vst.msk [vmem:[%s5 + $0xa4] sm:$0xf] %vm4771, %v4748
  %4814 = vst.msk [vmem:[%s5 + $0xa8] sm:$0xf] %vm4771, %v4749
  %4815 = vst.msk [vmem:[%s5 + $0xac] sm:$0xf] %vm4771, %v4750
  %4816 = vst.msk [vmem:[%s5 + $0xb0] sm:$0xf] %vm4771, %v4751
  %4817 = vst.msk [vmem:[%s5 + $0xb4] sm:$0xf] %vm4771, %v4752
  %4818 = vst.msk [vmem:[%s5 + $0xb8] sm:$0xf] %vm4771, %v4753
  %4819 = vst.msk [vmem:[%s5 + $0xbc] sm:$0xf] %vm4771, %v4754
  %4820 = vst.msk [vmem:[%s5 + $0xc0] sm:$0xf] %vm4771, %v4755
  %4821 = vst.msk [vmem:[%s5 + $0xc4] sm:$0xf] %vm4771, %v4756
  %4822 = vst.msk [vmem:[%s5 + $0xc8] sm:$0xf] %vm4771, %v4757
  %4823 = vst.msk [vmem:[%s5 + $0xcc] sm:$0xf] %vm4771, %v4758
  %4824 = vst.msk [vmem:[%s5 + $0xd0] sm:$0xf] %vm4771, %v4759
  %4825 = vst.msk [vmem:[%s5 + $0xd4] sm:$0xf] %vm4771, %v4760
  %4826 = vst.msk [vmem:[%s5 + $0xd8] sm:$0xf] %vm4771, %v4761
  %4827 = vst.msk [vmem:[%s5 + $0xdc] sm:$0xf] %vm4771, %v4762
  %4828 = vst.msk [vmem:[%s5 + $0xe0] sm:$0xf] %vm4771, %v4763
  %4829 = vst.msk [vmem:[%s5 + $0xe4] sm:$0xf] %vm4771, %v4764
  %4830 = vst.msk [vmem:[%s5 + $0xe8] sm:$0xf] %vm4771, %v4765
  %4831 = vst.msk [vmem:[%s5 + $0xec] sm:$0xf] %vm4771, %v4766
  %4832 = vst.msk [vmem:[%s5 + $0xf0] sm:$0xf] %vm4771, %v4767
  %4833 = vst.msk [vmem:[%s5 + $0xf4] sm:$0xf] %vm4771, %v4768
  %4834 = vst.msk [vmem:[%s5 + $0xf8] sm:$0xf] %vm4771, %v4769
  %4835 = vst.msk [vmem:[%s5 + $0xfc] sm:$0xf] %vm4771, %v4770
  // Predicated region
  $region22: #{conv_block_apply.2} parent=0 // pred_check
    _
  $region23: #{conv_block_apply.2} parent=0 // pred_check_branch
    %4837 = sbr.rel (0) target = $region25
  $region24: #{conv_block_apply.2} parent=0 // pred_region
    _
  $region25: #{conv_block_apply.2} parent=0 // pred_fallthru
    _
  // Predicated region
  $region26: #{conv_block_apply.2} parent=0 // pred_check
    _
  $region27: #{conv_block_apply.2} parent=0 // pred_check_branch
    %4839 = sbr.rel (0) target = $region29
  $region28: #{conv_block_apply.2} parent=0 // pred_region
    _
  $region29: #{conv_block_apply.2} parent=0 // pred_fallthru
    _

</llo_original>
